<compile_context>
chip_gen: v5e
topology: v5e:2x2
jax: 0.10.0
libtpu: 0.0.40
codegen_flags: <defaults>
</compile_context>

<pallas_src>
import jax
import jax.numpy as jnp
from jax.experimental import pallas as pl
from jax.experimental.pallas import tpu as pltpu

EPS = 1e-5
VMEM_LIMIT = 32 * 1024 * 1024


def _round_up(x, m):
    return (x + m - 1) // m * m


def _make_conv_stats_kernel(h, w):
    """Conv3d(3x3x3, pad=1) on one (n, d) output slice + BN stat accumulation."""
    wp = w + 2          # padded row pitch
    hwp = h * wp        # rows per output slice (W valid + 2 junk cols per row)

    def kernel(x0_ref, x1_ref, x2_ref, w_ref, y_ref, sum_ref, ssq_ref, acc_ref):
        # Zero the per-channel stats accumulators once, at the first grid step.
        @pl.when(jnp.logical_and(pl.program_id(0) == 0, pl.program_id(1) == 0))
        def _init():
            sum_ref[...] = jnp.zeros_like(sum_ref)
            ssq_ref[...] = jnp.zeros_like(ssq_ref)

        acc_ref[...] = jnp.zeros_like(acc_ref)
        xs = (x0_ref, x1_ref, x2_ref)          # depth-shifted padded slabs
        for kd in range(3):
            xk = xs[kd]
            for kh in range(3):
                for kw in range(3):
                    off = kh * wp + kw
                    # contiguous sublane-row strip of the flattened padded plane
                    strip = xk[off:off + hwp, :]
                    acc_ref[...] += jnp.dot(
                        strip, w_ref[kd * 9 + kh * 3 + kw],
                        preferred_element_type=jnp.float32)

        # Rows hitting the W-padding columns are junk (sliced off by the
        # wrapper); mask them out of the stored result and the BN statistics.
        rows = jax.lax.broadcasted_iota(jnp.int32, (hwp, 1), 0)
        valid = (rows % wp < w).astype(jnp.float32)
        y = acc_ref[...] * valid
        y_ref[...] = y.astype(y_ref.dtype)
        sum_ref[...] += jnp.sum(y, axis=0, keepdims=True)
        ssq_ref[...] += jnp.sum(y * y, axis=0, keepdims=True)

    return kernel


def _bn_relu_kernel(y_ref, scale_ref, shift_ref, o_ref):
    o_ref[...] = jnp.maximum(
        y_ref[...] * scale_ref[...] + shift_ref[...], 0.0).astype(o_ref.dtype)


def _conv_bn_relu_stage(x, w, gamma, beta, cpad_out, compute_dtype):
    """x: (N, D, H, W, Cx) channels-last.  Returns (N, D, H, W, cpad_out)."""
    n, d, h, w_sp, cx = x.shape
    cout, cin = w.shape[0], w.shape[1]
    cin_p = _round_up(cx, 8)                    # K alignment
    wp = w_sp + 2
    p2 = (h + 2) * wp
    p2p = _round_up(p2 + 2, 8)                  # +2: largest shift reads 2 past
    hwp = h * wp

    # --- glue: spatial zero-pad, flatten the (H+2)(W+2) plane, align K ------
    xq = jnp.pad(x, ((0, 0), (1, 1), (1, 1), (1, 1), (0, cin_p - cx)))
    xq = xq.reshape(n, d + 2, p2, cin_p)
    xq = jnp.pad(xq, ((0, 0), (0, 0), (0, p2p - p2), (0, 0)))
    xq = xq.astype(compute_dtype)

    # weights: (Cout, Cin, 3,3,3) -> (27, Cin_p, Cpad_out), (kd,kh,kw) major.
    wk = jnp.transpose(w, (2, 3, 4, 1, 0)).reshape(27, cin, cout)
    wk = jnp.pad(wk, ((0, 0), (0, cin_p - cin), (0, cpad_out - cout)))
    wk = wk.astype(compute_dtype)

    def _slab_spec(kd):
        return pl.BlockSpec((None, None, p2p, cin_p),
                            lambda bn, bd: (bn, bd + kd, 0, 0))

    conv_kernel = _make_conv_stats_kernel(h, w_sp)
    y, s1, s2 = pl.pallas_call(
        conv_kernel,
        out_shape=(
            jax.ShapeDtypeStruct((n, d, hwp, cpad_out), jnp.float32),
            jax.ShapeDtypeStruct((1, cpad_out), jnp.float32),
            jax.ShapeDtypeStruct((1, cpad_out), jnp.float32),
        ),
        grid=(n, d),
        in_specs=(
            _slab_spec(0), _slab_spec(1), _slab_spec(2),
            pl.BlockSpec((27, cin_p, cpad_out), lambda bn, bd: (0, 0, 0)),
        ),
        out_specs=(
            pl.BlockSpec((None, None, hwp, cpad_out), lambda bn, bd: (bn, bd, 0, 0)),
            pl.BlockSpec((1, cpad_out), lambda bn, bd: (0, 0)),
            pl.BlockSpec((1, cpad_out), lambda bn, bd: (0, 0)),
        ),
        scratch_shapes=[pltpu.VMEM((hwp, cpad_out), jnp.float32)],
        compiler_params=pltpu.CompilerParams(
            # stats outputs are revisited across the whole grid -> 'arbitrary'.
            dimension_semantics=("arbitrary", "arbitrary"),
            vmem_limit_bytes=VMEM_LIMIT,
        ),
    )(xq, xq, xq, wk)

    # --- finalize BatchNorm batch statistics (biased variance, eps=1e-5) ----
    m_total = n * d * h * w_sp
    mean = s1 / m_total
    var = jnp.maximum(s2 / m_total - mean * mean, 0.0)
    g = jnp.pad(gamma, (0, cpad_out - cout)).reshape(1, cpad_out)
    b = jnp.pad(beta, (0, cpad_out - cout)).reshape(1, cpad_out)
    scale = (g * jax.lax.rsqrt(var + EPS)).astype(jnp.float32)
    shift = (b - mean * scale).astype(jnp.float32)

    yn = pl.pallas_call(
        _bn_relu_kernel,
        out_shape=jax.ShapeDtypeStruct((n, d, hwp, cpad_out), jnp.float32),
        grid=(n, d),
        in_specs=(
            pl.BlockSpec((None, None, hwp, cpad_out), lambda bn, bd: (bn, bd, 0, 0)),
            pl.BlockSpec((1, cpad_out), lambda bn, bd: (0, 0)),
            pl.BlockSpec((1, cpad_out), lambda bn, bd: (0, 0)),
        ),
        out_specs=pl.BlockSpec((None, None, hwp, cpad_out),
                               lambda bn, bd: (bn, bd, 0, 0)),
        compiler_params=pltpu.CompilerParams(
            dimension_semantics=("parallel", "parallel"),
            vmem_limit_bytes=VMEM_LIMIT,
        ),
    )(y, scale, shift)

    # drop the W-padding junk columns; back to (N, D, H, W, Cpad_out)
    return yn.reshape(n, d, h, wp, cpad_out)[:, :, :, :w_sp, :]


def conv_block_forward(x_ncdhw, params, compute_dtype=jnp.float32):
    """Equivalent of conv_block.forward; input/output NCDHW like PyTorch.

    Set compute_dtype=jnp.bfloat16 on v6e/v7x for bf16 MXU inputs
    (f32 accumulation is kept either way).
    """
    cout = params["w1"].shape[0]
    cpad = _round_up(cout, 128)                 # lane-dense output channels
    x = jnp.transpose(x_ncdhw, (0, 2, 3, 4, 1))  # -> NDHWC
    y1 = _conv_bn_relu_stage(x, params["w1"], params["g1"], params["beta1"],
                             cpad, compute_dtype)
    y2 = _conv_bn_relu_stage(y1, params["w2"], params["g2"], params["beta2"],
                             cpad, compute_dtype)
    out = y2[..., :cout]
    return jnp.transpose(out, (0, 4, 1, 2, 3))   # -> NCDHW


def init_params(key, in_c, out_c):
    k1, k2, k3, k4 = jax.random.split(key, 4)
    s1 = 1.0 / jnp.sqrt(in_c * 27.0)
    s2 = 1.0 / jnp.sqrt(out_c * 27.0)
    return {
        # b1/b2 kept for parameter parity with nn.Conv3d, but they are
        # mathematically canceled by the following BatchNorm and never used.
        "w1": jax.random.uniform(k1, (out_c, in_c, 3, 3, 3), jnp.float32, -s1, s1),
        "b1": jax.random.uniform(k2, (out_c,), jnp.float32, -s1, s1),
        "g1": jnp.ones((out_c,), jnp.float32),     # BatchNorm3d default init
        "beta1": jnp.zeros((out_c,), jnp.float32),
        "w2": jax.random.uniform(k3, (out_c, out_c, 3, 3, 3), jnp.float32, -s2, s2),
        "b2": jax.random.uniform(k4, (out_c,), jnp.float32, -s2, s2),
        "g2": jnp.ones((out_c,), jnp.float32),
        "beta2": jnp.zeros((out_c,), jnp.float32),
    }


if __name__ == "__main__":
    key = jax.random.PRNGKey(0)
    kx, kp = jax.random.split(key)

    in_c, out_c = 4, 8
    n, d, h, w = 2, 8, 8, 8
    x = jax.random.normal(kx, (n, in_c, d, h, w), dtype=jnp.float32)
    params = init_params(kp, in_c, out_c)

    fwd = jax.jit(conv_block_forward)
    out = jax.block_until_ready(fwd(x, params))

    assert out.shape == (n, out_c, d, h, w), out.shape
    assert bool(jnp.all(jnp.isfinite(out)))
    print("KERNEL_OK")
</pallas_src>

<mosaic_0001>
module attributes {stable_mosaic.version = 11 : i64} {
  func.func @kernel(%arg0: i32, %arg1: i32, %arg2: memref<1x1x104x8xf32, #tpu.memory_space<vmem>>, %arg3: memref<1x1x104x8xf32, #tpu.memory_space<vmem>>, %arg4: memref<1x1x104x8xf32, #tpu.memory_space<vmem>>, %arg5: memref<27x8x128xf32, #tpu.memory_space<vmem>>, %arg6: memref<1x1x80x128xf32, #tpu.memory_space<vmem>>, %arg7: memref<1x128xf32, #tpu.memory_space<vmem>>, %arg8: memref<1x128xf32, #tpu.memory_space<vmem>>, %arg9: memref<80x128xf32, #tpu.memory_space<vmem>>) attributes {dimension_semantics = [#tpu.dimension_semantics<arbitrary>, #tpu.dimension_semantics<arbitrary>], iteration_bounds = array<i64: 2, 8>, scalar_prefetch = 0 : i64, scratch_operands = 1 : i64, tpu.core_type = #tpu.core_type<tc>, window_params = [{transform_indices = @transform_0, window_bounds = array<i64: 1, 1, 104, 8>}, {transform_indices = @transform_1, window_bounds = array<i64: 1, 1, 104, 8>}, {transform_indices = @transform_2, window_bounds = array<i64: 1, 1, 104, 8>}, {pipeline_mode = #tpu.pipeline_mode<synchronous>, transform_indices = @transform_3, window_bounds = array<i64: 27, 8, 128>}, {transform_indices = @transform_4, window_bounds = array<i64: 1, 1, 80, 128>}, {pipeline_mode = #tpu.pipeline_mode<synchronous>, transform_indices = @transform_5, window_bounds = array<i64: 1, 128>}, {pipeline_mode = #tpu.pipeline_mode<synchronous>, transform_indices = @transform_6, window_bounds = array<i64: 1, 128>}]} {
    %c0_i32 = arith.constant 0 : i32
    %0 = arith.cmpi eq, %arg0, %c0_i32 : i32
    %c0_i32_0 = arith.constant 0 : i32
    %1 = arith.cmpi eq, %arg1, %c0_i32_0 : i32
    %2 = arith.andi %0, %1 : i1
    %3 = arith.extui %2 : i1 to i32
    %c0_i32_1 = arith.constant 0 : i32
    %4 = arith.cmpi ne, %3, %c0_i32_1 : i32
    scf.if %4 {
      %cst_321 = arith.constant 0.000000e+00 : f32
      %261 = vector.broadcast %cst_321 : f32 to vector<1x128xf32>
      %c0_322 = arith.constant 0 : index
      %c0_323 = arith.constant 0 : index
      %262 = vector.load %arg7[%c0_322, %c0_323] : memref<1x128xf32, #tpu.memory_space<vmem>>, vector<1x128xf32>
      tpu.vector_store %arg7[%c0_322, %c0_323], %261 {strides = array<i32>} : memref<1x128xf32, #tpu.memory_space<vmem>>, vector<1x128xf32>,
      %cst_324 = arith.constant 0.000000e+00 : f32
      %263 = vector.broadcast %cst_324 : f32 to vector<1x128xf32>
      %c0_325 = arith.constant 0 : index
      %c0_326 = arith.constant 0 : index
      %264 = vector.load %arg8[%c0_325, %c0_326] : memref<1x128xf32, #tpu.memory_space<vmem>>, vector<1x128xf32>
      tpu.vector_store %arg8[%c0_325, %c0_326], %263 {strides = array<i32>} : memref<1x128xf32, #tpu.memory_space<vmem>>, vector<1x128xf32>,
    } else {
    }
    %cst = arith.constant 0.000000e+00 : f32
    %5 = vector.broadcast %cst : f32 to vector<80x128xf32>
    %c0 = arith.constant 0 : index
    %c0_2 = arith.constant 0 : index
    %6 = vector.load %arg9[%c0, %c0_2] : memref<80x128xf32, #tpu.memory_space<vmem>>, vector<80x128xf32>
    tpu.vector_store %arg9[%c0, %c0_2], %5 {strides = array<i32>} : memref<80x128xf32, #tpu.memory_space<vmem>>, vector<80x128xf32>,
    %c0_3 = arith.constant 0 : index
    %c0_4 = arith.constant 0 : index
    %c0_5 = arith.constant 0 : index
    %c0_6 = arith.constant 0 : index
    %7 = vector.load %arg2[%c0_3, %c0_4, %c0_5, %c0_6] : memref<1x1x104x8xf32, #tpu.memory_space<vmem>>, vector<1x1x80x8xf32>
    %8 = vector.shape_cast %7 : vector<1x1x80x8xf32> to vector<80x8xf32>
    %c0_7 = arith.constant 0 : index
    %c0_8 = arith.constant 0 : index
    %9 = vector.load %arg9[%c0_7, %c0_8] : memref<80x128xf32, #tpu.memory_space<vmem>>, vector<80x128xf32>
    %c0_9 = arith.constant 0 : index
    %c0_10 = arith.constant 0 : index
    %c0_11 = arith.constant 0 : index
    %10 = vector.load %arg5[%c0_9, %c0_10, %c0_11] : memref<27x8x128xf32, #tpu.memory_space<vmem>>, vector<1x8x128xf32>
    %11 = vector.shape_cast %10 : vector<1x8x128xf32> to vector<8x128xf32>
    %cst_12 = arith.constant dense<0.000000e+00> : vector<80x128xf32>
    %12 = tpu.matmul %8, %11, %cst_12 {dimension_numbers = #tpu.dot_dimension_numbers<[1], [0], [0], [1], [0, 0, 1, 1], [], []>} : vector<80x8xf32>, vector<8x128xf32>, vector<80x128xf32> -> vector<80x128xf32>
    %13 = arith.addf %9, %12 : vector<80x128xf32>
    %c0_13 = arith.constant 0 : index
    %c0_14 = arith.constant 0 : index
    %14 = vector.load %arg9[%c0_13, %c0_14] : memref<80x128xf32, #tpu.memory_space<vmem>>, vector<80x128xf32>
    tpu.vector_store %arg9[%c0_13, %c0_14], %13 {strides = array<i32>} : memref<80x128xf32, #tpu.memory_space<vmem>>, vector<80x128xf32>,
    %c0_15 = arith.constant 0 : index
    %c0_16 = arith.constant 0 : index
    %c1 = arith.constant 1 : index
    %c0_17 = arith.constant 0 : index
    %15 = vector.load %arg2[%c0_15, %c0_16, %c1, %c0_17] : memref<1x1x104x8xf32, #tpu.memory_space<vmem>>, vector<1x1x80x8xf32>
    %16 = vector.shape_cast %15 : vector<1x1x80x8xf32> to vector<80x8xf32>
    %c0_18 = arith.constant 0 : index
    %c0_19 = arith.constant 0 : index
    %17 = vector.load %arg9[%c0_18, %c0_19] : memref<80x128xf32, #tpu.memory_space<vmem>>, vector<80x128xf32>
    %c1_20 = arith.constant 1 : index
    %c0_21 = arith.constant 0 : index
    %c0_22 = arith.constant 0 : index
    %18 = vector.load %arg5[%c1_20, %c0_21, %c0_22] : memref<27x8x128xf32, #tpu.memory_space<vmem>>, vector<1x8x128xf32>
    %19 = vector.shape_cast %18 : vector<1x8x128xf32> to vector<8x128xf32>
    %cst_23 = arith.constant dense<0.000000e+00> : vector<80x128xf32>
    %20 = tpu.matmul %16, %19, %cst_23 {dimension_numbers = #tpu.dot_dimension_numbers<[1], [0], [0], [1], [0, 0, 1, 1], [], []>} : vector<80x8xf32>, vector<8x128xf32>, vector<80x128xf32> -> vector<80x128xf32>
    %21 = arith.addf %17, %20 : vector<80x128xf32>
    %c0_24 = arith.constant 0 : index
    %c0_25 = arith.constant 0 : index
    %22 = vector.load %arg9[%c0_24, %c0_25] : memref<80x128xf32, #tpu.memory_space<vmem>>, vector<80x128xf32>
    tpu.vector_store %arg9[%c0_24, %c0_25], %21 {strides = array<i32>} : memref<80x128xf32, #tpu.memory_space<vmem>>, vector<80x128xf32>,
    %c0_26 = arith.constant 0 : index
    %c0_27 = arith.constant 0 : index
    %c2 = arith.constant 2 : index
    %c0_28 = arith.constant 0 : index
    %23 = vector.load %arg2[%c0_26, %c0_27, %c2, %c0_28] : memref<1x1x104x8xf32, #tpu.memory_space<vmem>>, vector<1x1x80x8xf32>
    %24 = vector.shape_cast %23 : vector<1x1x80x8xf32> to vector<80x8xf32>
    %c0_29 = arith.constant 0 : index
    %c0_30 = arith.constant 0 : index
    %25 = vector.load %arg9[%c0_29, %c0_30] : memref<80x128xf32, #tpu.memory_space<vmem>>, vector<80x128xf32>
    %c2_31 = arith.constant 2 : index
    %c0_32 = arith.constant 0 : index
    %c0_33 = arith.constant 0 : index
    %26 = vector.load %arg5[%c2_31, %c0_32, %c0_33] : memref<27x8x128xf32, #tpu.memory_space<vmem>>, vector<1x8x128xf32>
    %27 = vector.shape_cast %26 : vector<1x8x128xf32> to vector<8x128xf32>
    %cst_34 = arith.constant dense<0.000000e+00> : vector<80x128xf32>
    %28 = tpu.matmul %24, %27, %cst_34 {dimension_numbers = #tpu.dot_dimension_numbers<[1], [0], [0], [1], [0, 0, 1, 1], [], []>} : vector<80x8xf32>, vector<8x128xf32>, vector<80x128xf32> -> vector<80x128xf32>
    %29 = arith.addf %25, %28 : vector<80x128xf32>
    %c0_35 = arith.constant 0 : index
    %c0_36 = arith.constant 0 : index
    %30 = vector.load %arg9[%c0_35, %c0_36] : memref<80x128xf32, #tpu.memory_space<vmem>>, vector<80x128xf32>
    tpu.vector_store %arg9[%c0_35, %c0_36], %29 {strides = array<i32>} : memref<80x128xf32, #tpu.memory_space<vmem>>, vector<80x128xf32>,
    %c0_37 = arith.constant 0 : index
    %c0_38 = arith.constant 0 : index
    %c10 = arith.constant 10 : index
    %c0_39 = arith.constant 0 : index
    %31 = vector.load %arg2[%c0_37, %c0_38, %c10, %c0_39] : memref<1x1x104x8xf32, #tpu.memory_space<vmem>>, vector<1x1x80x8xf32>
    %32 = vector.shape_cast %31 : vector<1x1x80x8xf32> to vector<80x8xf32>
    %c0_40 = arith.constant 0 : index
    %c0_41 = arith.constant 0 : index
    %33 = vector.load %arg9[%c0_40, %c0_41] : memref<80x128xf32, #tpu.memory_space<vmem>>, vector<80x128xf32>
    %c3 = arith.constant 3 : index
    %c0_42 = arith.constant 0 : index
    %c0_43 = arith.constant 0 : index
    %34 = vector.load %arg5[%c3, %c0_42, %c0_43] : memref<27x8x128xf32, #tpu.memory_space<vmem>>, vector<1x8x128xf32>
    %35 = vector.shape_cast %34 : vector<1x8x128xf32> to vector<8x128xf32>
    %cst_44 = arith.constant dense<0.000000e+00> : vector<80x128xf32>
    %36 = tpu.matmul %32, %35, %cst_44 {dimension_numbers = #tpu.dot_dimension_numbers<[1], [0], [0], [1], [0, 0, 1, 1], [], []>} : vector<80x8xf32>, vector<8x128xf32>, vector<80x128xf32> -> vector<80x128xf32>
    %37 = arith.addf %33, %36 : vector<80x128xf32>
    %c0_45 = arith.constant 0 : index
    %c0_46 = arith.constant 0 : index
    %38 = vector.load %arg9[%c0_45, %c0_46] : memref<80x128xf32, #tpu.memory_space<vmem>>, vector<80x128xf32>
    tpu.vector_store %arg9[%c0_45, %c0_46], %37 {strides = array<i32>} : memref<80x128xf32, #tpu.memory_space<vmem>>, vector<80x128xf32>,
    %c0_47 = arith.constant 0 : index
    %c0_48 = arith.constant 0 : index
    %c11 = arith.constant 11 : index
    %c0_49 = arith.constant 0 : index
    %39 = vector.load %arg2[%c0_47, %c0_48, %c11, %c0_49] : memref<1x1x104x8xf32, #tpu.memory_space<vmem>>, vector<1x1x80x8xf32>
    %40 = vector.shape_cast %39 : vector<1x1x80x8xf32> to vector<80x8xf32>
    %c0_50 = arith.constant 0 : index
    %c0_51 = arith.constant 0 : index
    %41 = vector.load %arg9[%c0_50, %c0_51] : memref<80x128xf32, #tpu.memory_space<vmem>>, vector<80x128xf32>
    %c4 = arith.constant 4 : index
    %c0_52 = arith.constant 0 : index
    %c0_53 = arith.constant 0 : index
    %42 = vector.load %arg5[%c4, %c0_52, %c0_53] : memref<27x8x128xf32, #tpu.memory_space<vmem>>, vector<1x8x128xf32>
    %43 = vector.shape_cast %42 : vector<1x8x128xf32> to vector<8x128xf32>
    %cst_54 = arith.constant dense<0.000000e+00> : vector<80x128xf32>
    %44 = tpu.matmul %40, %43, %cst_54 {dimension_numbers = #tpu.dot_dimension_numbers<[1], [0], [0], [1], [0, 0, 1, 1], [], []>} : vector<80x8xf32>, vector<8x128xf32>, vector<80x128xf32> -> vector<80x128xf32>
    %45 = arith.addf %41, %44 : vector<80x128xf32>
    %c0_55 = arith.constant 0 : index
    %c0_56 = arith.constant 0 : index
    %46 = vector.load %arg9[%c0_55, %c0_56] : memref<80x128xf32, #tpu.memory_space<vmem>>, vector<80x128xf32>
    tpu.vector_store %arg9[%c0_55, %c0_56], %45 {strides = array<i32>} : memref<80x128xf32, #tpu.memory_space<vmem>>, vector<80x128xf32>,
    %c0_57 = arith.constant 0 : index
    %c0_58 = arith.constant 0 : index
    %c12 = arith.constant 12 : index
    %c0_59 = arith.constant 0 : index
    %47 = vector.load %arg2[%c0_57, %c0_58, %c12, %c0_59] : memref<1x1x104x8xf32, #tpu.memory_space<vmem>>, vector<1x1x80x8xf32>
    %48 = vector.shape_cast %47 : vector<1x1x80x8xf32> to vector<80x8xf32>
    %c0_60 = arith.constant 0 : index
    %c0_61 = arith.constant 0 : index
    %49 = vector.load %arg9[%c0_60, %c0_61] : memref<80x128xf32, #tpu.memory_space<vmem>>, vector<80x128xf32>
    %c5 = arith.constant 5 : index
    %c0_62 = arith.constant 0 : index
    %c0_63 = arith.constant 0 : index
    %50 = vector.load %arg5[%c5, %c0_62, %c0_63] : memref<27x8x128xf32, #tpu.memory_space<vmem>>, vector<1x8x128xf32>
    %51 = vector.shape_cast %50 : vector<1x8x128xf32> to vector<8x128xf32>
    %cst_64 = arith.constant dense<0.000000e+00> : vector<80x128xf32>
    %52 = tpu.matmul %48, %51, %cst_64 {dimension_numbers = #tpu.dot_dimension_numbers<[1], [0], [0], [1], [0, 0, 1, 1], [], []>} : vector<80x8xf32>, vector<8x128xf32>, vector<80x128xf32> -> vector<80x128xf32>
    %53 = arith.addf %49, %52 : vector<80x128xf32>
    %c0_65 = arith.constant 0 : index
    %c0_66 = arith.constant 0 : index
    %54 = vector.load %arg9[%c0_65, %c0_66] : memref<80x128xf32, #tpu.memory_space<vmem>>, vector<80x128xf32>
    tpu.vector_store %arg9[%c0_65, %c0_66], %53 {strides = array<i32>} : memref<80x128xf32, #tpu.memory_space<vmem>>, vector<80x128xf32>,
    %c0_67 = arith.constant 0 : index
    %c0_68 = arith.constant 0 : index
    %c20 = arith.constant 20 : index
    %c0_69 = arith.constant 0 : index
    %55 = vector.load %arg2[%c0_67, %c0_68, %c20, %c0_69] : memref<1x1x104x8xf32, #tpu.memory_space<vmem>>, vector<1x1x80x8xf32>
    %56 = vector.shape_cast %55 : vector<1x1x80x8xf32> to vector<80x8xf32>
    %c0_70 = arith.constant 0 : index
    %c0_71 = arith.constant 0 : index
    %57 = vector.load %arg9[%c0_70, %c0_71] : memref<80x128xf32, #tpu.memory_space<vmem>>, vector<80x128xf32>
    %c6 = arith.constant 6 : index
    %c0_72 = arith.constant 0 : index
    %c0_73 = arith.constant 0 : index
    %58 = vector.load %arg5[%c6, %c0_72, %c0_73] : memref<27x8x128xf32, #tpu.memory_space<vmem>>, vector<1x8x128xf32>
    %59 = vector.shape_cast %58 : vector<1x8x128xf32> to vector<8x128xf32>
    %cst_74 = arith.constant dense<0.000000e+00> : vector<80x128xf32>
    %60 = tpu.matmul %56, %59, %cst_74 {dimension_numbers = #tpu.dot_dimension_numbers<[1], [0], [0], [1], [0, 0, 1, 1], [], []>} : vector<80x8xf32>, vector<8x128xf32>, vector<80x128xf32> -> vector<80x128xf32>
    %61 = arith.addf %57, %60 : vector<80x128xf32>
    %c0_75 = arith.constant 0 : index
    %c0_76 = arith.constant 0 : index
    %62 = vector.load %arg9[%c0_75, %c0_76] : memref<80x128xf32, #tpu.memory_space<vmem>>, vector<80x128xf32>
    tpu.vector_store %arg9[%c0_75, %c0_76], %61 {strides = array<i32>} : memref<80x128xf32, #tpu.memory_space<vmem>>, vector<80x128xf32>,
    %c0_77 = arith.constant 0 : index
    %c0_78 = arith.constant 0 : index
    %c21 = arith.constant 21 : index
    %c0_79 = arith.constant 0 : index
    %63 = vector.load %arg2[%c0_77, %c0_78, %c21, %c0_79] : memref<1x1x104x8xf32, #tpu.memory_space<vmem>>, vector<1x1x80x8xf32>
    %64 = vector.shape_cast %63 : vector<1x1x80x8xf32> to vector<80x8xf32>
    %c0_80 = arith.constant 0 : index
    %c0_81 = arith.constant 0 : index
    %65 = vector.load %arg9[%c0_80, %c0_81] : memref<80x128xf32, #tpu.memory_space<vmem>>, vector<80x128xf32>
    %c7 = arith.constant 7 : index
    %c0_82 = arith.constant 0 : index
    %c0_83 = arith.constant 0 : index
    %66 = vector.load %arg5[%c7, %c0_82, %c0_83] : memref<27x8x128xf32, #tpu.memory_space<vmem>>, vector<1x8x128xf32>
    %67 = vector.shape_cast %66 : vector<1x8x128xf32> to vector<8x128xf32>
    %cst_84 = arith.constant dense<0.000000e+00> : vector<80x128xf32>
    %68 = tpu.matmul %64, %67, %cst_84 {dimension_numbers = #tpu.dot_dimension_numbers<[1], [0], [0], [1], [0, 0, 1, 1], [], []>} : vector<80x8xf32>, vector<8x128xf32>, vector<80x128xf32> -> vector<80x128xf32>
    %69 = arith.addf %65, %68 : vector<80x128xf32>
    %c0_85 = arith.constant 0 : index
    %c0_86 = arith.constant 0 : index
    %70 = vector.load %arg9[%c0_85, %c0_86] : memref<80x128xf32, #tpu.memory_space<vmem>>, vector<80x128xf32>
    tpu.vector_store %arg9[%c0_85, %c0_86], %69 {strides = array<i32>} : memref<80x128xf32, #tpu.memory_space<vmem>>, vector<80x128xf32>,
    %c0_87 = arith.constant 0 : index
    %c0_88 = arith.constant 0 : index
    %c22 = arith.constant 22 : index
    %c0_89 = arith.constant 0 : index
    %71 = vector.load %arg2[%c0_87, %c0_88, %c22, %c0_89] : memref<1x1x104x8xf32, #tpu.memory_space<vmem>>, vector<1x1x80x8xf32>
    %72 = vector.shape_cast %71 : vector<1x1x80x8xf32> to vector<80x8xf32>
    %c0_90 = arith.constant 0 : index
    %c0_91 = arith.constant 0 : index
    %73 = vector.load %arg9[%c0_90, %c0_91] : memref<80x128xf32, #tpu.memory_space<vmem>>, vector<80x128xf32>
    %c8 = arith.constant 8 : index
    %c0_92 = arith.constant 0 : index
    %c0_93 = arith.constant 0 : index
    %74 = vector.load %arg5[%c8, %c0_92, %c0_93] : memref<27x8x128xf32, #tpu.memory_space<vmem>>, vector<1x8x128xf32>
    %75 = vector.shape_cast %74 : vector<1x8x128xf32> to vector<8x128xf32>
    %cst_94 = arith.constant dense<0.000000e+00> : vector<80x128xf32>
    %76 = tpu.matmul %72, %75, %cst_94 {dimension_numbers = #tpu.dot_dimension_numbers<[1], [0], [0], [1], [0, 0, 1, 1], [], []>} : vector<80x8xf32>, vector<8x128xf32>, vector<80x128xf32> -> vector<80x128xf32>
    %77 = arith.addf %73, %76 : vector<80x128xf32>
    %c0_95 = arith.constant 0 : index
    %c0_96 = arith.constant 0 : index
    %78 = vector.load %arg9[%c0_95, %c0_96] : memref<80x128xf32, #tpu.memory_space<vmem>>, vector<80x128xf32>
    tpu.vector_store %arg9[%c0_95, %c0_96], %77 {strides = array<i32>} : memref<80x128xf32, #tpu.memory_space<vmem>>, vector<80x128xf32>,
    %c0_97 = arith.constant 0 : index
    %c0_98 = arith.constant 0 : index
    %c0_99 = arith.constant 0 : index
    %c0_100 = arith.constant 0 : index
    %79 = vector.load %arg3[%c0_97, %c0_98, %c0_99, %c0_100] : memref<1x1x104x8xf32, #tpu.memory_space<vmem>>, vector<1x1x80x8xf32>
    %80 = vector.shape_cast %79 : vector<1x1x80x8xf32> to vector<80x8xf32>
    %c0_101 = arith.constant 0 : index
    %c0_102 = arith.constant 0 : index
    %81 = vector.load %arg9[%c0_101, %c0_102] : memref<80x128xf32, #tpu.memory_space<vmem>>, vector<80x128xf32>
    %c9 = arith.constant 9 : index
    %c0_103 = arith.constant 0 : index
    %c0_104 = arith.constant 0 : index
    %82 = vector.load %arg5[%c9, %c0_103, %c0_104] : memref<27x8x128xf32, #tpu.memory_space<vmem>>, vector<1x8x128xf32>
    %83 = vector.shape_cast %82 : vector<1x8x128xf32> to vector<8x128xf32>
    %cst_105 = arith.constant dense<0.000000e+00> : vector<80x128xf32>
    %84 = tpu.matmul %80, %83, %cst_105 {dimension_numbers = #tpu.dot_dimension_numbers<[1], [0], [0], [1], [0, 0, 1, 1], [], []>} : vector<80x8xf32>, vector<8x128xf32>, vector<80x128xf32> -> vector<80x128xf32>
    %85 = arith.addf %81, %84 : vector<80x128xf32>
    %c0_106 = arith.constant 0 : index
    %c0_107 = arith.constant 0 : index
    %86 = vector.load %arg9[%c0_106, %c0_107] : memref<80x128xf32, #tpu.memory_space<vmem>>, vector<80x128xf32>
    tpu.vector_store %arg9[%c0_106, %c0_107], %85 {strides = array<i32>} : memref<80x128xf32, #tpu.memory_space<vmem>>, vector<80x128xf32>,
    %c0_108 = arith.constant 0 : index
    %c0_109 = arith.constant 0 : index
    %c1_110 = arith.constant 1 : index
    %c0_111 = arith.constant 0 : index
    %87 = vector.load %arg3[%c0_108, %c0_109, %c1_110, %c0_111] : memref<1x1x104x8xf32, #tpu.memory_space<vmem>>, vector<1x1x80x8xf32>
    %88 = vector.shape_cast %87 : vector<1x1x80x8xf32> to vector<80x8xf32>
    %c0_112 = arith.constant 0 : index
    %c0_113 = arith.constant 0 : index
    %89 = vector.load %arg9[%c0_112, %c0_113] : memref<80x128xf32, #tpu.memory_space<vmem>>, vector<80x128xf32>
    %c10_114 = arith.constant 10 : index
    %c0_115 = arith.constant 0 : index
    %c0_116 = arith.constant 0 : index
    %90 = vector.load %arg5[%c10_114, %c0_115, %c0_116] : memref<27x8x128xf32, #tpu.memory_space<vmem>>, vector<1x8x128xf32>
    %91 = vector.shape_cast %90 : vector<1x8x128xf32> to vector<8x128xf32>
    %cst_117 = arith.constant dense<0.000000e+00> : vector<80x128xf32>
    %92 = tpu.matmul %88, %91, %cst_117 {dimension_numbers = #tpu.dot_dimension_numbers<[1], [0], [0], [1], [0, 0, 1, 1], [], []>} : vector<80x8xf32>, vector<8x128xf32>, vector<80x128xf32> -> vector<80x128xf32>
    %93 = arith.addf %89, %92 : vector<80x128xf32>
    %c0_118 = arith.constant 0 : index
    %c0_119 = arith.constant 0 : index
    %94 = vector.load %arg9[%c0_118, %c0_119] : memref<80x128xf32, #tpu.memory_space<vmem>>, vector<80x128xf32>
    tpu.vector_store %arg9[%c0_118, %c0_119], %93 {strides = array<i32>} : memref<80x128xf32, #tpu.memory_space<vmem>>, vector<80x128xf32>,
    %c0_120 = arith.constant 0 : index
    %c0_121 = arith.constant 0 : index
    %c2_122 = arith.constant 2 : index
    %c0_123 = arith.constant 0 : index
    %95 = vector.load %arg3[%c0_120, %c0_121, %c2_122, %c0_123] : memref<1x1x104x8xf32, #tpu.memory_space<vmem>>, vector<1x1x80x8xf32>
    %96 = vector.shape_cast %95 : vector<1x1x80x8xf32> to vector<80x8xf32>
    %c0_124 = arith.constant 0 : index
    %c0_125 = arith.constant 0 : index
    %97 = vector.load %arg9[%c0_124, %c0_125] : memref<80x128xf32, #tpu.memory_space<vmem>>, vector<80x128xf32>
    %c11_126 = arith.constant 11 : index
    %c0_127 = arith.constant 0 : index
    %c0_128 = arith.constant 0 : index
    %98 = vector.load %arg5[%c11_126, %c0_127, %c0_128] : memref<27x8x128xf32, #tpu.memory_space<vmem>>, vector<1x8x128xf32>
    %99 = vector.shape_cast %98 : vector<1x8x128xf32> to vector<8x128xf32>
    %cst_129 = arith.constant dense<0.000000e+00> : vector<80x128xf32>
    %100 = tpu.matmul %96, %99, %cst_129 {dimension_numbers = #tpu.dot_dimension_numbers<[1], [0], [0], [1], [0, 0, 1, 1], [], []>} : vector<80x8xf32>, vector<8x128xf32>, vector<80x128xf32> -> vector<80x128xf32>
    %101 = arith.addf %97, %100 : vector<80x128xf32>
    %c0_130 = arith.constant 0 : index
    %c0_131 = arith.constant 0 : index
    %102 = vector.load %arg9[%c0_130, %c0_131] : memref<80x128xf32, #tpu.memory_space<vmem>>, vector<80x128xf32>
    tpu.vector_store %arg9[%c0_130, %c0_131], %101 {strides = array<i32>} : memref<80x128xf32, #tpu.memory_space<vmem>>, vector<80x128xf32>,
    %c0_132 = arith.constant 0 : index
    %c0_133 = arith.constant 0 : index
    %c10_134 = arith.constant 10 : index
    %c0_135 = arith.constant 0 : index
    %103 = vector.load %arg3[%c0_132, %c0_133, %c10_134, %c0_135] : memref<1x1x104x8xf32, #tpu.memory_space<vmem>>, vector<1x1x80x8xf32>
    %104 = vector.shape_cast %103 : vector<1x1x80x8xf32> to vector<80x8xf32>
    %c0_136 = arith.constant 0 : index
    %c0_137 = arith.constant 0 : index
    %105 = vector.load %arg9[%c0_136, %c0_137] : memref<80x128xf32, #tpu.memory_space<vmem>>, vector<80x128xf32>
    %c12_138 = arith.constant 12 : index
    %c0_139 = arith.constant 0 : index
    %c0_140 = arith.constant 0 : index
    %106 = vector.load %arg5[%c12_138, %c0_139, %c0_140] : memref<27x8x128xf32, #tpu.memory_space<vmem>>, vector<1x8x128xf32>
    %107 = vector.shape_cast %106 : vector<1x8x128xf32> to vector<8x128xf32>
    %cst_141 = arith.constant dense<0.000000e+00> : vector<80x128xf32>
    %108 = tpu.matmul %104, %107, %cst_141 {dimension_numbers = #tpu.dot_dimension_numbers<[1], [0], [0], [1], [0, 0, 1, 1], [], []>} : vector<80x8xf32>, vector<8x128xf32>, vector<80x128xf32> -> vector<80x128xf32>
    %109 = arith.addf %105, %108 : vector<80x128xf32>
    %c0_142 = arith.constant 0 : index
    %c0_143 = arith.constant 0 : index
    %110 = vector.load %arg9[%c0_142, %c0_143] : memref<80x128xf32, #tpu.memory_space<vmem>>, vector<80x128xf32>
    tpu.vector_store %arg9[%c0_142, %c0_143], %109 {strides = array<i32>} : memref<80x128xf32, #tpu.memory_space<vmem>>, vector<80x128xf32>,
    %c0_144 = arith.constant 0 : index
    %c0_145 = arith.constant 0 : index
    %c11_146 = arith.constant 11 : index
    %c0_147 = arith.constant 0 : index
    %111 = vector.load %arg3[%c0_144, %c0_145, %c11_146, %c0_147] : memref<1x1x104x8xf32, #tpu.memory_space<vmem>>, vector<1x1x80x8xf32>
    %112 = vector.shape_cast %111 : vector<1x1x80x8xf32> to vector<80x8xf32>
    %c0_148 = arith.constant 0 : index
    %c0_149 = arith.constant 0 : index
    %113 = vector.load %arg9[%c0_148, %c0_149] : memref<80x128xf32, #tpu.memory_space<vmem>>, vector<80x128xf32>
    %c13 = arith.constant 13 : index
    %c0_150 = arith.constant 0 : index
    %c0_151 = arith.constant 0 : index
    %114 = vector.load %arg5[%c13, %c0_150, %c0_151] : memref<27x8x128xf32, #tpu.memory_space<vmem>>, vector<1x8x128xf32>
    %115 = vector.shape_cast %114 : vector<1x8x128xf32> to vector<8x128xf32>
    %cst_152 = arith.constant dense<0.000000e+00> : vector<80x128xf32>
    %116 = tpu.matmul %112, %115, %cst_152 {dimension_numbers = #tpu.dot_dimension_numbers<[1], [0], [0], [1], [0, 0, 1, 1], [], []>} : vector<80x8xf32>, vector<8x128xf32>, vector<80x128xf32> -> vector<80x128xf32>
    %117 = arith.addf %113, %116 : vector<80x128xf32>
    %c0_153 = arith.constant 0 : index
    %c0_154 = arith.constant 0 : index
    %118 = vector.load %arg9[%c0_153, %c0_154] : memref<80x128xf32, #tpu.memory_space<vmem>>, vector<80x128xf32>
    tpu.vector_store %arg9[%c0_153, %c0_154], %117 {strides = array<i32>} : memref<80x128xf32, #tpu.memory_space<vmem>>, vector<80x128xf32>,
    %c0_155 = arith.constant 0 : index
    %c0_156 = arith.constant 0 : index
    %c12_157 = arith.constant 12 : index
    %c0_158 = arith.constant 0 : index
    %119 = vector.load %arg3[%c0_155, %c0_156, %c12_157, %c0_158] : memref<1x1x104x8xf32, #tpu.memory_space<vmem>>, vector<1x1x80x8xf32>
    %120 = vector.shape_cast %119 : vector<1x1x80x8xf32> to vector<80x8xf32>
    %c0_159 = arith.constant 0 : index
    %c0_160 = arith.constant 0 : index
    %121 = vector.load %arg9[%c0_159, %c0_160] : memref<80x128xf32, #tpu.memory_space<vmem>>, vector<80x128xf32>
    %c14 = arith.constant 14 : index
    %c0_161 = arith.constant 0 : index
    %c0_162 = arith.constant 0 : index
    %122 = vector.load %arg5[%c14, %c0_161, %c0_162] : memref<27x8x128xf32, #tpu.memory_space<vmem>>, vector<1x8x128xf32>
    %123 = vector.shape_cast %122 : vector<1x8x128xf32> to vector<8x128xf32>
    %cst_163 = arith.constant dense<0.000000e+00> : vector<80x128xf32>
    %124 = tpu.matmul %120, %123, %cst_163 {dimension_numbers = #tpu.dot_dimension_numbers<[1], [0], [0], [1], [0, 0, 1, 1], [], []>} : vector<80x8xf32>, vector<8x128xf32>, vector<80x128xf32> -> vector<80x128xf32>
    %125 = arith.addf %121, %124 : vector<80x128xf32>
    %c0_164 = arith.constant 0 : index
    %c0_165 = arith.constant 0 : index
    %126 = vector.load %arg9[%c0_164, %c0_165] : memref<80x128xf32, #tpu.memory_space<vmem>>, vector<80x128xf32>
    tpu.vector_store %arg9[%c0_164, %c0_165], %125 {strides = array<i32>} : memref<80x128xf32, #tpu.memory_space<vmem>>, vector<80x128xf32>,
    %c0_166 = arith.constant 0 : index
    %c0_167 = arith.constant 0 : index
    %c20_168 = arith.constant 20 : index
    %c0_169 = arith.constant 0 : index
    %127 = vector.load %arg3[%c0_166, %c0_167, %c20_168, %c0_169] : memref<1x1x104x8xf32, #tpu.memory_space<vmem>>, vector<1x1x80x8xf32>
    %128 = vector.shape_cast %127 : vector<1x1x80x8xf32> to vector<80x8xf32>
    %c0_170 = arith.constant 0 : index
    %c0_171 = arith.constant 0 : index
    %129 = vector.load %arg9[%c0_170, %c0_171] : memref<80x128xf32, #tpu.memory_space<vmem>>, vector<80x128xf32>
    %c15 = arith.constant 15 : index
    %c0_172 = arith.constant 0 : index
    %c0_173 = arith.constant 0 : index
    %130 = vector.load %arg5[%c15, %c0_172, %c0_173] : memref<27x8x128xf32, #tpu.memory_space<vmem>>, vector<1x8x128xf32>
    %131 = vector.shape_cast %130 : vector<1x8x128xf32> to vector<8x128xf32>
    %cst_174 = arith.constant dense<0.000000e+00> : vector<80x128xf32>
    %132 = tpu.matmul %128, %131, %cst_174 {dimension_numbers = #tpu.dot_dimension_numbers<[1], [0], [0], [1], [0, 0, 1, 1], [], []>} : vector<80x8xf32>, vector<8x128xf32>, vector<80x128xf32> -> vector<80x128xf32>
    %133 = arith.addf %129, %132 : vector<80x128xf32>
    %c0_175 = arith.constant 0 : index
    %c0_176 = arith.constant 0 : index
    %134 = vector.load %arg9[%c0_175, %c0_176] : memref<80x128xf32, #tpu.memory_space<vmem>>, vector<80x128xf32>
    tpu.vector_store %arg9[%c0_175, %c0_176], %133 {strides = array<i32>} : memref<80x128xf32, #tpu.memory_space<vmem>>, vector<80x128xf32>,
    %c0_177 = arith.constant 0 : index
    %c0_178 = arith.constant 0 : index
    %c21_179 = arith.constant 21 : index
    %c0_180 = arith.constant 0 : index
    %135 = vector.load %arg3[%c0_177, %c0_178, %c21_179, %c0_180] : memref<1x1x104x8xf32, #tpu.memory_space<vmem>>, vector<1x1x80x8xf32>
    %136 = vector.shape_cast %135 : vector<1x1x80x8xf32> to vector<80x8xf32>
    %c0_181 = arith.constant 0 : index
    %c0_182 = arith.constant 0 : index
    %137 = vector.load %arg9[%c0_181, %c0_182] : memref<80x128xf32, #tpu.memory_space<vmem>>, vector<80x128xf32>
    %c16 = arith.constant 16 : index
    %c0_183 = arith.constant 0 : index
    %c0_184 = arith.constant 0 : index
    %138 = vector.load %arg5[%c16, %c0_183, %c0_184] : memref<27x8x128xf32, #tpu.memory_space<vmem>>, vector<1x8x128xf32>
    %139 = vector.shape_cast %138 : vector<1x8x128xf32> to vector<8x128xf32>
    %cst_185 = arith.constant dense<0.000000e+00> : vector<80x128xf32>
    %140 = tpu.matmul %136, %139, %cst_185 {dimension_numbers = #tpu.dot_dimension_numbers<[1], [0], [0], [1], [0, 0, 1, 1], [], []>} : vector<80x8xf32>, vector<8x128xf32>, vector<80x128xf32> -> vector<80x128xf32>
    %141 = arith.addf %137, %140 : vector<80x128xf32>
    %c0_186 = arith.constant 0 : index
    %c0_187 = arith.constant 0 : index
    %142 = vector.load %arg9[%c0_186, %c0_187] : memref<80x128xf32, #tpu.memory_space<vmem>>, vector<80x128xf32>
    tpu.vector_store %arg9[%c0_186, %c0_187], %141 {strides = array<i32>} : memref<80x128xf32, #tpu.memory_space<vmem>>, vector<80x128xf32>,
    %c0_188 = arith.constant 0 : index
    %c0_189 = arith.constant 0 : index
    %c22_190 = arith.constant 22 : index
    %c0_191 = arith.constant 0 : index
    %143 = vector.load %arg3[%c0_188, %c0_189, %c22_190, %c0_191] : memref<1x1x104x8xf32, #tpu.memory_space<vmem>>, vector<1x1x80x8xf32>
    %144 = vector.shape_cast %143 : vector<1x1x80x8xf32> to vector<80x8xf32>
    %c0_192 = arith.constant 0 : index
    %c0_193 = arith.constant 0 : index
    %145 = vector.load %arg9[%c0_192, %c0_193] : memref<80x128xf32, #tpu.memory_space<vmem>>, vector<80x128xf32>
    %c17 = arith.constant 17 : index
    %c0_194 = arith.constant 0 : index
    %c0_195 = arith.constant 0 : index
    %146 = vector.load %arg5[%c17, %c0_194, %c0_195] : memref<27x8x128xf32, #tpu.memory_space<vmem>>, vector<1x8x128xf32>
    %147 = vector.shape_cast %146 : vector<1x8x128xf32> to vector<8x128xf32>
    %cst_196 = arith.constant dense<0.000000e+00> : vector<80x128xf32>
    %148 = tpu.matmul %144, %147, %cst_196 {dimension_numbers = #tpu.dot_dimension_numbers<[1], [0], [0], [1], [0, 0, 1, 1], [], []>} : vector<80x8xf32>, vector<8x128xf32>, vector<80x128xf32> -> vector<80x128xf32>
    %149 = arith.addf %145, %148 : vector<80x128xf32>
    %c0_197 = arith.constant 0 : index
    %c0_198 = arith.constant 0 : index
    %150 = vector.load %arg9[%c0_197, %c0_198] : memref<80x128xf32, #tpu.memory_space<vmem>>, vector<80x128xf32>
    tpu.vector_store %arg9[%c0_197, %c0_198], %149 {strides = array<i32>} : memref<80x128xf32, #tpu.memory_space<vmem>>, vector<80x128xf32>,
    %c0_199 = arith.constant 0 : index
    %c0_200 = arith.constant 0 : index
    %c0_201 = arith.constant 0 : index
    %c0_202 = arith.constant 0 : index
    %151 = vector.load %arg4[%c0_199, %c0_200, %c0_201, %c0_202] : memref<1x1x104x8xf32, #tpu.memory_space<vmem>>, vector<1x1x80x8xf32>
    %152 = vector.shape_cast %151 : vector<1x1x80x8xf32> to vector<80x8xf32>
    %c0_203 = arith.constant 0 : index
    %c0_204 = arith.constant 0 : index
    %153 = vector.load %arg9[%c0_203, %c0_204] : memref<80x128xf32, #tpu.memory_space<vmem>>, vector<80x128xf32>
    %c18 = arith.constant 18 : index
    %c0_205 = arith.constant 0 : index
    %c0_206 = arith.constant 0 : index
    %154 = vector.load %arg5[%c18, %c0_205, %c0_206] : memref<27x8x128xf32, #tpu.memory_space<vmem>>, vector<1x8x128xf32>
    %155 = vector.shape_cast %154 : vector<1x8x128xf32> to vector<8x128xf32>
    %cst_207 = arith.constant dense<0.000000e+00> : vector<80x128xf32>
    %156 = tpu.matmul %152, %155, %cst_207 {dimension_numbers = #tpu.dot_dimension_numbers<[1], [0], [0], [1], [0, 0, 1, 1], [], []>} : vector<80x8xf32>, vector<8x128xf32>, vector<80x128xf32> -> vector<80x128xf32>
    %157 = arith.addf %153, %156 : vector<80x128xf32>
    %c0_208 = arith.constant 0 : index
    %c0_209 = arith.constant 0 : index
    %158 = vector.load %arg9[%c0_208, %c0_209] : memref<80x128xf32, #tpu.memory_space<vmem>>, vector<80x128xf32>
    tpu.vector_store %arg9[%c0_208, %c0_209], %157 {strides = array<i32>} : memref<80x128xf32, #tpu.memory_space<vmem>>, vector<80x128xf32>,
    %c0_210 = arith.constant 0 : index
    %c0_211 = arith.constant 0 : index
    %c1_212 = arith.constant 1 : index
    %c0_213 = arith.constant 0 : index
    %159 = vector.load %arg4[%c0_210, %c0_211, %c1_212, %c0_213] : memref<1x1x104x8xf32, #tpu.memory_space<vmem>>, vector<1x1x80x8xf32>
    %160 = vector.shape_cast %159 : vector<1x1x80x8xf32> to vector<80x8xf32>
    %c0_214 = arith.constant 0 : index
    %c0_215 = arith.constant 0 : index
    %161 = vector.load %arg9[%c0_214, %c0_215] : memref<80x128xf32, #tpu.memory_space<vmem>>, vector<80x128xf32>
    %c19 = arith.constant 19 : index
    %c0_216 = arith.constant 0 : index
    %c0_217 = arith.constant 0 : index
    %162 = vector.load %arg5[%c19, %c0_216, %c0_217] : memref<27x8x128xf32, #tpu.memory_space<vmem>>, vector<1x8x128xf32>
    %163 = vector.shape_cast %162 : vector<1x8x128xf32> to vector<8x128xf32>
    %cst_218 = arith.constant dense<0.000000e+00> : vector<80x128xf32>
    %164 = tpu.matmul %160, %163, %cst_218 {dimension_numbers = #tpu.dot_dimension_numbers<[1], [0], [0], [1], [0, 0, 1, 1], [], []>} : vector<80x8xf32>, vector<8x128xf32>, vector<80x128xf32> -> vector<80x128xf32>
    %165 = arith.addf %161, %164 : vector<80x128xf32>
    %c0_219 = arith.constant 0 : index
    %c0_220 = arith.constant 0 : index
    %166 = vector.load %arg9[%c0_219, %c0_220] : memref<80x128xf32, #tpu.memory_space<vmem>>, vector<80x128xf32>
    tpu.vector_store %arg9[%c0_219, %c0_220], %165 {strides = array<i32>} : memref<80x128xf32, #tpu.memory_space<vmem>>, vector<80x128xf32>,
    %c0_221 = arith.constant 0 : index
    %c0_222 = arith.constant 0 : index
    %c2_223 = arith.constant 2 : index
    %c0_224 = arith.constant 0 : index
    %167 = vector.load %arg4[%c0_221, %c0_222, %c2_223, %c0_224] : memref<1x1x104x8xf32, #tpu.memory_space<vmem>>, vector<1x1x80x8xf32>
    %168 = vector.shape_cast %167 : vector<1x1x80x8xf32> to vector<80x8xf32>
    %c0_225 = arith.constant 0 : index
    %c0_226 = arith.constant 0 : index
    %169 = vector.load %arg9[%c0_225, %c0_226] : memref<80x128xf32, #tpu.memory_space<vmem>>, vector<80x128xf32>
    %c20_227 = arith.constant 20 : index
    %c0_228 = arith.constant 0 : index
    %c0_229 = arith.constant 0 : index
    %170 = vector.load %arg5[%c20_227, %c0_228, %c0_229] : memref<27x8x128xf32, #tpu.memory_space<vmem>>, vector<1x8x128xf32>
    %171 = vector.shape_cast %170 : vector<1x8x128xf32> to vector<8x128xf32>
    %cst_230 = arith.constant dense<0.000000e+00> : vector<80x128xf32>
    %172 = tpu.matmul %168, %171, %cst_230 {dimension_numbers = #tpu.dot_dimension_numbers<[1], [0], [0], [1], [0, 0, 1, 1], [], []>} : vector<80x8xf32>, vector<8x128xf32>, vector<80x128xf32> -> vector<80x128xf32>
    %173 = arith.addf %169, %172 : vector<80x128xf32>
    %c0_231 = arith.constant 0 : index
    %c0_232 = arith.constant 0 : index
    %174 = vector.load %arg9[%c0_231, %c0_232] : memref<80x128xf32, #tpu.memory_space<vmem>>, vector<80x128xf32>
    tpu.vector_store %arg9[%c0_231, %c0_232], %173 {strides = array<i32>} : memref<80x128xf32, #tpu.memory_space<vmem>>, vector<80x128xf32>,
    %c0_233 = arith.constant 0 : index
    %c0_234 = arith.constant 0 : index
    %c10_235 = arith.constant 10 : index
    %c0_236 = arith.constant 0 : index
    %175 = vector.load %arg4[%c0_233, %c0_234, %c10_235, %c0_236] : memref<1x1x104x8xf32, #tpu.memory_space<vmem>>, vector<1x1x80x8xf32>
    %176 = vector.shape_cast %175 : vector<1x1x80x8xf32> to vector<80x8xf32>
    %c0_237 = arith.constant 0 : index
    %c0_238 = arith.constant 0 : index
    %177 = vector.load %arg9[%c0_237, %c0_238] : memref<80x128xf32, #tpu.memory_space<vmem>>, vector<80x128xf32>
    %c21_239 = arith.constant 21 : index
    %c0_240 = arith.constant 0 : index
    %c0_241 = arith.constant 0 : index
    %178 = vector.load %arg5[%c21_239, %c0_240, %c0_241] : memref<27x8x128xf32, #tpu.memory_space<vmem>>, vector<1x8x128xf32>
    %179 = vector.shape_cast %178 : vector<1x8x128xf32> to vector<8x128xf32>
    %cst_242 = arith.constant dense<0.000000e+00> : vector<80x128xf32>
    %180 = tpu.matmul %176, %179, %cst_242 {dimension_numbers = #tpu.dot_dimension_numbers<[1], [0], [0], [1], [0, 0, 1, 1], [], []>} : vector<80x8xf32>, vector<8x128xf32>, vector<80x128xf32> -> vector<80x128xf32>
    %181 = arith.addf %177, %180 : vector<80x128xf32>
    %c0_243 = arith.constant 0 : index
    %c0_244 = arith.constant 0 : index
    %182 = vector.load %arg9[%c0_243, %c0_244] : memref<80x128xf32, #tpu.memory_space<vmem>>, vector<80x128xf32>
    tpu.vector_store %arg9[%c0_243, %c0_244], %181 {strides = array<i32>} : memref<80x128xf32, #tpu.memory_space<vmem>>, vector<80x128xf32>,
    %c0_245 = arith.constant 0 : index
    %c0_246 = arith.constant 0 : index
    %c11_247 = arith.constant 11 : index
    %c0_248 = arith.constant 0 : index
    %183 = vector.load %arg4[%c0_245, %c0_246, %c11_247, %c0_248] : memref<1x1x104x8xf32, #tpu.memory_space<vmem>>, vector<1x1x80x8xf32>
    %184 = vector.shape_cast %183 : vector<1x1x80x8xf32> to vector<80x8xf32>
    %c0_249 = arith.constant 0 : index
    %c0_250 = arith.constant 0 : index
    %185 = vector.load %arg9[%c0_249, %c0_250] : memref<80x128xf32, #tpu.memory_space<vmem>>, vector<80x128xf32>
    %c22_251 = arith.constant 22 : index
    %c0_252 = arith.constant 0 : index
    %c0_253 = arith.constant 0 : index
    %186 = vector.load %arg5[%c22_251, %c0_252, %c0_253] : memref<27x8x128xf32, #tpu.memory_space<vmem>>, vector<1x8x128xf32>
    %187 = vector.shape_cast %186 : vector<1x8x128xf32> to vector<8x128xf32>
    %cst_254 = arith.constant dense<0.000000e+00> : vector<80x128xf32>
    %188 = tpu.matmul %184, %187, %cst_254 {dimension_numbers = #tpu.dot_dimension_numbers<[1], [0], [0], [1], [0, 0, 1, 1], [], []>} : vector<80x8xf32>, vector<8x128xf32>, vector<80x128xf32> -> vector<80x128xf32>
    %189 = arith.addf %185, %188 : vector<80x128xf32>
    %c0_255 = arith.constant 0 : index
    %c0_256 = arith.constant 0 : index
    %190 = vector.load %arg9[%c0_255, %c0_256] : memref<80x128xf32, #tpu.memory_space<vmem>>, vector<80x128xf32>
    tpu.vector_store %arg9[%c0_255, %c0_256], %189 {strides = array<i32>} : memref<80x128xf32, #tpu.memory_space<vmem>>, vector<80x128xf32>,
    %c0_257 = arith.constant 0 : index
    %c0_258 = arith.constant 0 : index
    %c12_259 = arith.constant 12 : index
    %c0_260 = arith.constant 0 : index
    %191 = vector.load %arg4[%c0_257, %c0_258, %c12_259, %c0_260] : memref<1x1x104x8xf32, #tpu.memory_space<vmem>>, vector<1x1x80x8xf32>
    %192 = vector.shape_cast %191 : vector<1x1x80x8xf32> to vector<80x8xf32>
    %c0_261 = arith.constant 0 : index
    %c0_262 = arith.constant 0 : index
    %193 = vector.load %arg9[%c0_261, %c0_262] : memref<80x128xf32, #tpu.memory_space<vmem>>, vector<80x128xf32>
    %c23 = arith.constant 23 : index
    %c0_263 = arith.constant 0 : index
    %c0_264 = arith.constant 0 : index
    %194 = vector.load %arg5[%c23, %c0_263, %c0_264] : memref<27x8x128xf32, #tpu.memory_space<vmem>>, vector<1x8x128xf32>
    %195 = vector.shape_cast %194 : vector<1x8x128xf32> to vector<8x128xf32>
    %cst_265 = arith.constant dense<0.000000e+00> : vector<80x128xf32>
    %196 = tpu.matmul %192, %195, %cst_265 {dimension_numbers = #tpu.dot_dimension_numbers<[1], [0], [0], [1], [0, 0, 1, 1], [], []>} : vector<80x8xf32>, vector<8x128xf32>, vector<80x128xf32> -> vector<80x128xf32>
    %197 = arith.addf %193, %196 : vector<80x128xf32>
    %c0_266 = arith.constant 0 : index
    %c0_267 = arith.constant 0 : index
    %198 = vector.load %arg9[%c0_266, %c0_267] : memref<80x128xf32, #tpu.memory_space<vmem>>, vector<80x128xf32>
    tpu.vector_store %arg9[%c0_266, %c0_267], %197 {strides = array<i32>} : memref<80x128xf32, #tpu.memory_space<vmem>>, vector<80x128xf32>,
    %c0_268 = arith.constant 0 : index
    %c0_269 = arith.constant 0 : index
    %c20_270 = arith.constant 20 : index
    %c0_271 = arith.constant 0 : index
    %199 = vector.load %arg4[%c0_268, %c0_269, %c20_270, %c0_271] : memref<1x1x104x8xf32, #tpu.memory_space<vmem>>, vector<1x1x80x8xf32>
    %200 = vector.shape_cast %199 : vector<1x1x80x8xf32> to vector<80x8xf32>
    %c0_272 = arith.constant 0 : index
    %c0_273 = arith.constant 0 : index
    %201 = vector.load %arg9[%c0_272, %c0_273] : memref<80x128xf32, #tpu.memory_space<vmem>>, vector<80x128xf32>
    %c24 = arith.constant 24 : index
    %c0_274 = arith.constant 0 : index
    %c0_275 = arith.constant 0 : index
    %202 = vector.load %arg5[%c24, %c0_274, %c0_275] : memref<27x8x128xf32, #tpu.memory_space<vmem>>, vector<1x8x128xf32>
    %203 = vector.shape_cast %202 : vector<1x8x128xf32> to vector<8x128xf32>
    %cst_276 = arith.constant dense<0.000000e+00> : vector<80x128xf32>
    %204 = tpu.matmul %200, %203, %cst_276 {dimension_numbers = #tpu.dot_dimension_numbers<[1], [0], [0], [1], [0, 0, 1, 1], [], []>} : vector<80x8xf32>, vector<8x128xf32>, vector<80x128xf32> -> vector<80x128xf32>
    %205 = arith.addf %201, %204 : vector<80x128xf32>
    %c0_277 = arith.constant 0 : index
    %c0_278 = arith.constant 0 : index
    %206 = vector.load %arg9[%c0_277, %c0_278] : memref<80x128xf32, #tpu.memory_space<vmem>>, vector<80x128xf32>
    tpu.vector_store %arg9[%c0_277, %c0_278], %205 {strides = array<i32>} : memref<80x128xf32, #tpu.memory_space<vmem>>, vector<80x128xf32>,
    %c0_279 = arith.constant 0 : index
    %c0_280 = arith.constant 0 : index
    %c21_281 = arith.constant 21 : index
    %c0_282 = arith.constant 0 : index
    %207 = vector.load %arg4[%c0_279, %c0_280, %c21_281, %c0_282] : memref<1x1x104x8xf32, #tpu.memory_space<vmem>>, vector<1x1x80x8xf32>
    %208 = vector.shape_cast %207 : vector<1x1x80x8xf32> to vector<80x8xf32>
    %c0_283 = arith.constant 0 : index
    %c0_284 = arith.constant 0 : index
    %209 = vector.load %arg9[%c0_283, %c0_284] : memref<80x128xf32, #tpu.memory_space<vmem>>, vector<80x128xf32>
    %c25 = arith.constant 25 : index
    %c0_285 = arith.constant 0 : index
    %c0_286 = arith.constant 0 : index
    %210 = vector.load %arg5[%c25, %c0_285, %c0_286] : memref<27x8x128xf32, #tpu.memory_space<vmem>>, vector<1x8x128xf32>
    %211 = vector.shape_cast %210 : vector<1x8x128xf32> to vector<8x128xf32>
    %cst_287 = arith.constant dense<0.000000e+00> : vector<80x128xf32>
    %212 = tpu.matmul %208, %211, %cst_287 {dimension_numbers = #tpu.dot_dimension_numbers<[1], [0], [0], [1], [0, 0, 1, 1], [], []>} : vector<80x8xf32>, vector<8x128xf32>, vector<80x128xf32> -> vector<80x128xf32>
    %213 = arith.addf %209, %212 : vector<80x128xf32>
    %c0_288 = arith.constant 0 : index
    %c0_289 = arith.constant 0 : index
    %214 = vector.load %arg9[%c0_288, %c0_289] : memref<80x128xf32, #tpu.memory_space<vmem>>, vector<80x128xf32>
    tpu.vector_store %arg9[%c0_288, %c0_289], %213 {strides = array<i32>} : memref<80x128xf32, #tpu.memory_space<vmem>>, vector<80x128xf32>,
    %c0_290 = arith.constant 0 : index
    %c0_291 = arith.constant 0 : index
    %c22_292 = arith.constant 22 : index
    %c0_293 = arith.constant 0 : index
    %215 = vector.load %arg4[%c0_290, %c0_291, %c22_292, %c0_293] : memref<1x1x104x8xf32, #tpu.memory_space<vmem>>, vector<1x1x80x8xf32>
    %216 = vector.shape_cast %215 : vector<1x1x80x8xf32> to vector<80x8xf32>
    %c0_294 = arith.constant 0 : index
    %c0_295 = arith.constant 0 : index
    %217 = vector.load %arg9[%c0_294, %c0_295] : memref<80x128xf32, #tpu.memory_space<vmem>>, vector<80x128xf32>
    %c26 = arith.constant 26 : index
    %c0_296 = arith.constant 0 : index
    %c0_297 = arith.constant 0 : index
    %218 = vector.load %arg5[%c26, %c0_296, %c0_297] : memref<27x8x128xf32, #tpu.memory_space<vmem>>, vector<1x8x128xf32>
    %219 = vector.shape_cast %218 : vector<1x8x128xf32> to vector<8x128xf32>
    %cst_298 = arith.constant dense<0.000000e+00> : vector<80x128xf32>
    %220 = tpu.matmul %216, %219, %cst_298 {dimension_numbers = #tpu.dot_dimension_numbers<[1], [0], [0], [1], [0, 0, 1, 1], [], []>} : vector<80x8xf32>, vector<8x128xf32>, vector<80x128xf32> -> vector<80x128xf32>
    %221 = arith.addf %217, %220 : vector<80x128xf32>
    %c0_299 = arith.constant 0 : index
    %c0_300 = arith.constant 0 : index
    %222 = vector.load %arg9[%c0_299, %c0_300] : memref<80x128xf32, #tpu.memory_space<vmem>>, vector<80x128xf32>
    tpu.vector_store %arg9[%c0_299, %c0_300], %221 {strides = array<i32>} : memref<80x128xf32, #tpu.memory_space<vmem>>, vector<80x128xf32>,
    %223 = tpu.iota {dimensions = array<i32: 0>} : vector<80x1xi32>
    %c10_i32 = arith.constant 10 : i32
    %c0_i32_301 = arith.constant 0 : i32
    %224 = arith.cmpi eq, %c10_i32, %c0_i32_301 : i32
    %c1_i32 = arith.constant 1 : i32
    %225 = arith.select %224, %c1_i32, %c10_i32 : i32
    %226 = vector.broadcast %225 : i32 to vector<80x1xi32>
    %227 = arith.remsi %223, %226 : vector<80x1xi32>
    %c0_i32_302 = arith.constant 0 : i32
    %228 = vector.broadcast %c0_i32_302 : i32 to vector<80x1xi32>
    %229 = arith.cmpi ne, %227, %228 : vector<80x1xi32>
    %c0_i32_303 = arith.constant 0 : i32
    %230 = vector.broadcast %c0_i32_303 : i32 to vector<80x1xi32>
    %231 = arith.cmpi slt, %227, %230 : vector<80x1xi32>
    %c0_i32_304 = arith.constant 0 : i32
    %232 = arith.cmpi slt, %225, %c0_i32_304 : i32
    %233 = vector.broadcast %232 : i1 to vector<80x1xi1>
    %234 = vector.broadcast %233 : vector<80x1xi1> to vector<80x1xi1>
    %235 = arith.xori %231, %234 : vector<80x1xi1>
    %236 = arith.andi %235, %229 : vector<80x1xi1>
    %237 = vector.broadcast %225 : i32 to vector<80x1xi32>
    %238 = arith.addi %227, %237 : vector<80x1xi32>
    %239 = arith.select %236, %238, %227 : vector<80x1xi1>, vector<80x1xi32>
    %c8_i32 = arith.constant 8 : i32
    %240 = vector.broadcast %c8_i32 : i32 to vector<80x1xi32>
    %241 = arith.cmpi slt, %239, %240 : vector<80x1xi32>
    %242 = arith.extui %241 : vector<80x1xi1> to vector<80x1xi32>
    %243 = arith.sitofp %242 : vector<80x1xi32> to vector<80x1xf32>
    %c0_305 = arith.constant 0 : index
    %c0_306 = arith.constant 0 : index
    %244 = vector.load %arg9[%c0_305, %c0_306] : memref<80x128xf32, #tpu.memory_space<vmem>>, vector<80x128xf32>
    %245 = vector.broadcast %243 : vector<80x1xf32> to vector<80x128xf32>
    %246 = arith.mulf %244, %245 : vector<80x128xf32>
    %c0_307 = arith.constant 0 : index
    %c0_308 = arith.constant 0 : index
    %c0_309 = arith.constant 0 : index
    %c0_310 = arith.constant 0 : index
    %247 = vector.load %arg6[%c0_307, %c0_308, %c0_309, %c0_310] : memref<1x1x80x128xf32, #tpu.memory_space<vmem>>, vector<1x1x80x128xf32>
    %248 = vector.shape_cast %247 : vector<1x1x80x128xf32> to vector<80x128xf32>
    %249 = vector.shape_cast %246 : vector<80x128xf32> to vector<1x1x80x128xf32>
    tpu.vector_store %arg6[%c0_307, %c0_308, %c0_309, %c0_310], %249 {strides = array<i32>} : memref<1x1x80x128xf32, #tpu.memory_space<vmem>>, vector<1x1x80x128xf32>,
    %c0_311 = arith.constant 0 : index
    %c0_312 = arith.constant 0 : index
    %250 = vector.load %arg7[%c0_311, %c0_312] : memref<1x128xf32, #tpu.memory_space<vmem>>, vector<1x128xf32>
    %cst_313 = arith.constant dense<0.000000e+00> : vector<128xf32>
    %251 = vector.multi_reduction <add>, %246, %cst_313 [0] : vector<80x128xf32> to vector<128xf32>
    %252 = vector.shape_cast %251 : vector<128xf32> to vector<1x128xf32>
    %253 = arith.addf %250, %252 : vector<1x128xf32>
    %c0_314 = arith.constant 0 : index
    %c0_315 = arith.constant 0 : index
    %254 = vector.load %arg7[%c0_314, %c0_315] : memref<1x128xf32, #tpu.memory_space<vmem>>, vector<1x128xf32>
    tpu.vector_store %arg7[%c0_314, %c0_315], %253 {strides = array<i32>} : memref<1x128xf32, #tpu.memory_space<vmem>>, vector<1x128xf32>,
    %c0_316 = arith.constant 0 : index
    %c0_317 = arith.constant 0 : index
    %255 = vector.load %arg8[%c0_316, %c0_317] : memref<1x128xf32, #tpu.memory_space<vmem>>, vector<1x128xf32>
    %256 = arith.mulf %246, %246 : vector<80x128xf32>
    %cst_318 = arith.constant dense<0.000000e+00> : vector<128xf32>
    %257 = vector.multi_reduction <add>, %256, %cst_318 [0] : vector<80x128xf32> to vector<128xf32>
    %258 = vector.shape_cast %257 : vector<128xf32> to vector<1x128xf32>
    %259 = arith.addf %255, %258 : vector<1x128xf32>
    %c0_319 = arith.constant 0 : index
    %c0_320 = arith.constant 0 : index
    %260 = vector.load %arg8[%c0_319, %c0_320] : memref<1x128xf32, #tpu.memory_space<vmem>>, vector<1x128xf32>
    tpu.vector_store %arg8[%c0_319, %c0_320], %259 {strides = array<i32>} : memref<1x128xf32, #tpu.memory_space<vmem>>, vector<1x128xf32>,
    return
  }
  func.func @transform_0(%arg0: i32, %arg1: i32) -> (i32, i32, i32, i32) {
    %c0_i32 = arith.constant 0 : i32
    %0 = arith.addi %arg1, %c0_i32 : i32
    %c0_i32_0 = arith.constant 0 : i32
    %c0_i32_1 = arith.constant 0 : i32
    %c0_i32_2 = arith.constant 0 : i32
    return %arg0, %0, %c0_i32_0, %c0_i32_1 : i32, i32, i32, i32
  }
  func.func @transform_1(%arg0: i32, %arg1: i32) -> (i32, i32, i32, i32) {
    %c1_i32 = arith.constant 1 : i32
    %0 = arith.addi %arg1, %c1_i32 : i32
    %c0_i32 = arith.constant 0 : i32
    %c0_i32_0 = arith.constant 0 : i32
    %c0_i32_1 = arith.constant 0 : i32
    return %arg0, %0, %c0_i32, %c0_i32_0 : i32, i32, i32, i32
  }
  func.func @transform_2(%arg0: i32, %arg1: i32) -> (i32, i32, i32, i32) {
    %c2_i32 = arith.constant 2 : i32
    %0 = arith.addi %arg1, %c2_i32 : i32
    %c0_i32 = arith.constant 0 : i32
    %c0_i32_0 = arith.constant 0 : i32
    %c0_i32_1 = arith.constant 0 : i32
    return %arg0, %0, %c0_i32, %c0_i32_0 : i32, i32, i32, i32
  }
  func.func @transform_3(%arg0: i32, %arg1: i32) -> (i32, i32, i32) {
    %c0_i32 = arith.constant 0 : i32
    %c0_i32_0 = arith.constant 0 : i32
    %c0_i32_1 = arith.constant 0 : i32
    %c0_i32_2 = arith.constant 0 : i32
    return %c0_i32, %c0_i32_0, %c0_i32_1 : i32, i32, i32
  }
  func.func @transform_4(%arg0: i32, %arg1: i32) -> (i32, i32, i32, i32) {
    %c0_i32 = arith.constant 0 : i32
    %c0_i32_0 = arith.constant 0 : i32
    %c0_i32_1 = arith.constant 0 : i32
    return %arg0, %arg1, %c0_i32, %c0_i32_0 : i32, i32, i32, i32
  }
  func.func @transform_5(%arg0: i32, %arg1: i32) -> (i32, i32) {
    %c0_i32 = arith.constant 0 : i32
    %c0_i32_0 = arith.constant 0 : i32
    %c0_i32_1 = arith.constant 0 : i32
    return %c0_i32, %c0_i32_0 : i32, i32
  }
  func.func @transform_6(%arg0: i32, %arg1: i32) -> (i32, i32) {
    %c0_i32 = arith.constant 0 : i32
    %c0_i32_0 = arith.constant 0 : i32
    %c0_i32_1 = arith.constant 0 : i32
    return %c0_i32, %c0_i32_0 : i32, i32
  }
}

module attributes {stable_mosaic.version = 11 : i64} {
  func.func @_bn_relu_kernel(%arg0: i32, %arg1: i32, %arg2: memref<1x1x80x128xf32, #tpu.memory_space<vmem>>, %arg3: memref<1x128xf32, #tpu.memory_space<vmem>>, %arg4: memref<1x128xf32, #tpu.memory_space<vmem>>, %arg5: memref<1x1x80x128xf32, #tpu.memory_space<vmem>>) attributes {dimension_semantics = [#tpu.dimension_semantics<parallel>, #tpu.dimension_semantics<parallel>], iteration_bounds = array<i64: 2, 8>, scalar_prefetch = 0 : i64, scratch_operands = 0 : i64, tpu.core_type = #tpu.core_type<tc>, window_params = [{transform_indices = @transform_0, window_bounds = array<i64: 1, 1, 80, 128>}, {pipeline_mode = #tpu.pipeline_mode<synchronous>, transform_indices = @transform_1, window_bounds = array<i64: 1, 128>}, {pipeline_mode = #tpu.pipeline_mode<synchronous>, transform_indices = @transform_2, window_bounds = array<i64: 1, 128>}, {transform_indices = @transform_3, window_bounds = array<i64: 1, 1, 80, 128>}]} {
    %c0 = arith.constant 0 : index
    %c0_0 = arith.constant 0 : index
    %c0_1 = arith.constant 0 : index
    %c0_2 = arith.constant 0 : index
    %0 = vector.load %arg2[%c0, %c0_0, %c0_1, %c0_2] : memref<1x1x80x128xf32, #tpu.memory_space<vmem>>, vector<1x1x80x128xf32>
    %1 = vector.shape_cast %0 : vector<1x1x80x128xf32> to vector<80x128xf32>
    %c0_3 = arith.constant 0 : index
    %c0_4 = arith.constant 0 : index
    %2 = vector.load %arg3[%c0_3, %c0_4] : memref<1x128xf32, #tpu.memory_space<vmem>>, vector<1x128xf32>
    %3 = vector.broadcast %2 : vector<1x128xf32> to vector<80x128xf32>
    %4 = arith.mulf %1, %3 : vector<80x128xf32>
    %c0_5 = arith.constant 0 : index
    %c0_6 = arith.constant 0 : index
    %5 = vector.load %arg4[%c0_5, %c0_6] : memref<1x128xf32, #tpu.memory_space<vmem>>, vector<1x128xf32>
    %6 = vector.broadcast %5 : vector<1x128xf32> to vector<80x128xf32>
    %7 = arith.addf %4, %6 : vector<80x128xf32>
    %cst = arith.constant 0.000000e+00 : f32
    %8 = vector.broadcast %cst : f32 to vector<80x128xf32>
    %9 = arith.maximumf %7, %8 : vector<80x128xf32>
    %c0_7 = arith.constant 0 : index
    %c0_8 = arith.constant 0 : index
    %c0_9 = arith.constant 0 : index
    %c0_10 = arith.constant 0 : index
    %10 = vector.load %arg5[%c0_7, %c0_8, %c0_9, %c0_10] : memref<1x1x80x128xf32, #tpu.memory_space<vmem>>, vector<1x1x80x128xf32>
    %11 = vector.shape_cast %10 : vector<1x1x80x128xf32> to vector<80x128xf32>
    %12 = vector.shape_cast %9 : vector<80x128xf32> to vector<1x1x80x128xf32>
    tpu.vector_store %arg5[%c0_7, %c0_8, %c0_9, %c0_10], %12 {strides = array<i32>} : memref<1x1x80x128xf32, #tpu.memory_space<vmem>>, vector<1x1x80x128xf32>,
    return
  }
  func.func @transform_0(%arg0: i32, %arg1: i32) -> (i32, i32, i32, i32) {
    %c0_i32 = arith.constant 0 : i32
    %c0_i32_0 = arith.constant 0 : i32
    %c0_i32_1 = arith.constant 0 : i32
    return %arg0, %arg1, %c0_i32, %c0_i32_0 : i32, i32, i32, i32
  }
  func.func @transform_1(%arg0: i32, %arg1: i32) -> (i32, i32) {
    %c0_i32 = arith.constant 0 : i32
    %c0_i32_0 = arith.constant 0 : i32
    %c0_i32_1 = arith.constant 0 : i32
    return %c0_i32, %c0_i32_0 : i32, i32
  }
  func.func @transform_2(%arg0: i32, %arg1: i32) -> (i32, i32) {
    %c0_i32 = arith.constant 0 : i32
    %c0_i32_0 = arith.constant 0 : i32
    %c0_i32_1 = arith.constant 0 : i32
    return %c0_i32, %c0_i32_0 : i32, i32
  }
  func.func @transform_3(%arg0: i32, %arg1: i32) -> (i32, i32, i32, i32) {
    %c0_i32 = arith.constant 0 : i32
    %c0_i32_0 = arith.constant 0 : i32
    %c0_i32_1 = arith.constant 0 : i32
    return %arg0, %arg1, %c0_i32, %c0_i32_0 : i32, i32, i32, i32
  }
}

module attributes {stable_mosaic.version = 11 : i64} {
  func.func @kernel(%arg0: i32, %arg1: i32, %arg2: memref<1x1x104x128xf32, #tpu.memory_space<vmem>>, %arg3: memref<1x1x104x128xf32, #tpu.memory_space<vmem>>, %arg4: memref<1x1x104x128xf32, #tpu.memory_space<vmem>>, %arg5: memref<27x128x128xf32, #tpu.memory_space<vmem>>, %arg6: memref<1x1x80x128xf32, #tpu.memory_space<vmem>>, %arg7: memref<1x128xf32, #tpu.memory_space<vmem>>, %arg8: memref<1x128xf32, #tpu.memory_space<vmem>>, %arg9: memref<80x128xf32, #tpu.memory_space<vmem>>) attributes {dimension_semantics = [#tpu.dimension_semantics<arbitrary>, #tpu.dimension_semantics<arbitrary>], iteration_bounds = array<i64: 2, 8>, scalar_prefetch = 0 : i64, scratch_operands = 1 : i64, tpu.core_type = #tpu.core_type<tc>, window_params = [{transform_indices = @transform_0, window_bounds = array<i64: 1, 1, 104, 128>}, {transform_indices = @transform_1, window_bounds = array<i64: 1, 1, 104, 128>}, {transform_indices = @transform_2, window_bounds = array<i64: 1, 1, 104, 128>}, {pipeline_mode = #tpu.pipeline_mode<synchronous>, transform_indices = @transform_3, window_bounds = array<i64: 27, 128, 128>}, {transform_indices = @transform_4, window_bounds = array<i64: 1, 1, 80, 128>}, {pipeline_mode = #tpu.pipeline_mode<synchronous>, transform_indices = @transform_5, window_bounds = array<i64: 1, 128>}, {pipeline_mode = #tpu.pipeline_mode<synchronous>, transform_indices = @transform_6, window_bounds = array<i64: 1, 128>}]} {
    %c0_i32 = arith.constant 0 : i32
    %0 = arith.cmpi eq, %arg0, %c0_i32 : i32
    %c0_i32_0 = arith.constant 0 : i32
    %1 = arith.cmpi eq, %arg1, %c0_i32_0 : i32
    %2 = arith.andi %0, %1 : i1
    %3 = arith.extui %2 : i1 to i32
    %c0_i32_1 = arith.constant 0 : i32
    %4 = arith.cmpi ne, %3, %c0_i32_1 : i32
    scf.if %4 {
      %cst_321 = arith.constant 0.000000e+00 : f32
      %261 = vector.broadcast %cst_321 : f32 to vector<1x128xf32>
      %c0_322 = arith.constant 0 : index
      %c0_323 = arith.constant 0 : index
      %262 = vector.load %arg7[%c0_322, %c0_323] : memref<1x128xf32, #tpu.memory_space<vmem>>, vector<1x128xf32>
      tpu.vector_store %arg7[%c0_322, %c0_323], %261 {strides = array<i32>} : memref<1x128xf32, #tpu.memory_space<vmem>>, vector<1x128xf32>,
      %cst_324 = arith.constant 0.000000e+00 : f32
      %263 = vector.broadcast %cst_324 : f32 to vector<1x128xf32>
      %c0_325 = arith.constant 0 : index
      %c0_326 = arith.constant 0 : index
      %264 = vector.load %arg8[%c0_325, %c0_326] : memref<1x128xf32, #tpu.memory_space<vmem>>, vector<1x128xf32>
      tpu.vector_store %arg8[%c0_325, %c0_326], %263 {strides = array<i32>} : memref<1x128xf32, #tpu.memory_space<vmem>>, vector<1x128xf32>,
    } else {
    }
    %cst = arith.constant 0.000000e+00 : f32
    %5 = vector.broadcast %cst : f32 to vector<80x128xf32>
    %c0 = arith.constant 0 : index
    %c0_2 = arith.constant 0 : index
    %6 = vector.load %arg9[%c0, %c0_2] : memref<80x128xf32, #tpu.memory_space<vmem>>, vector<80x128xf32>
    tpu.vector_store %arg9[%c0, %c0_2], %5 {strides = array<i32>} : memref<80x128xf32, #tpu.memory_space<vmem>>, vector<80x128xf32>,
    %c0_3 = arith.constant 0 : index
    %c0_4 = arith.constant 0 : index
    %c0_5 = arith.constant 0 : index
    %c0_6 = arith.constant 0 : index
    %7 = vector.load %arg2[%c0_3, %c0_4, %c0_5, %c0_6] : memref<1x1x104x128xf32, #tpu.memory_space<vmem>>, vector<1x1x80x128xf32>
    %8 = vector.shape_cast %7 : vector<1x1x80x128xf32> to vector<80x128xf32>
    %c0_7 = arith.constant 0 : index
    %c0_8 = arith.constant 0 : index
    %9 = vector.load %arg9[%c0_7, %c0_8] : memref<80x128xf32, #tpu.memory_space<vmem>>, vector<80x128xf32>
    %c0_9 = arith.constant 0 : index
    %c0_10 = arith.constant 0 : index
    %c0_11 = arith.constant 0 : index
    %10 = vector.load %arg5[%c0_9, %c0_10, %c0_11] : memref<27x128x128xf32, #tpu.memory_space<vmem>>, vector<1x128x128xf32>
    %11 = vector.shape_cast %10 : vector<1x128x128xf32> to vector<128x128xf32>
    %cst_12 = arith.constant dense<0.000000e+00> : vector<80x128xf32>
    %12 = tpu.matmul %8, %11, %cst_12 {dimension_numbers = #tpu.dot_dimension_numbers<[1], [0], [0], [1], [0, 0, 1, 1], [], []>} : vector<80x128xf32>, vector<128x128xf32>, vector<80x128xf32> -> vector<80x128xf32>
    %13 = arith.addf %9, %12 : vector<80x128xf32>
    %c0_13 = arith.constant 0 : index
    %c0_14 = arith.constant 0 : index
    %14 = vector.load %arg9[%c0_13, %c0_14] : memref<80x128xf32, #tpu.memory_space<vmem>>, vector<80x128xf32>
    tpu.vector_store %arg9[%c0_13, %c0_14], %13 {strides = array<i32>} : memref<80x128xf32, #tpu.memory_space<vmem>>, vector<80x128xf32>,
    %c0_15 = arith.constant 0 : index
    %c0_16 = arith.constant 0 : index
    %c1 = arith.constant 1 : index
    %c0_17 = arith.constant 0 : index
    %15 = vector.load %arg2[%c0_15, %c0_16, %c1, %c0_17] : memref<1x1x104x128xf32, #tpu.memory_space<vmem>>, vector<1x1x80x128xf32>
    %16 = vector.shape_cast %15 : vector<1x1x80x128xf32> to vector<80x128xf32>
    %c0_18 = arith.constant 0 : index
    %c0_19 = arith.constant 0 : index
    %17 = vector.load %arg9[%c0_18, %c0_19] : memref<80x128xf32, #tpu.memory_space<vmem>>, vector<80x128xf32>
    %c1_20 = arith.constant 1 : index
    %c0_21 = arith.constant 0 : index
    %c0_22 = arith.constant 0 : index
    %18 = vector.load %arg5[%c1_20, %c0_21, %c0_22] : memref<27x128x128xf32, #tpu.memory_space<vmem>>, vector<1x128x128xf32>
    %19 = vector.shape_cast %18 : vector<1x128x128xf32> to vector<128x128xf32>
    %cst_23 = arith.constant dense<0.000000e+00> : vector<80x128xf32>
    %20 = tpu.matmul %16, %19, %cst_23 {dimension_numbers = #tpu.dot_dimension_numbers<[1], [0], [0], [1], [0, 0, 1, 1], [], []>} : vector<80x128xf32>, vector<128x128xf32>, vector<80x128xf32> -> vector<80x128xf32>
    %21 = arith.addf %17, %20 : vector<80x128xf32>
    %c0_24 = arith.constant 0 : index
    %c0_25 = arith.constant 0 : index
    %22 = vector.load %arg9[%c0_24, %c0_25] : memref<80x128xf32, #tpu.memory_space<vmem>>, vector<80x128xf32>
    tpu.vector_store %arg9[%c0_24, %c0_25], %21 {strides = array<i32>} : memref<80x128xf32, #tpu.memory_space<vmem>>, vector<80x128xf32>,
    %c0_26 = arith.constant 0 : index
    %c0_27 = arith.constant 0 : index
    %c2 = arith.constant 2 : index
    %c0_28 = arith.constant 0 : index
    %23 = vector.load %arg2[%c0_26, %c0_27, %c2, %c0_28] : memref<1x1x104x128xf32, #tpu.memory_space<vmem>>, vector<1x1x80x128xf32>
    %24 = vector.shape_cast %23 : vector<1x1x80x128xf32> to vector<80x128xf32>
    %c0_29 = arith.constant 0 : index
    %c0_30 = arith.constant 0 : index
    %25 = vector.load %arg9[%c0_29, %c0_30] : memref<80x128xf32, #tpu.memory_space<vmem>>, vector<80x128xf32>
    %c2_31 = arith.constant 2 : index
    %c0_32 = arith.constant 0 : index
    %c0_33 = arith.constant 0 : index
    %26 = vector.load %arg5[%c2_31, %c0_32, %c0_33] : memref<27x128x128xf32, #tpu.memory_space<vmem>>, vector<1x128x128xf32>
    %27 = vector.shape_cast %26 : vector<1x128x128xf32> to vector<128x128xf32>
    %cst_34 = arith.constant dense<0.000000e+00> : vector<80x128xf32>
    %28 = tpu.matmul %24, %27, %cst_34 {dimension_numbers = #tpu.dot_dimension_numbers<[1], [0], [0], [1], [0, 0, 1, 1], [], []>} : vector<80x128xf32>, vector<128x128xf32>, vector<80x128xf32> -> vector<80x128xf32>
    %29 = arith.addf %25, %28 : vector<80x128xf32>
    %c0_35 = arith.constant 0 : index
    %c0_36 = arith.constant 0 : index
    %30 = vector.load %arg9[%c0_35, %c0_36] : memref<80x128xf32, #tpu.memory_space<vmem>>, vector<80x128xf32>
    tpu.vector_store %arg9[%c0_35, %c0_36], %29 {strides = array<i32>} : memref<80x128xf32, #tpu.memory_space<vmem>>, vector<80x128xf32>,
    %c0_37 = arith.constant 0 : index
    %c0_38 = arith.constant 0 : index
    %c10 = arith.constant 10 : index
    %c0_39 = arith.constant 0 : index
    %31 = vector.load %arg2[%c0_37, %c0_38, %c10, %c0_39] : memref<1x1x104x128xf32, #tpu.memory_space<vmem>>, vector<1x1x80x128xf32>
    %32 = vector.shape_cast %31 : vector<1x1x80x128xf32> to vector<80x128xf32>
    %c0_40 = arith.constant 0 : index
    %c0_41 = arith.constant 0 : index
    %33 = vector.load %arg9[%c0_40, %c0_41] : memref<80x128xf32, #tpu.memory_space<vmem>>, vector<80x128xf32>
    %c3 = arith.constant 3 : index
    %c0_42 = arith.constant 0 : index
    %c0_43 = arith.constant 0 : index
    %34 = vector.load %arg5[%c3, %c0_42, %c0_43] : memref<27x128x128xf32, #tpu.memory_space<vmem>>, vector<1x128x128xf32>
    %35 = vector.shape_cast %34 : vector<1x128x128xf32> to vector<128x128xf32>
    %cst_44 = arith.constant dense<0.000000e+00> : vector<80x128xf32>
    %36 = tpu.matmul %32, %35, %cst_44 {dimension_numbers = #tpu.dot_dimension_numbers<[1], [0], [0], [1], [0, 0, 1, 1], [], []>} : vector<80x128xf32>, vector<128x128xf32>, vector<80x128xf32> -> vector<80x128xf32>
    %37 = arith.addf %33, %36 : vector<80x128xf32>
    %c0_45 = arith.constant 0 : index
    %c0_46 = arith.constant 0 : index
    %38 = vector.load %arg9[%c0_45, %c0_46] : memref<80x128xf32, #tpu.memory_space<vmem>>, vector<80x128xf32>
    tpu.vector_store %arg9[%c0_45, %c0_46], %37 {strides = array<i32>} : memref<80x128xf32, #tpu.memory_space<vmem>>, vector<80x128xf32>,
    %c0_47 = arith.constant 0 : index
    %c0_48 = arith.constant 0 : index
    %c11 = arith.constant 11 : index
    %c0_49 = arith.constant 0 : index
    %39 = vector.load %arg2[%c0_47, %c0_48, %c11, %c0_49] : memref<1x1x104x128xf32, #tpu.memory_space<vmem>>, vector<1x1x80x128xf32>
    %40 = vector.shape_cast %39 : vector<1x1x80x128xf32> to vector<80x128xf32>
    %c0_50 = arith.constant 0 : index
    %c0_51 = arith.constant 0 : index
    %41 = vector.load %arg9[%c0_50, %c0_51] : memref<80x128xf32, #tpu.memory_space<vmem>>, vector<80x128xf32>
    %c4 = arith.constant 4 : index
    %c0_52 = arith.constant 0 : index
    %c0_53 = arith.constant 0 : index
    %42 = vector.load %arg5[%c4, %c0_52, %c0_53] : memref<27x128x128xf32, #tpu.memory_space<vmem>>, vector<1x128x128xf32>
    %43 = vector.shape_cast %42 : vector<1x128x128xf32> to vector<128x128xf32>
    %cst_54 = arith.constant dense<0.000000e+00> : vector<80x128xf32>
    %44 = tpu.matmul %40, %43, %cst_54 {dimension_numbers = #tpu.dot_dimension_numbers<[1], [0], [0], [1], [0, 0, 1, 1], [], []>} : vector<80x128xf32>, vector<128x128xf32>, vector<80x128xf32> -> vector<80x128xf32>
    %45 = arith.addf %41, %44 : vector<80x128xf32>
    %c0_55 = arith.constant 0 : index
    %c0_56 = arith.constant 0 : index
    %46 = vector.load %arg9[%c0_55, %c0_56] : memref<80x128xf32, #tpu.memory_space<vmem>>, vector<80x128xf32>
    tpu.vector_store %arg9[%c0_55, %c0_56], %45 {strides = array<i32>} : memref<80x128xf32, #tpu.memory_space<vmem>>, vector<80x128xf32>,
    %c0_57 = arith.constant 0 : index
    %c0_58 = arith.constant 0 : index
    %c12 = arith.constant 12 : index
    %c0_59 = arith.constant 0 : index
    %47 = vector.load %arg2[%c0_57, %c0_58, %c12, %c0_59] : memref<1x1x104x128xf32, #tpu.memory_space<vmem>>, vector<1x1x80x128xf32>
    %48 = vector.shape_cast %47 : vector<1x1x80x128xf32> to vector<80x128xf32>
    %c0_60 = arith.constant 0 : index
    %c0_61 = arith.constant 0 : index
    %49 = vector.load %arg9[%c0_60, %c0_61] : memref<80x128xf32, #tpu.memory_space<vmem>>, vector<80x128xf32>
    %c5 = arith.constant 5 : index
    %c0_62 = arith.constant 0 : index
    %c0_63 = arith.constant 0 : index
    %50 = vector.load %arg5[%c5, %c0_62, %c0_63] : memref<27x128x128xf32, #tpu.memory_space<vmem>>, vector<1x128x128xf32>
    %51 = vector.shape_cast %50 : vector<1x128x128xf32> to vector<128x128xf32>
    %cst_64 = arith.constant dense<0.000000e+00> : vector<80x128xf32>
    %52 = tpu.matmul %48, %51, %cst_64 {dimension_numbers = #tpu.dot_dimension_numbers<[1], [0], [0], [1], [0, 0, 1, 1], [], []>} : vector<80x128xf32>, vector<128x128xf32>, vector<80x128xf32> -> vector<80x128xf32>
    %53 = arith.addf %49, %52 : vector<80x128xf32>
    %c0_65 = arith.constant 0 : index
    %c0_66 = arith.constant 0 : index
    %54 = vector.load %arg9[%c0_65, %c0_66] : memref<80x128xf32, #tpu.memory_space<vmem>>, vector<80x128xf32>
    tpu.vector_store %arg9[%c0_65, %c0_66], %53 {strides = array<i32>} : memref<80x128xf32, #tpu.memory_space<vmem>>, vector<80x128xf32>,
    %c0_67 = arith.constant 0 : index
    %c0_68 = arith.constant 0 : index
    %c20 = arith.constant 20 : index
    %c0_69 = arith.constant 0 : index
    %55 = vector.load %arg2[%c0_67, %c0_68, %c20, %c0_69] : memref<1x1x104x128xf32, #tpu.memory_space<vmem>>, vector<1x1x80x128xf32>
    %56 = vector.shape_cast %55 : vector<1x1x80x128xf32> to vector<80x128xf32>
    %c0_70 = arith.constant 0 : index
    %c0_71 = arith.constant 0 : index
    %57 = vector.load %arg9[%c0_70, %c0_71] : memref<80x128xf32, #tpu.memory_space<vmem>>, vector<80x128xf32>
    %c6 = arith.constant 6 : index
    %c0_72 = arith.constant 0 : index
    %c0_73 = arith.constant 0 : index
    %58 = vector.load %arg5[%c6, %c0_72, %c0_73] : memref<27x128x128xf32, #tpu.memory_space<vmem>>, vector<1x128x128xf32>
    %59 = vector.shape_cast %58 : vector<1x128x128xf32> to vector<128x128xf32>
    %cst_74 = arith.constant dense<0.000000e+00> : vector<80x128xf32>
    %60 = tpu.matmul %56, %59, %cst_74 {dimension_numbers = #tpu.dot_dimension_numbers<[1], [0], [0], [1], [0, 0, 1, 1], [], []>} : vector<80x128xf32>, vector<128x128xf32>, vector<80x128xf32> -> vector<80x128xf32>
    %61 = arith.addf %57, %60 : vector<80x128xf32>
    %c0_75 = arith.constant 0 : index
    %c0_76 = arith.constant 0 : index
    %62 = vector.load %arg9[%c0_75, %c0_76] : memref<80x128xf32, #tpu.memory_space<vmem>>, vector<80x128xf32>
    tpu.vector_store %arg9[%c0_75, %c0_76], %61 {strides = array<i32>} : memref<80x128xf32, #tpu.memory_space<vmem>>, vector<80x128xf32>,
    %c0_77 = arith.constant 0 : index
    %c0_78 = arith.constant 0 : index
    %c21 = arith.constant 21 : index
    %c0_79 = arith.constant 0 : index
    %63 = vector.load %arg2[%c0_77, %c0_78, %c21, %c0_79] : memref<1x1x104x128xf32, #tpu.memory_space<vmem>>, vector<1x1x80x128xf32>
    %64 = vector.shape_cast %63 : vector<1x1x80x128xf32> to vector<80x128xf32>
    %c0_80 = arith.constant 0 : index
    %c0_81 = arith.constant 0 : index
    %65 = vector.load %arg9[%c0_80, %c0_81] : memref<80x128xf32, #tpu.memory_space<vmem>>, vector<80x128xf32>
    %c7 = arith.constant 7 : index
    %c0_82 = arith.constant 0 : index
    %c0_83 = arith.constant 0 : index
    %66 = vector.load %arg5[%c7, %c0_82, %c0_83] : memref<27x128x128xf32, #tpu.memory_space<vmem>>, vector<1x128x128xf32>
    %67 = vector.shape_cast %66 : vector<1x128x128xf32> to vector<128x128xf32>
    %cst_84 = arith.constant dense<0.000000e+00> : vector<80x128xf32>
    %68 = tpu.matmul %64, %67, %cst_84 {dimension_numbers = #tpu.dot_dimension_numbers<[1], [0], [0], [1], [0, 0, 1, 1], [], []>} : vector<80x128xf32>, vector<128x128xf32>, vector<80x128xf32> -> vector<80x128xf32>
    %69 = arith.addf %65, %68 : vector<80x128xf32>
    %c0_85 = arith.constant 0 : index
    %c0_86 = arith.constant 0 : index
    %70 = vector.load %arg9[%c0_85, %c0_86] : memref<80x128xf32, #tpu.memory_space<vmem>>, vector<80x128xf32>
    tpu.vector_store %arg9[%c0_85, %c0_86], %69 {strides = array<i32>} : memref<80x128xf32, #tpu.memory_space<vmem>>, vector<80x128xf32>,
    %c0_87 = arith.constant 0 : index
    %c0_88 = arith.constant 0 : index
    %c22 = arith.constant 22 : index
    %c0_89 = arith.constant 0 : index
    %71 = vector.load %arg2[%c0_87, %c0_88, %c22, %c0_89] : memref<1x1x104x128xf32, #tpu.memory_space<vmem>>, vector<1x1x80x128xf32>
    %72 = vector.shape_cast %71 : vector<1x1x80x128xf32> to vector<80x128xf32>
    %c0_90 = arith.constant 0 : index
    %c0_91 = arith.constant 0 : index
    %73 = vector.load %arg9[%c0_90, %c0_91] : memref<80x128xf32, #tpu.memory_space<vmem>>, vector<80x128xf32>
    %c8 = arith.constant 8 : index
    %c0_92 = arith.constant 0 : index
    %c0_93 = arith.constant 0 : index
    %74 = vector.load %arg5[%c8, %c0_92, %c0_93] : memref<27x128x128xf32, #tpu.memory_space<vmem>>, vector<1x128x128xf32>
    %75 = vector.shape_cast %74 : vector<1x128x128xf32> to vector<128x128xf32>
    %cst_94 = arith.constant dense<0.000000e+00> : vector<80x128xf32>
    %76 = tpu.matmul %72, %75, %cst_94 {dimension_numbers = #tpu.dot_dimension_numbers<[1], [0], [0], [1], [0, 0, 1, 1], [], []>} : vector<80x128xf32>, vector<128x128xf32>, vector<80x128xf32> -> vector<80x128xf32>
    %77 = arith.addf %73, %76 : vector<80x128xf32>
    %c0_95 = arith.constant 0 : index
    %c0_96 = arith.constant 0 : index
    %78 = vector.load %arg9[%c0_95, %c0_96] : memref<80x128xf32, #tpu.memory_space<vmem>>, vector<80x128xf32>
    tpu.vector_store %arg9[%c0_95, %c0_96], %77 {strides = array<i32>} : memref<80x128xf32, #tpu.memory_space<vmem>>, vector<80x128xf32>,
    %c0_97 = arith.constant 0 : index
    %c0_98 = arith.constant 0 : index
    %c0_99 = arith.constant 0 : index
    %c0_100 = arith.constant 0 : index
    %79 = vector.load %arg3[%c0_97, %c0_98, %c0_99, %c0_100] : memref<1x1x104x128xf32, #tpu.memory_space<vmem>>, vector<1x1x80x128xf32>
    %80 = vector.shape_cast %79 : vector<1x1x80x128xf32> to vector<80x128xf32>
    %c0_101 = arith.constant 0 : index
    %c0_102 = arith.constant 0 : index
    %81 = vector.load %arg9[%c0_101, %c0_102] : memref<80x128xf32, #tpu.memory_space<vmem>>, vector<80x128xf32>
    %c9 = arith.constant 9 : index
    %c0_103 = arith.constant 0 : index
    %c0_104 = arith.constant 0 : index
    %82 = vector.load %arg5[%c9, %c0_103, %c0_104] : memref<27x128x128xf32, #tpu.memory_space<vmem>>, vector<1x128x128xf32>
    %83 = vector.shape_cast %82 : vector<1x128x128xf32> to vector<128x128xf32>
    %cst_105 = arith.constant dense<0.000000e+00> : vector<80x128xf32>
    %84 = tpu.matmul %80, %83, %cst_105 {dimension_numbers = #tpu.dot_dimension_numbers<[1], [0], [0], [1], [0, 0, 1, 1], [], []>} : vector<80x128xf32>, vector<128x128xf32>, vector<80x128xf32> -> vector<80x128xf32>
    %85 = arith.addf %81, %84 : vector<80x128xf32>
    %c0_106 = arith.constant 0 : index
    %c0_107 = arith.constant 0 : index
    %86 = vector.load %arg9[%c0_106, %c0_107] : memref<80x128xf32, #tpu.memory_space<vmem>>, vector<80x128xf32>
    tpu.vector_store %arg9[%c0_106, %c0_107], %85 {strides = array<i32>} : memref<80x128xf32, #tpu.memory_space<vmem>>, vector<80x128xf32>,
    %c0_108 = arith.constant 0 : index
    %c0_109 = arith.constant 0 : index
    %c1_110 = arith.constant 1 : index
    %c0_111 = arith.constant 0 : index
    %87 = vector.load %arg3[%c0_108, %c0_109, %c1_110, %c0_111] : memref<1x1x104x128xf32, #tpu.memory_space<vmem>>, vector<1x1x80x128xf32>
    %88 = vector.shape_cast %87 : vector<1x1x80x128xf32> to vector<80x128xf32>
    %c0_112 = arith.constant 0 : index
    %c0_113 = arith.constant 0 : index
    %89 = vector.load %arg9[%c0_112, %c0_113] : memref<80x128xf32, #tpu.memory_space<vmem>>, vector<80x128xf32>
    %c10_114 = arith.constant 10 : index
    %c0_115 = arith.constant 0 : index
    %c0_116 = arith.constant 0 : index
    %90 = vector.load %arg5[%c10_114, %c0_115, %c0_116] : memref<27x128x128xf32, #tpu.memory_space<vmem>>, vector<1x128x128xf32>
    %91 = vector.shape_cast %90 : vector<1x128x128xf32> to vector<128x128xf32>
    %cst_117 = arith.constant dense<0.000000e+00> : vector<80x128xf32>
    %92 = tpu.matmul %88, %91, %cst_117 {dimension_numbers = #tpu.dot_dimension_numbers<[1], [0], [0], [1], [0, 0, 1, 1], [], []>} : vector<80x128xf32>, vector<128x128xf32>, vector<80x128xf32> -> vector<80x128xf32>
    %93 = arith.addf %89, %92 : vector<80x128xf32>
    %c0_118 = arith.constant 0 : index
    %c0_119 = arith.constant 0 : index
    %94 = vector.load %arg9[%c0_118, %c0_119] : memref<80x128xf32, #tpu.memory_space<vmem>>, vector<80x128xf32>
    tpu.vector_store %arg9[%c0_118, %c0_119], %93 {strides = array<i32>} : memref<80x128xf32, #tpu.memory_space<vmem>>, vector<80x128xf32>,
    %c0_120 = arith.constant 0 : index
    %c0_121 = arith.constant 0 : index
    %c2_122 = arith.constant 2 : index
    %c0_123 = arith.constant 0 : index
    %95 = vector.load %arg3[%c0_120, %c0_121, %c2_122, %c0_123] : memref<1x1x104x128xf32, #tpu.memory_space<vmem>>, vector<1x1x80x128xf32>
    %96 = vector.shape_cast %95 : vector<1x1x80x128xf32> to vector<80x128xf32>
    %c0_124 = arith.constant 0 : index
    %c0_125 = arith.constant 0 : index
    %97 = vector.load %arg9[%c0_124, %c0_125] : memref<80x128xf32, #tpu.memory_space<vmem>>, vector<80x128xf32>
    %c11_126 = arith.constant 11 : index
    %c0_127 = arith.constant 0 : index
    %c0_128 = arith.constant 0 : index
    %98 = vector.load %arg5[%c11_126, %c0_127, %c0_128] : memref<27x128x128xf32, #tpu.memory_space<vmem>>, vector<1x128x128xf32>
    %99 = vector.shape_cast %98 : vector<1x128x128xf32> to vector<128x128xf32>
    %cst_129 = arith.constant dense<0.000000e+00> : vector<80x128xf32>
    %100 = tpu.matmul %96, %99, %cst_129 {dimension_numbers = #tpu.dot_dimension_numbers<[1], [0], [0], [1], [0, 0, 1, 1], [], []>} : vector<80x128xf32>, vector<128x128xf32>, vector<80x128xf32> -> vector<80x128xf32>
    %101 = arith.addf %97, %100 : vector<80x128xf32>
    %c0_130 = arith.constant 0 : index
    %c0_131 = arith.constant 0 : index
    %102 = vector.load %arg9[%c0_130, %c0_131] : memref<80x128xf32, #tpu.memory_space<vmem>>, vector<80x128xf32>
    tpu.vector_store %arg9[%c0_130, %c0_131], %101 {strides = array<i32>} : memref<80x128xf32, #tpu.memory_space<vmem>>, vector<80x128xf32>,
    %c0_132 = arith.constant 0 : index
    %c0_133 = arith.constant 0 : index
    %c10_134 = arith.constant 10 : index
    %c0_135 = arith.constant 0 : index
    %103 = vector.load %arg3[%c0_132, %c0_133, %c10_134, %c0_135] : memref<1x1x104x128xf32, #tpu.memory_space<vmem>>, vector<1x1x80x128xf32>
    %104 = vector.shape_cast %103 : vector<1x1x80x128xf32> to vector<80x128xf32>
    %c0_136 = arith.constant 0 : index
    %c0_137 = arith.constant 0 : index
    %105 = vector.load %arg9[%c0_136, %c0_137] : memref<80x128xf32, #tpu.memory_space<vmem>>, vector<80x128xf32>
    %c12_138 = arith.constant 12 : index
    %c0_139 = arith.constant 0 : index
    %c0_140 = arith.constant 0 : index
    %106 = vector.load %arg5[%c12_138, %c0_139, %c0_140] : memref<27x128x128xf32, #tpu.memory_space<vmem>>, vector<1x128x128xf32>
    %107 = vector.shape_cast %106 : vector<1x128x128xf32> to vector<128x128xf32>
    %cst_141 = arith.constant dense<0.000000e+00> : vector<80x128xf32>
    %108 = tpu.matmul %104, %107, %cst_141 {dimension_numbers = #tpu.dot_dimension_numbers<[1], [0], [0], [1], [0, 0, 1, 1], [], []>} : vector<80x128xf32>, vector<128x128xf32>, vector<80x128xf32> -> vector<80x128xf32>
    %109 = arith.addf %105, %108 : vector<80x128xf32>
    %c0_142 = arith.constant 0 : index
    %c0_143 = arith.constant 0 : index
    %110 = vector.load %arg9[%c0_142, %c0_143] : memref<80x128xf32, #tpu.memory_space<vmem>>, vector<80x128xf32>
    tpu.vector_store %arg9[%c0_142, %c0_143], %109 {strides = array<i32>} : memref<80x128xf32, #tpu.memory_space<vmem>>, vector<80x128xf32>,
    %c0_144 = arith.constant 0 : index
    %c0_145 = arith.constant 0 : index
    %c11_146 = arith.constant 11 : index
    %c0_147 = arith.constant 0 : index
    %111 = vector.load %arg3[%c0_144, %c0_145, %c11_146, %c0_147] : memref<1x1x104x128xf32, #tpu.memory_space<vmem>>, vector<1x1x80x128xf32>
    %112 = vector.shape_cast %111 : vector<1x1x80x128xf32> to vector<80x128xf32>
    %c0_148 = arith.constant 0 : index
    %c0_149 = arith.constant 0 : index
    %113 = vector.load %arg9[%c0_148, %c0_149] : memref<80x128xf32, #tpu.memory_space<vmem>>, vector<80x128xf32>
    %c13 = arith.constant 13 : index
    %c0_150 = arith.constant 0 : index
    %c0_151 = arith.constant 0 : index
    %114 = vector.load %arg5[%c13, %c0_150, %c0_151] : memref<27x128x128xf32, #tpu.memory_space<vmem>>, vector<1x128x128xf32>
    %115 = vector.shape_cast %114 : vector<1x128x128xf32> to vector<128x128xf32>
    %cst_152 = arith.constant dense<0.000000e+00> : vector<80x128xf32>
    %116 = tpu.matmul %112, %115, %cst_152 {dimension_numbers = #tpu.dot_dimension_numbers<[1], [0], [0], [1], [0, 0, 1, 1], [], []>} : vector<80x128xf32>, vector<128x128xf32>, vector<80x128xf32> -> vector<80x128xf32>
    %117 = arith.addf %113, %116 : vector<80x128xf32>
    %c0_153 = arith.constant 0 : index
    %c0_154 = arith.constant 0 : index
    %118 = vector.load %arg9[%c0_153, %c0_154] : memref<80x128xf32, #tpu.memory_space<vmem>>, vector<80x128xf32>
    tpu.vector_store %arg9[%c0_153, %c0_154], %117 {strides = array<i32>} : memref<80x128xf32, #tpu.memory_space<vmem>>, vector<80x128xf32>,
    %c0_155 = arith.constant 0 : index
    %c0_156 = arith.constant 0 : index
    %c12_157 = arith.constant 12 : index
    %c0_158 = arith.constant 0 : index
    %119 = vector.load %arg3[%c0_155, %c0_156, %c12_157, %c0_158] : memref<1x1x104x128xf32, #tpu.memory_space<vmem>>, vector<1x1x80x128xf32>
    %120 = vector.shape_cast %119 : vector<1x1x80x128xf32> to vector<80x128xf32>
    %c0_159 = arith.constant 0 : index
    %c0_160 = arith.constant 0 : index
    %121 = vector.load %arg9[%c0_159, %c0_160] : memref<80x128xf32, #tpu.memory_space<vmem>>, vector<80x128xf32>
    %c14 = arith.constant 14 : index
    %c0_161 = arith.constant 0 : index
    %c0_162 = arith.constant 0 : index
    %122 = vector.load %arg5[%c14, %c0_161, %c0_162] : memref<27x128x128xf32, #tpu.memory_space<vmem>>, vector<1x128x128xf32>
    %123 = vector.shape_cast %122 : vector<1x128x128xf32> to vector<128x128xf32>
    %cst_163 = arith.constant dense<0.000000e+00> : vector<80x128xf32>
    %124 = tpu.matmul %120, %123, %cst_163 {dimension_numbers = #tpu.dot_dimension_numbers<[1], [0], [0], [1], [0, 0, 1, 1], [], []>} : vector<80x128xf32>, vector<128x128xf32>, vector<80x128xf32> -> vector<80x128xf32>
    %125 = arith.addf %121, %124 : vector<80x128xf32>
    %c0_164 = arith.constant 0 : index
    %c0_165 = arith.constant 0 : index
    %126 = vector.load %arg9[%c0_164, %c0_165] : memref<80x128xf32, #tpu.memory_space<vmem>>, vector<80x128xf32>
    tpu.vector_store %arg9[%c0_164, %c0_165], %125 {strides = array<i32>} : memref<80x128xf32, #tpu.memory_space<vmem>>, vector<80x128xf32>,
    %c0_166 = arith.constant 0 : index
    %c0_167 = arith.constant 0 : index
    %c20_168 = arith.constant 20 : index
    %c0_169 = arith.constant 0 : index
    %127 = vector.load %arg3[%c0_166, %c0_167, %c20_168, %c0_169] : memref<1x1x104x128xf32, #tpu.memory_space<vmem>>, vector<1x1x80x128xf32>
    %128 = vector.shape_cast %127 : vector<1x1x80x128xf32> to vector<80x128xf32>
    %c0_170 = arith.constant 0 : index
    %c0_171 = arith.constant 0 : index
    %129 = vector.load %arg9[%c0_170, %c0_171] : memref<80x128xf32, #tpu.memory_space<vmem>>, vector<80x128xf32>
    %c15 = arith.constant 15 : index
    %c0_172 = arith.constant 0 : index
    %c0_173 = arith.constant 0 : index
    %130 = vector.load %arg5[%c15, %c0_172, %c0_173] : memref<27x128x128xf32, #tpu.memory_space<vmem>>, vector<1x128x128xf32>
    %131 = vector.shape_cast %130 : vector<1x128x128xf32> to vector<128x128xf32>
    %cst_174 = arith.constant dense<0.000000e+00> : vector<80x128xf32>
    %132 = tpu.matmul %128, %131, %cst_174 {dimension_numbers = #tpu.dot_dimension_numbers<[1], [0], [0], [1], [0, 0, 1, 1], [], []>} : vector<80x128xf32>, vector<128x128xf32>, vector<80x128xf32> -> vector<80x128xf32>
    %133 = arith.addf %129, %132 : vector<80x128xf32>
    %c0_175 = arith.constant 0 : index
    %c0_176 = arith.constant 0 : index
    %134 = vector.load %arg9[%c0_175, %c0_176] : memref<80x128xf32, #tpu.memory_space<vmem>>, vector<80x128xf32>
    tpu.vector_store %arg9[%c0_175, %c0_176], %133 {strides = array<i32>} : memref<80x128xf32, #tpu.memory_space<vmem>>, vector<80x128xf32>,
    %c0_177 = arith.constant 0 : index
    %c0_178 = arith.constant 0 : index
    %c21_179 = arith.constant 21 : index
    %c0_180 = arith.constant 0 : index
    %135 = vector.load %arg3[%c0_177, %c0_178, %c21_179, %c0_180] : memref<1x1x104x128xf32, #tpu.memory_space<vmem>>, vector<1x1x80x128xf32>
    %136 = vector.shape_cast %135 : vector<1x1x80x128xf32> to vector<80x128xf32>
    %c0_181 = arith.constant 0 : index
    %c0_182 = arith.constant 0 : index
    %137 = vector.load %arg9[%c0_181, %c0_182] : memref<80x128xf32, #tpu.memory_space<vmem>>, vector<80x128xf32>
    %c16 = arith.constant 16 : index
    %c0_183 = arith.constant 0 : index
    %c0_184 = arith.constant 0 : index
    %138 = vector.load %arg5[%c16, %c0_183, %c0_184] : memref<27x128x128xf32, #tpu.memory_space<vmem>>, vector<1x128x128xf32>
    %139 = vector.shape_cast %138 : vector<1x128x128xf32> to vector<128x128xf32>
    %cst_185 = arith.constant dense<0.000000e+00> : vector<80x128xf32>
    %140 = tpu.matmul %136, %139, %cst_185 {dimension_numbers = #tpu.dot_dimension_numbers<[1], [0], [0], [1], [0, 0, 1, 1], [], []>} : vector<80x128xf32>, vector<128x128xf32>, vector<80x128xf32> -> vector<80x128xf32>
    %141 = arith.addf %137, %140 : vector<80x128xf32>
    %c0_186 = arith.constant 0 : index
    %c0_187 = arith.constant 0 : index
    %142 = vector.load %arg9[%c0_186, %c0_187] : memref<80x128xf32, #tpu.memory_space<vmem>>, vector<80x128xf32>
    tpu.vector_store %arg9[%c0_186, %c0_187], %141 {strides = array<i32>} : memref<80x128xf32, #tpu.memory_space<vmem>>, vector<80x128xf32>,
    %c0_188 = arith.constant 0 : index
    %c0_189 = arith.constant 0 : index
    %c22_190 = arith.constant 22 : index
    %c0_191 = arith.constant 0 : index
    %143 = vector.load %arg3[%c0_188, %c0_189, %c22_190, %c0_191] : memref<1x1x104x128xf32, #tpu.memory_space<vmem>>, vector<1x1x80x128xf32>
    %144 = vector.shape_cast %143 : vector<1x1x80x128xf32> to vector<80x128xf32>
    %c0_192 = arith.constant 0 : index
    %c0_193 = arith.constant 0 : index
    %145 = vector.load %arg9[%c0_192, %c0_193] : memref<80x128xf32, #tpu.memory_space<vmem>>, vector<80x128xf32>
    %c17 = arith.constant 17 : index
    %c0_194 = arith.constant 0 : index
    %c0_195 = arith.constant 0 : index
    %146 = vector.load %arg5[%c17, %c0_194, %c0_195] : memref<27x128x128xf32, #tpu.memory_space<vmem>>, vector<1x128x128xf32>
    %147 = vector.shape_cast %146 : vector<1x128x128xf32> to vector<128x128xf32>
    %cst_196 = arith.constant dense<0.000000e+00> : vector<80x128xf32>
    %148 = tpu.matmul %144, %147, %cst_196 {dimension_numbers = #tpu.dot_dimension_numbers<[1], [0], [0], [1], [0, 0, 1, 1], [], []>} : vector<80x128xf32>, vector<128x128xf32>, vector<80x128xf32> -> vector<80x128xf32>
    %149 = arith.addf %145, %148 : vector<80x128xf32>
    %c0_197 = arith.constant 0 : index
    %c0_198 = arith.constant 0 : index
    %150 = vector.load %arg9[%c0_197, %c0_198] : memref<80x128xf32, #tpu.memory_space<vmem>>, vector<80x128xf32>
    tpu.vector_store %arg9[%c0_197, %c0_198], %149 {strides = array<i32>} : memref<80x128xf32, #tpu.memory_space<vmem>>, vector<80x128xf32>,
    %c0_199 = arith.constant 0 : index
    %c0_200 = arith.constant 0 : index
    %c0_201 = arith.constant 0 : index
    %c0_202 = arith.constant 0 : index
    %151 = vector.load %arg4[%c0_199, %c0_200, %c0_201, %c0_202] : memref<1x1x104x128xf32, #tpu.memory_space<vmem>>, vector<1x1x80x128xf32>
    %152 = vector.shape_cast %151 : vector<1x1x80x128xf32> to vector<80x128xf32>
    %c0_203 = arith.constant 0 : index
    %c0_204 = arith.constant 0 : index
    %153 = vector.load %arg9[%c0_203, %c0_204] : memref<80x128xf32, #tpu.memory_space<vmem>>, vector<80x128xf32>
    %c18 = arith.constant 18 : index
    %c0_205 = arith.constant 0 : index
    %c0_206 = arith.constant 0 : index
    %154 = vector.load %arg5[%c18, %c0_205, %c0_206] : memref<27x128x128xf32, #tpu.memory_space<vmem>>, vector<1x128x128xf32>
    %155 = vector.shape_cast %154 : vector<1x128x128xf32> to vector<128x128xf32>
    %cst_207 = arith.constant dense<0.000000e+00> : vector<80x128xf32>
    %156 = tpu.matmul %152, %155, %cst_207 {dimension_numbers = #tpu.dot_dimension_numbers<[1], [0], [0], [1], [0, 0, 1, 1], [], []>} : vector<80x128xf32>, vector<128x128xf32>, vector<80x128xf32> -> vector<80x128xf32>
    %157 = arith.addf %153, %156 : vector<80x128xf32>
    %c0_208 = arith.constant 0 : index
    %c0_209 = arith.constant 0 : index
    %158 = vector.load %arg9[%c0_208, %c0_209] : memref<80x128xf32, #tpu.memory_space<vmem>>, vector<80x128xf32>
    tpu.vector_store %arg9[%c0_208, %c0_209], %157 {strides = array<i32>} : memref<80x128xf32, #tpu.memory_space<vmem>>, vector<80x128xf32>,
    %c0_210 = arith.constant 0 : index
    %c0_211 = arith.constant 0 : index
    %c1_212 = arith.constant 1 : index
    %c0_213 = arith.constant 0 : index
    %159 = vector.load %arg4[%c0_210, %c0_211, %c1_212, %c0_213] : memref<1x1x104x128xf32, #tpu.memory_space<vmem>>, vector<1x1x80x128xf32>
    %160 = vector.shape_cast %159 : vector<1x1x80x128xf32> to vector<80x128xf32>
    %c0_214 = arith.constant 0 : index
    %c0_215 = arith.constant 0 : index
    %161 = vector.load %arg9[%c0_214, %c0_215] : memref<80x128xf32, #tpu.memory_space<vmem>>, vector<80x128xf32>
    %c19 = arith.constant 19 : index
    %c0_216 = arith.constant 0 : index
    %c0_217 = arith.constant 0 : index
    %162 = vector.load %arg5[%c19, %c0_216, %c0_217] : memref<27x128x128xf32, #tpu.memory_space<vmem>>, vector<1x128x128xf32>
    %163 = vector.shape_cast %162 : vector<1x128x128xf32> to vector<128x128xf32>
    %cst_218 = arith.constant dense<0.000000e+00> : vector<80x128xf32>
    %164 = tpu.matmul %160, %163, %cst_218 {dimension_numbers = #tpu.dot_dimension_numbers<[1], [0], [0], [1], [0, 0, 1, 1], [], []>} : vector<80x128xf32>, vector<128x128xf32>, vector<80x128xf32> -> vector<80x128xf32>
    %165 = arith.addf %161, %164 : vector<80x128xf32>
    %c0_219 = arith.constant 0 : index
    %c0_220 = arith.constant 0 : index
    %166 = vector.load %arg9[%c0_219, %c0_220] : memref<80x128xf32, #tpu.memory_space<vmem>>, vector<80x128xf32>
    tpu.vector_store %arg9[%c0_219, %c0_220], %165 {strides = array<i32>} : memref<80x128xf32, #tpu.memory_space<vmem>>, vector<80x128xf32>,
    %c0_221 = arith.constant 0 : index
    %c0_222 = arith.constant 0 : index
    %c2_223 = arith.constant 2 : index
    %c0_224 = arith.constant 0 : index
    %167 = vector.load %arg4[%c0_221, %c0_222, %c2_223, %c0_224] : memref<1x1x104x128xf32, #tpu.memory_space<vmem>>, vector<1x1x80x128xf32>
    %168 = vector.shape_cast %167 : vector<1x1x80x128xf32> to vector<80x128xf32>
    %c0_225 = arith.constant 0 : index
    %c0_226 = arith.constant 0 : index
    %169 = vector.load %arg9[%c0_225, %c0_226] : memref<80x128xf32, #tpu.memory_space<vmem>>, vector<80x128xf32>
    %c20_227 = arith.constant 20 : index
    %c0_228 = arith.constant 0 : index
    %c0_229 = arith.constant 0 : index
    %170 = vector.load %arg5[%c20_227, %c0_228, %c0_229] : memref<27x128x128xf32, #tpu.memory_space<vmem>>, vector<1x128x128xf32>
    %171 = vector.shape_cast %170 : vector<1x128x128xf32> to vector<128x128xf32>
    %cst_230 = arith.constant dense<0.000000e+00> : vector<80x128xf32>
    %172 = tpu.matmul %168, %171, %cst_230 {dimension_numbers = #tpu.dot_dimension_numbers<[1], [0], [0], [1], [0, 0, 1, 1], [], []>} : vector<80x128xf32>, vector<128x128xf32>, vector<80x128xf32> -> vector<80x128xf32>
    %173 = arith.addf %169, %172 : vector<80x128xf32>
    %c0_231 = arith.constant 0 : index
    %c0_232 = arith.constant 0 : index
    %174 = vector.load %arg9[%c0_231, %c0_232] : memref<80x128xf32, #tpu.memory_space<vmem>>, vector<80x128xf32>
    tpu.vector_store %arg9[%c0_231, %c0_232], %173 {strides = array<i32>} : memref<80x128xf32, #tpu.memory_space<vmem>>, vector<80x128xf32>,
    %c0_233 = arith.constant 0 : index
    %c0_234 = arith.constant 0 : index
    %c10_235 = arith.constant 10 : index
    %c0_236 = arith.constant 0 : index
    %175 = vector.load %arg4[%c0_233, %c0_234, %c10_235, %c0_236] : memref<1x1x104x128xf32, #tpu.memory_space<vmem>>, vector<1x1x80x128xf32>
    %176 = vector.shape_cast %175 : vector<1x1x80x128xf32> to vector<80x128xf32>
    %c0_237 = arith.constant 0 : index
    %c0_238 = arith.constant 0 : index
    %177 = vector.load %arg9[%c0_237, %c0_238] : memref<80x128xf32, #tpu.memory_space<vmem>>, vector<80x128xf32>
    %c21_239 = arith.constant 21 : index
    %c0_240 = arith.constant 0 : index
    %c0_241 = arith.constant 0 : index
    %178 = vector.load %arg5[%c21_239, %c0_240, %c0_241] : memref<27x128x128xf32, #tpu.memory_space<vmem>>, vector<1x128x128xf32>
    %179 = vector.shape_cast %178 : vector<1x128x128xf32> to vector<128x128xf32>
    %cst_242 = arith.constant dense<0.000000e+00> : vector<80x128xf32>
    %180 = tpu.matmul %176, %179, %cst_242 {dimension_numbers = #tpu.dot_dimension_numbers<[1], [0], [0], [1], [0, 0, 1, 1], [], []>} : vector<80x128xf32>, vector<128x128xf32>, vector<80x128xf32> -> vector<80x128xf32>
    %181 = arith.addf %177, %180 : vector<80x128xf32>
    %c0_243 = arith.constant 0 : index
    %c0_244 = arith.constant 0 : index
    %182 = vector.load %arg9[%c0_243, %c0_244] : memref<80x128xf32, #tpu.memory_space<vmem>>, vector<80x128xf32>
    tpu.vector_store %arg9[%c0_243, %c0_244], %181 {strides = array<i32>} : memref<80x128xf32, #tpu.memory_space<vmem>>, vector<80x128xf32>,
    %c0_245 = arith.constant 0 : index
    %c0_246 = arith.constant 0 : index
    %c11_247 = arith.constant 11 : index
    %c0_248 = arith.constant 0 : index
    %183 = vector.load %arg4[%c0_245, %c0_246, %c11_247, %c0_248] : memref<1x1x104x128xf32, #tpu.memory_space<vmem>>, vector<1x1x80x128xf32>
    %184 = vector.shape_cast %183 : vector<1x1x80x128xf32> to vector<80x128xf32>
    %c0_249 = arith.constant 0 : index
    %c0_250 = arith.constant 0 : index
    %185 = vector.load %arg9[%c0_249, %c0_250] : memref<80x128xf32, #tpu.memory_space<vmem>>, vector<80x128xf32>
    %c22_251 = arith.constant 22 : index
    %c0_252 = arith.constant 0 : index
    %c0_253 = arith.constant 0 : index
    %186 = vector.load %arg5[%c22_251, %c0_252, %c0_253] : memref<27x128x128xf32, #tpu.memory_space<vmem>>, vector<1x128x128xf32>
    %187 = vector.shape_cast %186 : vector<1x128x128xf32> to vector<128x128xf32>
    %cst_254 = arith.constant dense<0.000000e+00> : vector<80x128xf32>
    %188 = tpu.matmul %184, %187, %cst_254 {dimension_numbers = #tpu.dot_dimension_numbers<[1], [0], [0], [1], [0, 0, 1, 1], [], []>} : vector<80x128xf32>, vector<128x128xf32>, vector<80x128xf32> -> vector<80x128xf32>
    %189 = arith.addf %185, %188 : vector<80x128xf32>
    %c0_255 = arith.constant 0 : index
    %c0_256 = arith.constant 0 : index
    %190 = vector.load %arg9[%c0_255, %c0_256] : memref<80x128xf32, #tpu.memory_space<vmem>>, vector<80x128xf32>
    tpu.vector_store %arg9[%c0_255, %c0_256], %189 {strides = array<i32>} : memref<80x128xf32, #tpu.memory_space<vmem>>, vector<80x128xf32>,
    %c0_257 = arith.constant 0 : index
    %c0_258 = arith.constant 0 : index
    %c12_259 = arith.constant 12 : index
    %c0_260 = arith.constant 0 : index
    %191 = vector.load %arg4[%c0_257, %c0_258, %c12_259, %c0_260] : memref<1x1x104x128xf32, #tpu.memory_space<vmem>>, vector<1x1x80x128xf32>
    %192 = vector.shape_cast %191 : vector<1x1x80x128xf32> to vector<80x128xf32>
    %c0_261 = arith.constant 0 : index
    %c0_262 = arith.constant 0 : index
    %193 = vector.load %arg9[%c0_261, %c0_262] : memref<80x128xf32, #tpu.memory_space<vmem>>, vector<80x128xf32>
    %c23 = arith.constant 23 : index
    %c0_263 = arith.constant 0 : index
    %c0_264 = arith.constant 0 : index
    %194 = vector.load %arg5[%c23, %c0_263, %c0_264] : memref<27x128x128xf32, #tpu.memory_space<vmem>>, vector<1x128x128xf32>
    %195 = vector.shape_cast %194 : vector<1x128x128xf32> to vector<128x128xf32>
    %cst_265 = arith.constant dense<0.000000e+00> : vector<80x128xf32>
    %196 = tpu.matmul %192, %195, %cst_265 {dimension_numbers = #tpu.dot_dimension_numbers<[1], [0], [0], [1], [0, 0, 1, 1], [], []>} : vector<80x128xf32>, vector<128x128xf32>, vector<80x128xf32> -> vector<80x128xf32>
    %197 = arith.addf %193, %196 : vector<80x128xf32>
    %c0_266 = arith.constant 0 : index
    %c0_267 = arith.constant 0 : index
    %198 = vector.load %arg9[%c0_266, %c0_267] : memref<80x128xf32, #tpu.memory_space<vmem>>, vector<80x128xf32>
    tpu.vector_store %arg9[%c0_266, %c0_267], %197 {strides = array<i32>} : memref<80x128xf32, #tpu.memory_space<vmem>>, vector<80x128xf32>,
    %c0_268 = arith.constant 0 : index
    %c0_269 = arith.constant 0 : index
    %c20_270 = arith.constant 20 : index
    %c0_271 = arith.constant 0 : index
    %199 = vector.load %arg4[%c0_268, %c0_269, %c20_270, %c0_271] : memref<1x1x104x128xf32, #tpu.memory_space<vmem>>, vector<1x1x80x128xf32>
    %200 = vector.shape_cast %199 : vector<1x1x80x128xf32> to vector<80x128xf32>
    %c0_272 = arith.constant 0 : index
    %c0_273 = arith.constant 0 : index
    %201 = vector.load %arg9[%c0_272, %c0_273] : memref<80x128xf32, #tpu.memory_space<vmem>>, vector<80x128xf32>
    %c24 = arith.constant 24 : index
    %c0_274 = arith.constant 0 : index
    %c0_275 = arith.constant 0 : index
    %202 = vector.load %arg5[%c24, %c0_274, %c0_275] : memref<27x128x128xf32, #tpu.memory_space<vmem>>, vector<1x128x128xf32>
    %203 = vector.shape_cast %202 : vector<1x128x128xf32> to vector<128x128xf32>
    %cst_276 = arith.constant dense<0.000000e+00> : vector<80x128xf32>
    %204 = tpu.matmul %200, %203, %cst_276 {dimension_numbers = #tpu.dot_dimension_numbers<[1], [0], [0], [1], [0, 0, 1, 1], [], []>} : vector<80x128xf32>, vector<128x128xf32>, vector<80x128xf32> -> vector<80x128xf32>
    %205 = arith.addf %201, %204 : vector<80x128xf32>
    %c0_277 = arith.constant 0 : index
    %c0_278 = arith.constant 0 : index
    %206 = vector.load %arg9[%c0_277, %c0_278] : memref<80x128xf32, #tpu.memory_space<vmem>>, vector<80x128xf32>
    tpu.vector_store %arg9[%c0_277, %c0_278], %205 {strides = array<i32>} : memref<80x128xf32, #tpu.memory_space<vmem>>, vector<80x128xf32>,
    %c0_279 = arith.constant 0 : index
    %c0_280 = arith.constant 0 : index
    %c21_281 = arith.constant 21 : index
    %c0_282 = arith.constant 0 : index
    %207 = vector.load %arg4[%c0_279, %c0_280, %c21_281, %c0_282] : memref<1x1x104x128xf32, #tpu.memory_space<vmem>>, vector<1x1x80x128xf32>
    %208 = vector.shape_cast %207 : vector<1x1x80x128xf32> to vector<80x128xf32>
    %c0_283 = arith.constant 0 : index
    %c0_284 = arith.constant 0 : index
    %209 = vector.load %arg9[%c0_283, %c0_284] : memref<80x128xf32, #tpu.memory_space<vmem>>, vector<80x128xf32>
    %c25 = arith.constant 25 : index
    %c0_285 = arith.constant 0 : index
    %c0_286 = arith.constant 0 : index
    %210 = vector.load %arg5[%c25, %c0_285, %c0_286] : memref<27x128x128xf32, #tpu.memory_space<vmem>>, vector<1x128x128xf32>
    %211 = vector.shape_cast %210 : vector<1x128x128xf32> to vector<128x128xf32>
    %cst_287 = arith.constant dense<0.000000e+00> : vector<80x128xf32>
    %212 = tpu.matmul %208, %211, %cst_287 {dimension_numbers = #tpu.dot_dimension_numbers<[1], [0], [0], [1], [0, 0, 1, 1], [], []>} : vector<80x128xf32>, vector<128x128xf32>, vector<80x128xf32> -> vector<80x128xf32>
    %213 = arith.addf %209, %212 : vector<80x128xf32>
    %c0_288 = arith.constant 0 : index
    %c0_289 = arith.constant 0 : index
    %214 = vector.load %arg9[%c0_288, %c0_289] : memref<80x128xf32, #tpu.memory_space<vmem>>, vector<80x128xf32>
    tpu.vector_store %arg9[%c0_288, %c0_289], %213 {strides = array<i32>} : memref<80x128xf32, #tpu.memory_space<vmem>>, vector<80x128xf32>,
    %c0_290 = arith.constant 0 : index
    %c0_291 = arith.constant 0 : index
    %c22_292 = arith.constant 22 : index
    %c0_293 = arith.constant 0 : index
    %215 = vector.load %arg4[%c0_290, %c0_291, %c22_292, %c0_293] : memref<1x1x104x128xf32, #tpu.memory_space<vmem>>, vector<1x1x80x128xf32>
    %216 = vector.shape_cast %215 : vector<1x1x80x128xf32> to vector<80x128xf32>
    %c0_294 = arith.constant 0 : index
    %c0_295 = arith.constant 0 : index
    %217 = vector.load %arg9[%c0_294, %c0_295] : memref<80x128xf32, #tpu.memory_space<vmem>>, vector<80x128xf32>
    %c26 = arith.constant 26 : index
    %c0_296 = arith.constant 0 : index
    %c0_297 = arith.constant 0 : index
    %218 = vector.load %arg5[%c26, %c0_296, %c0_297] : memref<27x128x128xf32, #tpu.memory_space<vmem>>, vector<1x128x128xf32>
    %219 = vector.shape_cast %218 : vector<1x128x128xf32> to vector<128x128xf32>
    %cst_298 = arith.constant dense<0.000000e+00> : vector<80x128xf32>
    %220 = tpu.matmul %216, %219, %cst_298 {dimension_numbers = #tpu.dot_dimension_numbers<[1], [0], [0], [1], [0, 0, 1, 1], [], []>} : vector<80x128xf32>, vector<128x128xf32>, vector<80x128xf32> -> vector<80x128xf32>
    %221 = arith.addf %217, %220 : vector<80x128xf32>
    %c0_299 = arith.constant 0 : index
    %c0_300 = arith.constant 0 : index
    %222 = vector.load %arg9[%c0_299, %c0_300] : memref<80x128xf32, #tpu.memory_space<vmem>>, vector<80x128xf32>
    tpu.vector_store %arg9[%c0_299, %c0_300], %221 {strides = array<i32>} : memref<80x128xf32, #tpu.memory_space<vmem>>, vector<80x128xf32>,
    %223 = tpu.iota {dimensions = array<i32: 0>} : vector<80x1xi32>
    %c10_i32 = arith.constant 10 : i32
    %c0_i32_301 = arith.constant 0 : i32
    %224 = arith.cmpi eq, %c10_i32, %c0_i32_301 : i32
    %c1_i32 = arith.constant 1 : i32
    %225 = arith.select %224, %c1_i32, %c10_i32 : i32
    %226 = vector.broadcast %225 : i32 to vector<80x1xi32>
    %227 = arith.remsi %223, %226 : vector<80x1xi32>
    %c0_i32_302 = arith.constant 0 : i32
    %228 = vector.broadcast %c0_i32_302 : i32 to vector<80x1xi32>
    %229 = arith.cmpi ne, %227, %228 : vector<80x1xi32>
    %c0_i32_303 = arith.constant 0 : i32
    %230 = vector.broadcast %c0_i32_303 : i32 to vector<80x1xi32>
    %231 = arith.cmpi slt, %227, %230 : vector<80x1xi32>
    %c0_i32_304 = arith.constant 0 : i32
    %232 = arith.cmpi slt, %225, %c0_i32_304 : i32
    %233 = vector.broadcast %232 : i1 to vector<80x1xi1>
    %234 = vector.broadcast %233 : vector<80x1xi1> to vector<80x1xi1>
    %235 = arith.xori %231, %234 : vector<80x1xi1>
    %236 = arith.andi %235, %229 : vector<80x1xi1>
    %237 = vector.broadcast %225 : i32 to vector<80x1xi32>
    %238 = arith.addi %227, %237 : vector<80x1xi32>
    %239 = arith.select %236, %238, %227 : vector<80x1xi1>, vector<80x1xi32>
    %c8_i32 = arith.constant 8 : i32
    %240 = vector.broadcast %c8_i32 : i32 to vector<80x1xi32>
    %241 = arith.cmpi slt, %239, %240 : vector<80x1xi32>
    %242 = arith.extui %241 : vector<80x1xi1> to vector<80x1xi32>
    %243 = arith.sitofp %242 : vector<80x1xi32> to vector<80x1xf32>
    %c0_305 = arith.constant 0 : index
    %c0_306 = arith.constant 0 : index
    %244 = vector.load %arg9[%c0_305, %c0_306] : memref<80x128xf32, #tpu.memory_space<vmem>>, vector<80x128xf32>
    %245 = vector.broadcast %243 : vector<80x1xf32> to vector<80x128xf32>
    %246 = arith.mulf %244, %245 : vector<80x128xf32>
    %c0_307 = arith.constant 0 : index
    %c0_308 = arith.constant 0 : index
    %c0_309 = arith.constant 0 : index
    %c0_310 = arith.constant 0 : index
    %247 = vector.load %arg6[%c0_307, %c0_308, %c0_309, %c0_310] : memref<1x1x80x128xf32, #tpu.memory_space<vmem>>, vector<1x1x80x128xf32>
    %248 = vector.shape_cast %247 : vector<1x1x80x128xf32> to vector<80x128xf32>
    %249 = vector.shape_cast %246 : vector<80x128xf32> to vector<1x1x80x128xf32>
    tpu.vector_store %arg6[%c0_307, %c0_308, %c0_309, %c0_310], %249 {strides = array<i32>} : memref<1x1x80x128xf32, #tpu.memory_space<vmem>>, vector<1x1x80x128xf32>,
    %c0_311 = arith.constant 0 : index
    %c0_312 = arith.constant 0 : index
    %250 = vector.load %arg7[%c0_311, %c0_312] : memref<1x128xf32, #tpu.memory_space<vmem>>, vector<1x128xf32>
    %cst_313 = arith.constant dense<0.000000e+00> : vector<128xf32>
    %251 = vector.multi_reduction <add>, %246, %cst_313 [0] : vector<80x128xf32> to vector<128xf32>
    %252 = vector.shape_cast %251 : vector<128xf32> to vector<1x128xf32>
    %253 = arith.addf %250, %252 : vector<1x128xf32>
    %c0_314 = arith.constant 0 : index
    %c0_315 = arith.constant 0 : index
    %254 = vector.load %arg7[%c0_314, %c0_315] : memref<1x128xf32, #tpu.memory_space<vmem>>, vector<1x128xf32>
    tpu.vector_store %arg7[%c0_314, %c0_315], %253 {strides = array<i32>} : memref<1x128xf32, #tpu.memory_space<vmem>>, vector<1x128xf32>,
    %c0_316 = arith.constant 0 : index
    %c0_317 = arith.constant 0 : index
    %255 = vector.load %arg8[%c0_316, %c0_317] : memref<1x128xf32, #tpu.memory_space<vmem>>, vector<1x128xf32>
    %256 = arith.mulf %246, %246 : vector<80x128xf32>
    %cst_318 = arith.constant dense<0.000000e+00> : vector<128xf32>
    %257 = vector.multi_reduction <add>, %256, %cst_318 [0] : vector<80x128xf32> to vector<128xf32>
    %258 = vector.shape_cast %257 : vector<128xf32> to vector<1x128xf32>
    %259 = arith.addf %255, %258 : vector<1x128xf32>
    %c0_319 = arith.constant 0 : index
    %c0_320 = arith.constant 0 : index
    %260 = vector.load %arg8[%c0_319, %c0_320] : memref<1x128xf32, #tpu.memory_space<vmem>>, vector<1x128xf32>
    tpu.vector_store %arg8[%c0_319, %c0_320], %259 {strides = array<i32>} : memref<1x128xf32, #tpu.memory_space<vmem>>, vector<1x128xf32>,
    return
  }
  func.func @transform_0(%arg0: i32, %arg1: i32) -> (i32, i32, i32, i32) {
    %c0_i32 = arith.constant 0 : i32
    %0 = arith.addi %arg1, %c0_i32 : i32
    %c0_i32_0 = arith.constant 0 : i32
    %c0_i32_1 = arith.constant 0 : i32
    %c0_i32_2 = arith.constant 0 : i32
    return %arg0, %0, %c0_i32_0, %c0_i32_1 : i32, i32, i32, i32
  }
  func.func @transform_1(%arg0: i32, %arg1: i32) -> (i32, i32, i32, i32) {
    %c1_i32 = arith.constant 1 : i32
    %0 = arith.addi %arg1, %c1_i32 : i32
    %c0_i32 = arith.constant 0 : i32
    %c0_i32_0 = arith.constant 0 : i32
    %c0_i32_1 = arith.constant 0 : i32
    return %arg0, %0, %c0_i32, %c0_i32_0 : i32, i32, i32, i32
  }
  func.func @transform_2(%arg0: i32, %arg1: i32) -> (i32, i32, i32, i32) {
    %c2_i32 = arith.constant 2 : i32
    %0 = arith.addi %arg1, %c2_i32 : i32
    %c0_i32 = arith.constant 0 : i32
    %c0_i32_0 = arith.constant 0 : i32
    %c0_i32_1 = arith.constant 0 : i32
    return %arg0, %0, %c0_i32, %c0_i32_0 : i32, i32, i32, i32
  }
  func.func @transform_3(%arg0: i32, %arg1: i32) -> (i32, i32, i32) {
    %c0_i32 = arith.constant 0 : i32
    %c0_i32_0 = arith.constant 0 : i32
    %c0_i32_1 = arith.constant 0 : i32
    %c0_i32_2 = arith.constant 0 : i32
    return %c0_i32, %c0_i32_0, %c0_i32_1 : i32, i32, i32
  }
  func.func @transform_4(%arg0: i32, %arg1: i32) -> (i32, i32, i32, i32) {
    %c0_i32 = arith.constant 0 : i32
    %c0_i32_0 = arith.constant 0 : i32
    %c0_i32_1 = arith.constant 0 : i32
    return %arg0, %arg1, %c0_i32, %c0_i32_0 : i32, i32, i32, i32
  }
  func.func @transform_5(%arg0: i32, %arg1: i32) -> (i32, i32) {
    %c0_i32 = arith.constant 0 : i32
    %c0_i32_0 = arith.constant 0 : i32
    %c0_i32_1 = arith.constant 0 : i32
    return %c0_i32, %c0_i32_0 : i32, i32
  }
  func.func @transform_6(%arg0: i32, %arg1: i32) -> (i32, i32) {
    %c0_i32 = arith.constant 0 : i32
    %c0_i32_0 = arith.constant 0 : i32
    %c0_i32_1 = arith.constant 0 : i32
    return %c0_i32, %c0_i32_0 : i32, i32
  }
}

</mosaic_0001>

<llo_original>
// kernel: conv_block_forward.5
$region0: #{conv_block_forward.5}
  #allocation0 [shape = 'u32[]', space=smem, size = 0x4, offset = 0x4, fixed_abs, tag = 'smem constant byte address 0x4 - core index']
  #allocation1 [shape = 'u32[72,128]{1,0:T(1,128)}', space=vmem, size = 0x9000, scoped, tag = 'internal scratch']
  %s0 = inlined_call_operand.vmem [shape: f32[2,8,80,128], index: 0, kind: input, shape index: {}]
  %s1 = inlined_call_operand.vmem [shape: f32[1,128], index: 1, kind: input, shape index: {}]
  %s2 = inlined_call_operand.vmem [shape: f32[1,128], index: 2, kind: input, shape index: {}]
  %s3 = inlined_call_operand.vmem [shape: f32[2,8,80,128], index: 3, kind: output, shape index: {}]
  %s4 = sld [smem:[#allocation0]]
  $region45: #{conv_block_forward.5} parent=0
    _
  %s6 = ssub.s32 1, %s4
  %s7 = scalar_select 0, %s6, %s4
  loop: start=0, step=1, limit=18
  $region2: #{conv_block_forward.5} parent=0 // loop_pre_header
    _
  $region3: #{conv_block_forward.5} parent=0 // loop_header
    %s9 = sphi 0, %s13
    %p10 = scmp.ge.s32.totalorder %s9, 18
    %s16 = sphi 0, %s28
    %s17 = sphi 0, %s24
    %s18 = sphi 0, %s16
    %s19 = sphi 0, %s17
    %s20 = sphi 0, %s18
    %s21 = sphi 0, %s19
    %s33 = sphi 0, %s35
    %s36 = sphi 0, %s33
    %s37 = sphi 0, %s36
    %s53 = sphi 0, %s37
    %s57 = sphi 0, %s57
    %s59 = sphi 0, %s57
    %s60 = sphi 0, %s59
    %s74 = sphi 0, %s60
    %s78 = sphi 0, %s78
    %s80 = sphi 0, %s78
    %s81 = sphi 0, %s80
    %s95 = sphi 0, %s81
    %s103 = sphi 0, %s105
    %s106 = sphi 0, %s103
    %s107 = sphi 0, %s106
    %s123 = sphi 0, %s107
  $region4: #{conv_block_forward.5} parent=0 // loop_header_branch
    %12 = sbr.rel (%p10) target = $region8
  $region5: #{conv_block_forward.5} parent=0 // loop_body
    %s14 = ssub.s32 %s9, 1
    %s15 = ssub.s32 %s9, 2
    %s22 = sadd.s32 1, %s17
    %p23 = scmp.ge.s32.totalorder %s22, 8
    %s24 = scalar_select %p23, 0, %s22
    %s25 = sadd.s32 1, %s16
    %s26 = scalar_select %p23, %s25, %s16
    %p27 = scmp.ge.s32.totalorder %s26, 2
    %s28 = scalar_select %p27, 0, %s26
    %s29 = ssub.s32 %s16, %s28
    %s30 = ssub.s32 %s17, %s24
    %s31 = sor.u32 %s29, %s30
    %p32 = scmp.eq.s32.totalorder %s31, 0
    %s34 = sadd.s32 %s33, 1
    %s35 = scalar_select %p32, %s33, %s34
    %p38 = pneg %p32
    %p39 = scmp.eq.s32.totalorder %s9, 15
    %p40 = por %p38, %p39
    %p41 = scmp.ne.s32.totalorder %s33, %s36
    %p42 = scmp.eq.s32.totalorder %s9, 0
    %p43 = por %p41, %p42
    %p44 = scmp.ne.s32.totalorder %s33, %s36
    %p45 = scmp.eq.s32.totalorder %s14, 15
    %p46 = por %p44, %p45
    %p47 = scmp.ne.s32.totalorder %s36, %s37
    %p48 = scmp.eq.s32.totalorder %s14, 0
    %p49 = por %p47, %p48
    %p50 = scmp.ne.s32.totalorder %s36, %s37
    %p51 = scmp.eq.s32.totalorder %s15, 15
    %p52 = por %p50, %p51
    %p54 = scmp.ne.s32.totalorder %s37, %s53
    %p55 = scmp.eq.s32.totalorder %s15, 0
    %p56 = por %p54, %p55
    %s58 = sadd.s32 %s57, 1
    %p61 = scmp.eq.s32.totalorder %s9, 15
    %p62 = scmp.ne.s32.totalorder %s57, %s59
    %p63 = scmp.eq.s32.totalorder %s9, 0
    %p64 = por %p62, %p63
    %p65 = scmp.ne.s32.totalorder %s57, %s59
    %p66 = scmp.eq.s32.totalorder %s14, 15
    %p67 = por %p65, %p66
    %p68 = scmp.ne.s32.totalorder %s59, %s60
    %p69 = scmp.eq.s32.totalorder %s14, 0
    %p70 = por %p68, %p69
    %p71 = scmp.ne.s32.totalorder %s59, %s60
    %p72 = scmp.eq.s32.totalorder %s15, 15
    %p73 = por %p71, %p72
    %p75 = scmp.ne.s32.totalorder %s60, %s74
    %p76 = scmp.eq.s32.totalorder %s15, 0
    %p77 = por %p75, %p76
    %s79 = sadd.s32 %s78, 1
    %p82 = scmp.eq.s32.totalorder %s9, 15
    %p83 = scmp.ne.s32.totalorder %s78, %s80
    %p84 = scmp.eq.s32.totalorder %s9, 0
    %p85 = por %p83, %p84
    %p86 = scmp.ne.s32.totalorder %s78, %s80
    %p87 = scmp.eq.s32.totalorder %s14, 15
    %p88 = por %p86, %p87
    %p89 = scmp.ne.s32.totalorder %s80, %s81
    %p90 = scmp.eq.s32.totalorder %s14, 0
    %p91 = por %p89, %p90
    %p92 = scmp.ne.s32.totalorder %s80, %s81
    %p93 = scmp.eq.s32.totalorder %s15, 15
    %p94 = por %p92, %p93
    %p96 = scmp.ne.s32.totalorder %s81, %s95
    %p97 = scmp.eq.s32.totalorder %s15, 0
    %p98 = por %p96, %p97
    %s99 = ssub.s32 %s16, %s28
    %s100 = ssub.s32 %s17, %s24
    %s101 = sor.u32 %s99, %s100
    %p102 = scmp.eq.s32.totalorder %s101, 0
    %s104 = sadd.s32 %s103, 1
    %s105 = scalar_select %p102, %s103, %s104
    %p108 = pneg %p102
    %p109 = scmp.eq.s32.totalorder %s9, 15
    %p110 = por %p108, %p109
    %p111 = scmp.ne.s32.totalorder %s103, %s106
    %p112 = scmp.eq.s32.totalorder %s9, 0
    %p113 = por %p111, %p112
    %p114 = scmp.ne.s32.totalorder %s103, %s106
    %p115 = scmp.eq.s32.totalorder %s14, 15
    %p116 = por %p114, %p115
    %p117 = scmp.ne.s32.totalorder %s106, %s107
    %p118 = scmp.eq.s32.totalorder %s14, 0
    %p119 = por %p117, %p118
    %p120 = scmp.ne.s32.totalorder %s106, %s107
    %p121 = scmp.eq.s32.totalorder %s15, 15
    %p122 = por %p120, %p121
    %p124 = scmp.ne.s32.totalorder %s107, %s123
    %p125 = scmp.eq.s32.totalorder %s15, 0
    %p126 = por %p124, %p125
    %p127 = scmp.le.s32.totalorder 1, %s9
    %p128 = scmp.lt.s32.totalorder %s9, 17
    %p129 = pnand %p127, %p128
    %p130 = pneg %p129
    // Predicated region
    $region9: #{conv_block_forward.5} parent=5 // pred_check
      _
    $region10: #{conv_block_forward.5} parent=5 // pred_check_branch
      %132 = sbr.rel (%p129) target = $region12
    $region11: #{conv_block_forward.5} parent=5 // pred_region
      %s133 = ssub.s32 %s9, 1
      // Predicated region
      $region13: #{conv_block_forward.5} parent=11 // pred_check
        %p134 = pneg %p70
      $region14: #{conv_block_forward.5} parent=11 // pred_check_branch
        %136 = sbr.rel (%p134) target = $region16
      $region15: #{conv_block_forward.5} parent=11 // pred_region
        _
      $region16: #{conv_block_forward.5} parent=11 // pred_fallthru
        _
      // Predicated region
      $region17: #{conv_block_forward.5} parent=11 // pred_check
        %p137 = pneg %p91
      $region18: #{conv_block_forward.5} parent=11 // pred_check_branch
        %139 = sbr.rel (%p137) target = $region20
      $region19: #{conv_block_forward.5} parent=11 // pred_region
        _
      $region20: #{conv_block_forward.5} parent=11 // pred_fallthru
        _
    $region12: #{conv_block_forward.5} parent=5 // pred_fallthru
      _
    %p140 = scmp.lt.s32.totalorder %s9, 16
    // Predicated region
    $region21: #{conv_block_forward.5} parent=5 // pred_check
      %p141 = pneg %p140
    $region22: #{conv_block_forward.5} parent=5 // pred_check_branch
      %143 = sbr.rel (%p141) target = $region24
    $region23: #{conv_block_forward.5} parent=5 // pred_region
      // Predicated region
      $region25: #{conv_block_forward.5} parent=23 // pred_check
        %p144 = pneg %p43
      $region26: #{conv_block_forward.5} parent=23 // pred_check_branch
        %146 = sbr.rel (%p144) target = $region28
      $region27: #{conv_block_forward.5} parent=23 // pred_region
        %p147 = scmp.lt.s32.totalorder %s16, 1
        %s148 = scalar_select %p147, %s16, 1
        %p149 = scmp.lt.s32.totalorder %s17, 7
        %s150 = scalar_select %p149, %s17, 7
        %s151 = smul.addr %s150, 10
        %s152 = smul.addr %s148, 80
        %s153 = sadd.s32 %s151, %s152
        %s154 = smul.addr %s153, 8
        %s155 = scalar_lea.vmem %s0, %s154
      $region28: #{conv_block_forward.5} parent=23 // pred_fallthru
        _
    $region24: #{conv_block_forward.5} parent=5 // pred_fallthru
      _
    %p156 = scmp.le.s32.totalorder 1, %s9
    %p157 = scmp.lt.s32.totalorder %s9, 17
    %p158 = pnand %p156, %p157
    %p159 = pneg %p158
    // Predicated region
    $region29: #{conv_block_forward.5} parent=5 // pred_check
      _
    $region30: #{conv_block_forward.5} parent=5 // pred_check_branch
      %161 = sbr.rel (%p158) target = $region32
    $region31: #{conv_block_forward.5} parent=5 // pred_region
      %s162 = ssub.s32 %s9, 1
      %p163 = scmp.lt.s32.totalorder %s18, 1
      %s164 = scalar_select %p163, %s18, 1
      %p165 = scmp.lt.s32.totalorder %s19, 7
      %s166 = scalar_select %p165, %s19, 7
      %s167 = smul.addr %s166, 10
      %s168 = smul.addr %s164, 80
      %s169 = sadd.s32 %s167, %s168
      %s170 = smul.addr %s169, 8
      %s171 = scalar_lea.vmem %s0, %s170
      %p172 = pneg %p49
      %p173 = pneg %p46
      %p174 = pneg %p70
      %p175 = pneg %p67
      %p176 = pneg %p91
      %p177 = pneg %p88
      %p178 = pneg %p119
      %p179 = pneg %p116
      %p180 = scmp.lt.s32.totalorder %s18, 1
      %s181 = scalar_select %p180, %s18, 1
      %p182 = scmp.lt.s32.totalorder %s19, 7
      %s183 = scalar_select %p182, %s19, 7
      %s184 = smul.addr %s183, 10
      %s185 = smul.addr %s181, 80
      %s186 = sadd.s32 %s184, %s185
      %s187 = smul.addr %s186, 8
      %s188 = scalar_lea.vmem %s3, %s187
      %p189 = scmp.lt.s32.totalorder %s18, 1
      %s190 = scalar_select %p189, %s18, 1
      %p191 = scmp.lt.s32.totalorder %s19, 7
      %s192 = scalar_select %p191, %s19, 7
      %s193 = smul.addr %s192, 10
      %s194 = smul.addr %s190, 80
      %s195 = sadd.s32 %s193, %s194
      %s196 = smul.addr %s195, 8
      %s197 = scalar_lea.vmem %s0, %s196
      %p198 = scmp.lt.s32.totalorder %s18, 1
      %s199 = scalar_select %p198, %s18, 1
      %p200 = scmp.lt.s32.totalorder %s19, 7
      %s201 = scalar_select %p200, %s19, 7
      %s202 = smul.addr %s201, 10
      %s203 = smul.addr %s199, 80
      %s204 = sadd.s32 %s202, %s203
      %s205 = smul.addr %s204, 8
      %s206 = scalar_lea.vmem %s3, %s205
      %v207 = vld [vmem:[%s197] sm:$0xff]
      %v208 = vld [vmem:[%s197 + $0x8] sm:$0xff]
      %v209 = vld [vmem:[%s197 + $0x10] sm:$0xff]
      %v210 = vld [vmem:[%s197 + $0x18] sm:$0xff]
      %v211 = vld [vmem:[%s197 + $0x20] sm:$0xff]
      %v212 = vld [vmem:[%s197 + $0x28] sm:$0xff]
      %v213 = vld [vmem:[%s197 + $0x30] sm:$0xff]
      %v214 = vld [vmem:[%s197 + $0x38] sm:$0xff]
      %v215 = vld [vmem:[%s197 + $0x40] sm:$0xff]
      %v216 = vld [vmem:[%s197 + $0x48] sm:$0xff]
      %v217 = vld [vmem:[%s1] sm:$0x1]
      %v219 = vperm.slane %v217, 0
      %v221 = vmul.f32 %v207, %v219
      %v222 = vmul.f32 %v208, %v219
      %v223 = vmul.f32 %v209, %v219
      %v224 = vmul.f32 %v210, %v219
      %v225 = vmul.f32 %v211, %v219
      %v226 = vmul.f32 %v212, %v219
      %v227 = vmul.f32 %v213, %v219
      %v228 = vmul.f32 %v214, %v219
      %v229 = vmul.f32 %v215, %v219
      %v230 = vmul.f32 %v216, %v219
      %v231 = vld [vmem:[%s2] sm:$0x1]
      %v233 = vperm.slane %v231, 0
      %v235 = vadd.f32 %v221, %v233
      %v236 = vadd.f32 %v222, %v233
      %v237 = vadd.f32 %v223, %v233
      %v238 = vadd.f32 %v224, %v233
      %v239 = vadd.f32 %v225, %v233
      %v240 = vadd.f32 %v226, %v233
      %v241 = vadd.f32 %v227, %v233
      %v242 = vadd.f32 %v228, %v233
      %v243 = vadd.f32 %v229, %v233
      %v244 = vadd.f32 %v230, %v233
      %v245 = vmax.f32 %v235, 0.0
      %v246 = vmax.f32 %v236, 0.0
      %v247 = vmax.f32 %v237, 0.0
      %v248 = vmax.f32 %v238, 0.0
      %v249 = vmax.f32 %v239, 0.0
      %v250 = vmax.f32 %v240, 0.0
      %v251 = vmax.f32 %v241, 0.0
      %v252 = vmax.f32 %v242, 0.0
      %v253 = vmax.f32 %v243, 0.0
      %v254 = vmax.f32 %v244, 0.0
      %255 = vst [vmem:[%s206] sm:$0xff] %v245
      %256 = vst [vmem:[%s206 + $0x8] sm:$0xff] %v246
      %257 = vst [vmem:[%s206 + $0x10] sm:$0xff] %v247
      %258 = vst [vmem:[%s206 + $0x18] sm:$0xff] %v248
      %259 = vst [vmem:[%s206 + $0x20] sm:$0xff] %v249
      %260 = vst [vmem:[%s206 + $0x28] sm:$0xff] %v250
      %261 = vst [vmem:[%s206 + $0x30] sm:$0xff] %v251
      %262 = vst [vmem:[%s206 + $0x38] sm:$0xff] %v252
      %263 = vst [vmem:[%s206 + $0x40] sm:$0xff] %v253
      %264 = vst [vmem:[%s206 + $0x48] sm:$0xff] %v254
      %p265 = scmp.lt.s32.totalorder %s18, 1
      %s266 = scalar_select %p265, %s18, 1
      %p267 = scmp.lt.s32.totalorder %s19, 7
      %s268 = scalar_select %p267, %s19, 7
      %s269 = smul.addr %s268, 10
      %s270 = smul.addr %s266, 80
      %s271 = sadd.s32 %s269, %s270
      %s272 = smul.addr %s271, 8
      %s273 = scalar_lea.vmem %s3, %s272
      // Predicated region
      $region33: #{conv_block_forward.5} parent=31 // pred_check
        %p274 = pneg %p116
      $region34: #{conv_block_forward.5} parent=31 // pred_check_branch
        %276 = sbr.rel (%p274) target = $region36
      $region35: #{conv_block_forward.5} parent=31 // pred_region
        _
      $region36: #{conv_block_forward.5} parent=31 // pred_fallthru
        _
    $region32: #{conv_block_forward.5} parent=5 // pred_fallthru
      _
    %p277 = scmp.le.s32.totalorder 2, %s9
    // Predicated region
    $region37: #{conv_block_forward.5} parent=5 // pred_check
      %p278 = pneg %p277
    $region38: #{conv_block_forward.5} parent=5 // pred_check_branch
      %280 = sbr.rel (%p278) target = $region40
    $region39: #{conv_block_forward.5} parent=5 // pred_region
      %s281 = ssub.s32 %s9, 2
      // Predicated region
      $region41: #{conv_block_forward.5} parent=39 // pred_check
        %p282 = pneg %p122
      $region42: #{conv_block_forward.5} parent=39 // pred_check_branch
        %284 = sbr.rel (%p282) target = $region44
      $region43: #{conv_block_forward.5} parent=39 // pred_region
        %p285 = scmp.lt.s32.totalorder %s20, 1
        %s286 = scalar_select %p285, %s20, 1
        %p287 = scmp.lt.s32.totalorder %s21, 7
        %s288 = scalar_select %p287, %s21, 7
        %s289 = smul.addr %s288, 10
        %s290 = smul.addr %s286, 80
        %s291 = sadd.s32 %s289, %s290
        %s292 = smul.addr %s291, 8
        %s293 = scalar_lea.vmem %s3, %s292
      $region44: #{conv_block_forward.5} parent=39 // pred_fallthru
        _
    $region40: #{conv_block_forward.5} parent=5 // pred_fallthru
      _
  $region6: #{conv_block_forward.5} parent=0 // loop_footer
    %s13 = sadd.s32 1, %s9
  $region7: #{conv_block_forward.5} parent=0 // loop_footer_branch
    %8 = sbr.rel target = $region3
  $region8: #{conv_block_forward.5} parent=0 // loop_exit
    _

// kernel: conv_block_forward.4
$region0: #{conv_block_forward.4}
  #allocation0 [shape = 'u32[]', space=smem, size = 0x4, offset = 0x4, fixed_abs, tag = 'smem constant byte address 0x4 - core index']
  #allocation1 [shape = 'u32[72,128]{1,0:T(1,128)}', space=vmem, size = 0x9000, scoped, tag = 'internal scratch']
  #allocation2 [shape = 'f32[80,128]{1,0:T(8,128)}', space=vmem, size = 0xa000, scoped, tag = 'scratch operand']
  %s0 = inlined_call_operand.vmem [shape: f32[2,10,104,8], index: 0, kind: input, shape index: {}, may-alias: {0,1,2}]
  %s1 = inlined_call_operand.vmem [shape: f32[2,10,104,8], index: 1, kind: input, shape index: {}, may-alias: {0,1,2}]
  %s2 = inlined_call_operand.vmem [shape: f32[2,10,104,8], index: 2, kind: input, shape index: {}, may-alias: {0,1,2}]
  %s3 = inlined_call_operand.vmem [shape: f32[27,8,128], index: 3, kind: input, shape index: {}]
  %s4 = inlined_call_operand.vmem [shape: f32[2,8,80,128], index: 4, kind: output, shape index: {0}]
  %s5 = inlined_call_operand.vmem [shape: f32[1,128], index: 5, kind: output, shape index: {1}]
  %s6 = inlined_call_operand.vmem [shape: f32[1,128], index: 6, kind: output, shape index: {2}]
  %7 = xla_tuple %s4, %s5, %s6
  %s8 = sld [smem:[#allocation0]]
  $region69: #{conv_block_forward.4} parent=0
    _
  %s10 = ssub.s32 1, %s8
  %s11 = scalar_select 0, %s10, %s8
  loop: start=0, step=1, limit=18
  $region2: #{conv_block_forward.4} parent=0 // loop_pre_header
    _
  $region3: #{conv_block_forward.4} parent=0 // loop_header
    %s13 = sphi 0, %s17
    %p14 = scmp.ge.s32.totalorder %s13, 18
    %s20 = sphi 0, %s32
    %s21 = sphi 0, %s28
    %s22 = sphi 0, %s20
    %s23 = sphi 0, %s21
    %s24 = sphi 0, %s22
    %s25 = sphi 0, %s23
    %s37 = sphi 0, %s39
    %s40 = sphi 0, %s37
    %s41 = sphi 0, %s40
    %s57 = sphi 0, %s41
    %s67 = sphi 0, %s69
    %s70 = sphi 0, %s67
    %s71 = sphi 0, %s70
    %s87 = sphi 0, %s71
    %s97 = sphi 0, %s99
    %s100 = sphi 0, %s97
    %s101 = sphi 0, %s100
    %s117 = sphi 0, %s101
    %s121 = sphi 0, %s121
    %s123 = sphi 0, %s121
    %s124 = sphi 0, %s123
    %s138 = sphi 0, %s124
    %s146 = sphi 0, %s148
    %s149 = sphi 0, %s146
    %s150 = sphi 0, %s149
    %s166 = sphi 0, %s150
    %s170 = sphi 0, %s170
    %s172 = sphi 0, %s170
    %s173 = sphi 0, %s172
    %s187 = sphi 0, %s173
    %s191 = sphi 0, %s191
    %s193 = sphi 0, %s191
    %s194 = sphi 0, %s193
    %s208 = sphi 0, %s194
  $region4: #{conv_block_forward.4} parent=0 // loop_header_branch
    %16 = sbr.rel (%p14) target = $region8
  $region5: #{conv_block_forward.4} parent=0 // loop_body
    %s18 = ssub.s32 %s13, 1
    %s19 = ssub.s32 %s13, 2
    %s26 = sadd.s32 1, %s21
    %p27 = scmp.ge.s32.totalorder %s26, 8
    %s28 = scalar_select %p27, 0, %s26
    %s29 = sadd.s32 1, %s20
    %s30 = scalar_select %p27, %s29, %s20
    %p31 = scmp.ge.s32.totalorder %s30, 2
    %s32 = scalar_select %p31, 0, %s30
    %s33 = ssub.s32 %s20, %s32
    %s34 = ssub.s32 %s21, %s28
    %s35 = sor.u32 %s33, %s34
    %p36 = scmp.eq.s32.totalorder %s35, 0
    %s38 = sadd.s32 %s37, 1
    %s39 = scalar_select %p36, %s37, %s38
    %p42 = pneg %p36
    %p43 = scmp.eq.s32.totalorder %s13, 15
    %p44 = por %p42, %p43
    %p45 = scmp.ne.s32.totalorder %s37, %s40
    %p46 = scmp.eq.s32.totalorder %s13, 0
    %p47 = por %p45, %p46
    %p48 = scmp.ne.s32.totalorder %s37, %s40
    %p49 = scmp.eq.s32.totalorder %s18, 15
    %p50 = por %p48, %p49
    %p51 = scmp.ne.s32.totalorder %s40, %s41
    %p52 = scmp.eq.s32.totalorder %s18, 0
    %p53 = por %p51, %p52
    %p54 = scmp.ne.s32.totalorder %s40, %s41
    %p55 = scmp.eq.s32.totalorder %s19, 15
    %p56 = por %p54, %p55
    %p58 = scmp.ne.s32.totalorder %s41, %s57
    %p59 = scmp.eq.s32.totalorder %s19, 0
    %p60 = por %p58, %p59
    %s61 = sadd.s32 %s21, 1
    %s62 = sadd.s32 %s28, 1
    %s63 = ssub.s32 %s20, %s32
    %s64 = ssub.s32 %s61, %s62
    %s65 = sor.u32 %s63, %s64
    %p66 = scmp.eq.s32.totalorder %s65, 0
    %s68 = sadd.s32 %s67, 1
    %s69 = scalar_select %p66, %s67, %s68
    %p72 = pneg %p66
    %p73 = scmp.eq.s32.totalorder %s13, 15
    %p74 = por %p72, %p73
    %p75 = scmp.ne.s32.totalorder %s67, %s70
    %p76 = scmp.eq.s32.totalorder %s13, 0
    %p77 = por %p75, %p76
    %p78 = scmp.ne.s32.totalorder %s67, %s70
    %p79 = scmp.eq.s32.totalorder %s18, 15
    %p80 = por %p78, %p79
    %p81 = scmp.ne.s32.totalorder %s70, %s71
    %p82 = scmp.eq.s32.totalorder %s18, 0
    %p83 = por %p81, %p82
    %p84 = scmp.ne.s32.totalorder %s70, %s71
    %p85 = scmp.eq.s32.totalorder %s19, 15
    %p86 = por %p84, %p85
    %p88 = scmp.ne.s32.totalorder %s71, %s87
    %p89 = scmp.eq.s32.totalorder %s19, 0
    %p90 = por %p88, %p89
    %s91 = sadd.s32 %s21, 2
    %s92 = sadd.s32 %s28, 2
    %s93 = ssub.s32 %s20, %s32
    %s94 = ssub.s32 %s91, %s92
    %s95 = sor.u32 %s93, %s94
    %p96 = scmp.eq.s32.totalorder %s95, 0
    %s98 = sadd.s32 %s97, 1
    %s99 = scalar_select %p96, %s97, %s98
    %p102 = pneg %p96
    %p103 = scmp.eq.s32.totalorder %s13, 15
    %p104 = por %p102, %p103
    %p105 = scmp.ne.s32.totalorder %s97, %s100
    %p106 = scmp.eq.s32.totalorder %s13, 0
    %p107 = por %p105, %p106
    %p108 = scmp.ne.s32.totalorder %s97, %s100
    %p109 = scmp.eq.s32.totalorder %s18, 15
    %p110 = por %p108, %p109
    %p111 = scmp.ne.s32.totalorder %s100, %s101
    %p112 = scmp.eq.s32.totalorder %s18, 0
    %p113 = por %p111, %p112
    %p114 = scmp.ne.s32.totalorder %s100, %s101
    %p115 = scmp.eq.s32.totalorder %s19, 15
    %p116 = por %p114, %p115
    %p118 = scmp.ne.s32.totalorder %s101, %s117
    %p119 = scmp.eq.s32.totalorder %s19, 0
    %p120 = por %p118, %p119
    %s122 = sadd.s32 %s121, 1
    %p125 = scmp.eq.s32.totalorder %s13, 15
    %p126 = scmp.ne.s32.totalorder %s121, %s123
    %p127 = scmp.eq.s32.totalorder %s13, 0
    %p128 = por %p126, %p127
    %p129 = scmp.ne.s32.totalorder %s121, %s123
    %p130 = scmp.eq.s32.totalorder %s18, 15
    %p131 = por %p129, %p130
    %p132 = scmp.ne.s32.totalorder %s123, %s124
    %p133 = scmp.eq.s32.totalorder %s18, 0
    %p134 = por %p132, %p133
    %p135 = scmp.ne.s32.totalorder %s123, %s124
    %p136 = scmp.eq.s32.totalorder %s19, 15
    %p137 = por %p135, %p136
    %p139 = scmp.ne.s32.totalorder %s124, %s138
    %p140 = scmp.eq.s32.totalorder %s19, 0
    %p141 = por %p139, %p140
    %s142 = ssub.s32 %s20, %s32
    %s143 = ssub.s32 %s21, %s28
    %s144 = sor.u32 %s142, %s143
    %p145 = scmp.eq.s32.totalorder %s144, 0
    %s147 = sadd.s32 %s146, 1
    %s148 = scalar_select %p145, %s146, %s147
    %p151 = pneg %p145
    %p152 = scmp.eq.s32.totalorder %s13, 15
    %p153 = por %p151, %p152
    %p154 = scmp.ne.s32.totalorder %s146, %s149
    %p155 = scmp.eq.s32.totalorder %s13, 0
    %p156 = por %p154, %p155
    %p157 = scmp.ne.s32.totalorder %s146, %s149
    %p158 = scmp.eq.s32.totalorder %s18, 15
    %p159 = por %p157, %p158
    %p160 = scmp.ne.s32.totalorder %s149, %s150
    %p161 = scmp.eq.s32.totalorder %s18, 0
    %p162 = por %p160, %p161
    %p163 = scmp.ne.s32.totalorder %s149, %s150
    %p164 = scmp.eq.s32.totalorder %s19, 15
    %p165 = por %p163, %p164
    %p167 = scmp.ne.s32.totalorder %s150, %s166
    %p168 = scmp.eq.s32.totalorder %s19, 0
    %p169 = por %p167, %p168
    %s171 = sadd.s32 %s170, 1
    %p174 = scmp.eq.s32.totalorder %s13, 15
    %p175 = scmp.ne.s32.totalorder %s170, %s172
    %p176 = scmp.eq.s32.totalorder %s13, 0
    %p177 = por %p175, %p176
    %p178 = scmp.ne.s32.totalorder %s170, %s172
    %p179 = scmp.eq.s32.totalorder %s18, 15
    %p180 = por %p178, %p179
    %p181 = scmp.ne.s32.totalorder %s172, %s173
    %p182 = scmp.eq.s32.totalorder %s18, 0
    %p183 = por %p181, %p182
    %p184 = scmp.ne.s32.totalorder %s172, %s173
    %p185 = scmp.eq.s32.totalorder %s19, 15
    %p186 = por %p184, %p185
    %p188 = scmp.ne.s32.totalorder %s173, %s187
    %p189 = scmp.eq.s32.totalorder %s19, 0
    %p190 = por %p188, %p189
    %s192 = sadd.s32 %s191, 1
    %p195 = scmp.eq.s32.totalorder %s13, 15
    %p196 = scmp.ne.s32.totalorder %s191, %s193
    %p197 = scmp.eq.s32.totalorder %s13, 0
    %p198 = por %p196, %p197
    %p199 = scmp.ne.s32.totalorder %s191, %s193
    %p200 = scmp.eq.s32.totalorder %s18, 15
    %p201 = por %p199, %p200
    %p202 = scmp.ne.s32.totalorder %s193, %s194
    %p203 = scmp.eq.s32.totalorder %s18, 0
    %p204 = por %p202, %p203
    %p205 = scmp.ne.s32.totalorder %s193, %s194
    %p206 = scmp.eq.s32.totalorder %s19, 15
    %p207 = por %p205, %p206
    %p209 = scmp.ne.s32.totalorder %s194, %s208
    %p210 = scmp.eq.s32.totalorder %s19, 0
    %p211 = por %p209, %p210
    %p212 = scmp.le.s32.totalorder 1, %s13
    %p213 = scmp.lt.s32.totalorder %s13, 17
    %p214 = pnand %p212, %p213
    %p215 = pneg %p214
    // Predicated region
    $region9: #{conv_block_forward.4} parent=5 // pred_check
      _
    $region10: #{conv_block_forward.4} parent=5 // pred_check_branch
      %217 = sbr.rel (%p214) target = $region12
    $region11: #{conv_block_forward.4} parent=5 // pred_region
      %s218 = ssub.s32 %s13, 1
      // Predicated region
      $region13: #{conv_block_forward.4} parent=11 // pred_check
        %p219 = pneg %p134
      $region14: #{conv_block_forward.4} parent=11 // pred_check_branch
        %221 = sbr.rel (%p219) target = $region16
      $region15: #{conv_block_forward.4} parent=11 // pred_region
        _
      $region16: #{conv_block_forward.4} parent=11 // pred_fallthru
        _
    $region12: #{conv_block_forward.4} parent=5 // pred_fallthru
      _
    %p222 = scmp.lt.s32.totalorder %s13, 16
    // Predicated region
    $region17: #{conv_block_forward.4} parent=5 // pred_check
      %p223 = pneg %p222
    $region18: #{conv_block_forward.4} parent=5 // pred_check_branch
      %225 = sbr.rel (%p223) target = $region20
    $region19: #{conv_block_forward.4} parent=5 // pred_region
      // Predicated region
      $region21: #{conv_block_forward.4} parent=19 // pred_check
        %p226 = pneg %p47
      $region22: #{conv_block_forward.4} parent=19 // pred_check_branch
        %228 = sbr.rel (%p226) target = $region24
      $region23: #{conv_block_forward.4} parent=19 // pred_region
        %p229 = scmp.lt.s32.totalorder %s20, 1
        %s230 = scalar_select %p229, %s20, 1
        %p231 = scmp.lt.s32.totalorder %s21, 9
        %s232 = scalar_select %p231, %s21, 9
        %s233 = smul.addr %s232, 13
        %s234 = smul.addr %s230, 130
        %s235 = sadd.s32 %s233, %s234
        %s236 = smul.addr %s235, 8
        %s237 = scalar_lea.vmem %s0, %s236
      $region24: #{conv_block_forward.4} parent=19 // pred_fallthru
        _
      // Predicated region
      $region25: #{conv_block_forward.4} parent=19 // pred_check
        %p238 = pneg %p77
      $region26: #{conv_block_forward.4} parent=19 // pred_check_branch
        %240 = sbr.rel (%p238) target = $region28
      $region27: #{conv_block_forward.4} parent=19 // pred_region
        %s241 = sadd.s32 %s21, 1
        %p242 = scmp.lt.s32.totalorder %s20, 1
        %s243 = scalar_select %p242, %s20, 1
        %p244 = scmp.lt.s32.totalorder %s241, 9
        %s245 = scalar_select %p244, %s241, 9
        %s246 = smul.addr %s245, 13
        %s247 = smul.addr %s243, 130
        %s248 = sadd.s32 %s246, %s247
        %s249 = smul.addr %s248, 8
        %s250 = scalar_lea.vmem %s1, %s249
        %s251 = sadd.s32 %s21, 1
      $region28: #{conv_block_forward.4} parent=19 // pred_fallthru
        _
      // Predicated region
      $region29: #{conv_block_forward.4} parent=19 // pred_check
        %p252 = pneg %p107
      $region30: #{conv_block_forward.4} parent=19 // pred_check_branch
        %254 = sbr.rel (%p252) target = $region32
      $region31: #{conv_block_forward.4} parent=19 // pred_region
        %s255 = sadd.s32 %s21, 2
        %p256 = scmp.lt.s32.totalorder %s20, 1
        %s257 = scalar_select %p256, %s20, 1
        %p258 = scmp.lt.s32.totalorder %s255, 9
        %s259 = scalar_select %p258, %s255, 9
        %s260 = smul.addr %s259, 13
        %s261 = smul.addr %s257, 130
        %s262 = sadd.s32 %s260, %s261
        %s263 = smul.addr %s262, 8
        %s264 = scalar_lea.vmem %s2, %s263
        %s265 = sadd.s32 %s21, 2
      $region32: #{conv_block_forward.4} parent=19 // pred_fallthru
        _
    $region20: #{conv_block_forward.4} parent=5 // pred_fallthru
      _
    %p266 = scmp.le.s32.totalorder 1, %s13
    %p267 = scmp.lt.s32.totalorder %s13, 17
    %p268 = pnand %p266, %p267
    %p269 = pneg %p268
    // Predicated region
    $region33: #{conv_block_forward.4} parent=5 // pred_check
      _
    $region34: #{conv_block_forward.4} parent=5 // pred_check_branch
      %271 = sbr.rel (%p268) target = $region36
    $region35: #{conv_block_forward.4} parent=5 // pred_region
      %s272 = ssub.s32 %s13, 1
      %p273 = scmp.lt.s32.totalorder %s22, 1
      %s274 = scalar_select %p273, %s22, 1
      %p275 = scmp.lt.s32.totalorder %s23, 9
      %s276 = scalar_select %p275, %s23, 9
      %s277 = smul.addr %s276, 13
      %s278 = smul.addr %s274, 130
      %s279 = sadd.s32 %s277, %s278
      %s280 = smul.addr %s279, 8
      %s281 = scalar_lea.vmem %s0, %s280
      %p282 = pneg %p53
      %p283 = pneg %p50
      %s284 = sadd.s32 %s23, 1
      %p285 = scmp.lt.s32.totalorder %s22, 1
      %s286 = scalar_select %p285, %s22, 1
      %p287 = scmp.lt.s32.totalorder %s284, 9
      %s288 = scalar_select %p287, %s284, 9
      %s289 = smul.addr %s288, 13
      %s290 = smul.addr %s286, 130
      %s291 = sadd.s32 %s289, %s290
      %s292 = smul.addr %s291, 8
      %s293 = scalar_lea.vmem %s1, %s292
      %p294 = pneg %p83
      %p295 = pneg %p80
      %s296 = sadd.s32 %s23, 2
      %p297 = scmp.lt.s32.totalorder %s22, 1
      %s298 = scalar_select %p297, %s22, 1
      %p299 = scmp.lt.s32.totalorder %s296, 9
      %s300 = scalar_select %p299, %s296, 9
      %s301 = smul.addr %s300, 13
      %s302 = smul.addr %s298, 130
      %s303 = sadd.s32 %s301, %s302
      %s304 = smul.addr %s303, 8
      %s305 = scalar_lea.vmem %s2, %s304
      %p306 = pneg %p113
      %p307 = pneg %p110
      %p308 = pneg %p134
      %p309 = pneg %p131
      %p310 = pneg %p162
      %p311 = pneg %p159
      %p312 = scmp.lt.s32.totalorder %s22, 1
      %s313 = scalar_select %p312, %s22, 1
      %p314 = scmp.lt.s32.totalorder %s23, 7
      %s315 = scalar_select %p314, %s23, 7
      %s316 = smul.addr %s315, 10
      %s317 = smul.addr %s313, 80
      %s318 = sadd.s32 %s316, %s317
      %s319 = smul.addr %s318, 8
      %s320 = scalar_lea.vmem %s4, %s319
      %p321 = pneg %p183
      %p322 = pneg %p180
      %p323 = pneg %p204
      %p324 = pneg %p201
      %p325 = scmp.lt.s32.totalorder %s22, 1
      %s326 = scalar_select %p325, %s22, 1
      %p327 = scmp.lt.s32.totalorder %s23, 9
      %s328 = scalar_select %p327, %s23, 9
      %s329 = smul.addr %s328, 13
      %s330 = smul.addr %s326, 130
      %s331 = sadd.s32 %s329, %s330
      %s332 = smul.addr %s331, 8
      %s333 = scalar_lea.vmem %s0, %s332
      %s334 = sadd.s32 %s23, 1
      %p335 = scmp.lt.s32.totalorder %s22, 1
      %s336 = scalar_select %p335, %s22, 1
      %p337 = scmp.lt.s32.totalorder %s334, 9
      %s338 = scalar_select %p337, %s334, 9
      %s339 = smul.addr %s338, 13
      %s340 = smul.addr %s336, 130
      %s341 = sadd.s32 %s339, %s340
      %s342 = smul.addr %s341, 8
      %s343 = scalar_lea.vmem %s1, %s342
      %s344 = sadd.s32 %s23, 1
      %s345 = sadd.s32 %s23, 2
      %p346 = scmp.lt.s32.totalorder %s22, 1
      %s347 = scalar_select %p346, %s22, 1
      %p348 = scmp.lt.s32.totalorder %s345, 9
      %s349 = scalar_select %p348, %s345, 9
      %s350 = smul.addr %s349, 13
      %s351 = smul.addr %s347, 130
      %s352 = sadd.s32 %s350, %s351
      %s353 = smul.addr %s352, 8
      %s354 = scalar_lea.vmem %s2, %s353
      %s355 = sadd.s32 %s23, 2
      %p356 = scmp.lt.s32.totalorder %s22, 1
      %s357 = scalar_select %p356, %s22, 1
      %p358 = scmp.lt.s32.totalorder %s23, 7
      %s359 = scalar_select %p358, %s23, 7
      %s360 = smul.addr %s359, 10
      %s361 = smul.addr %s357, 80
      %s362 = sadd.s32 %s360, %s361
      %s363 = smul.addr %s362, 8
      %s364 = scalar_lea.vmem %s4, %s363
      %p365 = scmp.eq.s32.totalorder %s22, 0
      %p366 = scmp.eq.s32.totalorder %s23, 0
      %p367 = pnand %p365, %p366
      %p368 = pneg %p367
      // Predicated region
      $region37: #{conv_block_forward.4} parent=35 // pred_check
        _
      $region38: #{conv_block_forward.4} parent=35 // pred_check_branch
        %370 = sbr.rel (%p367) target = $region40
      $region39: #{conv_block_forward.4} parent=35 // pred_region
        %371 = vst [vmem:[%s5] sm:$0x1] 0.0
        %372 = vst [vmem:[%s6] sm:$0x1] 0.0
      $region40: #{conv_block_forward.4} parent=35 // pred_fallthru
        _
      %373 = vst [vmem:[#allocation2] sm:$0xff] 0.0
      %374 = vst [vmem:[#allocation2 + $0x8] sm:$0xff] 0.0
      %375 = vst [vmem:[#allocation2 + $0x10] sm:$0xff] 0.0
      %376 = vst [vmem:[#allocation2 + $0x18] sm:$0xff] 0.0
      %377 = vst [vmem:[#allocation2 + $0x20] sm:$0xff] 0.0
      %378 = vst [vmem:[#allocation2 + $0x28] sm:$0xff] 0.0
      %379 = vst [vmem:[#allocation2 + $0x30] sm:$0xff] 0.0
      %380 = vst [vmem:[#allocation2 + $0x38] sm:$0xff] 0.0
      %381 = vst [vmem:[#allocation2 + $0x40] sm:$0xff] 0.0
      %382 = vst [vmem:[#allocation2 + $0x48] sm:$0xff] 0.0
      %v383 = vld [vmem:[%s333] sm:$0xff]
      %v384 = vld [vmem:[%s333 + $0x8] sm:$0xff]
      %v385 = vld [vmem:[%s333 + $0x10] sm:$0xff]
      %v386 = vld [vmem:[%s333 + $0x18] sm:$0xff]
      %v387 = vld [vmem:[%s333 + $0x20] sm:$0xff]
      %v388 = vld [vmem:[%s333 + $0x28] sm:$0xff]
      %v389 = vld [vmem:[%s333 + $0x30] sm:$0xff]
      %v390 = vld [vmem:[%s333 + $0x38] sm:$0xff]
      %v391 = vld [vmem:[%s333 + $0x40] sm:$0xff]
      %v392 = vld [vmem:[%s333 + $0x48] sm:$0xff]
      %v393 = vld [vmem:[#allocation2] sm:$0xff]
      %v394 = vld [vmem:[#allocation2 + $0x8] sm:$0xff]
      %v395 = vld [vmem:[#allocation2 + $0x10] sm:$0xff]
      %v396 = vld [vmem:[#allocation2 + $0x18] sm:$0xff]
      %v397 = vld [vmem:[#allocation2 + $0x20] sm:$0xff]
      %v398 = vld [vmem:[#allocation2 + $0x28] sm:$0xff]
      %v399 = vld [vmem:[#allocation2 + $0x30] sm:$0xff]
      %v400 = vld [vmem:[#allocation2 + $0x38] sm:$0xff]
      %v401 = vld [vmem:[#allocation2 + $0x40] sm:$0xff]
      %v402 = vld [vmem:[#allocation2 + $0x48] sm:$0xff]
      %v403 = vld [vmem:[%s3] sm:$0xff]
      %vm404 = vcmask 64512
      %v406 = vsel %vm404, %v383, 0
      %v409 = vsel %vm404, %v384, 0
      %v412 = vsel %vm404, %v385, 0
      %v415 = vsel %vm404, %v386, 0
      %v418 = vsel %vm404, %v387, 0
      %v421 = vsel %vm404, %v388, 0
      %v424 = vsel %vm404, %v389, 0
      %v427 = vsel %vm404, %v390, 0
      %v430 = vsel %vm404, %v391, 0
      %v433 = vsel %vm404, %v392, 0
      %435 = vmatpush.msra.mxu0 0.0
      %436 = vmatpush.msra.mxu0 0.0
      %437 = vmatpush.msra.mxu0 0.0
      %438 = vmatpush.msra.mxu0 0.0
      %439 = vmatpush.msra.mxu0 0.0
      %440 = vmatpush.msra.mxu0 0.0
      %441 = vmatpush.msra.mxu0 0.0
      %442 = vmatpush.msra.mxu0 0.0
      %443 = vmatpush.msra.mxu0 0.0
      %444 = vmatpush.msra.mxu0 0.0
      %445 = vmatpush.msra.mxu0 0.0
      %446 = vmatpush.msra.mxu0 0.0
      %447 = vmatpush.msra.mxu0 0.0
      %448 = vmatpush.msra.mxu0 0.0
      %449 = vmatpush.msra.mxu0 0.0
      %450 = vmatpush.msra.mxu0 %v403
      %451 = vmatmul.f32.gmra.mxu0 %v406
      %v452 = vpop.f32.mrf.mxu0
      %v453 = vadd.f32 0.0, %v452
      %454 = vmatmul.f32.gmra.mxu0 %v409
      %v455 = vpop.f32.mrf.mxu0
      %v456 = vadd.f32 0.0, %v455
      %457 = vmatmul.f32.gmra.mxu0 %v412
      %v458 = vpop.f32.mrf.mxu0
      %v459 = vadd.f32 0.0, %v458
      %460 = vmatmul.f32.gmra.mxu0 %v415
      %v461 = vpop.f32.mrf.mxu0
      %v462 = vadd.f32 0.0, %v461
      %463 = vmatmul.f32.gmra.mxu0 %v418
      %v464 = vpop.f32.mrf.mxu0
      %v465 = vadd.f32 0.0, %v464
      %466 = vmatmul.f32.gmra.mxu0 %v421
      %v467 = vpop.f32.mrf.mxu0
      %v468 = vadd.f32 0.0, %v467
      %469 = vmatmul.f32.gmra.mxu0 %v424
      %v470 = vpop.f32.mrf.mxu0
      %v471 = vadd.f32 0.0, %v470
      %472 = vmatmul.f32.gmra.mxu0 %v427
      %v473 = vpop.f32.mrf.mxu0
      %v474 = vadd.f32 0.0, %v473
      %475 = vmatmul.f32.gmra.mxu0 %v430
      %v476 = vpop.f32.mrf.mxu0
      %v477 = vadd.f32 0.0, %v476
      %478 = vmatmul.f32.gmra.mxu0 %v433
      %v479 = vpop.f32.mrf.mxu0
      %v480 = vadd.f32 0.0, %v479
      %481 = vdwg.mxu0
      %v482 = vadd.f32 %v393, %v453
      %v483 = vadd.f32 %v394, %v456
      %v484 = vadd.f32 %v395, %v459
      %v485 = vadd.f32 %v396, %v462
      %v486 = vadd.f32 %v397, %v465
      %v487 = vadd.f32 %v398, %v468
      %v488 = vadd.f32 %v399, %v471
      %v489 = vadd.f32 %v400, %v474
      %v490 = vadd.f32 %v401, %v477
      %v491 = vadd.f32 %v402, %v480
      %492 = vst [vmem:[#allocation2] sm:$0xff] %v482
      %493 = vst [vmem:[#allocation2 + $0x8] sm:$0xff] %v483
      %494 = vst [vmem:[#allocation2 + $0x10] sm:$0xff] %v484
      %495 = vst [vmem:[#allocation2 + $0x18] sm:$0xff] %v485
      %496 = vst [vmem:[#allocation2 + $0x20] sm:$0xff] %v486
      %497 = vst [vmem:[#allocation2 + $0x28] sm:$0xff] %v487
      %498 = vst [vmem:[#allocation2 + $0x30] sm:$0xff] %v488
      %499 = vst [vmem:[#allocation2 + $0x38] sm:$0xff] %v489
      %500 = vst [vmem:[#allocation2 + $0x40] sm:$0xff] %v490
      %501 = vst [vmem:[#allocation2 + $0x48] sm:$0xff] %v491
      %v502 = vld [vmem:[%s333 + $0x1] sm:$0xff]
      %v503 = vld [vmem:[%s333 + $0x9] sm:$0xff]
      %v504 = vld [vmem:[%s333 + $0x11] sm:$0xff]
      %v505 = vld [vmem:[%s333 + $0x19] sm:$0xff]
      %v506 = vld [vmem:[%s333 + $0x21] sm:$0xff]
      %v507 = vld [vmem:[%s333 + $0x29] sm:$0xff]
      %v508 = vld [vmem:[%s333 + $0x31] sm:$0xff]
      %v509 = vld [vmem:[%s333 + $0x39] sm:$0xff]
      %v510 = vld [vmem:[%s333 + $0x41] sm:$0xff]
      %v511 = vld [vmem:[%s333 + $0x49] sm:$0xff]
      %v512 = vld [vmem:[#allocation2] sm:$0xff]
      %v513 = vld [vmem:[#allocation2 + $0x8] sm:$0xff]
      %v514 = vld [vmem:[#allocation2 + $0x10] sm:$0xff]
      %v515 = vld [vmem:[#allocation2 + $0x18] sm:$0xff]
      %v516 = vld [vmem:[#allocation2 + $0x20] sm:$0xff]
      %v517 = vld [vmem:[#allocation2 + $0x28] sm:$0xff]
      %v518 = vld [vmem:[#allocation2 + $0x30] sm:$0xff]
      %v519 = vld [vmem:[#allocation2 + $0x38] sm:$0xff]
      %v520 = vld [vmem:[#allocation2 + $0x40] sm:$0xff]
      %v521 = vld [vmem:[#allocation2 + $0x48] sm:$0xff]
      %s522 = scalar_lea.vmem %s3, 8
      %v523 = vld [vmem:[%s522] sm:$0xff]
      %v525 = vsel %vm404, %v502, 0
      %v528 = vsel %vm404, %v503, 0
      %v531 = vsel %vm404, %v504, 0
      %v534 = vsel %vm404, %v505, 0
      %v537 = vsel %vm404, %v506, 0
      %v540 = vsel %vm404, %v507, 0
      %v543 = vsel %vm404, %v508, 0
      %v546 = vsel %vm404, %v509, 0
      %v549 = vsel %vm404, %v510, 0
      %v552 = vsel %vm404, %v511, 0
      %554 = vmatpush.msra.mxu0 0.0
      %555 = vmatpush.msra.mxu0 0.0
      %556 = vmatpush.msra.mxu0 0.0
      %557 = vmatpush.msra.mxu0 0.0
      %558 = vmatpush.msra.mxu0 0.0
      %559 = vmatpush.msra.mxu0 0.0
      %560 = vmatpush.msra.mxu0 0.0
      %561 = vmatpush.msra.mxu0 0.0
      %562 = vmatpush.msra.mxu0 0.0
      %563 = vmatpush.msra.mxu0 0.0
      %564 = vmatpush.msra.mxu0 0.0
      %565 = vmatpush.msra.mxu0 0.0
      %566 = vmatpush.msra.mxu0 0.0
      %567 = vmatpush.msra.mxu0 0.0
      %568 = vmatpush.msra.mxu0 0.0
      %569 = vmatpush.msra.mxu0 %v523
      %570 = vmatmul.f32.gmra.mxu0 %v525
      %v571 = vpop.f32.mrf.mxu0
      %v572 = vadd.f32 0.0, %v571
      %573 = vmatmul.f32.gmra.mxu0 %v528
      %v574 = vpop.f32.mrf.mxu0
      %v575 = vadd.f32 0.0, %v574
      %576 = vmatmul.f32.gmra.mxu0 %v531
      %v577 = vpop.f32.mrf.mxu0
      %v578 = vadd.f32 0.0, %v577
      %579 = vmatmul.f32.gmra.mxu0 %v534
      %v580 = vpop.f32.mrf.mxu0
      %v581 = vadd.f32 0.0, %v580
      %582 = vmatmul.f32.gmra.mxu0 %v537
      %v583 = vpop.f32.mrf.mxu0
      %v584 = vadd.f32 0.0, %v583
      %585 = vmatmul.f32.gmra.mxu0 %v540
      %v586 = vpop.f32.mrf.mxu0
      %v587 = vadd.f32 0.0, %v586
      %588 = vmatmul.f32.gmra.mxu0 %v543
      %v589 = vpop.f32.mrf.mxu0
      %v590 = vadd.f32 0.0, %v589
      %591 = vmatmul.f32.gmra.mxu0 %v546
      %v592 = vpop.f32.mrf.mxu0
      %v593 = vadd.f32 0.0, %v592
      %594 = vmatmul.f32.gmra.mxu0 %v549
      %v595 = vpop.f32.mrf.mxu0
      %v596 = vadd.f32 0.0, %v595
      %597 = vmatmul.f32.gmra.mxu0 %v552
      %v598 = vpop.f32.mrf.mxu0
      %v599 = vadd.f32 0.0, %v598
      %600 = vdwg.mxu0
      %v601 = vadd.f32 %v512, %v572
      %v602 = vadd.f32 %v513, %v575
      %v603 = vadd.f32 %v514, %v578
      %v604 = vadd.f32 %v515, %v581
      %v605 = vadd.f32 %v516, %v584
      %v606 = vadd.f32 %v517, %v587
      %v607 = vadd.f32 %v518, %v590
      %v608 = vadd.f32 %v519, %v593
      %v609 = vadd.f32 %v520, %v596
      %v610 = vadd.f32 %v521, %v599
      %611 = vst [vmem:[#allocation2] sm:$0xff] %v601
      %612 = vst [vmem:[#allocation2 + $0x8] sm:$0xff] %v602
      %613 = vst [vmem:[#allocation2 + $0x10] sm:$0xff] %v603
      %614 = vst [vmem:[#allocation2 + $0x18] sm:$0xff] %v604
      %615 = vst [vmem:[#allocation2 + $0x20] sm:$0xff] %v605
      %616 = vst [vmem:[#allocation2 + $0x28] sm:$0xff] %v606
      %617 = vst [vmem:[#allocation2 + $0x30] sm:$0xff] %v607
      %618 = vst [vmem:[#allocation2 + $0x38] sm:$0xff] %v608
      %619 = vst [vmem:[#allocation2 + $0x40] sm:$0xff] %v609
      %620 = vst [vmem:[#allocation2 + $0x48] sm:$0xff] %v610
      %v621 = vld [vmem:[%s333 + $0x2] sm:$0xff]
      %v622 = vld [vmem:[%s333 + $0xa] sm:$0xff]
      %v623 = vld [vmem:[%s333 + $0x12] sm:$0xff]
      %v624 = vld [vmem:[%s333 + $0x1a] sm:$0xff]
      %v625 = vld [vmem:[%s333 + $0x22] sm:$0xff]
      %v626 = vld [vmem:[%s333 + $0x2a] sm:$0xff]
      %v627 = vld [vmem:[%s333 + $0x32] sm:$0xff]
      %v628 = vld [vmem:[%s333 + $0x3a] sm:$0xff]
      %v629 = vld [vmem:[%s333 + $0x42] sm:$0xff]
      %v630 = vld [vmem:[%s333 + $0x4a] sm:$0xff]
      %v631 = vld [vmem:[#allocation2] sm:$0xff]
      %v632 = vld [vmem:[#allocation2 + $0x8] sm:$0xff]
      %v633 = vld [vmem:[#allocation2 + $0x10] sm:$0xff]
      %v634 = vld [vmem:[#allocation2 + $0x18] sm:$0xff]
      %v635 = vld [vmem:[#allocation2 + $0x20] sm:$0xff]
      %v636 = vld [vmem:[#allocation2 + $0x28] sm:$0xff]
      %v637 = vld [vmem:[#allocation2 + $0x30] sm:$0xff]
      %v638 = vld [vmem:[#allocation2 + $0x38] sm:$0xff]
      %v639 = vld [vmem:[#allocation2 + $0x40] sm:$0xff]
      %v640 = vld [vmem:[#allocation2 + $0x48] sm:$0xff]
      %s641 = scalar_lea.vmem %s3, 16
      %v642 = vld [vmem:[%s641] sm:$0xff]
      %v644 = vsel %vm404, %v621, 0
      %v647 = vsel %vm404, %v622, 0
      %v650 = vsel %vm404, %v623, 0
      %v653 = vsel %vm404, %v624, 0
      %v656 = vsel %vm404, %v625, 0
      %v659 = vsel %vm404, %v626, 0
      %v662 = vsel %vm404, %v627, 0
      %v665 = vsel %vm404, %v628, 0
      %v668 = vsel %vm404, %v629, 0
      %v671 = vsel %vm404, %v630, 0
      %673 = vmatpush.msra.mxu0 0.0
      %674 = vmatpush.msra.mxu0 0.0
      %675 = vmatpush.msra.mxu0 0.0
      %676 = vmatpush.msra.mxu0 0.0
      %677 = vmatpush.msra.mxu0 0.0
      %678 = vmatpush.msra.mxu0 0.0
      %679 = vmatpush.msra.mxu0 0.0
      %680 = vmatpush.msra.mxu0 0.0
      %681 = vmatpush.msra.mxu0 0.0
      %682 = vmatpush.msra.mxu0 0.0
      %683 = vmatpush.msra.mxu0 0.0
      %684 = vmatpush.msra.mxu0 0.0
      %685 = vmatpush.msra.mxu0 0.0
      %686 = vmatpush.msra.mxu0 0.0
      %687 = vmatpush.msra.mxu0 0.0
      %688 = vmatpush.msra.mxu0 %v642
      %689 = vmatmul.f32.gmra.mxu0 %v644
      %v690 = vpop.f32.mrf.mxu0
      %v691 = vadd.f32 0.0, %v690
      %692 = vmatmul.f32.gmra.mxu0 %v647
      %v693 = vpop.f32.mrf.mxu0
      %v694 = vadd.f32 0.0, %v693
      %695 = vmatmul.f32.gmra.mxu0 %v650
      %v696 = vpop.f32.mrf.mxu0
      %v697 = vadd.f32 0.0, %v696
      %698 = vmatmul.f32.gmra.mxu0 %v653
      %v699 = vpop.f32.mrf.mxu0
      %v700 = vadd.f32 0.0, %v699
      %701 = vmatmul.f32.gmra.mxu0 %v656
      %v702 = vpop.f32.mrf.mxu0
      %v703 = vadd.f32 0.0, %v702
      %704 = vmatmul.f32.gmra.mxu0 %v659
      %v705 = vpop.f32.mrf.mxu0
      %v706 = vadd.f32 0.0, %v705
      %707 = vmatmul.f32.gmra.mxu0 %v662
      %v708 = vpop.f32.mrf.mxu0
      %v709 = vadd.f32 0.0, %v708
      %710 = vmatmul.f32.gmra.mxu0 %v665
      %v711 = vpop.f32.mrf.mxu0
      %v712 = vadd.f32 0.0, %v711
      %713 = vmatmul.f32.gmra.mxu0 %v668
      %v714 = vpop.f32.mrf.mxu0
      %v715 = vadd.f32 0.0, %v714
      %716 = vmatmul.f32.gmra.mxu0 %v671
      %v717 = vpop.f32.mrf.mxu0
      %v718 = vadd.f32 0.0, %v717
      %719 = vdwg.mxu0
      %v720 = vadd.f32 %v631, %v691
      %v721 = vadd.f32 %v632, %v694
      %v722 = vadd.f32 %v633, %v697
      %v723 = vadd.f32 %v634, %v700
      %v724 = vadd.f32 %v635, %v703
      %v725 = vadd.f32 %v636, %v706
      %v726 = vadd.f32 %v637, %v709
      %v727 = vadd.f32 %v638, %v712
      %v728 = vadd.f32 %v639, %v715
      %v729 = vadd.f32 %v640, %v718
      %730 = vst [vmem:[#allocation2] sm:$0xff] %v720
      %731 = vst [vmem:[#allocation2 + $0x8] sm:$0xff] %v721
      %732 = vst [vmem:[#allocation2 + $0x10] sm:$0xff] %v722
      %733 = vst [vmem:[#allocation2 + $0x18] sm:$0xff] %v723
      %734 = vst [vmem:[#allocation2 + $0x20] sm:$0xff] %v724
      %735 = vst [vmem:[#allocation2 + $0x28] sm:$0xff] %v725
      %736 = vst [vmem:[#allocation2 + $0x30] sm:$0xff] %v726
      %737 = vst [vmem:[#allocation2 + $0x38] sm:$0xff] %v727
      %738 = vst [vmem:[#allocation2 + $0x40] sm:$0xff] %v728
      %739 = vst [vmem:[#allocation2 + $0x48] sm:$0xff] %v729
      %v740 = vld [vmem:[%s333 + $0xa] sm:$0xff]
      %v741 = vld [vmem:[%s333 + $0x12] sm:$0xff]
      %v742 = vld [vmem:[%s333 + $0x1a] sm:$0xff]
      %v743 = vld [vmem:[%s333 + $0x22] sm:$0xff]
      %v744 = vld [vmem:[%s333 + $0x2a] sm:$0xff]
      %v745 = vld [vmem:[%s333 + $0x32] sm:$0xff]
      %v746 = vld [vmem:[%s333 + $0x3a] sm:$0xff]
      %v747 = vld [vmem:[%s333 + $0x42] sm:$0xff]
      %v748 = vld [vmem:[%s333 + $0x4a] sm:$0xff]
      %v749 = vld [vmem:[%s333 + $0x52] sm:$0xff]
      %v750 = vld [vmem:[#allocation2] sm:$0xff]
      %v751 = vld [vmem:[#allocation2 + $0x8] sm:$0xff]
      %v752 = vld [vmem:[#allocation2 + $0x10] sm:$0xff]
      %v753 = vld [vmem:[#allocation2 + $0x18] sm:$0xff]
      %v754 = vld [vmem:[#allocation2 + $0x20] sm:$0xff]
      %v755 = vld [vmem:[#allocation2 + $0x28] sm:$0xff]
      %v756 = vld [vmem:[#allocation2 + $0x30] sm:$0xff]
      %v757 = vld [vmem:[#allocation2 + $0x38] sm:$0xff]
      %v758 = vld [vmem:[#allocation2 + $0x40] sm:$0xff]
      %v759 = vld [vmem:[#allocation2 + $0x48] sm:$0xff]
      %s760 = scalar_lea.vmem %s3, 24
      %v761 = vld [vmem:[%s760] sm:$0xff]
      %v763 = vsel %vm404, %v740, 0
      %v766 = vsel %vm404, %v741, 0
      %v769 = vsel %vm404, %v742, 0
      %v772 = vsel %vm404, %v743, 0
      %v775 = vsel %vm404, %v744, 0
      %v778 = vsel %vm404, %v745, 0
      %v781 = vsel %vm404, %v746, 0
      %v784 = vsel %vm404, %v747, 0
      %v787 = vsel %vm404, %v748, 0
      %v790 = vsel %vm404, %v749, 0
      %792 = vmatpush.msra.mxu0 0.0
      %793 = vmatpush.msra.mxu0 0.0
      %794 = vmatpush.msra.mxu0 0.0
      %795 = vmatpush.msra.mxu0 0.0
      %796 = vmatpush.msra.mxu0 0.0
      %797 = vmatpush.msra.mxu0 0.0
      %798 = vmatpush.msra.mxu0 0.0
      %799 = vmatpush.msra.mxu0 0.0
      %800 = vmatpush.msra.mxu0 0.0
      %801 = vmatpush.msra.mxu0 0.0
      %802 = vmatpush.msra.mxu0 0.0
      %803 = vmatpush.msra.mxu0 0.0
      %804 = vmatpush.msra.mxu0 0.0
      %805 = vmatpush.msra.mxu0 0.0
      %806 = vmatpush.msra.mxu0 0.0
      %807 = vmatpush.msra.mxu0 %v761
      %808 = vmatmul.f32.gmra.mxu0 %v763
      %v809 = vpop.f32.mrf.mxu0
      %v810 = vadd.f32 0.0, %v809
      %811 = vmatmul.f32.gmra.mxu0 %v766
      %v812 = vpop.f32.mrf.mxu0
      %v813 = vadd.f32 0.0, %v812
      %814 = vmatmul.f32.gmra.mxu0 %v769
      %v815 = vpop.f32.mrf.mxu0
      %v816 = vadd.f32 0.0, %v815
      %817 = vmatmul.f32.gmra.mxu0 %v772
      %v818 = vpop.f32.mrf.mxu0
      %v819 = vadd.f32 0.0, %v818
      %820 = vmatmul.f32.gmra.mxu0 %v775
      %v821 = vpop.f32.mrf.mxu0
      %v822 = vadd.f32 0.0, %v821
      %823 = vmatmul.f32.gmra.mxu0 %v778
      %v824 = vpop.f32.mrf.mxu0
      %v825 = vadd.f32 0.0, %v824
      %826 = vmatmul.f32.gmra.mxu0 %v781
      %v827 = vpop.f32.mrf.mxu0
      %v828 = vadd.f32 0.0, %v827
      %829 = vmatmul.f32.gmra.mxu0 %v784
      %v830 = vpop.f32.mrf.mxu0
      %v831 = vadd.f32 0.0, %v830
      %832 = vmatmul.f32.gmra.mxu0 %v787
      %v833 = vpop.f32.mrf.mxu0
      %v834 = vadd.f32 0.0, %v833
      %835 = vmatmul.f32.gmra.mxu0 %v790
      %v836 = vpop.f32.mrf.mxu0
      %v837 = vadd.f32 0.0, %v836
      %838 = vdwg.mxu0
      %v839 = vadd.f32 %v750, %v810
      %v840 = vadd.f32 %v751, %v813
      %v841 = vadd.f32 %v752, %v816
      %v842 = vadd.f32 %v753, %v819
      %v843 = vadd.f32 %v754, %v822
      %v844 = vadd.f32 %v755, %v825
      %v845 = vadd.f32 %v756, %v828
      %v846 = vadd.f32 %v757, %v831
      %v847 = vadd.f32 %v758, %v834
      %v848 = vadd.f32 %v759, %v837
      %849 = vst [vmem:[#allocation2] sm:$0xff] %v839
      %850 = vst [vmem:[#allocation2 + $0x8] sm:$0xff] %v840
      %851 = vst [vmem:[#allocation2 + $0x10] sm:$0xff] %v841
      %852 = vst [vmem:[#allocation2 + $0x18] sm:$0xff] %v842
      %853 = vst [vmem:[#allocation2 + $0x20] sm:$0xff] %v843
      %854 = vst [vmem:[#allocation2 + $0x28] sm:$0xff] %v844
      %855 = vst [vmem:[#allocation2 + $0x30] sm:$0xff] %v845
      %856 = vst [vmem:[#allocation2 + $0x38] sm:$0xff] %v846
      %857 = vst [vmem:[#allocation2 + $0x40] sm:$0xff] %v847
      %858 = vst [vmem:[#allocation2 + $0x48] sm:$0xff] %v848
      %v859 = vld [vmem:[%s333 + $0xb] sm:$0xff]
      %v860 = vld [vmem:[%s333 + $0x13] sm:$0xff]
      %v861 = vld [vmem:[%s333 + $0x1b] sm:$0xff]
      %v862 = vld [vmem:[%s333 + $0x23] sm:$0xff]
      %v863 = vld [vmem:[%s333 + $0x2b] sm:$0xff]
      %v864 = vld [vmem:[%s333 + $0x33] sm:$0xff]
      %v865 = vld [vmem:[%s333 + $0x3b] sm:$0xff]
      %v866 = vld [vmem:[%s333 + $0x43] sm:$0xff]
      %v867 = vld [vmem:[%s333 + $0x4b] sm:$0xff]
      %v868 = vld [vmem:[%s333 + $0x53] sm:$0xff]
      %v869 = vld [vmem:[#allocation2] sm:$0xff]
      %v870 = vld [vmem:[#allocation2 + $0x8] sm:$0xff]
      %v871 = vld [vmem:[#allocation2 + $0x10] sm:$0xff]
      %v872 = vld [vmem:[#allocation2 + $0x18] sm:$0xff]
      %v873 = vld [vmem:[#allocation2 + $0x20] sm:$0xff]
      %v874 = vld [vmem:[#allocation2 + $0x28] sm:$0xff]
      %v875 = vld [vmem:[#allocation2 + $0x30] sm:$0xff]
      %v876 = vld [vmem:[#allocation2 + $0x38] sm:$0xff]
      %v877 = vld [vmem:[#allocation2 + $0x40] sm:$0xff]
      %v878 = vld [vmem:[#allocation2 + $0x48] sm:$0xff]
      %s879 = scalar_lea.vmem %s3, 32
      %v880 = vld [vmem:[%s879] sm:$0xff]
      %v882 = vsel %vm404, %v859, 0
      %v885 = vsel %vm404, %v860, 0
      %v888 = vsel %vm404, %v861, 0
      %v891 = vsel %vm404, %v862, 0
      %v894 = vsel %vm404, %v863, 0
      %v897 = vsel %vm404, %v864, 0
      %v900 = vsel %vm404, %v865, 0
      %v903 = vsel %vm404, %v866, 0
      %v906 = vsel %vm404, %v867, 0
      %v909 = vsel %vm404, %v868, 0
      %911 = vmatpush.msra.mxu0 0.0
      %912 = vmatpush.msra.mxu0 0.0
      %913 = vmatpush.msra.mxu0 0.0
      %914 = vmatpush.msra.mxu0 0.0
      %915 = vmatpush.msra.mxu0 0.0
      %916 = vmatpush.msra.mxu0 0.0
      %917 = vmatpush.msra.mxu0 0.0
      %918 = vmatpush.msra.mxu0 0.0
      %919 = vmatpush.msra.mxu0 0.0
      %920 = vmatpush.msra.mxu0 0.0
      %921 = vmatpush.msra.mxu0 0.0
      %922 = vmatpush.msra.mxu0 0.0
      %923 = vmatpush.msra.mxu0 0.0
      %924 = vmatpush.msra.mxu0 0.0
      %925 = vmatpush.msra.mxu0 0.0
      %926 = vmatpush.msra.mxu0 %v880
      %927 = vmatmul.f32.gmra.mxu0 %v882
      %v928 = vpop.f32.mrf.mxu0
      %v929 = vadd.f32 0.0, %v928
      %930 = vmatmul.f32.gmra.mxu0 %v885
      %v931 = vpop.f32.mrf.mxu0
      %v932 = vadd.f32 0.0, %v931
      %933 = vmatmul.f32.gmra.mxu0 %v888
      %v934 = vpop.f32.mrf.mxu0
      %v935 = vadd.f32 0.0, %v934
      %936 = vmatmul.f32.gmra.mxu0 %v891
      %v937 = vpop.f32.mrf.mxu0
      %v938 = vadd.f32 0.0, %v937
      %939 = vmatmul.f32.gmra.mxu0 %v894
      %v940 = vpop.f32.mrf.mxu0
      %v941 = vadd.f32 0.0, %v940
      %942 = vmatmul.f32.gmra.mxu0 %v897
      %v943 = vpop.f32.mrf.mxu0
      %v944 = vadd.f32 0.0, %v943
      %945 = vmatmul.f32.gmra.mxu0 %v900
      %v946 = vpop.f32.mrf.mxu0
      %v947 = vadd.f32 0.0, %v946
      %948 = vmatmul.f32.gmra.mxu0 %v903
      %v949 = vpop.f32.mrf.mxu0
      %v950 = vadd.f32 0.0, %v949
      %951 = vmatmul.f32.gmra.mxu0 %v906
      %v952 = vpop.f32.mrf.mxu0
      %v953 = vadd.f32 0.0, %v952
      %954 = vmatmul.f32.gmra.mxu0 %v909
      %v955 = vpop.f32.mrf.mxu0
      %v956 = vadd.f32 0.0, %v955
      %957 = vdwg.mxu0
      %v958 = vadd.f32 %v869, %v929
      %v959 = vadd.f32 %v870, %v932
      %v960 = vadd.f32 %v871, %v935
      %v961 = vadd.f32 %v872, %v938
      %v962 = vadd.f32 %v873, %v941
      %v963 = vadd.f32 %v874, %v944
      %v964 = vadd.f32 %v875, %v947
      %v965 = vadd.f32 %v876, %v950
      %v966 = vadd.f32 %v877, %v953
      %v967 = vadd.f32 %v878, %v956
      %968 = vst [vmem:[#allocation2] sm:$0xff] %v958
      %969 = vst [vmem:[#allocation2 + $0x8] sm:$0xff] %v959
      %970 = vst [vmem:[#allocation2 + $0x10] sm:$0xff] %v960
      %971 = vst [vmem:[#allocation2 + $0x18] sm:$0xff] %v961
      %972 = vst [vmem:[#allocation2 + $0x20] sm:$0xff] %v962
      %973 = vst [vmem:[#allocation2 + $0x28] sm:$0xff] %v963
      %974 = vst [vmem:[#allocation2 + $0x30] sm:$0xff] %v964
      %975 = vst [vmem:[#allocation2 + $0x38] sm:$0xff] %v965
      %976 = vst [vmem:[#allocation2 + $0x40] sm:$0xff] %v966
      %977 = vst [vmem:[#allocation2 + $0x48] sm:$0xff] %v967
      %v978 = vld [vmem:[%s333 + $0xc] sm:$0xff]
      %v979 = vld [vmem:[%s333 + $0x14] sm:$0xff]
      %v980 = vld [vmem:[%s333 + $0x1c] sm:$0xff]
      %v981 = vld [vmem:[%s333 + $0x24] sm:$0xff]
      %v982 = vld [vmem:[%s333 + $0x2c] sm:$0xff]
      %v983 = vld [vmem:[%s333 + $0x34] sm:$0xff]
      %v984 = vld [vmem:[%s333 + $0x3c] sm:$0xff]
      %v985 = vld [vmem:[%s333 + $0x44] sm:$0xff]
      %v986 = vld [vmem:[%s333 + $0x4c] sm:$0xff]
      %v987 = vld [vmem:[%s333 + $0x54] sm:$0xff]
      %v988 = vld [vmem:[#allocation2] sm:$0xff]
      %v989 = vld [vmem:[#allocation2 + $0x8] sm:$0xff]
      %v990 = vld [vmem:[#allocation2 + $0x10] sm:$0xff]
      %v991 = vld [vmem:[#allocation2 + $0x18] sm:$0xff]
      %v992 = vld [vmem:[#allocation2 + $0x20] sm:$0xff]
      %v993 = vld [vmem:[#allocation2 + $0x28] sm:$0xff]
      %v994 = vld [vmem:[#allocation2 + $0x30] sm:$0xff]
      %v995 = vld [vmem:[#allocation2 + $0x38] sm:$0xff]
      %v996 = vld [vmem:[#allocation2 + $0x40] sm:$0xff]
      %v997 = vld [vmem:[#allocation2 + $0x48] sm:$0xff]
      %s998 = scalar_lea.vmem %s3, 40
      %v999 = vld [vmem:[%s998] sm:$0xff]
      %v1001 = vsel %vm404, %v978, 0
      %v1004 = vsel %vm404, %v979, 0
      %v1007 = vsel %vm404, %v980, 0
      %v1010 = vsel %vm404, %v981, 0
      %v1013 = vsel %vm404, %v982, 0
      %v1016 = vsel %vm404, %v983, 0
      %v1019 = vsel %vm404, %v984, 0
      %v1022 = vsel %vm404, %v985, 0
      %v1025 = vsel %vm404, %v986, 0
      %v1028 = vsel %vm404, %v987, 0
      %1030 = vmatpush.msra.mxu0 0.0
      %1031 = vmatpush.msra.mxu0 0.0
      %1032 = vmatpush.msra.mxu0 0.0
      %1033 = vmatpush.msra.mxu0 0.0
      %1034 = vmatpush.msra.mxu0 0.0
      %1035 = vmatpush.msra.mxu0 0.0
      %1036 = vmatpush.msra.mxu0 0.0
      %1037 = vmatpush.msra.mxu0 0.0
      %1038 = vmatpush.msra.mxu0 0.0
      %1039 = vmatpush.msra.mxu0 0.0
      %1040 = vmatpush.msra.mxu0 0.0
      %1041 = vmatpush.msra.mxu0 0.0
      %1042 = vmatpush.msra.mxu0 0.0
      %1043 = vmatpush.msra.mxu0 0.0
      %1044 = vmatpush.msra.mxu0 0.0
      %1045 = vmatpush.msra.mxu0 %v999
      %1046 = vmatmul.f32.gmra.mxu0 %v1001
      %v1047 = vpop.f32.mrf.mxu0
      %v1048 = vadd.f32 0.0, %v1047
      %1049 = vmatmul.f32.gmra.mxu0 %v1004
      %v1050 = vpop.f32.mrf.mxu0
      %v1051 = vadd.f32 0.0, %v1050
      %1052 = vmatmul.f32.gmra.mxu0 %v1007
      %v1053 = vpop.f32.mrf.mxu0
      %v1054 = vadd.f32 0.0, %v1053
      %1055 = vmatmul.f32.gmra.mxu0 %v1010
      %v1056 = vpop.f32.mrf.mxu0
      %v1057 = vadd.f32 0.0, %v1056
      %1058 = vmatmul.f32.gmra.mxu0 %v1013
      %v1059 = vpop.f32.mrf.mxu0
      %v1060 = vadd.f32 0.0, %v1059
      %1061 = vmatmul.f32.gmra.mxu0 %v1016
      %v1062 = vpop.f32.mrf.mxu0
      %v1063 = vadd.f32 0.0, %v1062
      %1064 = vmatmul.f32.gmra.mxu0 %v1019
      %v1065 = vpop.f32.mrf.mxu0
      %v1066 = vadd.f32 0.0, %v1065
      %1067 = vmatmul.f32.gmra.mxu0 %v1022
      %v1068 = vpop.f32.mrf.mxu0
      %v1069 = vadd.f32 0.0, %v1068
      %1070 = vmatmul.f32.gmra.mxu0 %v1025
      %v1071 = vpop.f32.mrf.mxu0
      %v1072 = vadd.f32 0.0, %v1071
      %1073 = vmatmul.f32.gmra.mxu0 %v1028
      %v1074 = vpop.f32.mrf.mxu0
      %v1075 = vadd.f32 0.0, %v1074
      %1076 = vdwg.mxu0
      %v1077 = vadd.f32 %v988, %v1048
      %v1078 = vadd.f32 %v989, %v1051
      %v1079 = vadd.f32 %v990, %v1054
      %v1080 = vadd.f32 %v991, %v1057
      %v1081 = vadd.f32 %v992, %v1060
      %v1082 = vadd.f32 %v993, %v1063
      %v1083 = vadd.f32 %v994, %v1066
      %v1084 = vadd.f32 %v995, %v1069
      %v1085 = vadd.f32 %v996, %v1072
      %v1086 = vadd.f32 %v997, %v1075
      %1087 = vst [vmem:[#allocation2] sm:$0xff] %v1077
      %1088 = vst [vmem:[#allocation2 + $0x8] sm:$0xff] %v1078
      %1089 = vst [vmem:[#allocation2 + $0x10] sm:$0xff] %v1079
      %1090 = vst [vmem:[#allocation2 + $0x18] sm:$0xff] %v1080
      %1091 = vst [vmem:[#allocation2 + $0x20] sm:$0xff] %v1081
      %1092 = vst [vmem:[#allocation2 + $0x28] sm:$0xff] %v1082
      %1093 = vst [vmem:[#allocation2 + $0x30] sm:$0xff] %v1083
      %1094 = vst [vmem:[#allocation2 + $0x38] sm:$0xff] %v1084
      %1095 = vst [vmem:[#allocation2 + $0x40] sm:$0xff] %v1085
      %1096 = vst [vmem:[#allocation2 + $0x48] sm:$0xff] %v1086
      %v1097 = vld [vmem:[%s333 + $0x14] sm:$0xff]
      %v1098 = vld [vmem:[%s333 + $0x1c] sm:$0xff]
      %v1099 = vld [vmem:[%s333 + $0x24] sm:$0xff]
      %v1100 = vld [vmem:[%s333 + $0x2c] sm:$0xff]
      %v1101 = vld [vmem:[%s333 + $0x34] sm:$0xff]
      %v1102 = vld [vmem:[%s333 + $0x3c] sm:$0xff]
      %v1103 = vld [vmem:[%s333 + $0x44] sm:$0xff]
      %v1104 = vld [vmem:[%s333 + $0x4c] sm:$0xff]
      %v1105 = vld [vmem:[%s333 + $0x54] sm:$0xff]
      %v1106 = vld [vmem:[%s333 + $0x5c] sm:$0xff]
      %v1107 = vld [vmem:[#allocation2] sm:$0xff]
      %v1108 = vld [vmem:[#allocation2 + $0x8] sm:$0xff]
      %v1109 = vld [vmem:[#allocation2 + $0x10] sm:$0xff]
      %v1110 = vld [vmem:[#allocation2 + $0x18] sm:$0xff]
      %v1111 = vld [vmem:[#allocation2 + $0x20] sm:$0xff]
      %v1112 = vld [vmem:[#allocation2 + $0x28] sm:$0xff]
      %v1113 = vld [vmem:[#allocation2 + $0x30] sm:$0xff]
      %v1114 = vld [vmem:[#allocation2 + $0x38] sm:$0xff]
      %v1115 = vld [vmem:[#allocation2 + $0x40] sm:$0xff]
      %v1116 = vld [vmem:[#allocation2 + $0x48] sm:$0xff]
      %s1117 = scalar_lea.vmem %s3, 48
      %v1118 = vld [vmem:[%s1117] sm:$0xff]
      %v1120 = vsel %vm404, %v1097, 0
      %v1123 = vsel %vm404, %v1098, 0
      %v1126 = vsel %vm404, %v1099, 0
      %v1129 = vsel %vm404, %v1100, 0
      %v1132 = vsel %vm404, %v1101, 0
      %v1135 = vsel %vm404, %v1102, 0
      %v1138 = vsel %vm404, %v1103, 0
      %v1141 = vsel %vm404, %v1104, 0
      %v1144 = vsel %vm404, %v1105, 0
      %v1147 = vsel %vm404, %v1106, 0
      %1149 = vmatpush.msra.mxu0 0.0
      %1150 = vmatpush.msra.mxu0 0.0
      %1151 = vmatpush.msra.mxu0 0.0
      %1152 = vmatpush.msra.mxu0 0.0
      %1153 = vmatpush.msra.mxu0 0.0
      %1154 = vmatpush.msra.mxu0 0.0
      %1155 = vmatpush.msra.mxu0 0.0
      %1156 = vmatpush.msra.mxu0 0.0
      %1157 = vmatpush.msra.mxu0 0.0
      %1158 = vmatpush.msra.mxu0 0.0
      %1159 = vmatpush.msra.mxu0 0.0
      %1160 = vmatpush.msra.mxu0 0.0
      %1161 = vmatpush.msra.mxu0 0.0
      %1162 = vmatpush.msra.mxu0 0.0
      %1163 = vmatpush.msra.mxu0 0.0
      %1164 = vmatpush.msra.mxu0 %v1118
      %1165 = vmatmul.f32.gmra.mxu0 %v1120
      %v1166 = vpop.f32.mrf.mxu0
      %v1167 = vadd.f32 0.0, %v1166
      %1168 = vmatmul.f32.gmra.mxu0 %v1123
      %v1169 = vpop.f32.mrf.mxu0
      %v1170 = vadd.f32 0.0, %v1169
      %1171 = vmatmul.f32.gmra.mxu0 %v1126
      %v1172 = vpop.f32.mrf.mxu0
      %v1173 = vadd.f32 0.0, %v1172
      %1174 = vmatmul.f32.gmra.mxu0 %v1129
      %v1175 = vpop.f32.mrf.mxu0
      %v1176 = vadd.f32 0.0, %v1175
      %1177 = vmatmul.f32.gmra.mxu0 %v1132
      %v1178 = vpop.f32.mrf.mxu0
      %v1179 = vadd.f32 0.0, %v1178
      %1180 = vmatmul.f32.gmra.mxu0 %v1135
      %v1181 = vpop.f32.mrf.mxu0
      %v1182 = vadd.f32 0.0, %v1181
      %1183 = vmatmul.f32.gmra.mxu0 %v1138
      %v1184 = vpop.f32.mrf.mxu0
      %v1185 = vadd.f32 0.0, %v1184
      %1186 = vmatmul.f32.gmra.mxu0 %v1141
      %v1187 = vpop.f32.mrf.mxu0
      %v1188 = vadd.f32 0.0, %v1187
      %1189 = vmatmul.f32.gmra.mxu0 %v1144
      %v1190 = vpop.f32.mrf.mxu0
      %v1191 = vadd.f32 0.0, %v1190
      %1192 = vmatmul.f32.gmra.mxu0 %v1147
      %v1193 = vpop.f32.mrf.mxu0
      %v1194 = vadd.f32 0.0, %v1193
      %1195 = vdwg.mxu0
      %v1196 = vadd.f32 %v1107, %v1167
      %v1197 = vadd.f32 %v1108, %v1170
      %v1198 = vadd.f32 %v1109, %v1173
      %v1199 = vadd.f32 %v1110, %v1176
      %v1200 = vadd.f32 %v1111, %v1179
      %v1201 = vadd.f32 %v1112, %v1182
      %v1202 = vadd.f32 %v1113, %v1185
      %v1203 = vadd.f32 %v1114, %v1188
      %v1204 = vadd.f32 %v1115, %v1191
      %v1205 = vadd.f32 %v1116, %v1194
      %1206 = vst [vmem:[#allocation2] sm:$0xff] %v1196
      %1207 = vst [vmem:[#allocation2 + $0x8] sm:$0xff] %v1197
      %1208 = vst [vmem:[#allocation2 + $0x10] sm:$0xff] %v1198
      %1209 = vst [vmem:[#allocation2 + $0x18] sm:$0xff] %v1199
      %1210 = vst [vmem:[#allocation2 + $0x20] sm:$0xff] %v1200
      %1211 = vst [vmem:[#allocation2 + $0x28] sm:$0xff] %v1201
      %1212 = vst [vmem:[#allocation2 + $0x30] sm:$0xff] %v1202
      %1213 = vst [vmem:[#allocation2 + $0x38] sm:$0xff] %v1203
      %1214 = vst [vmem:[#allocation2 + $0x40] sm:$0xff] %v1204
      %1215 = vst [vmem:[#allocation2 + $0x48] sm:$0xff] %v1205
      %v1216 = vld [vmem:[%s333 + $0x15] sm:$0xff]
      %v1217 = vld [vmem:[%s333 + $0x1d] sm:$0xff]
      %v1218 = vld [vmem:[%s333 + $0x25] sm:$0xff]
      %v1219 = vld [vmem:[%s333 + $0x2d] sm:$0xff]
      %v1220 = vld [vmem:[%s333 + $0x35] sm:$0xff]
      %v1221 = vld [vmem:[%s333 + $0x3d] sm:$0xff]
      %v1222 = vld [vmem:[%s333 + $0x45] sm:$0xff]
      %v1223 = vld [vmem:[%s333 + $0x4d] sm:$0xff]
      %v1224 = vld [vmem:[%s333 + $0x55] sm:$0xff]
      %v1225 = vld [vmem:[%s333 + $0x5d] sm:$0xff]
      %v1226 = vld [vmem:[#allocation2] sm:$0xff]
      %v1227 = vld [vmem:[#allocation2 + $0x8] sm:$0xff]
      %v1228 = vld [vmem:[#allocation2 + $0x10] sm:$0xff]
      %v1229 = vld [vmem:[#allocation2 + $0x18] sm:$0xff]
      %v1230 = vld [vmem:[#allocation2 + $0x20] sm:$0xff]
      %v1231 = vld [vmem:[#allocation2 + $0x28] sm:$0xff]
      %v1232 = vld [vmem:[#allocation2 + $0x30] sm:$0xff]
      %v1233 = vld [vmem:[#allocation2 + $0x38] sm:$0xff]
      %v1234 = vld [vmem:[#allocation2 + $0x40] sm:$0xff]
      %v1235 = vld [vmem:[#allocation2 + $0x48] sm:$0xff]
      %s1236 = scalar_lea.vmem %s3, 56
      %v1237 = vld [vmem:[%s1236] sm:$0xff]
      %v1239 = vsel %vm404, %v1216, 0
      %v1242 = vsel %vm404, %v1217, 0
      %v1245 = vsel %vm404, %v1218, 0
      %v1248 = vsel %vm404, %v1219, 0
      %v1251 = vsel %vm404, %v1220, 0
      %v1254 = vsel %vm404, %v1221, 0
      %v1257 = vsel %vm404, %v1222, 0
      %v1260 = vsel %vm404, %v1223, 0
      %v1263 = vsel %vm404, %v1224, 0
      %v1266 = vsel %vm404, %v1225, 0
      %1268 = vmatpush.msra.mxu0 0.0
      %1269 = vmatpush.msra.mxu0 0.0
      %1270 = vmatpush.msra.mxu0 0.0
      %1271 = vmatpush.msra.mxu0 0.0
      %1272 = vmatpush.msra.mxu0 0.0
      %1273 = vmatpush.msra.mxu0 0.0
      %1274 = vmatpush.msra.mxu0 0.0
      %1275 = vmatpush.msra.mxu0 0.0
      %1276 = vmatpush.msra.mxu0 0.0
      %1277 = vmatpush.msra.mxu0 0.0
      %1278 = vmatpush.msra.mxu0 0.0
      %1279 = vmatpush.msra.mxu0 0.0
      %1280 = vmatpush.msra.mxu0 0.0
      %1281 = vmatpush.msra.mxu0 0.0
      %1282 = vmatpush.msra.mxu0 0.0
      %1283 = vmatpush.msra.mxu0 %v1237
      %1284 = vmatmul.f32.gmra.mxu0 %v1239
      %v1285 = vpop.f32.mrf.mxu0
      %v1286 = vadd.f32 0.0, %v1285
      %1287 = vmatmul.f32.gmra.mxu0 %v1242
      %v1288 = vpop.f32.mrf.mxu0
      %v1289 = vadd.f32 0.0, %v1288
      %1290 = vmatmul.f32.gmra.mxu0 %v1245
      %v1291 = vpop.f32.mrf.mxu0
      %v1292 = vadd.f32 0.0, %v1291
      %1293 = vmatmul.f32.gmra.mxu0 %v1248
      %v1294 = vpop.f32.mrf.mxu0
      %v1295 = vadd.f32 0.0, %v1294
      %1296 = vmatmul.f32.gmra.mxu0 %v1251
      %v1297 = vpop.f32.mrf.mxu0
      %v1298 = vadd.f32 0.0, %v1297
      %1299 = vmatmul.f32.gmra.mxu0 %v1254
      %v1300 = vpop.f32.mrf.mxu0
      %v1301 = vadd.f32 0.0, %v1300
      %1302 = vmatmul.f32.gmra.mxu0 %v1257
      %v1303 = vpop.f32.mrf.mxu0
      %v1304 = vadd.f32 0.0, %v1303
      %1305 = vmatmul.f32.gmra.mxu0 %v1260
      %v1306 = vpop.f32.mrf.mxu0
      %v1307 = vadd.f32 0.0, %v1306
      %1308 = vmatmul.f32.gmra.mxu0 %v1263
      %v1309 = vpop.f32.mrf.mxu0
      %v1310 = vadd.f32 0.0, %v1309
      %1311 = vmatmul.f32.gmra.mxu0 %v1266
      %v1312 = vpop.f32.mrf.mxu0
      %v1313 = vadd.f32 0.0, %v1312
      %1314 = vdwg.mxu0
      %v1315 = vadd.f32 %v1226, %v1286
      %v1316 = vadd.f32 %v1227, %v1289
      %v1317 = vadd.f32 %v1228, %v1292
      %v1318 = vadd.f32 %v1229, %v1295
      %v1319 = vadd.f32 %v1230, %v1298
      %v1320 = vadd.f32 %v1231, %v1301
      %v1321 = vadd.f32 %v1232, %v1304
      %v1322 = vadd.f32 %v1233, %v1307
      %v1323 = vadd.f32 %v1234, %v1310
      %v1324 = vadd.f32 %v1235, %v1313
      %1325 = vst [vmem:[#allocation2] sm:$0xff] %v1315
      %1326 = vst [vmem:[#allocation2 + $0x8] sm:$0xff] %v1316
      %1327 = vst [vmem:[#allocation2 + $0x10] sm:$0xff] %v1317
      %1328 = vst [vmem:[#allocation2 + $0x18] sm:$0xff] %v1318
      %1329 = vst [vmem:[#allocation2 + $0x20] sm:$0xff] %v1319
      %1330 = vst [vmem:[#allocation2 + $0x28] sm:$0xff] %v1320
      %1331 = vst [vmem:[#allocation2 + $0x30] sm:$0xff] %v1321
      %1332 = vst [vmem:[#allocation2 + $0x38] sm:$0xff] %v1322
      %1333 = vst [vmem:[#allocation2 + $0x40] sm:$0xff] %v1323
      %1334 = vst [vmem:[#allocation2 + $0x48] sm:$0xff] %v1324
      %v1335 = vld [vmem:[%s333 + $0x16] sm:$0xff]
      %v1336 = vld [vmem:[%s333 + $0x1e] sm:$0xff]
      %v1337 = vld [vmem:[%s333 + $0x26] sm:$0xff]
      %v1338 = vld [vmem:[%s333 + $0x2e] sm:$0xff]
      %v1339 = vld [vmem:[%s333 + $0x36] sm:$0xff]
      %v1340 = vld [vmem:[%s333 + $0x3e] sm:$0xff]
      %v1341 = vld [vmem:[%s333 + $0x46] sm:$0xff]
      %v1342 = vld [vmem:[%s333 + $0x4e] sm:$0xff]
      %v1343 = vld [vmem:[%s333 + $0x56] sm:$0xff]
      %v1344 = vld [vmem:[%s333 + $0x5e] sm:$0xff]
      %v1345 = vld [vmem:[#allocation2] sm:$0xff]
      %v1346 = vld [vmem:[#allocation2 + $0x8] sm:$0xff]
      %v1347 = vld [vmem:[#allocation2 + $0x10] sm:$0xff]
      %v1348 = vld [vmem:[#allocation2 + $0x18] sm:$0xff]
      %v1349 = vld [vmem:[#allocation2 + $0x20] sm:$0xff]
      %v1350 = vld [vmem:[#allocation2 + $0x28] sm:$0xff]
      %v1351 = vld [vmem:[#allocation2 + $0x30] sm:$0xff]
      %v1352 = vld [vmem:[#allocation2 + $0x38] sm:$0xff]
      %v1353 = vld [vmem:[#allocation2 + $0x40] sm:$0xff]
      %v1354 = vld [vmem:[#allocation2 + $0x48] sm:$0xff]
      %s1355 = scalar_lea.vmem %s3, 64
      %v1356 = vld [vmem:[%s1355] sm:$0xff]
      %v1358 = vsel %vm404, %v1335, 0
      %v1361 = vsel %vm404, %v1336, 0
      %v1364 = vsel %vm404, %v1337, 0
      %v1367 = vsel %vm404, %v1338, 0
      %v1370 = vsel %vm404, %v1339, 0
      %v1373 = vsel %vm404, %v1340, 0
      %v1376 = vsel %vm404, %v1341, 0
      %v1379 = vsel %vm404, %v1342, 0
      %v1382 = vsel %vm404, %v1343, 0
      %v1385 = vsel %vm404, %v1344, 0
      %1387 = vmatpush.msra.mxu0 0.0
      %1388 = vmatpush.msra.mxu0 0.0
      %1389 = vmatpush.msra.mxu0 0.0
      %1390 = vmatpush.msra.mxu0 0.0
      %1391 = vmatpush.msra.mxu0 0.0
      %1392 = vmatpush.msra.mxu0 0.0
      %1393 = vmatpush.msra.mxu0 0.0
      %1394 = vmatpush.msra.mxu0 0.0
      %1395 = vmatpush.msra.mxu0 0.0
      %1396 = vmatpush.msra.mxu0 0.0
      %1397 = vmatpush.msra.mxu0 0.0
      %1398 = vmatpush.msra.mxu0 0.0
      %1399 = vmatpush.msra.mxu0 0.0
      %1400 = vmatpush.msra.mxu0 0.0
      %1401 = vmatpush.msra.mxu0 0.0
      %1402 = vmatpush.msra.mxu0 %v1356
      %1403 = vmatmul.f32.gmra.mxu0 %v1358
      %v1404 = vpop.f32.mrf.mxu0
      %v1405 = vadd.f32 0.0, %v1404
      %1406 = vmatmul.f32.gmra.mxu0 %v1361
      %v1407 = vpop.f32.mrf.mxu0
      %v1408 = vadd.f32 0.0, %v1407
      %1409 = vmatmul.f32.gmra.mxu0 %v1364
      %v1410 = vpop.f32.mrf.mxu0
      %v1411 = vadd.f32 0.0, %v1410
      %1412 = vmatmul.f32.gmra.mxu0 %v1367
      %v1413 = vpop.f32.mrf.mxu0
      %v1414 = vadd.f32 0.0, %v1413
      %1415 = vmatmul.f32.gmra.mxu0 %v1370
      %v1416 = vpop.f32.mrf.mxu0
      %v1417 = vadd.f32 0.0, %v1416
      %1418 = vmatmul.f32.gmra.mxu0 %v1373
      %v1419 = vpop.f32.mrf.mxu0
      %v1420 = vadd.f32 0.0, %v1419
      %1421 = vmatmul.f32.gmra.mxu0 %v1376
      %v1422 = vpop.f32.mrf.mxu0
      %v1423 = vadd.f32 0.0, %v1422
      %1424 = vmatmul.f32.gmra.mxu0 %v1379
      %v1425 = vpop.f32.mrf.mxu0
      %v1426 = vadd.f32 0.0, %v1425
      %1427 = vmatmul.f32.gmra.mxu0 %v1382
      %v1428 = vpop.f32.mrf.mxu0
      %v1429 = vadd.f32 0.0, %v1428
      %1430 = vmatmul.f32.gmra.mxu0 %v1385
      %v1431 = vpop.f32.mrf.mxu0
      %v1432 = vadd.f32 0.0, %v1431
      %1433 = vdwg.mxu0
      %v1434 = vadd.f32 %v1345, %v1405
      %v1435 = vadd.f32 %v1346, %v1408
      %v1436 = vadd.f32 %v1347, %v1411
      %v1437 = vadd.f32 %v1348, %v1414
      %v1438 = vadd.f32 %v1349, %v1417
      %v1439 = vadd.f32 %v1350, %v1420
      %v1440 = vadd.f32 %v1351, %v1423
      %v1441 = vadd.f32 %v1352, %v1426
      %v1442 = vadd.f32 %v1353, %v1429
      %v1443 = vadd.f32 %v1354, %v1432
      %1444 = vst [vmem:[#allocation2] sm:$0xff] %v1434
      %1445 = vst [vmem:[#allocation2 + $0x8] sm:$0xff] %v1435
      %1446 = vst [vmem:[#allocation2 + $0x10] sm:$0xff] %v1436
      %1447 = vst [vmem:[#allocation2 + $0x18] sm:$0xff] %v1437
      %1448 = vst [vmem:[#allocation2 + $0x20] sm:$0xff] %v1438
      %1449 = vst [vmem:[#allocation2 + $0x28] sm:$0xff] %v1439
      %1450 = vst [vmem:[#allocation2 + $0x30] sm:$0xff] %v1440
      %1451 = vst [vmem:[#allocation2 + $0x38] sm:$0xff] %v1441
      %1452 = vst [vmem:[#allocation2 + $0x40] sm:$0xff] %v1442
      %1453 = vst [vmem:[#allocation2 + $0x48] sm:$0xff] %v1443
      %v1454 = vld [vmem:[%s343] sm:$0xff]
      %v1455 = vld [vmem:[%s343 + $0x8] sm:$0xff]
      %v1456 = vld [vmem:[%s343 + $0x10] sm:$0xff]
      %v1457 = vld [vmem:[%s343 + $0x18] sm:$0xff]
      %v1458 = vld [vmem:[%s343 + $0x20] sm:$0xff]
      %v1459 = vld [vmem:[%s343 + $0x28] sm:$0xff]
      %v1460 = vld [vmem:[%s343 + $0x30] sm:$0xff]
      %v1461 = vld [vmem:[%s343 + $0x38] sm:$0xff]
      %v1462 = vld [vmem:[%s343 + $0x40] sm:$0xff]
      %v1463 = vld [vmem:[%s343 + $0x48] sm:$0xff]
      %v1464 = vld [vmem:[#allocation2] sm:$0xff]
      %v1465 = vld [vmem:[#allocation2 + $0x8] sm:$0xff]
      %v1466 = vld [vmem:[#allocation2 + $0x10] sm:$0xff]
      %v1467 = vld [vmem:[#allocation2 + $0x18] sm:$0xff]
      %v1468 = vld [vmem:[#allocation2 + $0x20] sm:$0xff]
      %v1469 = vld [vmem:[#allocation2 + $0x28] sm:$0xff]
      %v1470 = vld [vmem:[#allocation2 + $0x30] sm:$0xff]
      %v1471 = vld [vmem:[#allocation2 + $0x38] sm:$0xff]
      %v1472 = vld [vmem:[#allocation2 + $0x40] sm:$0xff]
      %v1473 = vld [vmem:[#allocation2 + $0x48] sm:$0xff]
      %s1474 = scalar_lea.vmem %s3, 72
      %v1475 = vld [vmem:[%s1474] sm:$0xff]
      %v1477 = vsel %vm404, %v1454, 0
      %v1480 = vsel %vm404, %v1455, 0
      %v1483 = vsel %vm404, %v1456, 0
      %v1486 = vsel %vm404, %v1457, 0
      %v1489 = vsel %vm404, %v1458, 0
      %v1492 = vsel %vm404, %v1459, 0
      %v1495 = vsel %vm404, %v1460, 0
      %v1498 = vsel %vm404, %v1461, 0
      %v1501 = vsel %vm404, %v1462, 0
      %v1504 = vsel %vm404, %v1463, 0
      %1506 = vmatpush.msra.mxu0 0.0
      %1507 = vmatpush.msra.mxu0 0.0
      %1508 = vmatpush.msra.mxu0 0.0
      %1509 = vmatpush.msra.mxu0 0.0
      %1510 = vmatpush.msra.mxu0 0.0
      %1511 = vmatpush.msra.mxu0 0.0
      %1512 = vmatpush.msra.mxu0 0.0
      %1513 = vmatpush.msra.mxu0 0.0
      %1514 = vmatpush.msra.mxu0 0.0
      %1515 = vmatpush.msra.mxu0 0.0
      %1516 = vmatpush.msra.mxu0 0.0
      %1517 = vmatpush.msra.mxu0 0.0
      %1518 = vmatpush.msra.mxu0 0.0
      %1519 = vmatpush.msra.mxu0 0.0
      %1520 = vmatpush.msra.mxu0 0.0
      %1521 = vmatpush.msra.mxu0 %v1475
      %1522 = vmatmul.f32.gmra.mxu0 %v1477
      %v1523 = vpop.f32.mrf.mxu0
      %v1524 = vadd.f32 0.0, %v1523
      %1525 = vmatmul.f32.gmra.mxu0 %v1480
      %v1526 = vpop.f32.mrf.mxu0
      %v1527 = vadd.f32 0.0, %v1526
      %1528 = vmatmul.f32.gmra.mxu0 %v1483
      %v1529 = vpop.f32.mrf.mxu0
      %v1530 = vadd.f32 0.0, %v1529
      %1531 = vmatmul.f32.gmra.mxu0 %v1486
      %v1532 = vpop.f32.mrf.mxu0
      %v1533 = vadd.f32 0.0, %v1532
      %1534 = vmatmul.f32.gmra.mxu0 %v1489
      %v1535 = vpop.f32.mrf.mxu0
      %v1536 = vadd.f32 0.0, %v1535
      %1537 = vmatmul.f32.gmra.mxu0 %v1492
      %v1538 = vpop.f32.mrf.mxu0
      %v1539 = vadd.f32 0.0, %v1538
      %1540 = vmatmul.f32.gmra.mxu0 %v1495
      %v1541 = vpop.f32.mrf.mxu0
      %v1542 = vadd.f32 0.0, %v1541
      %1543 = vmatmul.f32.gmra.mxu0 %v1498
      %v1544 = vpop.f32.mrf.mxu0
      %v1545 = vadd.f32 0.0, %v1544
      %1546 = vmatmul.f32.gmra.mxu0 %v1501
      %v1547 = vpop.f32.mrf.mxu0
      %v1548 = vadd.f32 0.0, %v1547
      %1549 = vmatmul.f32.gmra.mxu0 %v1504
      %v1550 = vpop.f32.mrf.mxu0
      %v1551 = vadd.f32 0.0, %v1550
      %1552 = vdwg.mxu0
      %v1553 = vadd.f32 %v1464, %v1524
      %v1554 = vadd.f32 %v1465, %v1527
      %v1555 = vadd.f32 %v1466, %v1530
      %v1556 = vadd.f32 %v1467, %v1533
      %v1557 = vadd.f32 %v1468, %v1536
      %v1558 = vadd.f32 %v1469, %v1539
      %v1559 = vadd.f32 %v1470, %v1542
      %v1560 = vadd.f32 %v1471, %v1545
      %v1561 = vadd.f32 %v1472, %v1548
      %v1562 = vadd.f32 %v1473, %v1551
      %1563 = vst [vmem:[#allocation2] sm:$0xff] %v1553
      %1564 = vst [vmem:[#allocation2 + $0x8] sm:$0xff] %v1554
      %1565 = vst [vmem:[#allocation2 + $0x10] sm:$0xff] %v1555
      %1566 = vst [vmem:[#allocation2 + $0x18] sm:$0xff] %v1556
      %1567 = vst [vmem:[#allocation2 + $0x20] sm:$0xff] %v1557
      %1568 = vst [vmem:[#allocation2 + $0x28] sm:$0xff] %v1558
      %1569 = vst [vmem:[#allocation2 + $0x30] sm:$0xff] %v1559
      %1570 = vst [vmem:[#allocation2 + $0x38] sm:$0xff] %v1560
      %1571 = vst [vmem:[#allocation2 + $0x40] sm:$0xff] %v1561
      %1572 = vst [vmem:[#allocation2 + $0x48] sm:$0xff] %v1562
      %v1573 = vld [vmem:[%s343 + $0x1] sm:$0xff]
      %v1574 = vld [vmem:[%s343 + $0x9] sm:$0xff]
      %v1575 = vld [vmem:[%s343 + $0x11] sm:$0xff]
      %v1576 = vld [vmem:[%s343 + $0x19] sm:$0xff]
      %v1577 = vld [vmem:[%s343 + $0x21] sm:$0xff]
      %v1578 = vld [vmem:[%s343 + $0x29] sm:$0xff]
      %v1579 = vld [vmem:[%s343 + $0x31] sm:$0xff]
      %v1580 = vld [vmem:[%s343 + $0x39] sm:$0xff]
      %v1581 = vld [vmem:[%s343 + $0x41] sm:$0xff]
      %v1582 = vld [vmem:[%s343 + $0x49] sm:$0xff]
      %v1583 = vld [vmem:[#allocation2] sm:$0xff]
      %v1584 = vld [vmem:[#allocation2 + $0x8] sm:$0xff]
      %v1585 = vld [vmem:[#allocation2 + $0x10] sm:$0xff]
      %v1586 = vld [vmem:[#allocation2 + $0x18] sm:$0xff]
      %v1587 = vld [vmem:[#allocation2 + $0x20] sm:$0xff]
      %v1588 = vld [vmem:[#allocation2 + $0x28] sm:$0xff]
      %v1589 = vld [vmem:[#allocation2 + $0x30] sm:$0xff]
      %v1590 = vld [vmem:[#allocation2 + $0x38] sm:$0xff]
      %v1591 = vld [vmem:[#allocation2 + $0x40] sm:$0xff]
      %v1592 = vld [vmem:[#allocation2 + $0x48] sm:$0xff]
      %s1593 = scalar_lea.vmem %s3, 80
      %v1594 = vld [vmem:[%s1593] sm:$0xff]
      %v1596 = vsel %vm404, %v1573, 0
      %v1599 = vsel %vm404, %v1574, 0
      %v1602 = vsel %vm404, %v1575, 0
      %v1605 = vsel %vm404, %v1576, 0
      %v1608 = vsel %vm404, %v1577, 0
      %v1611 = vsel %vm404, %v1578, 0
      %v1614 = vsel %vm404, %v1579, 0
      %v1617 = vsel %vm404, %v1580, 0
      %v1620 = vsel %vm404, %v1581, 0
      %v1623 = vsel %vm404, %v1582, 0
      %1625 = vmatpush.msra.mxu0 0.0
      %1626 = vmatpush.msra.mxu0 0.0
      %1627 = vmatpush.msra.mxu0 0.0
      %1628 = vmatpush.msra.mxu0 0.0
      %1629 = vmatpush.msra.mxu0 0.0
      %1630 = vmatpush.msra.mxu0 0.0
      %1631 = vmatpush.msra.mxu0 0.0
      %1632 = vmatpush.msra.mxu0 0.0
      %1633 = vmatpush.msra.mxu0 0.0
      %1634 = vmatpush.msra.mxu0 0.0
      %1635 = vmatpush.msra.mxu0 0.0
      %1636 = vmatpush.msra.mxu0 0.0
      %1637 = vmatpush.msra.mxu0 0.0
      %1638 = vmatpush.msra.mxu0 0.0
      %1639 = vmatpush.msra.mxu0 0.0
      %1640 = vmatpush.msra.mxu0 %v1594
      %1641 = vmatmul.f32.gmra.mxu0 %v1596
      %v1642 = vpop.f32.mrf.mxu0
      %v1643 = vadd.f32 0.0, %v1642
      %1644 = vmatmul.f32.gmra.mxu0 %v1599
      %v1645 = vpop.f32.mrf.mxu0
      %v1646 = vadd.f32 0.0, %v1645
      %1647 = vmatmul.f32.gmra.mxu0 %v1602
      %v1648 = vpop.f32.mrf.mxu0
      %v1649 = vadd.f32 0.0, %v1648
      %1650 = vmatmul.f32.gmra.mxu0 %v1605
      %v1651 = vpop.f32.mrf.mxu0
      %v1652 = vadd.f32 0.0, %v1651
      %1653 = vmatmul.f32.gmra.mxu0 %v1608
      %v1654 = vpop.f32.mrf.mxu0
      %v1655 = vadd.f32 0.0, %v1654
      %1656 = vmatmul.f32.gmra.mxu0 %v1611
      %v1657 = vpop.f32.mrf.mxu0
      %v1658 = vadd.f32 0.0, %v1657
      %1659 = vmatmul.f32.gmra.mxu0 %v1614
      %v1660 = vpop.f32.mrf.mxu0
      %v1661 = vadd.f32 0.0, %v1660
      %1662 = vmatmul.f32.gmra.mxu0 %v1617
      %v1663 = vpop.f32.mrf.mxu0
      %v1664 = vadd.f32 0.0, %v1663
      %1665 = vmatmul.f32.gmra.mxu0 %v1620
      %v1666 = vpop.f32.mrf.mxu0
      %v1667 = vadd.f32 0.0, %v1666
      %1668 = vmatmul.f32.gmra.mxu0 %v1623
      %v1669 = vpop.f32.mrf.mxu0
      %v1670 = vadd.f32 0.0, %v1669
      %1671 = vdwg.mxu0
      %v1672 = vadd.f32 %v1583, %v1643
      %v1673 = vadd.f32 %v1584, %v1646
      %v1674 = vadd.f32 %v1585, %v1649
      %v1675 = vadd.f32 %v1586, %v1652
      %v1676 = vadd.f32 %v1587, %v1655
      %v1677 = vadd.f32 %v1588, %v1658
      %v1678 = vadd.f32 %v1589, %v1661
      %v1679 = vadd.f32 %v1590, %v1664
      %v1680 = vadd.f32 %v1591, %v1667
      %v1681 = vadd.f32 %v1592, %v1670
      %1682 = vst [vmem:[#allocation2] sm:$0xff] %v1672
      %1683 = vst [vmem:[#allocation2 + $0x8] sm:$0xff] %v1673
      %1684 = vst [vmem:[#allocation2 + $0x10] sm:$0xff] %v1674
      %1685 = vst [vmem:[#allocation2 + $0x18] sm:$0xff] %v1675
      %1686 = vst [vmem:[#allocation2 + $0x20] sm:$0xff] %v1676
      %1687 = vst [vmem:[#allocation2 + $0x28] sm:$0xff] %v1677
      %1688 = vst [vmem:[#allocation2 + $0x30] sm:$0xff] %v1678
      %1689 = vst [vmem:[#allocation2 + $0x38] sm:$0xff] %v1679
      %1690 = vst [vmem:[#allocation2 + $0x40] sm:$0xff] %v1680
      %1691 = vst [vmem:[#allocation2 + $0x48] sm:$0xff] %v1681
      %v1692 = vld [vmem:[%s343 + $0x2] sm:$0xff]
      %v1693 = vld [vmem:[%s343 + $0xa] sm:$0xff]
      %v1694 = vld [vmem:[%s343 + $0x12] sm:$0xff]
      %v1695 = vld [vmem:[%s343 + $0x1a] sm:$0xff]
      %v1696 = vld [vmem:[%s343 + $0x22] sm:$0xff]
      %v1697 = vld [vmem:[%s343 + $0x2a] sm:$0xff]
      %v1698 = vld [vmem:[%s343 + $0x32] sm:$0xff]
      %v1699 = vld [vmem:[%s343 + $0x3a] sm:$0xff]
      %v1700 = vld [vmem:[%s343 + $0x42] sm:$0xff]
      %v1701 = vld [vmem:[%s343 + $0x4a] sm:$0xff]
      %v1702 = vld [vmem:[#allocation2] sm:$0xff]
      %v1703 = vld [vmem:[#allocation2 + $0x8] sm:$0xff]
      %v1704 = vld [vmem:[#allocation2 + $0x10] sm:$0xff]
      %v1705 = vld [vmem:[#allocation2 + $0x18] sm:$0xff]
      %v1706 = vld [vmem:[#allocation2 + $0x20] sm:$0xff]
      %v1707 = vld [vmem:[#allocation2 + $0x28] sm:$0xff]
      %v1708 = vld [vmem:[#allocation2 + $0x30] sm:$0xff]
      %v1709 = vld [vmem:[#allocation2 + $0x38] sm:$0xff]
      %v1710 = vld [vmem:[#allocation2 + $0x40] sm:$0xff]
      %v1711 = vld [vmem:[#allocation2 + $0x48] sm:$0xff]
      %s1712 = scalar_lea.vmem %s3, 88
      %v1713 = vld [vmem:[%s1712] sm:$0xff]
      %v1715 = vsel %vm404, %v1692, 0
      %v1718 = vsel %vm404, %v1693, 0
      %v1721 = vsel %vm404, %v1694, 0
      %v1724 = vsel %vm404, %v1695, 0
      %v1727 = vsel %vm404, %v1696, 0
      %v1730 = vsel %vm404, %v1697, 0
      %v1733 = vsel %vm404, %v1698, 0
      %v1736 = vsel %vm404, %v1699, 0
      %v1739 = vsel %vm404, %v1700, 0
      %v1742 = vsel %vm404, %v1701, 0
      %1744 = vmatpush.msra.mxu0 0.0
      %1745 = vmatpush.msra.mxu0 0.0
      %1746 = vmatpush.msra.mxu0 0.0
      %1747 = vmatpush.msra.mxu0 0.0
      %1748 = vmatpush.msra.mxu0 0.0
      %1749 = vmatpush.msra.mxu0 0.0
      %1750 = vmatpush.msra.mxu0 0.0
      %1751 = vmatpush.msra.mxu0 0.0
      %1752 = vmatpush.msra.mxu0 0.0
      %1753 = vmatpush.msra.mxu0 0.0
      %1754 = vmatpush.msra.mxu0 0.0
      %1755 = vmatpush.msra.mxu0 0.0
      %1756 = vmatpush.msra.mxu0 0.0
      %1757 = vmatpush.msra.mxu0 0.0
      %1758 = vmatpush.msra.mxu0 0.0
      %1759 = vmatpush.msra.mxu0 %v1713
      %1760 = vmatmul.f32.gmra.mxu0 %v1715
      %v1761 = vpop.f32.mrf.mxu0
      %v1762 = vadd.f32 0.0, %v1761
      %1763 = vmatmul.f32.gmra.mxu0 %v1718
      %v1764 = vpop.f32.mrf.mxu0
      %v1765 = vadd.f32 0.0, %v1764
      %1766 = vmatmul.f32.gmra.mxu0 %v1721
      %v1767 = vpop.f32.mrf.mxu0
      %v1768 = vadd.f32 0.0, %v1767
      %1769 = vmatmul.f32.gmra.mxu0 %v1724
      %v1770 = vpop.f32.mrf.mxu0
      %v1771 = vadd.f32 0.0, %v1770
      %1772 = vmatmul.f32.gmra.mxu0 %v1727
      %v1773 = vpop.f32.mrf.mxu0
      %v1774 = vadd.f32 0.0, %v1773
      %1775 = vmatmul.f32.gmra.mxu0 %v1730
      %v1776 = vpop.f32.mrf.mxu0
      %v1777 = vadd.f32 0.0, %v1776
      %1778 = vmatmul.f32.gmra.mxu0 %v1733
      %v1779 = vpop.f32.mrf.mxu0
      %v1780 = vadd.f32 0.0, %v1779
      %1781 = vmatmul.f32.gmra.mxu0 %v1736
      %v1782 = vpop.f32.mrf.mxu0
      %v1783 = vadd.f32 0.0, %v1782
      %1784 = vmatmul.f32.gmra.mxu0 %v1739
      %v1785 = vpop.f32.mrf.mxu0
      %v1786 = vadd.f32 0.0, %v1785
      %1787 = vmatmul.f32.gmra.mxu0 %v1742
      %v1788 = vpop.f32.mrf.mxu0
      %v1789 = vadd.f32 0.0, %v1788
      %1790 = vdwg.mxu0
      %v1791 = vadd.f32 %v1702, %v1762
      %v1792 = vadd.f32 %v1703, %v1765
      %v1793 = vadd.f32 %v1704, %v1768
      %v1794 = vadd.f32 %v1705, %v1771
      %v1795 = vadd.f32 %v1706, %v1774
      %v1796 = vadd.f32 %v1707, %v1777
      %v1797 = vadd.f32 %v1708, %v1780
      %v1798 = vadd.f32 %v1709, %v1783
      %v1799 = vadd.f32 %v1710, %v1786
      %v1800 = vadd.f32 %v1711, %v1789
      %1801 = vst [vmem:[#allocation2] sm:$0xff] %v1791
      %1802 = vst [vmem:[#allocation2 + $0x8] sm:$0xff] %v1792
      %1803 = vst [vmem:[#allocation2 + $0x10] sm:$0xff] %v1793
      %1804 = vst [vmem:[#allocation2 + $0x18] sm:$0xff] %v1794
      %1805 = vst [vmem:[#allocation2 + $0x20] sm:$0xff] %v1795
      %1806 = vst [vmem:[#allocation2 + $0x28] sm:$0xff] %v1796
      %1807 = vst [vmem:[#allocation2 + $0x30] sm:$0xff] %v1797
      %1808 = vst [vmem:[#allocation2 + $0x38] sm:$0xff] %v1798
      %1809 = vst [vmem:[#allocation2 + $0x40] sm:$0xff] %v1799
      %1810 = vst [vmem:[#allocation2 + $0x48] sm:$0xff] %v1800
      %v1811 = vld [vmem:[%s343 + $0xa] sm:$0xff]
      %v1812 = vld [vmem:[%s343 + $0x12] sm:$0xff]
      %v1813 = vld [vmem:[%s343 + $0x1a] sm:$0xff]
      %v1814 = vld [vmem:[%s343 + $0x22] sm:$0xff]
      %v1815 = vld [vmem:[%s343 + $0x2a] sm:$0xff]
      %v1816 = vld [vmem:[%s343 + $0x32] sm:$0xff]
      %v1817 = vld [vmem:[%s343 + $0x3a] sm:$0xff]
      %v1818 = vld [vmem:[%s343 + $0x42] sm:$0xff]
      %v1819 = vld [vmem:[%s343 + $0x4a] sm:$0xff]
      %v1820 = vld [vmem:[%s343 + $0x52] sm:$0xff]
      %v1821 = vld [vmem:[#allocation2] sm:$0xff]
      %v1822 = vld [vmem:[#allocation2 + $0x8] sm:$0xff]
      %v1823 = vld [vmem:[#allocation2 + $0x10] sm:$0xff]
      %v1824 = vld [vmem:[#allocation2 + $0x18] sm:$0xff]
      %v1825 = vld [vmem:[#allocation2 + $0x20] sm:$0xff]
      %v1826 = vld [vmem:[#allocation2 + $0x28] sm:$0xff]
      %v1827 = vld [vmem:[#allocation2 + $0x30] sm:$0xff]
      %v1828 = vld [vmem:[#allocation2 + $0x38] sm:$0xff]
      %v1829 = vld [vmem:[#allocation2 + $0x40] sm:$0xff]
      %v1830 = vld [vmem:[#allocation2 + $0x48] sm:$0xff]
      %s1831 = scalar_lea.vmem %s3, 96
      %v1832 = vld [vmem:[%s1831] sm:$0xff]
      %v1834 = vsel %vm404, %v1811, 0
      %v1837 = vsel %vm404, %v1812, 0
      %v1840 = vsel %vm404, %v1813, 0
      %v1843 = vsel %vm404, %v1814, 0
      %v1846 = vsel %vm404, %v1815, 0
      %v1849 = vsel %vm404, %v1816, 0
      %v1852 = vsel %vm404, %v1817, 0
      %v1855 = vsel %vm404, %v1818, 0
      %v1858 = vsel %vm404, %v1819, 0
      %v1861 = vsel %vm404, %v1820, 0
      %1863 = vmatpush.msra.mxu0 0.0
      %1864 = vmatpush.msra.mxu0 0.0
      %1865 = vmatpush.msra.mxu0 0.0
      %1866 = vmatpush.msra.mxu0 0.0
      %1867 = vmatpush.msra.mxu0 0.0
      %1868 = vmatpush.msra.mxu0 0.0
      %1869 = vmatpush.msra.mxu0 0.0
      %1870 = vmatpush.msra.mxu0 0.0
      %1871 = vmatpush.msra.mxu0 0.0
      %1872 = vmatpush.msra.mxu0 0.0
      %1873 = vmatpush.msra.mxu0 0.0
      %1874 = vmatpush.msra.mxu0 0.0
      %1875 = vmatpush.msra.mxu0 0.0
      %1876 = vmatpush.msra.mxu0 0.0
      %1877 = vmatpush.msra.mxu0 0.0
      %1878 = vmatpush.msra.mxu0 %v1832
      %1879 = vmatmul.f32.gmra.mxu0 %v1834
      %v1880 = vpop.f32.mrf.mxu0
      %v1881 = vadd.f32 0.0, %v1880
      %1882 = vmatmul.f32.gmra.mxu0 %v1837
      %v1883 = vpop.f32.mrf.mxu0
      %v1884 = vadd.f32 0.0, %v1883
      %1885 = vmatmul.f32.gmra.mxu0 %v1840
      %v1886 = vpop.f32.mrf.mxu0
      %v1887 = vadd.f32 0.0, %v1886
      %1888 = vmatmul.f32.gmra.mxu0 %v1843
      %v1889 = vpop.f32.mrf.mxu0
      %v1890 = vadd.f32 0.0, %v1889
      %1891 = vmatmul.f32.gmra.mxu0 %v1846
      %v1892 = vpop.f32.mrf.mxu0
      %v1893 = vadd.f32 0.0, %v1892
      %1894 = vmatmul.f32.gmra.mxu0 %v1849
      %v1895 = vpop.f32.mrf.mxu0
      %v1896 = vadd.f32 0.0, %v1895
      %1897 = vmatmul.f32.gmra.mxu0 %v1852
      %v1898 = vpop.f32.mrf.mxu0
      %v1899 = vadd.f32 0.0, %v1898
      %1900 = vmatmul.f32.gmra.mxu0 %v1855
      %v1901 = vpop.f32.mrf.mxu0
      %v1902 = vadd.f32 0.0, %v1901
      %1903 = vmatmul.f32.gmra.mxu0 %v1858
      %v1904 = vpop.f32.mrf.mxu0
      %v1905 = vadd.f32 0.0, %v1904
      %1906 = vmatmul.f32.gmra.mxu0 %v1861
      %v1907 = vpop.f32.mrf.mxu0
      %v1908 = vadd.f32 0.0, %v1907
      %1909 = vdwg.mxu0
      %v1910 = vadd.f32 %v1821, %v1881
      %v1911 = vadd.f32 %v1822, %v1884
      %v1912 = vadd.f32 %v1823, %v1887
      %v1913 = vadd.f32 %v1824, %v1890
      %v1914 = vadd.f32 %v1825, %v1893
      %v1915 = vadd.f32 %v1826, %v1896
      %v1916 = vadd.f32 %v1827, %v1899
      %v1917 = vadd.f32 %v1828, %v1902
      %v1918 = vadd.f32 %v1829, %v1905
      %v1919 = vadd.f32 %v1830, %v1908
      %1920 = vst [vmem:[#allocation2] sm:$0xff] %v1910
      %1921 = vst [vmem:[#allocation2 + $0x8] sm:$0xff] %v1911
      %1922 = vst [vmem:[#allocation2 + $0x10] sm:$0xff] %v1912
      %1923 = vst [vmem:[#allocation2 + $0x18] sm:$0xff] %v1913
      %1924 = vst [vmem:[#allocation2 + $0x20] sm:$0xff] %v1914
      %1925 = vst [vmem:[#allocation2 + $0x28] sm:$0xff] %v1915
      %1926 = vst [vmem:[#allocation2 + $0x30] sm:$0xff] %v1916
      %1927 = vst [vmem:[#allocation2 + $0x38] sm:$0xff] %v1917
      %1928 = vst [vmem:[#allocation2 + $0x40] sm:$0xff] %v1918
      %1929 = vst [vmem:[#allocation2 + $0x48] sm:$0xff] %v1919
      %v1930 = vld [vmem:[%s343 + $0xb] sm:$0xff]
      %v1931 = vld [vmem:[%s343 + $0x13] sm:$0xff]
      %v1932 = vld [vmem:[%s343 + $0x1b] sm:$0xff]
      %v1933 = vld [vmem:[%s343 + $0x23] sm:$0xff]
      %v1934 = vld [vmem:[%s343 + $0x2b] sm:$0xff]
      %v1935 = vld [vmem:[%s343 + $0x33] sm:$0xff]
      %v1936 = vld [vmem:[%s343 + $0x3b] sm:$0xff]
      %v1937 = vld [vmem:[%s343 + $0x43] sm:$0xff]
      %v1938 = vld [vmem:[%s343 + $0x4b] sm:$0xff]
      %v1939 = vld [vmem:[%s343 + $0x53] sm:$0xff]
      %v1940 = vld [vmem:[#allocation2] sm:$0xff]
      %v1941 = vld [vmem:[#allocation2 + $0x8] sm:$0xff]
      %v1942 = vld [vmem:[#allocation2 + $0x10] sm:$0xff]
      %v1943 = vld [vmem:[#allocation2 + $0x18] sm:$0xff]
      %v1944 = vld [vmem:[#allocation2 + $0x20] sm:$0xff]
      %v1945 = vld [vmem:[#allocation2 + $0x28] sm:$0xff]
      %v1946 = vld [vmem:[#allocation2 + $0x30] sm:$0xff]
      %v1947 = vld [vmem:[#allocation2 + $0x38] sm:$0xff]
      %v1948 = vld [vmem:[#allocation2 + $0x40] sm:$0xff]
      %v1949 = vld [vmem:[#allocation2 + $0x48] sm:$0xff]
      %s1950 = scalar_lea.vmem %s3, 104
      %v1951 = vld [vmem:[%s1950] sm:$0xff]
      %v1953 = vsel %vm404, %v1930, 0
      %v1956 = vsel %vm404, %v1931, 0
      %v1959 = vsel %vm404, %v1932, 0
      %v1962 = vsel %vm404, %v1933, 0
      %v1965 = vsel %vm404, %v1934, 0
      %v1968 = vsel %vm404, %v1935, 0
      %v1971 = vsel %vm404, %v1936, 0
      %v1974 = vsel %vm404, %v1937, 0
      %v1977 = vsel %vm404, %v1938, 0
      %v1980 = vsel %vm404, %v1939, 0
      %1982 = vmatpush.msra.mxu0 0.0
      %1983 = vmatpush.msra.mxu0 0.0
      %1984 = vmatpush.msra.mxu0 0.0
      %1985 = vmatpush.msra.mxu0 0.0
      %1986 = vmatpush.msra.mxu0 0.0
      %1987 = vmatpush.msra.mxu0 0.0
      %1988 = vmatpush.msra.mxu0 0.0
      %1989 = vmatpush.msra.mxu0 0.0
      %1990 = vmatpush.msra.mxu0 0.0
      %1991 = vmatpush.msra.mxu0 0.0
      %1992 = vmatpush.msra.mxu0 0.0
      %1993 = vmatpush.msra.mxu0 0.0
      %1994 = vmatpush.msra.mxu0 0.0
      %1995 = vmatpush.msra.mxu0 0.0
      %1996 = vmatpush.msra.mxu0 0.0
      %1997 = vmatpush.msra.mxu0 %v1951
      %1998 = vmatmul.f32.gmra.mxu0 %v1953
      %v1999 = vpop.f32.mrf.mxu0
      %v2000 = vadd.f32 0.0, %v1999
      %2001 = vmatmul.f32.gmra.mxu0 %v1956
      %v2002 = vpop.f32.mrf.mxu0
      %v2003 = vadd.f32 0.0, %v2002
      %2004 = vmatmul.f32.gmra.mxu0 %v1959
      %v2005 = vpop.f32.mrf.mxu0
      %v2006 = vadd.f32 0.0, %v2005
      %2007 = vmatmul.f32.gmra.mxu0 %v1962
      %v2008 = vpop.f32.mrf.mxu0
      %v2009 = vadd.f32 0.0, %v2008
      %2010 = vmatmul.f32.gmra.mxu0 %v1965
      %v2011 = vpop.f32.mrf.mxu0
      %v2012 = vadd.f32 0.0, %v2011
      %2013 = vmatmul.f32.gmra.mxu0 %v1968
      %v2014 = vpop.f32.mrf.mxu0
      %v2015 = vadd.f32 0.0, %v2014
      %2016 = vmatmul.f32.gmra.mxu0 %v1971
      %v2017 = vpop.f32.mrf.mxu0
      %v2018 = vadd.f32 0.0, %v2017
      %2019 = vmatmul.f32.gmra.mxu0 %v1974
      %v2020 = vpop.f32.mrf.mxu0
      %v2021 = vadd.f32 0.0, %v2020
      %2022 = vmatmul.f32.gmra.mxu0 %v1977
      %v2023 = vpop.f32.mrf.mxu0
      %v2024 = vadd.f32 0.0, %v2023
      %2025 = vmatmul.f32.gmra.mxu0 %v1980
      %v2026 = vpop.f32.mrf.mxu0
      %v2027 = vadd.f32 0.0, %v2026
      %2028 = vdwg.mxu0
      %v2029 = vadd.f32 %v1940, %v2000
      %v2030 = vadd.f32 %v1941, %v2003
      %v2031 = vadd.f32 %v1942, %v2006
      %v2032 = vadd.f32 %v1943, %v2009
      %v2033 = vadd.f32 %v1944, %v2012
      %v2034 = vadd.f32 %v1945, %v2015
      %v2035 = vadd.f32 %v1946, %v2018
      %v2036 = vadd.f32 %v1947, %v2021
      %v2037 = vadd.f32 %v1948, %v2024
      %v2038 = vadd.f32 %v1949, %v2027
      %2039 = vst [vmem:[#allocation2] sm:$0xff] %v2029
      %2040 = vst [vmem:[#allocation2 + $0x8] sm:$0xff] %v2030
      %2041 = vst [vmem:[#allocation2 + $0x10] sm:$0xff] %v2031
      %2042 = vst [vmem:[#allocation2 + $0x18] sm:$0xff] %v2032
      %2043 = vst [vmem:[#allocation2 + $0x20] sm:$0xff] %v2033
      %2044 = vst [vmem:[#allocation2 + $0x28] sm:$0xff] %v2034
      %2045 = vst [vmem:[#allocation2 + $0x30] sm:$0xff] %v2035
      %2046 = vst [vmem:[#allocation2 + $0x38] sm:$0xff] %v2036
      %2047 = vst [vmem:[#allocation2 + $0x40] sm:$0xff] %v2037
      %2048 = vst [vmem:[#allocation2 + $0x48] sm:$0xff] %v2038
      %v2049 = vld [vmem:[%s343 + $0xc] sm:$0xff]
      %v2050 = vld [vmem:[%s343 + $0x14] sm:$0xff]
      %v2051 = vld [vmem:[%s343 + $0x1c] sm:$0xff]
      %v2052 = vld [vmem:[%s343 + $0x24] sm:$0xff]
      %v2053 = vld [vmem:[%s343 + $0x2c] sm:$0xff]
      %v2054 = vld [vmem:[%s343 + $0x34] sm:$0xff]
      %v2055 = vld [vmem:[%s343 + $0x3c] sm:$0xff]
      %v2056 = vld [vmem:[%s343 + $0x44] sm:$0xff]
      %v2057 = vld [vmem:[%s343 + $0x4c] sm:$0xff]
      %v2058 = vld [vmem:[%s343 + $0x54] sm:$0xff]
      %v2059 = vld [vmem:[#allocation2] sm:$0xff]
      %v2060 = vld [vmem:[#allocation2 + $0x8] sm:$0xff]
      %v2061 = vld [vmem:[#allocation2 + $0x10] sm:$0xff]
      %v2062 = vld [vmem:[#allocation2 + $0x18] sm:$0xff]
      %v2063 = vld [vmem:[#allocation2 + $0x20] sm:$0xff]
      %v2064 = vld [vmem:[#allocation2 + $0x28] sm:$0xff]
      %v2065 = vld [vmem:[#allocation2 + $0x30] sm:$0xff]
      %v2066 = vld [vmem:[#allocation2 + $0x38] sm:$0xff]
      %v2067 = vld [vmem:[#allocation2 + $0x40] sm:$0xff]
      %v2068 = vld [vmem:[#allocation2 + $0x48] sm:$0xff]
      %s2069 = scalar_lea.vmem %s3, 112
      %v2070 = vld [vmem:[%s2069] sm:$0xff]
      %v2072 = vsel %vm404, %v2049, 0
      %v2075 = vsel %vm404, %v2050, 0
      %v2078 = vsel %vm404, %v2051, 0
      %v2081 = vsel %vm404, %v2052, 0
      %v2084 = vsel %vm404, %v2053, 0
      %v2087 = vsel %vm404, %v2054, 0
      %v2090 = vsel %vm404, %v2055, 0
      %v2093 = vsel %vm404, %v2056, 0
      %v2096 = vsel %vm404, %v2057, 0
      %v2099 = vsel %vm404, %v2058, 0
      %2101 = vmatpush.msra.mxu0 0.0
      %2102 = vmatpush.msra.mxu0 0.0
      %2103 = vmatpush.msra.mxu0 0.0
      %2104 = vmatpush.msra.mxu0 0.0
      %2105 = vmatpush.msra.mxu0 0.0
      %2106 = vmatpush.msra.mxu0 0.0
      %2107 = vmatpush.msra.mxu0 0.0
      %2108 = vmatpush.msra.mxu0 0.0
      %2109 = vmatpush.msra.mxu0 0.0
      %2110 = vmatpush.msra.mxu0 0.0
      %2111 = vmatpush.msra.mxu0 0.0
      %2112 = vmatpush.msra.mxu0 0.0
      %2113 = vmatpush.msra.mxu0 0.0
      %2114 = vmatpush.msra.mxu0 0.0
      %2115 = vmatpush.msra.mxu0 0.0
      %2116 = vmatpush.msra.mxu0 %v2070
      %2117 = vmatmul.f32.gmra.mxu0 %v2072
      %v2118 = vpop.f32.mrf.mxu0
      %v2119 = vadd.f32 0.0, %v2118
      %2120 = vmatmul.f32.gmra.mxu0 %v2075
      %v2121 = vpop.f32.mrf.mxu0
      %v2122 = vadd.f32 0.0, %v2121
      %2123 = vmatmul.f32.gmra.mxu0 %v2078
      %v2124 = vpop.f32.mrf.mxu0
      %v2125 = vadd.f32 0.0, %v2124
      %2126 = vmatmul.f32.gmra.mxu0 %v2081
      %v2127 = vpop.f32.mrf.mxu0
      %v2128 = vadd.f32 0.0, %v2127
      %2129 = vmatmul.f32.gmra.mxu0 %v2084
      %v2130 = vpop.f32.mrf.mxu0
      %v2131 = vadd.f32 0.0, %v2130
      %2132 = vmatmul.f32.gmra.mxu0 %v2087
      %v2133 = vpop.f32.mrf.mxu0
      %v2134 = vadd.f32 0.0, %v2133
      %2135 = vmatmul.f32.gmra.mxu0 %v2090
      %v2136 = vpop.f32.mrf.mxu0
      %v2137 = vadd.f32 0.0, %v2136
      %2138 = vmatmul.f32.gmra.mxu0 %v2093
      %v2139 = vpop.f32.mrf.mxu0
      %v2140 = vadd.f32 0.0, %v2139
      %2141 = vmatmul.f32.gmra.mxu0 %v2096
      %v2142 = vpop.f32.mrf.mxu0
      %v2143 = vadd.f32 0.0, %v2142
      %2144 = vmatmul.f32.gmra.mxu0 %v2099
      %v2145 = vpop.f32.mrf.mxu0
      %v2146 = vadd.f32 0.0, %v2145
      %2147 = vdwg.mxu0
      %v2148 = vadd.f32 %v2059, %v2119
      %v2149 = vadd.f32 %v2060, %v2122
      %v2150 = vadd.f32 %v2061, %v2125
      %v2151 = vadd.f32 %v2062, %v2128
      %v2152 = vadd.f32 %v2063, %v2131
      %v2153 = vadd.f32 %v2064, %v2134
      %v2154 = vadd.f32 %v2065, %v2137
      %v2155 = vadd.f32 %v2066, %v2140
      %v2156 = vadd.f32 %v2067, %v2143
      %v2157 = vadd.f32 %v2068, %v2146
      %2158 = vst [vmem:[#allocation2] sm:$0xff] %v2148
      %2159 = vst [vmem:[#allocation2 + $0x8] sm:$0xff] %v2149
      %2160 = vst [vmem:[#allocation2 + $0x10] sm:$0xff] %v2150
      %2161 = vst [vmem:[#allocation2 + $0x18] sm:$0xff] %v2151
      %2162 = vst [vmem:[#allocation2 + $0x20] sm:$0xff] %v2152
      %2163 = vst [vmem:[#allocation2 + $0x28] sm:$0xff] %v2153
      %2164 = vst [vmem:[#allocation2 + $0x30] sm:$0xff] %v2154
      %2165 = vst [vmem:[#allocation2 + $0x38] sm:$0xff] %v2155
      %2166 = vst [vmem:[#allocation2 + $0x40] sm:$0xff] %v2156
      %2167 = vst [vmem:[#allocation2 + $0x48] sm:$0xff] %v2157
      %v2168 = vld [vmem:[%s343 + $0x14] sm:$0xff]
      %v2169 = vld [vmem:[%s343 + $0x1c] sm:$0xff]
      %v2170 = vld [vmem:[%s343 + $0x24] sm:$0xff]
      %v2171 = vld [vmem:[%s343 + $0x2c] sm:$0xff]
      %v2172 = vld [vmem:[%s343 + $0x34] sm:$0xff]
      %v2173 = vld [vmem:[%s343 + $0x3c] sm:$0xff]
      %v2174 = vld [vmem:[%s343 + $0x44] sm:$0xff]
      %v2175 = vld [vmem:[%s343 + $0x4c] sm:$0xff]
      %v2176 = vld [vmem:[%s343 + $0x54] sm:$0xff]
      %v2177 = vld [vmem:[%s343 + $0x5c] sm:$0xff]
      %v2178 = vld [vmem:[#allocation2] sm:$0xff]
      %v2179 = vld [vmem:[#allocation2 + $0x8] sm:$0xff]
      %v2180 = vld [vmem:[#allocation2 + $0x10] sm:$0xff]
      %v2181 = vld [vmem:[#allocation2 + $0x18] sm:$0xff]
      %v2182 = vld [vmem:[#allocation2 + $0x20] sm:$0xff]
      %v2183 = vld [vmem:[#allocation2 + $0x28] sm:$0xff]
      %v2184 = vld [vmem:[#allocation2 + $0x30] sm:$0xff]
      %v2185 = vld [vmem:[#allocation2 + $0x38] sm:$0xff]
      %v2186 = vld [vmem:[#allocation2 + $0x40] sm:$0xff]
      %v2187 = vld [vmem:[#allocation2 + $0x48] sm:$0xff]
      %s2188 = scalar_lea.vmem %s3, 120
      %v2189 = vld [vmem:[%s2188] sm:$0xff]
      %v2191 = vsel %vm404, %v2168, 0
      %v2194 = vsel %vm404, %v2169, 0
      %v2197 = vsel %vm404, %v2170, 0
      %v2200 = vsel %vm404, %v2171, 0
      %v2203 = vsel %vm404, %v2172, 0
      %v2206 = vsel %vm404, %v2173, 0
      %v2209 = vsel %vm404, %v2174, 0
      %v2212 = vsel %vm404, %v2175, 0
      %v2215 = vsel %vm404, %v2176, 0
      %v2218 = vsel %vm404, %v2177, 0
      %2220 = vmatpush.msra.mxu0 0.0
      %2221 = vmatpush.msra.mxu0 0.0
      %2222 = vmatpush.msra.mxu0 0.0
      %2223 = vmatpush.msra.mxu0 0.0
      %2224 = vmatpush.msra.mxu0 0.0
      %2225 = vmatpush.msra.mxu0 0.0
      %2226 = vmatpush.msra.mxu0 0.0
      %2227 = vmatpush.msra.mxu0 0.0
      %2228 = vmatpush.msra.mxu0 0.0
      %2229 = vmatpush.msra.mxu0 0.0
      %2230 = vmatpush.msra.mxu0 0.0
      %2231 = vmatpush.msra.mxu0 0.0
      %2232 = vmatpush.msra.mxu0 0.0
      %2233 = vmatpush.msra.mxu0 0.0
      %2234 = vmatpush.msra.mxu0 0.0
      %2235 = vmatpush.msra.mxu0 %v2189
      %2236 = vmatmul.f32.gmra.mxu0 %v2191
      %v2237 = vpop.f32.mrf.mxu0
      %v2238 = vadd.f32 0.0, %v2237
      %2239 = vmatmul.f32.gmra.mxu0 %v2194
      %v2240 = vpop.f32.mrf.mxu0
      %v2241 = vadd.f32 0.0, %v2240
      %2242 = vmatmul.f32.gmra.mxu0 %v2197
      %v2243 = vpop.f32.mrf.mxu0
      %v2244 = vadd.f32 0.0, %v2243
      %2245 = vmatmul.f32.gmra.mxu0 %v2200
      %v2246 = vpop.f32.mrf.mxu0
      %v2247 = vadd.f32 0.0, %v2246
      %2248 = vmatmul.f32.gmra.mxu0 %v2203
      %v2249 = vpop.f32.mrf.mxu0
      %v2250 = vadd.f32 0.0, %v2249
      %2251 = vmatmul.f32.gmra.mxu0 %v2206
      %v2252 = vpop.f32.mrf.mxu0
      %v2253 = vadd.f32 0.0, %v2252
      %2254 = vmatmul.f32.gmra.mxu0 %v2209
      %v2255 = vpop.f32.mrf.mxu0
      %v2256 = vadd.f32 0.0, %v2255
      %2257 = vmatmul.f32.gmra.mxu0 %v2212
      %v2258 = vpop.f32.mrf.mxu0
      %v2259 = vadd.f32 0.0, %v2258
      %2260 = vmatmul.f32.gmra.mxu0 %v2215
      %v2261 = vpop.f32.mrf.mxu0
      %v2262 = vadd.f32 0.0, %v2261
      %2263 = vmatmul.f32.gmra.mxu0 %v2218
      %v2264 = vpop.f32.mrf.mxu0
      %v2265 = vadd.f32 0.0, %v2264
      %2266 = vdwg.mxu0
      %v2267 = vadd.f32 %v2178, %v2238
      %v2268 = vadd.f32 %v2179, %v2241
      %v2269 = vadd.f32 %v2180, %v2244
      %v2270 = vadd.f32 %v2181, %v2247
      %v2271 = vadd.f32 %v2182, %v2250
      %v2272 = vadd.f32 %v2183, %v2253
      %v2273 = vadd.f32 %v2184, %v2256
      %v2274 = vadd.f32 %v2185, %v2259
      %v2275 = vadd.f32 %v2186, %v2262
      %v2276 = vadd.f32 %v2187, %v2265
      %2277 = vst [vmem:[#allocation2] sm:$0xff] %v2267
      %2278 = vst [vmem:[#allocation2 + $0x8] sm:$0xff] %v2268
      %2279 = vst [vmem:[#allocation2 + $0x10] sm:$0xff] %v2269
      %2280 = vst [vmem:[#allocation2 + $0x18] sm:$0xff] %v2270
      %2281 = vst [vmem:[#allocation2 + $0x20] sm:$0xff] %v2271
      %2282 = vst [vmem:[#allocation2 + $0x28] sm:$0xff] %v2272
      %2283 = vst [vmem:[#allocation2 + $0x30] sm:$0xff] %v2273
      %2284 = vst [vmem:[#allocation2 + $0x38] sm:$0xff] %v2274
      %2285 = vst [vmem:[#allocation2 + $0x40] sm:$0xff] %v2275
      %2286 = vst [vmem:[#allocation2 + $0x48] sm:$0xff] %v2276
      %v2287 = vld [vmem:[%s343 + $0x15] sm:$0xff]
      %v2288 = vld [vmem:[%s343 + $0x1d] sm:$0xff]
      %v2289 = vld [vmem:[%s343 + $0x25] sm:$0xff]
      %v2290 = vld [vmem:[%s343 + $0x2d] sm:$0xff]
      %v2291 = vld [vmem:[%s343 + $0x35] sm:$0xff]
      %v2292 = vld [vmem:[%s343 + $0x3d] sm:$0xff]
      %v2293 = vld [vmem:[%s343 + $0x45] sm:$0xff]
      %v2294 = vld [vmem:[%s343 + $0x4d] sm:$0xff]
      %v2295 = vld [vmem:[%s343 + $0x55] sm:$0xff]
      %v2296 = vld [vmem:[%s343 + $0x5d] sm:$0xff]
      %v2297 = vld [vmem:[#allocation2] sm:$0xff]
      %v2298 = vld [vmem:[#allocation2 + $0x8] sm:$0xff]
      %v2299 = vld [vmem:[#allocation2 + $0x10] sm:$0xff]
      %v2300 = vld [vmem:[#allocation2 + $0x18] sm:$0xff]
      %v2301 = vld [vmem:[#allocation2 + $0x20] sm:$0xff]
      %v2302 = vld [vmem:[#allocation2 + $0x28] sm:$0xff]
      %v2303 = vld [vmem:[#allocation2 + $0x30] sm:$0xff]
      %v2304 = vld [vmem:[#allocation2 + $0x38] sm:$0xff]
      %v2305 = vld [vmem:[#allocation2 + $0x40] sm:$0xff]
      %v2306 = vld [vmem:[#allocation2 + $0x48] sm:$0xff]
      %s2307 = scalar_lea.vmem %s3, 128
      %v2308 = vld [vmem:[%s2307] sm:$0xff]
      %v2310 = vsel %vm404, %v2287, 0
      %v2313 = vsel %vm404, %v2288, 0
      %v2316 = vsel %vm404, %v2289, 0
      %v2319 = vsel %vm404, %v2290, 0
      %v2322 = vsel %vm404, %v2291, 0
      %v2325 = vsel %vm404, %v2292, 0
      %v2328 = vsel %vm404, %v2293, 0
      %v2331 = vsel %vm404, %v2294, 0
      %v2334 = vsel %vm404, %v2295, 0
      %v2337 = vsel %vm404, %v2296, 0
      %2339 = vmatpush.msra.mxu0 0.0
      %2340 = vmatpush.msra.mxu0 0.0
      %2341 = vmatpush.msra.mxu0 0.0
      %2342 = vmatpush.msra.mxu0 0.0
      %2343 = vmatpush.msra.mxu0 0.0
      %2344 = vmatpush.msra.mxu0 0.0
      %2345 = vmatpush.msra.mxu0 0.0
      %2346 = vmatpush.msra.mxu0 0.0
      %2347 = vmatpush.msra.mxu0 0.0
      %2348 = vmatpush.msra.mxu0 0.0
      %2349 = vmatpush.msra.mxu0 0.0
      %2350 = vmatpush.msra.mxu0 0.0
      %2351 = vmatpush.msra.mxu0 0.0
      %2352 = vmatpush.msra.mxu0 0.0
      %2353 = vmatpush.msra.mxu0 0.0
      %2354 = vmatpush.msra.mxu0 %v2308
      %2355 = vmatmul.f32.gmra.mxu0 %v2310
      %v2356 = vpop.f32.mrf.mxu0
      %v2357 = vadd.f32 0.0, %v2356
      %2358 = vmatmul.f32.gmra.mxu0 %v2313
      %v2359 = vpop.f32.mrf.mxu0
      %v2360 = vadd.f32 0.0, %v2359
      %2361 = vmatmul.f32.gmra.mxu0 %v2316
      %v2362 = vpop.f32.mrf.mxu0
      %v2363 = vadd.f32 0.0, %v2362
      %2364 = vmatmul.f32.gmra.mxu0 %v2319
      %v2365 = vpop.f32.mrf.mxu0
      %v2366 = vadd.f32 0.0, %v2365
      %2367 = vmatmul.f32.gmra.mxu0 %v2322
      %v2368 = vpop.f32.mrf.mxu0
      %v2369 = vadd.f32 0.0, %v2368
      %2370 = vmatmul.f32.gmra.mxu0 %v2325
      %v2371 = vpop.f32.mrf.mxu0
      %v2372 = vadd.f32 0.0, %v2371
      %2373 = vmatmul.f32.gmra.mxu0 %v2328
      %v2374 = vpop.f32.mrf.mxu0
      %v2375 = vadd.f32 0.0, %v2374
      %2376 = vmatmul.f32.gmra.mxu0 %v2331
      %v2377 = vpop.f32.mrf.mxu0
      %v2378 = vadd.f32 0.0, %v2377
      %2379 = vmatmul.f32.gmra.mxu0 %v2334
      %v2380 = vpop.f32.mrf.mxu0
      %v2381 = vadd.f32 0.0, %v2380
      %2382 = vmatmul.f32.gmra.mxu0 %v2337
      %v2383 = vpop.f32.mrf.mxu0
      %v2384 = vadd.f32 0.0, %v2383
      %2385 = vdwg.mxu0
      %v2386 = vadd.f32 %v2297, %v2357
      %v2387 = vadd.f32 %v2298, %v2360
      %v2388 = vadd.f32 %v2299, %v2363
      %v2389 = vadd.f32 %v2300, %v2366
      %v2390 = vadd.f32 %v2301, %v2369
      %v2391 = vadd.f32 %v2302, %v2372
      %v2392 = vadd.f32 %v2303, %v2375
      %v2393 = vadd.f32 %v2304, %v2378
      %v2394 = vadd.f32 %v2305, %v2381
      %v2395 = vadd.f32 %v2306, %v2384
      %2396 = vst [vmem:[#allocation2] sm:$0xff] %v2386
      %2397 = vst [vmem:[#allocation2 + $0x8] sm:$0xff] %v2387
      %2398 = vst [vmem:[#allocation2 + $0x10] sm:$0xff] %v2388
      %2399 = vst [vmem:[#allocation2 + $0x18] sm:$0xff] %v2389
      %2400 = vst [vmem:[#allocation2 + $0x20] sm:$0xff] %v2390
      %2401 = vst [vmem:[#allocation2 + $0x28] sm:$0xff] %v2391
      %2402 = vst [vmem:[#allocation2 + $0x30] sm:$0xff] %v2392
      %2403 = vst [vmem:[#allocation2 + $0x38] sm:$0xff] %v2393
      %2404 = vst [vmem:[#allocation2 + $0x40] sm:$0xff] %v2394
      %2405 = vst [vmem:[#allocation2 + $0x48] sm:$0xff] %v2395
      %v2406 = vld [vmem:[%s343 + $0x16] sm:$0xff]
      %v2407 = vld [vmem:[%s343 + $0x1e] sm:$0xff]
      %v2408 = vld [vmem:[%s343 + $0x26] sm:$0xff]
      %v2409 = vld [vmem:[%s343 + $0x2e] sm:$0xff]
      %v2410 = vld [vmem:[%s343 + $0x36] sm:$0xff]
      %v2411 = vld [vmem:[%s343 + $0x3e] sm:$0xff]
      %v2412 = vld [vmem:[%s343 + $0x46] sm:$0xff]
      %v2413 = vld [vmem:[%s343 + $0x4e] sm:$0xff]
      %v2414 = vld [vmem:[%s343 + $0x56] sm:$0xff]
      %v2415 = vld [vmem:[%s343 + $0x5e] sm:$0xff]
      %v2416 = vld [vmem:[#allocation2] sm:$0xff]
      %v2417 = vld [vmem:[#allocation2 + $0x8] sm:$0xff]
      %v2418 = vld [vmem:[#allocation2 + $0x10] sm:$0xff]
      %v2419 = vld [vmem:[#allocation2 + $0x18] sm:$0xff]
      %v2420 = vld [vmem:[#allocation2 + $0x20] sm:$0xff]
      %v2421 = vld [vmem:[#allocation2 + $0x28] sm:$0xff]
      %v2422 = vld [vmem:[#allocation2 + $0x30] sm:$0xff]
      %v2423 = vld [vmem:[#allocation2 + $0x38] sm:$0xff]
      %v2424 = vld [vmem:[#allocation2 + $0x40] sm:$0xff]
      %v2425 = vld [vmem:[#allocation2 + $0x48] sm:$0xff]
      %s2426 = scalar_lea.vmem %s3, 136
      %v2427 = vld [vmem:[%s2426] sm:$0xff]
      %v2429 = vsel %vm404, %v2406, 0
      %v2432 = vsel %vm404, %v2407, 0
      %v2435 = vsel %vm404, %v2408, 0
      %v2438 = vsel %vm404, %v2409, 0
      %v2441 = vsel %vm404, %v2410, 0
      %v2444 = vsel %vm404, %v2411, 0
      %v2447 = vsel %vm404, %v2412, 0
      %v2450 = vsel %vm404, %v2413, 0
      %v2453 = vsel %vm404, %v2414, 0
      %v2456 = vsel %vm404, %v2415, 0
      %2458 = vmatpush.msra.mxu0 0.0
      %2459 = vmatpush.msra.mxu0 0.0
      %2460 = vmatpush.msra.mxu0 0.0
      %2461 = vmatpush.msra.mxu0 0.0
      %2462 = vmatpush.msra.mxu0 0.0
      %2463 = vmatpush.msra.mxu0 0.0
      %2464 = vmatpush.msra.mxu0 0.0
      %2465 = vmatpush.msra.mxu0 0.0
      %2466 = vmatpush.msra.mxu0 0.0
      %2467 = vmatpush.msra.mxu0 0.0
      %2468 = vmatpush.msra.mxu0 0.0
      %2469 = vmatpush.msra.mxu0 0.0
      %2470 = vmatpush.msra.mxu0 0.0
      %2471 = vmatpush.msra.mxu0 0.0
      %2472 = vmatpush.msra.mxu0 0.0
      %2473 = vmatpush.msra.mxu0 %v2427
      %2474 = vmatmul.f32.gmra.mxu0 %v2429
      %v2475 = vpop.f32.mrf.mxu0
      %v2476 = vadd.f32 0.0, %v2475
      %2477 = vmatmul.f32.gmra.mxu0 %v2432
      %v2478 = vpop.f32.mrf.mxu0
      %v2479 = vadd.f32 0.0, %v2478
      %2480 = vmatmul.f32.gmra.mxu0 %v2435
      %v2481 = vpop.f32.mrf.mxu0
      %v2482 = vadd.f32 0.0, %v2481
      %2483 = vmatmul.f32.gmra.mxu0 %v2438
      %v2484 = vpop.f32.mrf.mxu0
      %v2485 = vadd.f32 0.0, %v2484
      %2486 = vmatmul.f32.gmra.mxu0 %v2441
      %v2487 = vpop.f32.mrf.mxu0
      %v2488 = vadd.f32 0.0, %v2487
      %2489 = vmatmul.f32.gmra.mxu0 %v2444
      %v2490 = vpop.f32.mrf.mxu0
      %v2491 = vadd.f32 0.0, %v2490
      %2492 = vmatmul.f32.gmra.mxu0 %v2447
      %v2493 = vpop.f32.mrf.mxu0
      %v2494 = vadd.f32 0.0, %v2493
      %2495 = vmatmul.f32.gmra.mxu0 %v2450
      %v2496 = vpop.f32.mrf.mxu0
      %v2497 = vadd.f32 0.0, %v2496
      %2498 = vmatmul.f32.gmra.mxu0 %v2453
      %v2499 = vpop.f32.mrf.mxu0
      %v2500 = vadd.f32 0.0, %v2499
      %2501 = vmatmul.f32.gmra.mxu0 %v2456
      %v2502 = vpop.f32.mrf.mxu0
      %v2503 = vadd.f32 0.0, %v2502
      %2504 = vdwg.mxu0
      %v2505 = vadd.f32 %v2416, %v2476
      %v2506 = vadd.f32 %v2417, %v2479
      %v2507 = vadd.f32 %v2418, %v2482
      %v2508 = vadd.f32 %v2419, %v2485
      %v2509 = vadd.f32 %v2420, %v2488
      %v2510 = vadd.f32 %v2421, %v2491
      %v2511 = vadd.f32 %v2422, %v2494
      %v2512 = vadd.f32 %v2423, %v2497
      %v2513 = vadd.f32 %v2424, %v2500
      %v2514 = vadd.f32 %v2425, %v2503
      %2515 = vst [vmem:[#allocation2] sm:$0xff] %v2505
      %2516 = vst [vmem:[#allocation2 + $0x8] sm:$0xff] %v2506
      %2517 = vst [vmem:[#allocation2 + $0x10] sm:$0xff] %v2507
      %2518 = vst [vmem:[#allocation2 + $0x18] sm:$0xff] %v2508
      %2519 = vst [vmem:[#allocation2 + $0x20] sm:$0xff] %v2509
      %2520 = vst [vmem:[#allocation2 + $0x28] sm:$0xff] %v2510
      %2521 = vst [vmem:[#allocation2 + $0x30] sm:$0xff] %v2511
      %2522 = vst [vmem:[#allocation2 + $0x38] sm:$0xff] %v2512
      %2523 = vst [vmem:[#allocation2 + $0x40] sm:$0xff] %v2513
      %2524 = vst [vmem:[#allocation2 + $0x48] sm:$0xff] %v2514
      %v2525 = vld [vmem:[%s354] sm:$0xff]
      %v2526 = vld [vmem:[%s354 + $0x8] sm:$0xff]
      %v2527 = vld [vmem:[%s354 + $0x10] sm:$0xff]
      %v2528 = vld [vmem:[%s354 + $0x18] sm:$0xff]
      %v2529 = vld [vmem:[%s354 + $0x20] sm:$0xff]
      %v2530 = vld [vmem:[%s354 + $0x28] sm:$0xff]
      %v2531 = vld [vmem:[%s354 + $0x30] sm:$0xff]
      %v2532 = vld [vmem:[%s354 + $0x38] sm:$0xff]
      %v2533 = vld [vmem:[%s354 + $0x40] sm:$0xff]
      %v2534 = vld [vmem:[%s354 + $0x48] sm:$0xff]
      %v2535 = vld [vmem:[#allocation2] sm:$0xff]
      %v2536 = vld [vmem:[#allocation2 + $0x8] sm:$0xff]
      %v2537 = vld [vmem:[#allocation2 + $0x10] sm:$0xff]
      %v2538 = vld [vmem:[#allocation2 + $0x18] sm:$0xff]
      %v2539 = vld [vmem:[#allocation2 + $0x20] sm:$0xff]
      %v2540 = vld [vmem:[#allocation2 + $0x28] sm:$0xff]
      %v2541 = vld [vmem:[#allocation2 + $0x30] sm:$0xff]
      %v2542 = vld [vmem:[#allocation2 + $0x38] sm:$0xff]
      %v2543 = vld [vmem:[#allocation2 + $0x40] sm:$0xff]
      %v2544 = vld [vmem:[#allocation2 + $0x48] sm:$0xff]
      %s2545 = scalar_lea.vmem %s3, 144
      %v2546 = vld [vmem:[%s2545] sm:$0xff]
      %v2548 = vsel %vm404, %v2525, 0
      %v2551 = vsel %vm404, %v2526, 0
      %v2554 = vsel %vm404, %v2527, 0
      %v2557 = vsel %vm404, %v2528, 0
      %v2560 = vsel %vm404, %v2529, 0
      %v2563 = vsel %vm404, %v2530, 0
      %v2566 = vsel %vm404, %v2531, 0
      %v2569 = vsel %vm404, %v2532, 0
      %v2572 = vsel %vm404, %v2533, 0
      %v2575 = vsel %vm404, %v2534, 0
      %2577 = vmatpush.msra.mxu0 0.0
      %2578 = vmatpush.msra.mxu0 0.0
      %2579 = vmatpush.msra.mxu0 0.0
      %2580 = vmatpush.msra.mxu0 0.0
      %2581 = vmatpush.msra.mxu0 0.0
      %2582 = vmatpush.msra.mxu0 0.0
      %2583 = vmatpush.msra.mxu0 0.0
      %2584 = vmatpush.msra.mxu0 0.0
      %2585 = vmatpush.msra.mxu0 0.0
      %2586 = vmatpush.msra.mxu0 0.0
      %2587 = vmatpush.msra.mxu0 0.0
      %2588 = vmatpush.msra.mxu0 0.0
      %2589 = vmatpush.msra.mxu0 0.0
      %2590 = vmatpush.msra.mxu0 0.0
      %2591 = vmatpush.msra.mxu0 0.0
      %2592 = vmatpush.msra.mxu0 %v2546
      %2593 = vmatmul.f32.gmra.mxu0 %v2548
      %v2594 = vpop.f32.mrf.mxu0
      %v2595 = vadd.f32 0.0, %v2594
      %2596 = vmatmul.f32.gmra.mxu0 %v2551
      %v2597 = vpop.f32.mrf.mxu0
      %v2598 = vadd.f32 0.0, %v2597
      %2599 = vmatmul.f32.gmra.mxu0 %v2554
      %v2600 = vpop.f32.mrf.mxu0
      %v2601 = vadd.f32 0.0, %v2600
      %2602 = vmatmul.f32.gmra.mxu0 %v2557
      %v2603 = vpop.f32.mrf.mxu0
      %v2604 = vadd.f32 0.0, %v2603
      %2605 = vmatmul.f32.gmra.mxu0 %v2560
      %v2606 = vpop.f32.mrf.mxu0
      %v2607 = vadd.f32 0.0, %v2606
      %2608 = vmatmul.f32.gmra.mxu0 %v2563
      %v2609 = vpop.f32.mrf.mxu0
      %v2610 = vadd.f32 0.0, %v2609
      %2611 = vmatmul.f32.gmra.mxu0 %v2566
      %v2612 = vpop.f32.mrf.mxu0
      %v2613 = vadd.f32 0.0, %v2612
      %2614 = vmatmul.f32.gmra.mxu0 %v2569
      %v2615 = vpop.f32.mrf.mxu0
      %v2616 = vadd.f32 0.0, %v2615
      %2617 = vmatmul.f32.gmra.mxu0 %v2572
      %v2618 = vpop.f32.mrf.mxu0
      %v2619 = vadd.f32 0.0, %v2618
      %2620 = vmatmul.f32.gmra.mxu0 %v2575
      %v2621 = vpop.f32.mrf.mxu0
      %v2622 = vadd.f32 0.0, %v2621
      %2623 = vdwg.mxu0
      %v2624 = vadd.f32 %v2535, %v2595
      %v2625 = vadd.f32 %v2536, %v2598
      %v2626 = vadd.f32 %v2537, %v2601
      %v2627 = vadd.f32 %v2538, %v2604
      %v2628 = vadd.f32 %v2539, %v2607
      %v2629 = vadd.f32 %v2540, %v2610
      %v2630 = vadd.f32 %v2541, %v2613
      %v2631 = vadd.f32 %v2542, %v2616
      %v2632 = vadd.f32 %v2543, %v2619
      %v2633 = vadd.f32 %v2544, %v2622
      %2634 = vst [vmem:[#allocation2] sm:$0xff] %v2624
      %2635 = vst [vmem:[#allocation2 + $0x8] sm:$0xff] %v2625
      %2636 = vst [vmem:[#allocation2 + $0x10] sm:$0xff] %v2626
      %2637 = vst [vmem:[#allocation2 + $0x18] sm:$0xff] %v2627
      %2638 = vst [vmem:[#allocation2 + $0x20] sm:$0xff] %v2628
      %2639 = vst [vmem:[#allocation2 + $0x28] sm:$0xff] %v2629
      %2640 = vst [vmem:[#allocation2 + $0x30] sm:$0xff] %v2630
      %2641 = vst [vmem:[#allocation2 + $0x38] sm:$0xff] %v2631
      %2642 = vst [vmem:[#allocation2 + $0x40] sm:$0xff] %v2632
      %2643 = vst [vmem:[#allocation2 + $0x48] sm:$0xff] %v2633
      %v2644 = vld [vmem:[%s354 + $0x1] sm:$0xff]
      %v2645 = vld [vmem:[%s354 + $0x9] sm:$0xff]
      %v2646 = vld [vmem:[%s354 + $0x11] sm:$0xff]
      %v2647 = vld [vmem:[%s354 + $0x19] sm:$0xff]
      %v2648 = vld [vmem:[%s354 + $0x21] sm:$0xff]
      %v2649 = vld [vmem:[%s354 + $0x29] sm:$0xff]
      %v2650 = vld [vmem:[%s354 + $0x31] sm:$0xff]
      %v2651 = vld [vmem:[%s354 + $0x39] sm:$0xff]
      %v2652 = vld [vmem:[%s354 + $0x41] sm:$0xff]
      %v2653 = vld [vmem:[%s354 + $0x49] sm:$0xff]
      %v2654 = vld [vmem:[#allocation2] sm:$0xff]
      %v2655 = vld [vmem:[#allocation2 + $0x8] sm:$0xff]
      %v2656 = vld [vmem:[#allocation2 + $0x10] sm:$0xff]
      %v2657 = vld [vmem:[#allocation2 + $0x18] sm:$0xff]
      %v2658 = vld [vmem:[#allocation2 + $0x20] sm:$0xff]
      %v2659 = vld [vmem:[#allocation2 + $0x28] sm:$0xff]
      %v2660 = vld [vmem:[#allocation2 + $0x30] sm:$0xff]
      %v2661 = vld [vmem:[#allocation2 + $0x38] sm:$0xff]
      %v2662 = vld [vmem:[#allocation2 + $0x40] sm:$0xff]
      %v2663 = vld [vmem:[#allocation2 + $0x48] sm:$0xff]
      %s2664 = scalar_lea.vmem %s3, 152
      %v2665 = vld [vmem:[%s2664] sm:$0xff]
      %v2667 = vsel %vm404, %v2644, 0
      %v2670 = vsel %vm404, %v2645, 0
      %v2673 = vsel %vm404, %v2646, 0
      %v2676 = vsel %vm404, %v2647, 0
      %v2679 = vsel %vm404, %v2648, 0
      %v2682 = vsel %vm404, %v2649, 0
      %v2685 = vsel %vm404, %v2650, 0
      %v2688 = vsel %vm404, %v2651, 0
      %v2691 = vsel %vm404, %v2652, 0
      %v2694 = vsel %vm404, %v2653, 0
      %2696 = vmatpush.msra.mxu0 0.0
      %2697 = vmatpush.msra.mxu0 0.0
      %2698 = vmatpush.msra.mxu0 0.0
      %2699 = vmatpush.msra.mxu0 0.0
      %2700 = vmatpush.msra.mxu0 0.0
      %2701 = vmatpush.msra.mxu0 0.0
      %2702 = vmatpush.msra.mxu0 0.0
      %2703 = vmatpush.msra.mxu0 0.0
      %2704 = vmatpush.msra.mxu0 0.0
      %2705 = vmatpush.msra.mxu0 0.0
      %2706 = vmatpush.msra.mxu0 0.0
      %2707 = vmatpush.msra.mxu0 0.0
      %2708 = vmatpush.msra.mxu0 0.0
      %2709 = vmatpush.msra.mxu0 0.0
      %2710 = vmatpush.msra.mxu0 0.0
      %2711 = vmatpush.msra.mxu0 %v2665
      %2712 = vmatmul.f32.gmra.mxu0 %v2667
      %v2713 = vpop.f32.mrf.mxu0
      %v2714 = vadd.f32 0.0, %v2713
      %2715 = vmatmul.f32.gmra.mxu0 %v2670
      %v2716 = vpop.f32.mrf.mxu0
      %v2717 = vadd.f32 0.0, %v2716
      %2718 = vmatmul.f32.gmra.mxu0 %v2673
      %v2719 = vpop.f32.mrf.mxu0
      %v2720 = vadd.f32 0.0, %v2719
      %2721 = vmatmul.f32.gmra.mxu0 %v2676
      %v2722 = vpop.f32.mrf.mxu0
      %v2723 = vadd.f32 0.0, %v2722
      %2724 = vmatmul.f32.gmra.mxu0 %v2679
      %v2725 = vpop.f32.mrf.mxu0
      %v2726 = vadd.f32 0.0, %v2725
      %2727 = vmatmul.f32.gmra.mxu0 %v2682
      %v2728 = vpop.f32.mrf.mxu0
      %v2729 = vadd.f32 0.0, %v2728
      %2730 = vmatmul.f32.gmra.mxu0 %v2685
      %v2731 = vpop.f32.mrf.mxu0
      %v2732 = vadd.f32 0.0, %v2731
      %2733 = vmatmul.f32.gmra.mxu0 %v2688
      %v2734 = vpop.f32.mrf.mxu0
      %v2735 = vadd.f32 0.0, %v2734
      %2736 = vmatmul.f32.gmra.mxu0 %v2691
      %v2737 = vpop.f32.mrf.mxu0
      %v2738 = vadd.f32 0.0, %v2737
      %2739 = vmatmul.f32.gmra.mxu0 %v2694
      %v2740 = vpop.f32.mrf.mxu0
      %v2741 = vadd.f32 0.0, %v2740
      %2742 = vdwg.mxu0
      %v2743 = vadd.f32 %v2654, %v2714
      %v2744 = vadd.f32 %v2655, %v2717
      %v2745 = vadd.f32 %v2656, %v2720
      %v2746 = vadd.f32 %v2657, %v2723
      %v2747 = vadd.f32 %v2658, %v2726
      %v2748 = vadd.f32 %v2659, %v2729
      %v2749 = vadd.f32 %v2660, %v2732
      %v2750 = vadd.f32 %v2661, %v2735
      %v2751 = vadd.f32 %v2662, %v2738
      %v2752 = vadd.f32 %v2663, %v2741
      %2753 = vst [vmem:[#allocation2] sm:$0xff] %v2743
      %2754 = vst [vmem:[#allocation2 + $0x8] sm:$0xff] %v2744
      %2755 = vst [vmem:[#allocation2 + $0x10] sm:$0xff] %v2745
      %2756 = vst [vmem:[#allocation2 + $0x18] sm:$0xff] %v2746
      %2757 = vst [vmem:[#allocation2 + $0x20] sm:$0xff] %v2747
      %2758 = vst [vmem:[#allocation2 + $0x28] sm:$0xff] %v2748
      %2759 = vst [vmem:[#allocation2 + $0x30] sm:$0xff] %v2749
      %2760 = vst [vmem:[#allocation2 + $0x38] sm:$0xff] %v2750
      %2761 = vst [vmem:[#allocation2 + $0x40] sm:$0xff] %v2751
      %2762 = vst [vmem:[#allocation2 + $0x48] sm:$0xff] %v2752
      %v2763 = vld [vmem:[%s354 + $0x2] sm:$0xff]
      %v2764 = vld [vmem:[%s354 + $0xa] sm:$0xff]
      %v2765 = vld [vmem:[%s354 + $0x12] sm:$0xff]
      %v2766 = vld [vmem:[%s354 + $0x1a] sm:$0xff]
      %v2767 = vld [vmem:[%s354 + $0x22] sm:$0xff]
      %v2768 = vld [vmem:[%s354 + $0x2a] sm:$0xff]
      %v2769 = vld [vmem:[%s354 + $0x32] sm:$0xff]
      %v2770 = vld [vmem:[%s354 + $0x3a] sm:$0xff]
      %v2771 = vld [vmem:[%s354 + $0x42] sm:$0xff]
      %v2772 = vld [vmem:[%s354 + $0x4a] sm:$0xff]
      %v2773 = vld [vmem:[#allocation2] sm:$0xff]
      %v2774 = vld [vmem:[#allocation2 + $0x8] sm:$0xff]
      %v2775 = vld [vmem:[#allocation2 + $0x10] sm:$0xff]
      %v2776 = vld [vmem:[#allocation2 + $0x18] sm:$0xff]
      %v2777 = vld [vmem:[#allocation2 + $0x20] sm:$0xff]
      %v2778 = vld [vmem:[#allocation2 + $0x28] sm:$0xff]
      %v2779 = vld [vmem:[#allocation2 + $0x30] sm:$0xff]
      %v2780 = vld [vmem:[#allocation2 + $0x38] sm:$0xff]
      %v2781 = vld [vmem:[#allocation2 + $0x40] sm:$0xff]
      %v2782 = vld [vmem:[#allocation2 + $0x48] sm:$0xff]
      %s2783 = scalar_lea.vmem %s3, 160
      %v2784 = vld [vmem:[%s2783] sm:$0xff]
      %v2786 = vsel %vm404, %v2763, 0
      %v2789 = vsel %vm404, %v2764, 0
      %v2792 = vsel %vm404, %v2765, 0
      %v2795 = vsel %vm404, %v2766, 0
      %v2798 = vsel %vm404, %v2767, 0
      %v2801 = vsel %vm404, %v2768, 0
      %v2804 = vsel %vm404, %v2769, 0
      %v2807 = vsel %vm404, %v2770, 0
      %v2810 = vsel %vm404, %v2771, 0
      %v2813 = vsel %vm404, %v2772, 0
      %2815 = vmatpush.msra.mxu0 0.0
      %2816 = vmatpush.msra.mxu0 0.0
      %2817 = vmatpush.msra.mxu0 0.0
      %2818 = vmatpush.msra.mxu0 0.0
      %2819 = vmatpush.msra.mxu0 0.0
      %2820 = vmatpush.msra.mxu0 0.0
      %2821 = vmatpush.msra.mxu0 0.0
      %2822 = vmatpush.msra.mxu0 0.0
      %2823 = vmatpush.msra.mxu0 0.0
      %2824 = vmatpush.msra.mxu0 0.0
      %2825 = vmatpush.msra.mxu0 0.0
      %2826 = vmatpush.msra.mxu0 0.0
      %2827 = vmatpush.msra.mxu0 0.0
      %2828 = vmatpush.msra.mxu0 0.0
      %2829 = vmatpush.msra.mxu0 0.0
      %2830 = vmatpush.msra.mxu0 %v2784
      %2831 = vmatmul.f32.gmra.mxu0 %v2786
      %v2832 = vpop.f32.mrf.mxu0
      %v2833 = vadd.f32 0.0, %v2832
      %2834 = vmatmul.f32.gmra.mxu0 %v2789
      %v2835 = vpop.f32.mrf.mxu0
      %v2836 = vadd.f32 0.0, %v2835
      %2837 = vmatmul.f32.gmra.mxu0 %v2792
      %v2838 = vpop.f32.mrf.mxu0
      %v2839 = vadd.f32 0.0, %v2838
      %2840 = vmatmul.f32.gmra.mxu0 %v2795
      %v2841 = vpop.f32.mrf.mxu0
      %v2842 = vadd.f32 0.0, %v2841
      %2843 = vmatmul.f32.gmra.mxu0 %v2798
      %v2844 = vpop.f32.mrf.mxu0
      %v2845 = vadd.f32 0.0, %v2844
      %2846 = vmatmul.f32.gmra.mxu0 %v2801
      %v2847 = vpop.f32.mrf.mxu0
      %v2848 = vadd.f32 0.0, %v2847
      %2849 = vmatmul.f32.gmra.mxu0 %v2804
      %v2850 = vpop.f32.mrf.mxu0
      %v2851 = vadd.f32 0.0, %v2850
      %2852 = vmatmul.f32.gmra.mxu0 %v2807
      %v2853 = vpop.f32.mrf.mxu0
      %v2854 = vadd.f32 0.0, %v2853
      %2855 = vmatmul.f32.gmra.mxu0 %v2810
      %v2856 = vpop.f32.mrf.mxu0
      %v2857 = vadd.f32 0.0, %v2856
      %2858 = vmatmul.f32.gmra.mxu0 %v2813
      %v2859 = vpop.f32.mrf.mxu0
      %v2860 = vadd.f32 0.0, %v2859
      %2861 = vdwg.mxu0
      %v2862 = vadd.f32 %v2773, %v2833
      %v2863 = vadd.f32 %v2774, %v2836
      %v2864 = vadd.f32 %v2775, %v2839
      %v2865 = vadd.f32 %v2776, %v2842
      %v2866 = vadd.f32 %v2777, %v2845
      %v2867 = vadd.f32 %v2778, %v2848
      %v2868 = vadd.f32 %v2779, %v2851
      %v2869 = vadd.f32 %v2780, %v2854
      %v2870 = vadd.f32 %v2781, %v2857
      %v2871 = vadd.f32 %v2782, %v2860
      %2872 = vst [vmem:[#allocation2] sm:$0xff] %v2862
      %2873 = vst [vmem:[#allocation2 + $0x8] sm:$0xff] %v2863
      %2874 = vst [vmem:[#allocation2 + $0x10] sm:$0xff] %v2864
      %2875 = vst [vmem:[#allocation2 + $0x18] sm:$0xff] %v2865
      %2876 = vst [vmem:[#allocation2 + $0x20] sm:$0xff] %v2866
      %2877 = vst [vmem:[#allocation2 + $0x28] sm:$0xff] %v2867
      %2878 = vst [vmem:[#allocation2 + $0x30] sm:$0xff] %v2868
      %2879 = vst [vmem:[#allocation2 + $0x38] sm:$0xff] %v2869
      %2880 = vst [vmem:[#allocation2 + $0x40] sm:$0xff] %v2870
      %2881 = vst [vmem:[#allocation2 + $0x48] sm:$0xff] %v2871
      %v2882 = vld [vmem:[%s354 + $0xa] sm:$0xff]
      %v2883 = vld [vmem:[%s354 + $0x12] sm:$0xff]
      %v2884 = vld [vmem:[%s354 + $0x1a] sm:$0xff]
      %v2885 = vld [vmem:[%s354 + $0x22] sm:$0xff]
      %v2886 = vld [vmem:[%s354 + $0x2a] sm:$0xff]
      %v2887 = vld [vmem:[%s354 + $0x32] sm:$0xff]
      %v2888 = vld [vmem:[%s354 + $0x3a] sm:$0xff]
      %v2889 = vld [vmem:[%s354 + $0x42] sm:$0xff]
      %v2890 = vld [vmem:[%s354 + $0x4a] sm:$0xff]
      %v2891 = vld [vmem:[%s354 + $0x52] sm:$0xff]
      %v2892 = vld [vmem:[#allocation2] sm:$0xff]
      %v2893 = vld [vmem:[#allocation2 + $0x8] sm:$0xff]
      %v2894 = vld [vmem:[#allocation2 + $0x10] sm:$0xff]
      %v2895 = vld [vmem:[#allocation2 + $0x18] sm:$0xff]
      %v2896 = vld [vmem:[#allocation2 + $0x20] sm:$0xff]
      %v2897 = vld [vmem:[#allocation2 + $0x28] sm:$0xff]
      %v2898 = vld [vmem:[#allocation2 + $0x30] sm:$0xff]
      %v2899 = vld [vmem:[#allocation2 + $0x38] sm:$0xff]
      %v2900 = vld [vmem:[#allocation2 + $0x40] sm:$0xff]
      %v2901 = vld [vmem:[#allocation2 + $0x48] sm:$0xff]
      %s2902 = scalar_lea.vmem %s3, 168
      %v2903 = vld [vmem:[%s2902] sm:$0xff]
      %v2905 = vsel %vm404, %v2882, 0
      %v2908 = vsel %vm404, %v2883, 0
      %v2911 = vsel %vm404, %v2884, 0
      %v2914 = vsel %vm404, %v2885, 0
      %v2917 = vsel %vm404, %v2886, 0
      %v2920 = vsel %vm404, %v2887, 0
      %v2923 = vsel %vm404, %v2888, 0
      %v2926 = vsel %vm404, %v2889, 0
      %v2929 = vsel %vm404, %v2890, 0
      %v2932 = vsel %vm404, %v2891, 0
      %2934 = vmatpush.msra.mxu0 0.0
      %2935 = vmatpush.msra.mxu0 0.0
      %2936 = vmatpush.msra.mxu0 0.0
      %2937 = vmatpush.msra.mxu0 0.0
      %2938 = vmatpush.msra.mxu0 0.0
      %2939 = vmatpush.msra.mxu0 0.0
      %2940 = vmatpush.msra.mxu0 0.0
      %2941 = vmatpush.msra.mxu0 0.0
      %2942 = vmatpush.msra.mxu0 0.0
      %2943 = vmatpush.msra.mxu0 0.0
      %2944 = vmatpush.msra.mxu0 0.0
      %2945 = vmatpush.msra.mxu0 0.0
      %2946 = vmatpush.msra.mxu0 0.0
      %2947 = vmatpush.msra.mxu0 0.0
      %2948 = vmatpush.msra.mxu0 0.0
      %2949 = vmatpush.msra.mxu0 %v2903
      %2950 = vmatmul.f32.gmra.mxu0 %v2905
      %v2951 = vpop.f32.mrf.mxu0
      %v2952 = vadd.f32 0.0, %v2951
      %2953 = vmatmul.f32.gmra.mxu0 %v2908
      %v2954 = vpop.f32.mrf.mxu0
      %v2955 = vadd.f32 0.0, %v2954
      %2956 = vmatmul.f32.gmra.mxu0 %v2911
      %v2957 = vpop.f32.mrf.mxu0
      %v2958 = vadd.f32 0.0, %v2957
      %2959 = vmatmul.f32.gmra.mxu0 %v2914
      %v2960 = vpop.f32.mrf.mxu0
      %v2961 = vadd.f32 0.0, %v2960
      %2962 = vmatmul.f32.gmra.mxu0 %v2917
      %v2963 = vpop.f32.mrf.mxu0
      %v2964 = vadd.f32 0.0, %v2963
      %2965 = vmatmul.f32.gmra.mxu0 %v2920
      %v2966 = vpop.f32.mrf.mxu0
      %v2967 = vadd.f32 0.0, %v2966
      %2968 = vmatmul.f32.gmra.mxu0 %v2923
      %v2969 = vpop.f32.mrf.mxu0
      %v2970 = vadd.f32 0.0, %v2969
      %2971 = vmatmul.f32.gmra.mxu0 %v2926
      %v2972 = vpop.f32.mrf.mxu0
      %v2973 = vadd.f32 0.0, %v2972
      %2974 = vmatmul.f32.gmra.mxu0 %v2929
      %v2975 = vpop.f32.mrf.mxu0
      %v2976 = vadd.f32 0.0, %v2975
      %2977 = vmatmul.f32.gmra.mxu0 %v2932
      %v2978 = vpop.f32.mrf.mxu0
      %v2979 = vadd.f32 0.0, %v2978
      %2980 = vdwg.mxu0
      %v2981 = vadd.f32 %v2892, %v2952
      %v2982 = vadd.f32 %v2893, %v2955
      %v2983 = vadd.f32 %v2894, %v2958
      %v2984 = vadd.f32 %v2895, %v2961
      %v2985 = vadd.f32 %v2896, %v2964
      %v2986 = vadd.f32 %v2897, %v2967
      %v2987 = vadd.f32 %v2898, %v2970
      %v2988 = vadd.f32 %v2899, %v2973
      %v2989 = vadd.f32 %v2900, %v2976
      %v2990 = vadd.f32 %v2901, %v2979
      %2991 = vst [vmem:[#allocation2] sm:$0xff] %v2981
      %2992 = vst [vmem:[#allocation2 + $0x8] sm:$0xff] %v2982
      %2993 = vst [vmem:[#allocation2 + $0x10] sm:$0xff] %v2983
      %2994 = vst [vmem:[#allocation2 + $0x18] sm:$0xff] %v2984
      %2995 = vst [vmem:[#allocation2 + $0x20] sm:$0xff] %v2985
      %2996 = vst [vmem:[#allocation2 + $0x28] sm:$0xff] %v2986
      %2997 = vst [vmem:[#allocation2 + $0x30] sm:$0xff] %v2987
      %2998 = vst [vmem:[#allocation2 + $0x38] sm:$0xff] %v2988
      %2999 = vst [vmem:[#allocation2 + $0x40] sm:$0xff] %v2989
      %3000 = vst [vmem:[#allocation2 + $0x48] sm:$0xff] %v2990
      %v3001 = vld [vmem:[%s354 + $0xb] sm:$0xff]
      %v3002 = vld [vmem:[%s354 + $0x13] sm:$0xff]
      %v3003 = vld [vmem:[%s354 + $0x1b] sm:$0xff]
      %v3004 = vld [vmem:[%s354 + $0x23] sm:$0xff]
      %v3005 = vld [vmem:[%s354 + $0x2b] sm:$0xff]
      %v3006 = vld [vmem:[%s354 + $0x33] sm:$0xff]
      %v3007 = vld [vmem:[%s354 + $0x3b] sm:$0xff]
      %v3008 = vld [vmem:[%s354 + $0x43] sm:$0xff]
      %v3009 = vld [vmem:[%s354 + $0x4b] sm:$0xff]
      %v3010 = vld [vmem:[%s354 + $0x53] sm:$0xff]
      %v3011 = vld [vmem:[#allocation2] sm:$0xff]
      %v3012 = vld [vmem:[#allocation2 + $0x8] sm:$0xff]
      %v3013 = vld [vmem:[#allocation2 + $0x10] sm:$0xff]
      %v3014 = vld [vmem:[#allocation2 + $0x18] sm:$0xff]
      %v3015 = vld [vmem:[#allocation2 + $0x20] sm:$0xff]
      %v3016 = vld [vmem:[#allocation2 + $0x28] sm:$0xff]
      %v3017 = vld [vmem:[#allocation2 + $0x30] sm:$0xff]
      %v3018 = vld [vmem:[#allocation2 + $0x38] sm:$0xff]
      %v3019 = vld [vmem:[#allocation2 + $0x40] sm:$0xff]
      %v3020 = vld [vmem:[#allocation2 + $0x48] sm:$0xff]
      %s3021 = scalar_lea.vmem %s3, 176
      %v3022 = vld [vmem:[%s3021] sm:$0xff]
      %v3024 = vsel %vm404, %v3001, 0
      %v3027 = vsel %vm404, %v3002, 0
      %v3030 = vsel %vm404, %v3003, 0
      %v3033 = vsel %vm404, %v3004, 0
      %v3036 = vsel %vm404, %v3005, 0
      %v3039 = vsel %vm404, %v3006, 0
      %v3042 = vsel %vm404, %v3007, 0
      %v3045 = vsel %vm404, %v3008, 0
      %v3048 = vsel %vm404, %v3009, 0
      %v3051 = vsel %vm404, %v3010, 0
      %3053 = vmatpush.msra.mxu0 0.0
      %3054 = vmatpush.msra.mxu0 0.0
      %3055 = vmatpush.msra.mxu0 0.0
      %3056 = vmatpush.msra.mxu0 0.0
      %3057 = vmatpush.msra.mxu0 0.0
      %3058 = vmatpush.msra.mxu0 0.0
      %3059 = vmatpush.msra.mxu0 0.0
      %3060 = vmatpush.msra.mxu0 0.0
      %3061 = vmatpush.msra.mxu0 0.0
      %3062 = vmatpush.msra.mxu0 0.0
      %3063 = vmatpush.msra.mxu0 0.0
      %3064 = vmatpush.msra.mxu0 0.0
      %3065 = vmatpush.msra.mxu0 0.0
      %3066 = vmatpush.msra.mxu0 0.0
      %3067 = vmatpush.msra.mxu0 0.0
      %3068 = vmatpush.msra.mxu0 %v3022
      %3069 = vmatmul.f32.gmra.mxu0 %v3024
      %v3070 = vpop.f32.mrf.mxu0
      %v3071 = vadd.f32 0.0, %v3070
      %3072 = vmatmul.f32.gmra.mxu0 %v3027
      %v3073 = vpop.f32.mrf.mxu0
      %v3074 = vadd.f32 0.0, %v3073
      %3075 = vmatmul.f32.gmra.mxu0 %v3030
      %v3076 = vpop.f32.mrf.mxu0
      %v3077 = vadd.f32 0.0, %v3076
      %3078 = vmatmul.f32.gmra.mxu0 %v3033
      %v3079 = vpop.f32.mrf.mxu0
      %v3080 = vadd.f32 0.0, %v3079
      %3081 = vmatmul.f32.gmra.mxu0 %v3036
      %v3082 = vpop.f32.mrf.mxu0
      %v3083 = vadd.f32 0.0, %v3082
      %3084 = vmatmul.f32.gmra.mxu0 %v3039
      %v3085 = vpop.f32.mrf.mxu0
      %v3086 = vadd.f32 0.0, %v3085
      %3087 = vmatmul.f32.gmra.mxu0 %v3042
      %v3088 = vpop.f32.mrf.mxu0
      %v3089 = vadd.f32 0.0, %v3088
      %3090 = vmatmul.f32.gmra.mxu0 %v3045
      %v3091 = vpop.f32.mrf.mxu0
      %v3092 = vadd.f32 0.0, %v3091
      %3093 = vmatmul.f32.gmra.mxu0 %v3048
      %v3094 = vpop.f32.mrf.mxu0
      %v3095 = vadd.f32 0.0, %v3094
      %3096 = vmatmul.f32.gmra.mxu0 %v3051
      %v3097 = vpop.f32.mrf.mxu0
      %v3098 = vadd.f32 0.0, %v3097
      %3099 = vdwg.mxu0
      %v3100 = vadd.f32 %v3011, %v3071
      %v3101 = vadd.f32 %v3012, %v3074
      %v3102 = vadd.f32 %v3013, %v3077
      %v3103 = vadd.f32 %v3014, %v3080
      %v3104 = vadd.f32 %v3015, %v3083
      %v3105 = vadd.f32 %v3016, %v3086
      %v3106 = vadd.f32 %v3017, %v3089
      %v3107 = vadd.f32 %v3018, %v3092
      %v3108 = vadd.f32 %v3019, %v3095
      %v3109 = vadd.f32 %v3020, %v3098
      %3110 = vst [vmem:[#allocation2] sm:$0xff] %v3100
      %3111 = vst [vmem:[#allocation2 + $0x8] sm:$0xff] %v3101
      %3112 = vst [vmem:[#allocation2 + $0x10] sm:$0xff] %v3102
      %3113 = vst [vmem:[#allocation2 + $0x18] sm:$0xff] %v3103
      %3114 = vst [vmem:[#allocation2 + $0x20] sm:$0xff] %v3104
      %3115 = vst [vmem:[#allocation2 + $0x28] sm:$0xff] %v3105
      %3116 = vst [vmem:[#allocation2 + $0x30] sm:$0xff] %v3106
      %3117 = vst [vmem:[#allocation2 + $0x38] sm:$0xff] %v3107
      %3118 = vst [vmem:[#allocation2 + $0x40] sm:$0xff] %v3108
      %3119 = vst [vmem:[#allocation2 + $0x48] sm:$0xff] %v3109
      %v3120 = vld [vmem:[%s354 + $0xc] sm:$0xff]
      %v3121 = vld [vmem:[%s354 + $0x14] sm:$0xff]
      %v3122 = vld [vmem:[%s354 + $0x1c] sm:$0xff]
      %v3123 = vld [vmem:[%s354 + $0x24] sm:$0xff]
      %v3124 = vld [vmem:[%s354 + $0x2c] sm:$0xff]
      %v3125 = vld [vmem:[%s354 + $0x34] sm:$0xff]
      %v3126 = vld [vmem:[%s354 + $0x3c] sm:$0xff]
      %v3127 = vld [vmem:[%s354 + $0x44] sm:$0xff]
      %v3128 = vld [vmem:[%s354 + $0x4c] sm:$0xff]
      %v3129 = vld [vmem:[%s354 + $0x54] sm:$0xff]
      %v3130 = vld [vmem:[#allocation2] sm:$0xff]
      %v3131 = vld [vmem:[#allocation2 + $0x8] sm:$0xff]
      %v3132 = vld [vmem:[#allocation2 + $0x10] sm:$0xff]
      %v3133 = vld [vmem:[#allocation2 + $0x18] sm:$0xff]
      %v3134 = vld [vmem:[#allocation2 + $0x20] sm:$0xff]
      %v3135 = vld [vmem:[#allocation2 + $0x28] sm:$0xff]
      %v3136 = vld [vmem:[#allocation2 + $0x30] sm:$0xff]
      %v3137 = vld [vmem:[#allocation2 + $0x38] sm:$0xff]
      %v3138 = vld [vmem:[#allocation2 + $0x40] sm:$0xff]
      %v3139 = vld [vmem:[#allocation2 + $0x48] sm:$0xff]
      %s3140 = scalar_lea.vmem %s3, 184
      %v3141 = vld [vmem:[%s3140] sm:$0xff]
      %v3143 = vsel %vm404, %v3120, 0
      %v3146 = vsel %vm404, %v3121, 0
      %v3149 = vsel %vm404, %v3122, 0
      %v3152 = vsel %vm404, %v3123, 0
      %v3155 = vsel %vm404, %v3124, 0
      %v3158 = vsel %vm404, %v3125, 0
      %v3161 = vsel %vm404, %v3126, 0
      %v3164 = vsel %vm404, %v3127, 0
      %v3167 = vsel %vm404, %v3128, 0
      %v3170 = vsel %vm404, %v3129, 0
      %3172 = vmatpush.msra.mxu0 0.0
      %3173 = vmatpush.msra.mxu0 0.0
      %3174 = vmatpush.msra.mxu0 0.0
      %3175 = vmatpush.msra.mxu0 0.0
      %3176 = vmatpush.msra.mxu0 0.0
      %3177 = vmatpush.msra.mxu0 0.0
      %3178 = vmatpush.msra.mxu0 0.0
      %3179 = vmatpush.msra.mxu0 0.0
      %3180 = vmatpush.msra.mxu0 0.0
      %3181 = vmatpush.msra.mxu0 0.0
      %3182 = vmatpush.msra.mxu0 0.0
      %3183 = vmatpush.msra.mxu0 0.0
      %3184 = vmatpush.msra.mxu0 0.0
      %3185 = vmatpush.msra.mxu0 0.0
      %3186 = vmatpush.msra.mxu0 0.0
      %3187 = vmatpush.msra.mxu0 %v3141
      %3188 = vmatmul.f32.gmra.mxu0 %v3143
      %v3189 = vpop.f32.mrf.mxu0
      %v3190 = vadd.f32 0.0, %v3189
      %3191 = vmatmul.f32.gmra.mxu0 %v3146
      %v3192 = vpop.f32.mrf.mxu0
      %v3193 = vadd.f32 0.0, %v3192
      %3194 = vmatmul.f32.gmra.mxu0 %v3149
      %v3195 = vpop.f32.mrf.mxu0
      %v3196 = vadd.f32 0.0, %v3195
      %3197 = vmatmul.f32.gmra.mxu0 %v3152
      %v3198 = vpop.f32.mrf.mxu0
      %v3199 = vadd.f32 0.0, %v3198
      %3200 = vmatmul.f32.gmra.mxu0 %v3155
      %v3201 = vpop.f32.mrf.mxu0
      %v3202 = vadd.f32 0.0, %v3201
      %3203 = vmatmul.f32.gmra.mxu0 %v3158
      %v3204 = vpop.f32.mrf.mxu0
      %v3205 = vadd.f32 0.0, %v3204
      %3206 = vmatmul.f32.gmra.mxu0 %v3161
      %v3207 = vpop.f32.mrf.mxu0
      %v3208 = vadd.f32 0.0, %v3207
      %3209 = vmatmul.f32.gmra.mxu0 %v3164
      %v3210 = vpop.f32.mrf.mxu0
      %v3211 = vadd.f32 0.0, %v3210
      %3212 = vmatmul.f32.gmra.mxu0 %v3167
      %v3213 = vpop.f32.mrf.mxu0
      %v3214 = vadd.f32 0.0, %v3213
      %3215 = vmatmul.f32.gmra.mxu0 %v3170
      %v3216 = vpop.f32.mrf.mxu0
      %v3217 = vadd.f32 0.0, %v3216
      %3218 = vdwg.mxu0
      %v3219 = vadd.f32 %v3130, %v3190
      %v3220 = vadd.f32 %v3131, %v3193
      %v3221 = vadd.f32 %v3132, %v3196
      %v3222 = vadd.f32 %v3133, %v3199
      %v3223 = vadd.f32 %v3134, %v3202
      %v3224 = vadd.f32 %v3135, %v3205
      %v3225 = vadd.f32 %v3136, %v3208
      %v3226 = vadd.f32 %v3137, %v3211
      %v3227 = vadd.f32 %v3138, %v3214
      %v3228 = vadd.f32 %v3139, %v3217
      %3229 = vst [vmem:[#allocation2] sm:$0xff] %v3219
      %3230 = vst [vmem:[#allocation2 + $0x8] sm:$0xff] %v3220
      %3231 = vst [vmem:[#allocation2 + $0x10] sm:$0xff] %v3221
      %3232 = vst [vmem:[#allocation2 + $0x18] sm:$0xff] %v3222
      %3233 = vst [vmem:[#allocation2 + $0x20] sm:$0xff] %v3223
      %3234 = vst [vmem:[#allocation2 + $0x28] sm:$0xff] %v3224
      %3235 = vst [vmem:[#allocation2 + $0x30] sm:$0xff] %v3225
      %3236 = vst [vmem:[#allocation2 + $0x38] sm:$0xff] %v3226
      %3237 = vst [vmem:[#allocation2 + $0x40] sm:$0xff] %v3227
      %3238 = vst [vmem:[#allocation2 + $0x48] sm:$0xff] %v3228
      %v3239 = vld [vmem:[%s354 + $0x14] sm:$0xff]
      %v3240 = vld [vmem:[%s354 + $0x1c] sm:$0xff]
      %v3241 = vld [vmem:[%s354 + $0x24] sm:$0xff]
      %v3242 = vld [vmem:[%s354 + $0x2c] sm:$0xff]
      %v3243 = vld [vmem:[%s354 + $0x34] sm:$0xff]
      %v3244 = vld [vmem:[%s354 + $0x3c] sm:$0xff]
      %v3245 = vld [vmem:[%s354 + $0x44] sm:$0xff]
      %v3246 = vld [vmem:[%s354 + $0x4c] sm:$0xff]
      %v3247 = vld [vmem:[%s354 + $0x54] sm:$0xff]
      %v3248 = vld [vmem:[%s354 + $0x5c] sm:$0xff]
      %v3249 = vld [vmem:[#allocation2] sm:$0xff]
      %v3250 = vld [vmem:[#allocation2 + $0x8] sm:$0xff]
      %v3251 = vld [vmem:[#allocation2 + $0x10] sm:$0xff]
      %v3252 = vld [vmem:[#allocation2 + $0x18] sm:$0xff]
      %v3253 = vld [vmem:[#allocation2 + $0x20] sm:$0xff]
      %v3254 = vld [vmem:[#allocation2 + $0x28] sm:$0xff]
      %v3255 = vld [vmem:[#allocation2 + $0x30] sm:$0xff]
      %v3256 = vld [vmem:[#allocation2 + $0x38] sm:$0xff]
      %v3257 = vld [vmem:[#allocation2 + $0x40] sm:$0xff]
      %v3258 = vld [vmem:[#allocation2 + $0x48] sm:$0xff]
      %s3259 = scalar_lea.vmem %s3, 192
      %v3260 = vld [vmem:[%s3259] sm:$0xff]
      %v3262 = vsel %vm404, %v3239, 0
      %v3265 = vsel %vm404, %v3240, 0
      %v3268 = vsel %vm404, %v3241, 0
      %v3271 = vsel %vm404, %v3242, 0
      %v3274 = vsel %vm404, %v3243, 0
      %v3277 = vsel %vm404, %v3244, 0
      %v3280 = vsel %vm404, %v3245, 0
      %v3283 = vsel %vm404, %v3246, 0
      %v3286 = vsel %vm404, %v3247, 0
      %v3289 = vsel %vm404, %v3248, 0
      %3291 = vmatpush.msra.mxu0 0.0
      %3292 = vmatpush.msra.mxu0 0.0
      %3293 = vmatpush.msra.mxu0 0.0
      %3294 = vmatpush.msra.mxu0 0.0
      %3295 = vmatpush.msra.mxu0 0.0
      %3296 = vmatpush.msra.mxu0 0.0
      %3297 = vmatpush.msra.mxu0 0.0
      %3298 = vmatpush.msra.mxu0 0.0
      %3299 = vmatpush.msra.mxu0 0.0
      %3300 = vmatpush.msra.mxu0 0.0
      %3301 = vmatpush.msra.mxu0 0.0
      %3302 = vmatpush.msra.mxu0 0.0
      %3303 = vmatpush.msra.mxu0 0.0
      %3304 = vmatpush.msra.mxu0 0.0
      %3305 = vmatpush.msra.mxu0 0.0
      %3306 = vmatpush.msra.mxu0 %v3260
      %3307 = vmatmul.f32.gmra.mxu0 %v3262
      %v3308 = vpop.f32.mrf.mxu0
      %v3309 = vadd.f32 0.0, %v3308
      %3310 = vmatmul.f32.gmra.mxu0 %v3265
      %v3311 = vpop.f32.mrf.mxu0
      %v3312 = vadd.f32 0.0, %v3311
      %3313 = vmatmul.f32.gmra.mxu0 %v3268
      %v3314 = vpop.f32.mrf.mxu0
      %v3315 = vadd.f32 0.0, %v3314
      %3316 = vmatmul.f32.gmra.mxu0 %v3271
      %v3317 = vpop.f32.mrf.mxu0
      %v3318 = vadd.f32 0.0, %v3317
      %3319 = vmatmul.f32.gmra.mxu0 %v3274
      %v3320 = vpop.f32.mrf.mxu0
      %v3321 = vadd.f32 0.0, %v3320
      %3322 = vmatmul.f32.gmra.mxu0 %v3277
      %v3323 = vpop.f32.mrf.mxu0
      %v3324 = vadd.f32 0.0, %v3323
      %3325 = vmatmul.f32.gmra.mxu0 %v3280
      %v3326 = vpop.f32.mrf.mxu0
      %v3327 = vadd.f32 0.0, %v3326
      %3328 = vmatmul.f32.gmra.mxu0 %v3283
      %v3329 = vpop.f32.mrf.mxu0
      %v3330 = vadd.f32 0.0, %v3329
      %3331 = vmatmul.f32.gmra.mxu0 %v3286
      %v3332 = vpop.f32.mrf.mxu0
      %v3333 = vadd.f32 0.0, %v3332
      %3334 = vmatmul.f32.gmra.mxu0 %v3289
      %v3335 = vpop.f32.mrf.mxu0
      %v3336 = vadd.f32 0.0, %v3335
      %3337 = vdwg.mxu0
      %v3338 = vadd.f32 %v3249, %v3309
      %v3339 = vadd.f32 %v3250, %v3312
      %v3340 = vadd.f32 %v3251, %v3315
      %v3341 = vadd.f32 %v3252, %v3318
      %v3342 = vadd.f32 %v3253, %v3321
      %v3343 = vadd.f32 %v3254, %v3324
      %v3344 = vadd.f32 %v3255, %v3327
      %v3345 = vadd.f32 %v3256, %v3330
      %v3346 = vadd.f32 %v3257, %v3333
      %v3347 = vadd.f32 %v3258, %v3336
      %3348 = vst [vmem:[#allocation2] sm:$0xff] %v3338
      %3349 = vst [vmem:[#allocation2 + $0x8] sm:$0xff] %v3339
      %3350 = vst [vmem:[#allocation2 + $0x10] sm:$0xff] %v3340
      %3351 = vst [vmem:[#allocation2 + $0x18] sm:$0xff] %v3341
      %3352 = vst [vmem:[#allocation2 + $0x20] sm:$0xff] %v3342
      %3353 = vst [vmem:[#allocation2 + $0x28] sm:$0xff] %v3343
      %3354 = vst [vmem:[#allocation2 + $0x30] sm:$0xff] %v3344
      %3355 = vst [vmem:[#allocation2 + $0x38] sm:$0xff] %v3345
      %3356 = vst [vmem:[#allocation2 + $0x40] sm:$0xff] %v3346
      %3357 = vst [vmem:[#allocation2 + $0x48] sm:$0xff] %v3347
      %v3358 = vld [vmem:[%s354 + $0x15] sm:$0xff]
      %v3359 = vld [vmem:[%s354 + $0x1d] sm:$0xff]
      %v3360 = vld [vmem:[%s354 + $0x25] sm:$0xff]
      %v3361 = vld [vmem:[%s354 + $0x2d] sm:$0xff]
      %v3362 = vld [vmem:[%s354 + $0x35] sm:$0xff]
      %v3363 = vld [vmem:[%s354 + $0x3d] sm:$0xff]
      %v3364 = vld [vmem:[%s354 + $0x45] sm:$0xff]
      %v3365 = vld [vmem:[%s354 + $0x4d] sm:$0xff]
      %v3366 = vld [vmem:[%s354 + $0x55] sm:$0xff]
      %v3367 = vld [vmem:[%s354 + $0x5d] sm:$0xff]
      %v3368 = vld [vmem:[#allocation2] sm:$0xff]
      %v3369 = vld [vmem:[#allocation2 + $0x8] sm:$0xff]
      %v3370 = vld [vmem:[#allocation2 + $0x10] sm:$0xff]
      %v3371 = vld [vmem:[#allocation2 + $0x18] sm:$0xff]
      %v3372 = vld [vmem:[#allocation2 + $0x20] sm:$0xff]
      %v3373 = vld [vmem:[#allocation2 + $0x28] sm:$0xff]
      %v3374 = vld [vmem:[#allocation2 + $0x30] sm:$0xff]
      %v3375 = vld [vmem:[#allocation2 + $0x38] sm:$0xff]
      %v3376 = vld [vmem:[#allocation2 + $0x40] sm:$0xff]
      %v3377 = vld [vmem:[#allocation2 + $0x48] sm:$0xff]
      %s3378 = scalar_lea.vmem %s3, 200
      %v3379 = vld [vmem:[%s3378] sm:$0xff]
      %v3381 = vsel %vm404, %v3358, 0
      %v3384 = vsel %vm404, %v3359, 0
      %v3387 = vsel %vm404, %v3360, 0
      %v3390 = vsel %vm404, %v3361, 0
      %v3393 = vsel %vm404, %v3362, 0
      %v3396 = vsel %vm404, %v3363, 0
      %v3399 = vsel %vm404, %v3364, 0
      %v3402 = vsel %vm404, %v3365, 0
      %v3405 = vsel %vm404, %v3366, 0
      %v3408 = vsel %vm404, %v3367, 0
      %3410 = vmatpush.msra.mxu0 0.0
      %3411 = vmatpush.msra.mxu0 0.0
      %3412 = vmatpush.msra.mxu0 0.0
      %3413 = vmatpush.msra.mxu0 0.0
      %3414 = vmatpush.msra.mxu0 0.0
      %3415 = vmatpush.msra.mxu0 0.0
      %3416 = vmatpush.msra.mxu0 0.0
      %3417 = vmatpush.msra.mxu0 0.0
      %3418 = vmatpush.msra.mxu0 0.0
      %3419 = vmatpush.msra.mxu0 0.0
      %3420 = vmatpush.msra.mxu0 0.0
      %3421 = vmatpush.msra.mxu0 0.0
      %3422 = vmatpush.msra.mxu0 0.0
      %3423 = vmatpush.msra.mxu0 0.0
      %3424 = vmatpush.msra.mxu0 0.0
      %3425 = vmatpush.msra.mxu0 %v3379
      %3426 = vmatmul.f32.gmra.mxu0 %v3381
      %v3427 = vpop.f32.mrf.mxu0
      %v3428 = vadd.f32 0.0, %v3427
      %3429 = vmatmul.f32.gmra.mxu0 %v3384
      %v3430 = vpop.f32.mrf.mxu0
      %v3431 = vadd.f32 0.0, %v3430
      %3432 = vmatmul.f32.gmra.mxu0 %v3387
      %v3433 = vpop.f32.mrf.mxu0
      %v3434 = vadd.f32 0.0, %v3433
      %3435 = vmatmul.f32.gmra.mxu0 %v3390
      %v3436 = vpop.f32.mrf.mxu0
      %v3437 = vadd.f32 0.0, %v3436
      %3438 = vmatmul.f32.gmra.mxu0 %v3393
      %v3439 = vpop.f32.mrf.mxu0
      %v3440 = vadd.f32 0.0, %v3439
      %3441 = vmatmul.f32.gmra.mxu0 %v3396
      %v3442 = vpop.f32.mrf.mxu0
      %v3443 = vadd.f32 0.0, %v3442
      %3444 = vmatmul.f32.gmra.mxu0 %v3399
      %v3445 = vpop.f32.mrf.mxu0
      %v3446 = vadd.f32 0.0, %v3445
      %3447 = vmatmul.f32.gmra.mxu0 %v3402
      %v3448 = vpop.f32.mrf.mxu0
      %v3449 = vadd.f32 0.0, %v3448
      %3450 = vmatmul.f32.gmra.mxu0 %v3405
      %v3451 = vpop.f32.mrf.mxu0
      %v3452 = vadd.f32 0.0, %v3451
      %3453 = vmatmul.f32.gmra.mxu0 %v3408
      %v3454 = vpop.f32.mrf.mxu0
      %v3455 = vadd.f32 0.0, %v3454
      %3456 = vdwg.mxu0
      %v3457 = vadd.f32 %v3368, %v3428
      %v3458 = vadd.f32 %v3369, %v3431
      %v3459 = vadd.f32 %v3370, %v3434
      %v3460 = vadd.f32 %v3371, %v3437
      %v3461 = vadd.f32 %v3372, %v3440
      %v3462 = vadd.f32 %v3373, %v3443
      %v3463 = vadd.f32 %v3374, %v3446
      %v3464 = vadd.f32 %v3375, %v3449
      %v3465 = vadd.f32 %v3376, %v3452
      %v3466 = vadd.f32 %v3377, %v3455
      %3467 = vst [vmem:[#allocation2] sm:$0xff] %v3457
      %3468 = vst [vmem:[#allocation2 + $0x8] sm:$0xff] %v3458
      %3469 = vst [vmem:[#allocation2 + $0x10] sm:$0xff] %v3459
      %3470 = vst [vmem:[#allocation2 + $0x18] sm:$0xff] %v3460
      %3471 = vst [vmem:[#allocation2 + $0x20] sm:$0xff] %v3461
      %3472 = vst [vmem:[#allocation2 + $0x28] sm:$0xff] %v3462
      %3473 = vst [vmem:[#allocation2 + $0x30] sm:$0xff] %v3463
      %3474 = vst [vmem:[#allocation2 + $0x38] sm:$0xff] %v3464
      %3475 = vst [vmem:[#allocation2 + $0x40] sm:$0xff] %v3465
      %3476 = vst [vmem:[#allocation2 + $0x48] sm:$0xff] %v3466
      %v3477 = vld [vmem:[%s354 + $0x16] sm:$0xff]
      %v3478 = vld [vmem:[%s354 + $0x1e] sm:$0xff]
      %v3479 = vld [vmem:[%s354 + $0x26] sm:$0xff]
      %v3480 = vld [vmem:[%s354 + $0x2e] sm:$0xff]
      %v3481 = vld [vmem:[%s354 + $0x36] sm:$0xff]
      %v3482 = vld [vmem:[%s354 + $0x3e] sm:$0xff]
      %v3483 = vld [vmem:[%s354 + $0x46] sm:$0xff]
      %v3484 = vld [vmem:[%s354 + $0x4e] sm:$0xff]
      %v3485 = vld [vmem:[%s354 + $0x56] sm:$0xff]
      %v3486 = vld [vmem:[%s354 + $0x5e] sm:$0xff]
      %v3487 = vld [vmem:[#allocation2] sm:$0xff]
      %v3488 = vld [vmem:[#allocation2 + $0x8] sm:$0xff]
      %v3489 = vld [vmem:[#allocation2 + $0x10] sm:$0xff]
      %v3490 = vld [vmem:[#allocation2 + $0x18] sm:$0xff]
      %v3491 = vld [vmem:[#allocation2 + $0x20] sm:$0xff]
      %v3492 = vld [vmem:[#allocation2 + $0x28] sm:$0xff]
      %v3493 = vld [vmem:[#allocation2 + $0x30] sm:$0xff]
      %v3494 = vld [vmem:[#allocation2 + $0x38] sm:$0xff]
      %v3495 = vld [vmem:[#allocation2 + $0x40] sm:$0xff]
      %v3496 = vld [vmem:[#allocation2 + $0x48] sm:$0xff]
      %s3497 = scalar_lea.vmem %s3, 208
      %v3498 = vld [vmem:[%s3497] sm:$0xff]
      %v3500 = vsel %vm404, %v3477, 0
      %v3503 = vsel %vm404, %v3478, 0
      %v3506 = vsel %vm404, %v3479, 0
      %v3509 = vsel %vm404, %v3480, 0
      %v3512 = vsel %vm404, %v3481, 0
      %v3515 = vsel %vm404, %v3482, 0
      %v3518 = vsel %vm404, %v3483, 0
      %v3521 = vsel %vm404, %v3484, 0
      %v3524 = vsel %vm404, %v3485, 0
      %v3527 = vsel %vm404, %v3486, 0
      %3529 = vmatpush.msra.mxu0 0.0
      %3530 = vmatpush.msra.mxu0 0.0
      %3531 = vmatpush.msra.mxu0 0.0
      %3532 = vmatpush.msra.mxu0 0.0
      %3533 = vmatpush.msra.mxu0 0.0
      %3534 = vmatpush.msra.mxu0 0.0
      %3535 = vmatpush.msra.mxu0 0.0
      %3536 = vmatpush.msra.mxu0 0.0
      %3537 = vmatpush.msra.mxu0 0.0
      %3538 = vmatpush.msra.mxu0 0.0
      %3539 = vmatpush.msra.mxu0 0.0
      %3540 = vmatpush.msra.mxu0 0.0
      %3541 = vmatpush.msra.mxu0 0.0
      %3542 = vmatpush.msra.mxu0 0.0
      %3543 = vmatpush.msra.mxu0 0.0
      %3544 = vmatpush.msra.mxu0 %v3498
      %3545 = vmatmul.f32.gmra.mxu0 %v3500
      %v3546 = vpop.f32.mrf.mxu0
      %v3547 = vadd.f32 0.0, %v3546
      %3548 = vmatmul.f32.gmra.mxu0 %v3503
      %v3549 = vpop.f32.mrf.mxu0
      %v3550 = vadd.f32 0.0, %v3549
      %3551 = vmatmul.f32.gmra.mxu0 %v3506
      %v3552 = vpop.f32.mrf.mxu0
      %v3553 = vadd.f32 0.0, %v3552
      %3554 = vmatmul.f32.gmra.mxu0 %v3509
      %v3555 = vpop.f32.mrf.mxu0
      %v3556 = vadd.f32 0.0, %v3555
      %3557 = vmatmul.f32.gmra.mxu0 %v3512
      %v3558 = vpop.f32.mrf.mxu0
      %v3559 = vadd.f32 0.0, %v3558
      %3560 = vmatmul.f32.gmra.mxu0 %v3515
      %v3561 = vpop.f32.mrf.mxu0
      %v3562 = vadd.f32 0.0, %v3561
      %3563 = vmatmul.f32.gmra.mxu0 %v3518
      %v3564 = vpop.f32.mrf.mxu0
      %v3565 = vadd.f32 0.0, %v3564
      %3566 = vmatmul.f32.gmra.mxu0 %v3521
      %v3567 = vpop.f32.mrf.mxu0
      %v3568 = vadd.f32 0.0, %v3567
      %3569 = vmatmul.f32.gmra.mxu0 %v3524
      %v3570 = vpop.f32.mrf.mxu0
      %v3571 = vadd.f32 0.0, %v3570
      %3572 = vmatmul.f32.gmra.mxu0 %v3527
      %v3573 = vpop.f32.mrf.mxu0
      %v3574 = vadd.f32 0.0, %v3573
      %3575 = vdwg.mxu0
      %v3576 = vadd.f32 %v3487, %v3547
      %v3577 = vadd.f32 %v3488, %v3550
      %v3578 = vadd.f32 %v3489, %v3553
      %v3579 = vadd.f32 %v3490, %v3556
      %v3580 = vadd.f32 %v3491, %v3559
      %v3581 = vadd.f32 %v3492, %v3562
      %v3582 = vadd.f32 %v3493, %v3565
      %v3583 = vadd.f32 %v3494, %v3568
      %v3584 = vadd.f32 %v3495, %v3571
      %v3585 = vadd.f32 %v3496, %v3574
      %3586 = vst [vmem:[#allocation2] sm:$0xff] %v3576
      %3587 = vst [vmem:[#allocation2 + $0x8] sm:$0xff] %v3577
      %3588 = vst [vmem:[#allocation2 + $0x10] sm:$0xff] %v3578
      %3589 = vst [vmem:[#allocation2 + $0x18] sm:$0xff] %v3579
      %3590 = vst [vmem:[#allocation2 + $0x20] sm:$0xff] %v3580
      %3591 = vst [vmem:[#allocation2 + $0x28] sm:$0xff] %v3581
      %3592 = vst [vmem:[#allocation2 + $0x30] sm:$0xff] %v3582
      %3593 = vst [vmem:[#allocation2 + $0x38] sm:$0xff] %v3583
      %3594 = vst [vmem:[#allocation2 + $0x40] sm:$0xff] %v3584
      %3595 = vst [vmem:[#allocation2 + $0x48] sm:$0xff] %v3585
      %v3596 = vlaneseq
      %v3597 = vshrl.u32 %v3596, 7
      %v3598 = vadd.s32 %v3597, 8
      %v3599 = vadd.s32 %v3597, 16
      %v3600 = vadd.s32 %v3597, 24
      %v3601 = vadd.s32 %v3597, 32
      %v3602 = vadd.s32 %v3597, 40
      %v3603 = vadd.s32 %v3597, 48
      %v3604 = vadd.s32 %v3597, 56
      %v3605 = vadd.s32 %v3597, 64
      %v3606 = vadd.s32 %v3597, 72
      %vm3607 = vcmp.lt.s32.totalorder %v3597, 0
      %v3608 = vsub.s32 0, %v3597
      %v3609 = vsel %vm3607, %v3608, %v3597
      %v3610 = vand.u32 %v3609, 65535
      %v3611 = vshrl.u32 %v3609, 16
      %v3613 = vmul.u32 %v3610, 52429
      %v3614 = vmul.u32 %v3610, 52428
      %v3615 = vmul.u32 %v3611, 52429
      %v3616 = vmul.u32 %v3611, 52428
      %v3617 = vshll.u32 %v3614, 16
      %v3618 = vshrl.u32 %v3614, 16
      %v3619 = vshll.u32 %v3615, 16
      %v3620 = vshrl.u32 %v3615, 16
      %vm3621 = vc.u32 %v3613, %v3617
      %v3622 = vsel %vm3621, 1, 0
      %v3623 = vadd.s32 %v3613, %v3617
      %v3624 = vadd.s32 %v3616, %v3622
      %vm3625 = vc.u32 %v3623, %v3619
      %v3626 = vsel %vm3625, 1, 0
      %v3627 = vadd.s32 %v3623, %v3619
      %v3628 = vadd.s32 %v3624, %v3626
      %v3629 = vadd.s32 %v3628, %v3618
      %v3630 = vadd.s32 %v3629, %v3620
      %v3631 = vshrl.u32 %v3630, 3
      %v3632 = vmul.u32 %v3631, 10
      %v3633 = vsub.s32 %v3609, %v3632
      %v3634 = vsub.s32 0, %v3633
      %v3635 = vsel %vm3607, %v3634, %v3633
      %vm3636 = vcmp.lt.s32.totalorder %v3598, 0
      %v3637 = vsub.s32 0, %v3598
      %v3638 = vsel %vm3636, %v3637, %v3598
      %v3639 = vand.u32 %v3638, 65535
      %v3640 = vshrl.u32 %v3638, 16
      %v3642 = vmul.u32 %v3639, 52429
      %v3643 = vmul.u32 %v3639, 52428
      %v3644 = vmul.u32 %v3640, 52429
      %v3645 = vmul.u32 %v3640, 52428
      %v3646 = vshll.u32 %v3643, 16
      %v3647 = vshrl.u32 %v3643, 16
      %v3648 = vshll.u32 %v3644, 16
      %v3649 = vshrl.u32 %v3644, 16
      %vm3650 = vc.u32 %v3642, %v3646
      %v3651 = vsel %vm3650, 1, 0
      %v3652 = vadd.s32 %v3642, %v3646
      %v3653 = vadd.s32 %v3645, %v3651
      %vm3654 = vc.u32 %v3652, %v3648
      %v3655 = vsel %vm3654, 1, 0
      %v3656 = vadd.s32 %v3652, %v3648
      %v3657 = vadd.s32 %v3653, %v3655
      %v3658 = vadd.s32 %v3657, %v3647
      %v3659 = vadd.s32 %v3658, %v3649
      %v3660 = vshrl.u32 %v3659, 3
      %v3661 = vmul.u32 %v3660, 10
      %v3662 = vsub.s32 %v3638, %v3661
      %v3663 = vsub.s32 0, %v3662
      %v3664 = vsel %vm3636, %v3663, %v3662
      %vm3665 = vcmp.lt.s32.totalorder %v3599, 0
      %v3666 = vsub.s32 0, %v3599
      %v3667 = vsel %vm3665, %v3666, %v3599
      %v3668 = vand.u32 %v3667, 65535
      %v3669 = vshrl.u32 %v3667, 16
      %v3671 = vmul.u32 %v3668, 52429
      %v3672 = vmul.u32 %v3668, 52428
      %v3673 = vmul.u32 %v3669, 52429
      %v3674 = vmul.u32 %v3669, 52428
      %v3675 = vshll.u32 %v3672, 16
      %v3676 = vshrl.u32 %v3672, 16
      %v3677 = vshll.u32 %v3673, 16
      %v3678 = vshrl.u32 %v3673, 16
      %vm3679 = vc.u32 %v3671, %v3675
      %v3680 = vsel %vm3679, 1, 0
      %v3681 = vadd.s32 %v3671, %v3675
      %v3682 = vadd.s32 %v3674, %v3680
      %vm3683 = vc.u32 %v3681, %v3677
      %v3684 = vsel %vm3683, 1, 0
      %v3685 = vadd.s32 %v3681, %v3677
      %v3686 = vadd.s32 %v3682, %v3684
      %v3687 = vadd.s32 %v3686, %v3676
      %v3688 = vadd.s32 %v3687, %v3678
      %v3689 = vshrl.u32 %v3688, 3
      %v3690 = vmul.u32 %v3689, 10
      %v3691 = vsub.s32 %v3667, %v3690
      %v3692 = vsub.s32 0, %v3691
      %v3693 = vsel %vm3665, %v3692, %v3691
      %vm3694 = vcmp.lt.s32.totalorder %v3600, 0
      %v3695 = vsub.s32 0, %v3600
      %v3696 = vsel %vm3694, %v3695, %v3600
      %v3697 = vand.u32 %v3696, 65535
      %v3698 = vshrl.u32 %v3696, 16
      %v3700 = vmul.u32 %v3697, 52429
      %v3701 = vmul.u32 %v3697, 52428
      %v3702 = vmul.u32 %v3698, 52429
      %v3703 = vmul.u32 %v3698, 52428
      %v3704 = vshll.u32 %v3701, 16
      %v3705 = vshrl.u32 %v3701, 16
      %v3706 = vshll.u32 %v3702, 16
      %v3707 = vshrl.u32 %v3702, 16
      %vm3708 = vc.u32 %v3700, %v3704
      %v3709 = vsel %vm3708, 1, 0
      %v3710 = vadd.s32 %v3700, %v3704
      %v3711 = vadd.s32 %v3703, %v3709
      %vm3712 = vc.u32 %v3710, %v3706
      %v3713 = vsel %vm3712, 1, 0
      %v3714 = vadd.s32 %v3710, %v3706
      %v3715 = vadd.s32 %v3711, %v3713
      %v3716 = vadd.s32 %v3715, %v3705
      %v3717 = vadd.s32 %v3716, %v3707
      %v3718 = vshrl.u32 %v3717, 3
      %v3719 = vmul.u32 %v3718, 10
      %v3720 = vsub.s32 %v3696, %v3719
      %v3721 = vsub.s32 0, %v3720
      %v3722 = vsel %vm3694, %v3721, %v3720
      %vm3723 = vcmp.lt.s32.totalorder %v3601, 0
      %v3724 = vsub.s32 0, %v3601
      %v3725 = vsel %vm3723, %v3724, %v3601
      %v3726 = vand.u32 %v3725, 65535
      %v3727 = vshrl.u32 %v3725, 16
      %v3729 = vmul.u32 %v3726, 52429
      %v3730 = vmul.u32 %v3726, 52428
      %v3731 = vmul.u32 %v3727, 52429
      %v3732 = vmul.u32 %v3727, 52428
      %v3733 = vshll.u32 %v3730, 16
      %v3734 = vshrl.u32 %v3730, 16
      %v3735 = vshll.u32 %v3731, 16
      %v3736 = vshrl.u32 %v3731, 16
      %vm3737 = vc.u32 %v3729, %v3733
      %v3738 = vsel %vm3737, 1, 0
      %v3739 = vadd.s32 %v3729, %v3733
      %v3740 = vadd.s32 %v3732, %v3738
      %vm3741 = vc.u32 %v3739, %v3735
      %v3742 = vsel %vm3741, 1, 0
      %v3743 = vadd.s32 %v3739, %v3735
      %v3744 = vadd.s32 %v3740, %v3742
      %v3745 = vadd.s32 %v3744, %v3734
      %v3746 = vadd.s32 %v3745, %v3736
      %v3747 = vshrl.u32 %v3746, 3
      %v3748 = vmul.u32 %v3747, 10
      %v3749 = vsub.s32 %v3725, %v3748
      %v3750 = vsub.s32 0, %v3749
      %v3751 = vsel %vm3723, %v3750, %v3749
      %vm3752 = vcmp.lt.s32.totalorder %v3602, 0
      %v3753 = vsub.s32 0, %v3602
      %v3754 = vsel %vm3752, %v3753, %v3602
      %v3755 = vand.u32 %v3754, 65535
      %v3756 = vshrl.u32 %v3754, 16
      %v3758 = vmul.u32 %v3755, 52429
      %v3759 = vmul.u32 %v3755, 52428
      %v3760 = vmul.u32 %v3756, 52429
      %v3761 = vmul.u32 %v3756, 52428
      %v3762 = vshll.u32 %v3759, 16
      %v3763 = vshrl.u32 %v3759, 16
      %v3764 = vshll.u32 %v3760, 16
      %v3765 = vshrl.u32 %v3760, 16
      %vm3766 = vc.u32 %v3758, %v3762
      %v3767 = vsel %vm3766, 1, 0
      %v3768 = vadd.s32 %v3758, %v3762
      %v3769 = vadd.s32 %v3761, %v3767
      %vm3770 = vc.u32 %v3768, %v3764
      %v3771 = vsel %vm3770, 1, 0
      %v3772 = vadd.s32 %v3768, %v3764
      %v3773 = vadd.s32 %v3769, %v3771
      %v3774 = vadd.s32 %v3773, %v3763
      %v3775 = vadd.s32 %v3774, %v3765
      %v3776 = vshrl.u32 %v3775, 3
      %v3777 = vmul.u32 %v3776, 10
      %v3778 = vsub.s32 %v3754, %v3777
      %v3779 = vsub.s32 0, %v3778
      %v3780 = vsel %vm3752, %v3779, %v3778
      %vm3781 = vcmp.lt.s32.totalorder %v3603, 0
      %v3782 = vsub.s32 0, %v3603
      %v3783 = vsel %vm3781, %v3782, %v3603
      %v3784 = vand.u32 %v3783, 65535
      %v3785 = vshrl.u32 %v3783, 16
      %v3787 = vmul.u32 %v3784, 52429
      %v3788 = vmul.u32 %v3784, 52428
      %v3789 = vmul.u32 %v3785, 52429
      %v3790 = vmul.u32 %v3785, 52428
      %v3791 = vshll.u32 %v3788, 16
      %v3792 = vshrl.u32 %v3788, 16
      %v3793 = vshll.u32 %v3789, 16
      %v3794 = vshrl.u32 %v3789, 16
      %vm3795 = vc.u32 %v3787, %v3791
      %v3796 = vsel %vm3795, 1, 0
      %v3797 = vadd.s32 %v3787, %v3791
      %v3798 = vadd.s32 %v3790, %v3796
      %vm3799 = vc.u32 %v3797, %v3793
      %v3800 = vsel %vm3799, 1, 0
      %v3801 = vadd.s32 %v3797, %v3793
      %v3802 = vadd.s32 %v3798, %v3800
      %v3803 = vadd.s32 %v3802, %v3792
      %v3804 = vadd.s32 %v3803, %v3794
      %v3805 = vshrl.u32 %v3804, 3
      %v3806 = vmul.u32 %v3805, 10
      %v3807 = vsub.s32 %v3783, %v3806
      %v3808 = vsub.s32 0, %v3807
      %v3809 = vsel %vm3781, %v3808, %v3807
      %vm3810 = vcmp.lt.s32.totalorder %v3604, 0
      %v3811 = vsub.s32 0, %v3604
      %v3812 = vsel %vm3810, %v3811, %v3604
      %v3813 = vand.u32 %v3812, 65535
      %v3814 = vshrl.u32 %v3812, 16
      %v3816 = vmul.u32 %v3813, 52429
      %v3817 = vmul.u32 %v3813, 52428
      %v3818 = vmul.u32 %v3814, 52429
      %v3819 = vmul.u32 %v3814, 52428
      %v3820 = vshll.u32 %v3817, 16
      %v3821 = vshrl.u32 %v3817, 16
      %v3822 = vshll.u32 %v3818, 16
      %v3823 = vshrl.u32 %v3818, 16
      %vm3824 = vc.u32 %v3816, %v3820
      %v3825 = vsel %vm3824, 1, 0
      %v3826 = vadd.s32 %v3816, %v3820
      %v3827 = vadd.s32 %v3819, %v3825
      %vm3828 = vc.u32 %v3826, %v3822
      %v3829 = vsel %vm3828, 1, 0
      %v3830 = vadd.s32 %v3826, %v3822
      %v3831 = vadd.s32 %v3827, %v3829
      %v3832 = vadd.s32 %v3831, %v3821
      %v3833 = vadd.s32 %v3832, %v3823
      %v3834 = vshrl.u32 %v3833, 3
      %v3835 = vmul.u32 %v3834, 10
      %v3836 = vsub.s32 %v3812, %v3835
      %v3837 = vsub.s32 0, %v3836
      %v3838 = vsel %vm3810, %v3837, %v3836
      %vm3839 = vcmp.lt.s32.totalorder %v3605, 0
      %v3840 = vsub.s32 0, %v3605
      %v3841 = vsel %vm3839, %v3840, %v3605
      %v3842 = vand.u32 %v3841, 65535
      %v3843 = vshrl.u32 %v3841, 16
      %v3845 = vmul.u32 %v3842, 52429
      %v3846 = vmul.u32 %v3842, 52428
      %v3847 = vmul.u32 %v3843, 52429
      %v3848 = vmul.u32 %v3843, 52428
      %v3849 = vshll.u32 %v3846, 16
      %v3850 = vshrl.u32 %v3846, 16
      %v3851 = vshll.u32 %v3847, 16
      %v3852 = vshrl.u32 %v3847, 16
      %vm3853 = vc.u32 %v3845, %v3849
      %v3854 = vsel %vm3853, 1, 0
      %v3855 = vadd.s32 %v3845, %v3849
      %v3856 = vadd.s32 %v3848, %v3854
      %vm3857 = vc.u32 %v3855, %v3851
      %v3858 = vsel %vm3857, 1, 0
      %v3859 = vadd.s32 %v3855, %v3851
      %v3860 = vadd.s32 %v3856, %v3858
      %v3861 = vadd.s32 %v3860, %v3850
      %v3862 = vadd.s32 %v3861, %v3852
      %v3863 = vshrl.u32 %v3862, 3
      %v3864 = vmul.u32 %v3863, 10
      %v3865 = vsub.s32 %v3841, %v3864
      %v3866 = vsub.s32 0, %v3865
      %v3867 = vsel %vm3839, %v3866, %v3865
      %vm3868 = vcmp.lt.s32.totalorder %v3606, 0
      %v3869 = vsub.s32 0, %v3606
      %v3870 = vsel %vm3868, %v3869, %v3606
      %v3871 = vand.u32 %v3870, 65535
      %v3872 = vshrl.u32 %v3870, 16
      %v3874 = vmul.u32 %v3871, 52429
      %v3875 = vmul.u32 %v3871, 52428
      %v3876 = vmul.u32 %v3872, 52429
      %v3877 = vmul.u32 %v3872, 52428
      %v3878 = vshll.u32 %v3875, 16
      %v3879 = vshrl.u32 %v3875, 16
      %v3880 = vshll.u32 %v3876, 16
      %v3881 = vshrl.u32 %v3876, 16
      %vm3882 = vc.u32 %v3874, %v3878
      %v3883 = vsel %vm3882, 1, 0
      %v3884 = vadd.s32 %v3874, %v3878
      %v3885 = vadd.s32 %v3877, %v3883
      %vm3886 = vc.u32 %v3884, %v3880
      %v3887 = vsel %vm3886, 1, 0
      %v3888 = vadd.s32 %v3884, %v3880
      %v3889 = vadd.s32 %v3885, %v3887
      %v3890 = vadd.s32 %v3889, %v3879
      %v3891 = vadd.s32 %v3890, %v3881
      %v3892 = vshrl.u32 %v3891, 3
      %v3893 = vmul.u32 %v3892, 10
      %v3894 = vsub.s32 %v3870, %v3893
      %v3895 = vsub.s32 0, %v3894
      %v3896 = vsel %vm3868, %v3895, %v3894
      %vm3897 = vcmp.ne.s32.totalorder %v3635, 0
      %vm3898 = vcmp.ne.s32.totalorder %v3664, 0
      %vm3899 = vcmp.ne.s32.totalorder %v3693, 0
      %vm3900 = vcmp.ne.s32.totalorder %v3722, 0
      %vm3901 = vcmp.ne.s32.totalorder %v3751, 0
      %vm3902 = vcmp.ne.s32.totalorder %v3780, 0
      %vm3903 = vcmp.ne.s32.totalorder %v3809, 0
      %vm3904 = vcmp.ne.s32.totalorder %v3838, 0
      %vm3905 = vcmp.ne.s32.totalorder %v3867, 0
      %vm3906 = vcmp.ne.s32.totalorder %v3896, 0
      %vm3907 = vcmp.lt.s32.totalorder %v3635, 0
      %vm3908 = vcmp.lt.s32.totalorder %v3664, 0
      %vm3909 = vcmp.lt.s32.totalorder %v3693, 0
      %vm3910 = vcmp.lt.s32.totalorder %v3722, 0
      %vm3911 = vcmp.lt.s32.totalorder %v3751, 0
      %vm3912 = vcmp.lt.s32.totalorder %v3780, 0
      %vm3913 = vcmp.lt.s32.totalorder %v3809, 0
      %vm3914 = vcmp.lt.s32.totalorder %v3838, 0
      %vm3915 = vcmp.lt.s32.totalorder %v3867, 0
      %vm3916 = vcmp.lt.s32.totalorder %v3896, 0
      %vm3917 = vmand %vm3907, %vm3897
      %vm3918 = vmand %vm3908, %vm3898
      %vm3919 = vmand %vm3909, %vm3899
      %vm3920 = vmand %vm3910, %vm3900
      %vm3921 = vmand %vm3911, %vm3901
      %vm3922 = vmand %vm3912, %vm3902
      %vm3923 = vmand %vm3913, %vm3903
      %vm3924 = vmand %vm3914, %vm3904
      %vm3925 = vmand %vm3915, %vm3905
      %vm3926 = vmand %vm3916, %vm3906
      %v3927 = vadd.s32 %v3635, 10
      %v3928 = vadd.s32 %v3664, 10
      %v3929 = vadd.s32 %v3693, 10
      %v3930 = vadd.s32 %v3722, 10
      %v3931 = vadd.s32 %v3751, 10
      %v3932 = vadd.s32 %v3780, 10
      %v3933 = vadd.s32 %v3809, 10
      %v3934 = vadd.s32 %v3838, 10
      %v3935 = vadd.s32 %v3867, 10
      %v3936 = vadd.s32 %v3896, 10
      %v3937 = vsel %vm3917, %v3927, %v3635
      %v3938 = vsel %vm3918, %v3928, %v3664
      %v3939 = vsel %vm3919, %v3929, %v3693
      %v3940 = vsel %vm3920, %v3930, %v3722
      %v3941 = vsel %vm3921, %v3931, %v3751
      %v3942 = vsel %vm3922, %v3932, %v3780
      %v3943 = vsel %vm3923, %v3933, %v3809
      %v3944 = vsel %vm3924, %v3934, %v3838
      %v3945 = vsel %vm3925, %v3935, %v3867
      %v3946 = vsel %vm3926, %v3936, %v3896
      %vm3947 = vcmp.lt.s32.totalorder %v3937, 8
      %vm3948 = vcmp.lt.s32.totalorder %v3938, 8
      %vm3949 = vcmp.lt.s32.totalorder %v3939, 8
      %vm3950 = vcmp.lt.s32.totalorder %v3940, 8
      %vm3951 = vcmp.lt.s32.totalorder %v3941, 8
      %vm3952 = vcmp.lt.s32.totalorder %v3942, 8
      %vm3953 = vcmp.lt.s32.totalorder %v3943, 8
      %vm3954 = vcmp.lt.s32.totalorder %v3944, 8
      %vm3955 = vcmp.lt.s32.totalorder %v3945, 8
      %vm3956 = vcmp.lt.s32.totalorder %v3946, 8
      %v3957 = vsel %vm3947, 1, 0
      %v3958 = vsel %vm3948, 1, 0
      %v3959 = vsel %vm3949, 1, 0
      %v3960 = vsel %vm3950, 1, 0
      %v3961 = vsel %vm3951, 1, 0
      %v3962 = vsel %vm3952, 1, 0
      %v3963 = vsel %vm3953, 1, 0
      %v3964 = vsel %vm3954, 1, 0
      %v3965 = vsel %vm3955, 1, 0
      %v3966 = vsel %vm3956, 1, 0
      %v3967 = vcvt.s32.f32 %v3957
      %v3968 = vcvt.s32.f32 %v3958
      %v3969 = vcvt.s32.f32 %v3959
      %v3970 = vcvt.s32.f32 %v3960
      %v3971 = vcvt.s32.f32 %v3961
      %v3972 = vcvt.s32.f32 %v3962
      %v3973 = vcvt.s32.f32 %v3963
      %v3974 = vcvt.s32.f32 %v3964
      %v3975 = vcvt.s32.f32 %v3965
      %v3976 = vcvt.s32.f32 %v3966
      %v3977 = vld [vmem:[#allocation2] sm:$0xff]
      %v3978 = vld [vmem:[#allocation2 + $0x8] sm:$0xff]
      %v3979 = vld [vmem:[#allocation2 + $0x10] sm:$0xff]
      %v3980 = vld [vmem:[#allocation2 + $0x18] sm:$0xff]
      %v3981 = vld [vmem:[#allocation2 + $0x20] sm:$0xff]
      %v3982 = vld [vmem:[#allocation2 + $0x28] sm:$0xff]
      %v3983 = vld [vmem:[#allocation2 + $0x30] sm:$0xff]
      %v3984 = vld [vmem:[#allocation2 + $0x38] sm:$0xff]
      %v3985 = vld [vmem:[#allocation2 + $0x40] sm:$0xff]
      %v3986 = vld [vmem:[#allocation2 + $0x48] sm:$0xff]
      %v3987 = vmul.f32 %v3977, %v3967
      %v3988 = vmul.f32 %v3978, %v3968
      %v3989 = vmul.f32 %v3979, %v3969
      %v3990 = vmul.f32 %v3980, %v3970
      %v3991 = vmul.f32 %v3981, %v3971
      %v3992 = vmul.f32 %v3982, %v3972
      %v3993 = vmul.f32 %v3983, %v3973
      %v3994 = vmul.f32 %v3984, %v3974
      %v3995 = vmul.f32 %v3985, %v3975
      %v3996 = vmul.f32 %v3986, %v3976
      %3997 = vst [vmem:[%s364] sm:$0xff] %v3987
      %3998 = vst [vmem:[%s364 + $0x8] sm:$0xff] %v3988
      %3999 = vst [vmem:[%s364 + $0x10] sm:$0xff] %v3989
      %4000 = vst [vmem:[%s364 + $0x18] sm:$0xff] %v3990
      %4001 = vst [vmem:[%s364 + $0x20] sm:$0xff] %v3991
      %4002 = vst [vmem:[%s364 + $0x28] sm:$0xff] %v3992
      %4003 = vst [vmem:[%s364 + $0x30] sm:$0xff] %v3993
      %4004 = vst [vmem:[%s364 + $0x38] sm:$0xff] %v3994
      %4005 = vst [vmem:[%s364 + $0x40] sm:$0xff] %v3995
      %4006 = vst [vmem:[%s364 + $0x48] sm:$0xff] %v3996
      %v4007 = vld [vmem:[%s5] sm:$0x1]
      %v4008 = vadd.f32 %v3987, %v3988
      %v4009 = vadd.f32 %v4008, %v3989
      %v4010 = vadd.f32 %v4009, %v3990
      %v4011 = vadd.f32 %v4010, %v3991
      %v4012 = vadd.f32 %v4011, %v3992
      %v4013 = vadd.f32 %v4012, %v3993
      %v4014 = vadd.f32 %v4013, %v3994
      %v4015 = vadd.f32 %v4014, %v3995
      %v4016 = vadd.f32 %v4015, %v3996
      %v4017 = vrot.slane %v4016, 4
      %v4018 = vadd.f32 %v4016, %v4017
      %v4019 = vrot.slane %v4018, 2
      %v4020 = vadd.f32 %v4018, %v4019
      %v4021 = vrot.slane %v4020, 1
      %v4022 = vadd.f32 %v4020, %v4021
      %v4023 = vadd.f32 %v4007, %v4022
      %4024 = vst [vmem:[%s5] sm:$0x1] %v4023
      %v4025 = vld [vmem:[%s6] sm:$0x1]
      %v4026 = vmul.f32 %v3987, %v3987
      %v4027 = vmul.f32 %v3988, %v3988
      %v4028 = vmul.f32 %v3989, %v3989
      %v4029 = vmul.f32 %v3990, %v3990
      %v4030 = vmul.f32 %v3991, %v3991
      %v4031 = vmul.f32 %v3992, %v3992
      %v4032 = vmul.f32 %v3993, %v3993
      %v4033 = vmul.f32 %v3994, %v3994
      %v4034 = vmul.f32 %v3995, %v3995
      %v4035 = vmul.f32 %v3996, %v3996
      %v4036 = vadd.f32 %v4026, %v4027
      %v4037 = vadd.f32 %v4036, %v4028
      %v4038 = vadd.f32 %v4037, %v4029
      %v4039 = vadd.f32 %v4038, %v4030
      %v4040 = vadd.f32 %v4039, %v4031
      %v4041 = vadd.f32 %v4040, %v4032
      %v4042 = vadd.f32 %v4041, %v4033
      %v4043 = vadd.f32 %v4042, %v4034
      %v4044 = vadd.f32 %v4043, %v4035
      %v4045 = vrot.slane %v4044, 4
      %v4046 = vadd.f32 %v4044, %v4045
      %v4047 = vrot.slane %v4046, 2
      %v4048 = vadd.f32 %v4046, %v4047
      %v4049 = vrot.slane %v4048, 1
      %v4050 = vadd.f32 %v4048, %v4049
      %v4051 = vadd.f32 %v4025, %v4050
      %4052 = vst [vmem:[%s6] sm:$0x1] %v4051
      %p4053 = scmp.lt.s32.totalorder %s22, 1
      %s4054 = scalar_select %p4053, %s22, 1
      %p4055 = scmp.lt.s32.totalorder %s23, 7
      %s4056 = scalar_select %p4055, %s23, 7
      %s4057 = smul.addr %s4056, 10
      %s4058 = smul.addr %s4054, 80
      %s4059 = sadd.s32 %s4057, %s4058
      %s4060 = smul.addr %s4059, 8
      %s4061 = scalar_lea.vmem %s4, %s4060
      // Predicated region
      $region41: #{conv_block_forward.4} parent=35 // pred_check
        %p4062 = pneg %p159
      $region42: #{conv_block_forward.4} parent=35 // pred_check_branch
        %4064 = sbr.rel (%p4062) target = $region44
      $region43: #{conv_block_forward.4} parent=35 // pred_region
        _
      $region44: #{conv_block_forward.4} parent=35 // pred_fallthru
        _
      // Predicated region
      $region45: #{conv_block_forward.4} parent=35 // pred_check
        %p4065 = pneg %p180
      $region46: #{conv_block_forward.4} parent=35 // pred_check_branch
        %4067 = sbr.rel (%p4065) target = $region48
      $region47: #{conv_block_forward.4} parent=35 // pred_region
        _
      $region48: #{conv_block_forward.4} parent=35 // pred_fallthru
        _
      // Predicated region
      $region49: #{conv_block_forward.4} parent=35 // pred_check
        %p4068 = pneg %p201
      $region50: #{conv_block_forward.4} parent=35 // pred_check_branch
        %4070 = sbr.rel (%p4068) target = $region52
      $region51: #{conv_block_forward.4} parent=35 // pred_region
        _
      $region52: #{conv_block_forward.4} parent=35 // pred_fallthru
        _
      // Predicated region
      $region53: #{conv_block_forward.4} parent=35 // pred_check
        %p4071 = pneg %p180
      $region54: #{conv_block_forward.4} parent=35 // pred_check_branch
        %4073 = sbr.rel (%p4071) target = $region56
      $region55: #{conv_block_forward.4} parent=35 // pred_region
        _
      $region56: #{conv_block_forward.4} parent=35 // pred_fallthru
        _
      // Predicated region
      $region57: #{conv_block_forward.4} parent=35 // pred_check
        %p4074 = pneg %p201
      $region58: #{conv_block_forward.4} parent=35 // pred_check_branch
        %4076 = sbr.rel (%p4074) target = $region60
      $region59: #{conv_block_forward.4} parent=35 // pred_region
        _
      $region60: #{conv_block_forward.4} parent=35 // pred_fallthru
        _
    $region36: #{conv_block_forward.4} parent=5 // pred_fallthru
      _
    %p4077 = scmp.le.s32.totalorder 2, %s13
    // Predicated region
    $region61: #{conv_block_forward.4} parent=5 // pred_check
      %p4078 = pneg %p4077
    $region62: #{conv_block_forward.4} parent=5 // pred_check_branch
      %4080 = sbr.rel (%p4078) target = $region64
    $region63: #{conv_block_forward.4} parent=5 // pred_region
      %s4081 = ssub.s32 %s13, 2
      // Predicated region
      $region65: #{conv_block_forward.4} parent=63 // pred_check
        %p4082 = pneg %p165
      $region66: #{conv_block_forward.4} parent=63 // pred_check_branch
        %4084 = sbr.rel (%p4082) target = $region68
      $region67: #{conv_block_forward.4} parent=63 // pred_region
        %p4085 = scmp.lt.s32.totalorder %s24, 1
        %s4086 = scalar_select %p4085, %s24, 1
        %p4087 = scmp.lt.s32.totalorder %s25, 7
        %s4088 = scalar_select %p4087, %s25, 7
        %s4089 = smul.addr %s4088, 10
        %s4090 = smul.addr %s4086, 80
        %s4091 = sadd.s32 %s4089, %s4090
        %s4092 = smul.addr %s4091, 8
        %s4093 = scalar_lea.vmem %s4, %s4092
      $region68: #{conv_block_forward.4} parent=63 // pred_fallthru
        _
    $region64: #{conv_block_forward.4} parent=5 // pred_fallthru
      _
  $region6: #{conv_block_forward.4} parent=0 // loop_footer
    %s17 = sadd.s32 1, %s13
  $region7: #{conv_block_forward.4} parent=0 // loop_footer_branch
    %12 = sbr.rel target = $region3
  $region8: #{conv_block_forward.4} parent=0 // loop_exit
    _

// kernel: conv_block_forward.6
$region0: #{conv_block_forward.6}
  #allocation0 [shape = 'u32[]', space=smem, size = 0x4, offset = 0x4, fixed_abs, tag = 'smem constant byte address 0x4 - core index']
  #allocation1 [shape = 'u32[72,128]{1,0:T(1,128)}', space=vmem, size = 0x9000, scoped, tag = 'internal scratch']
  #allocation2 [shape = 'f32[80,128]{1,0:T(8,128)}', space=vmem, size = 0xa000, scoped, tag = 'scratch operand']
  %s0 = inlined_call_operand.vmem [shape: f32[2,10,104,128], index: 0, kind: input, shape index: {}, may-alias: {0,1,2}]
  %s1 = inlined_call_operand.vmem [shape: f32[2,10,104,128], index: 1, kind: input, shape index: {}, may-alias: {0,1,2}]
  %s2 = inlined_call_operand.vmem [shape: f32[2,10,104,128], index: 2, kind: input, shape index: {}, may-alias: {0,1,2}]
  %s3 = inlined_call_operand.vmem [shape: f32[27,128,128], index: 3, kind: input, shape index: {}]
  %s4 = inlined_call_operand.vmem [shape: f32[2,8,80,128], index: 4, kind: output, shape index: {0}]
  %s5 = inlined_call_operand.vmem [shape: f32[1,128], index: 5, kind: output, shape index: {1}]
  %s6 = inlined_call_operand.vmem [shape: f32[1,128], index: 6, kind: output, shape index: {2}]
  %7 = xla_tuple %s4, %s5, %s6
  %s8 = sld [smem:[#allocation0]]
  $region69: #{conv_block_forward.6} parent=0
    _
  %s10 = ssub.s32 1, %s8
  %s11 = scalar_select 0, %s10, %s8
  loop: start=0, step=1, limit=18
  $region2: #{conv_block_forward.6} parent=0 // loop_pre_header
    _
  $region3: #{conv_block_forward.6} parent=0 // loop_header
    %s13 = sphi 0, %s17
    %p14 = scmp.ge.s32.totalorder %s13, 18
    %s20 = sphi 0, %s32
    %s21 = sphi 0, %s28
    %s22 = sphi 0, %s20
    %s23 = sphi 0, %s21
    %s24 = sphi 0, %s22
    %s25 = sphi 0, %s23
    %s37 = sphi 0, %s39
    %s40 = sphi 0, %s37
    %s41 = sphi 0, %s40
    %s57 = sphi 0, %s41
    %s67 = sphi 0, %s69
    %s70 = sphi 0, %s67
    %s71 = sphi 0, %s70
    %s87 = sphi 0, %s71
    %s97 = sphi 0, %s99
    %s100 = sphi 0, %s97
    %s101 = sphi 0, %s100
    %s117 = sphi 0, %s101
    %s121 = sphi 0, %s121
    %s123 = sphi 0, %s121
    %s124 = sphi 0, %s123
    %s138 = sphi 0, %s124
    %s146 = sphi 0, %s148
    %s149 = sphi 0, %s146
    %s150 = sphi 0, %s149
    %s166 = sphi 0, %s150
    %s170 = sphi 0, %s170
    %s172 = sphi 0, %s170
    %s173 = sphi 0, %s172
    %s187 = sphi 0, %s173
    %s191 = sphi 0, %s191
    %s193 = sphi 0, %s191
    %s194 = sphi 0, %s193
    %s208 = sphi 0, %s194
  $region4: #{conv_block_forward.6} parent=0 // loop_header_branch
    %16 = sbr.rel (%p14) target = $region8
  $region5: #{conv_block_forward.6} parent=0 // loop_body
    %s18 = ssub.s32 %s13, 1
    %s19 = ssub.s32 %s13, 2
    %s26 = sadd.s32 1, %s21
    %p27 = scmp.ge.s32.totalorder %s26, 8
    %s28 = scalar_select %p27, 0, %s26
    %s29 = sadd.s32 1, %s20
    %s30 = scalar_select %p27, %s29, %s20
    %p31 = scmp.ge.s32.totalorder %s30, 2
    %s32 = scalar_select %p31, 0, %s30
    %s33 = ssub.s32 %s20, %s32
    %s34 = ssub.s32 %s21, %s28
    %s35 = sor.u32 %s33, %s34
    %p36 = scmp.eq.s32.totalorder %s35, 0
    %s38 = sadd.s32 %s37, 1
    %s39 = scalar_select %p36, %s37, %s38
    %p42 = pneg %p36
    %p43 = scmp.eq.s32.totalorder %s13, 15
    %p44 = por %p42, %p43
    %p45 = scmp.ne.s32.totalorder %s37, %s40
    %p46 = scmp.eq.s32.totalorder %s13, 0
    %p47 = por %p45, %p46
    %p48 = scmp.ne.s32.totalorder %s37, %s40
    %p49 = scmp.eq.s32.totalorder %s18, 15
    %p50 = por %p48, %p49
    %p51 = scmp.ne.s32.totalorder %s40, %s41
    %p52 = scmp.eq.s32.totalorder %s18, 0
    %p53 = por %p51, %p52
    %p54 = scmp.ne.s32.totalorder %s40, %s41
    %p55 = scmp.eq.s32.totalorder %s19, 15
    %p56 = por %p54, %p55
    %p58 = scmp.ne.s32.totalorder %s41, %s57
    %p59 = scmp.eq.s32.totalorder %s19, 0
    %p60 = por %p58, %p59
    %s61 = sadd.s32 %s21, 1
    %s62 = sadd.s32 %s28, 1
    %s63 = ssub.s32 %s20, %s32
    %s64 = ssub.s32 %s61, %s62
    %s65 = sor.u32 %s63, %s64
    %p66 = scmp.eq.s32.totalorder %s65, 0
    %s68 = sadd.s32 %s67, 1
    %s69 = scalar_select %p66, %s67, %s68
    %p72 = pneg %p66
    %p73 = scmp.eq.s32.totalorder %s13, 15
    %p74 = por %p72, %p73
    %p75 = scmp.ne.s32.totalorder %s67, %s70
    %p76 = scmp.eq.s32.totalorder %s13, 0
    %p77 = por %p75, %p76
    %p78 = scmp.ne.s32.totalorder %s67, %s70
    %p79 = scmp.eq.s32.totalorder %s18, 15
    %p80 = por %p78, %p79
    %p81 = scmp.ne.s32.totalorder %s70, %s71
    %p82 = scmp.eq.s32.totalorder %s18, 0
    %p83 = por %p81, %p82
    %p84 = scmp.ne.s32.totalorder %s70, %s71
    %p85 = scmp.eq.s32.totalorder %s19, 15
    %p86 = por %p84, %p85
    %p88 = scmp.ne.s32.totalorder %s71, %s87
    %p89 = scmp.eq.s32.totalorder %s19, 0
    %p90 = por %p88, %p89
    %s91 = sadd.s32 %s21, 2
    %s92 = sadd.s32 %s28, 2
    %s93 = ssub.s32 %s20, %s32
    %s94 = ssub.s32 %s91, %s92
    %s95 = sor.u32 %s93, %s94
    %p96 = scmp.eq.s32.totalorder %s95, 0
    %s98 = sadd.s32 %s97, 1
    %s99 = scalar_select %p96, %s97, %s98
    %p102 = pneg %p96
    %p103 = scmp.eq.s32.totalorder %s13, 15
    %p104 = por %p102, %p103
    %p105 = scmp.ne.s32.totalorder %s97, %s100
    %p106 = scmp.eq.s32.totalorder %s13, 0
    %p107 = por %p105, %p106
    %p108 = scmp.ne.s32.totalorder %s97, %s100
    %p109 = scmp.eq.s32.totalorder %s18, 15
    %p110 = por %p108, %p109
    %p111 = scmp.ne.s32.totalorder %s100, %s101
    %p112 = scmp.eq.s32.totalorder %s18, 0
    %p113 = por %p111, %p112
    %p114 = scmp.ne.s32.totalorder %s100, %s101
    %p115 = scmp.eq.s32.totalorder %s19, 15
    %p116 = por %p114, %p115
    %p118 = scmp.ne.s32.totalorder %s101, %s117
    %p119 = scmp.eq.s32.totalorder %s19, 0
    %p120 = por %p118, %p119
    %s122 = sadd.s32 %s121, 1
    %p125 = scmp.eq.s32.totalorder %s13, 15
    %p126 = scmp.ne.s32.totalorder %s121, %s123
    %p127 = scmp.eq.s32.totalorder %s13, 0
    %p128 = por %p126, %p127
    %p129 = scmp.ne.s32.totalorder %s121, %s123
    %p130 = scmp.eq.s32.totalorder %s18, 15
    %p131 = por %p129, %p130
    %p132 = scmp.ne.s32.totalorder %s123, %s124
    %p133 = scmp.eq.s32.totalorder %s18, 0
    %p134 = por %p132, %p133
    %p135 = scmp.ne.s32.totalorder %s123, %s124
    %p136 = scmp.eq.s32.totalorder %s19, 15
    %p137 = por %p135, %p136
    %p139 = scmp.ne.s32.totalorder %s124, %s138
    %p140 = scmp.eq.s32.totalorder %s19, 0
    %p141 = por %p139, %p140
    %s142 = ssub.s32 %s20, %s32
    %s143 = ssub.s32 %s21, %s28
    %s144 = sor.u32 %s142, %s143
    %p145 = scmp.eq.s32.totalorder %s144, 0
    %s147 = sadd.s32 %s146, 1
    %s148 = scalar_select %p145, %s146, %s147
    %p151 = pneg %p145
    %p152 = scmp.eq.s32.totalorder %s13, 15
    %p153 = por %p151, %p152
    %p154 = scmp.ne.s32.totalorder %s146, %s149
    %p155 = scmp.eq.s32.totalorder %s13, 0
    %p156 = por %p154, %p155
    %p157 = scmp.ne.s32.totalorder %s146, %s149
    %p158 = scmp.eq.s32.totalorder %s18, 15
    %p159 = por %p157, %p158
    %p160 = scmp.ne.s32.totalorder %s149, %s150
    %p161 = scmp.eq.s32.totalorder %s18, 0
    %p162 = por %p160, %p161
    %p163 = scmp.ne.s32.totalorder %s149, %s150
    %p164 = scmp.eq.s32.totalorder %s19, 15
    %p165 = por %p163, %p164
    %p167 = scmp.ne.s32.totalorder %s150, %s166
    %p168 = scmp.eq.s32.totalorder %s19, 0
    %p169 = por %p167, %p168
    %s171 = sadd.s32 %s170, 1
    %p174 = scmp.eq.s32.totalorder %s13, 15
    %p175 = scmp.ne.s32.totalorder %s170, %s172
    %p176 = scmp.eq.s32.totalorder %s13, 0
    %p177 = por %p175, %p176
    %p178 = scmp.ne.s32.totalorder %s170, %s172
    %p179 = scmp.eq.s32.totalorder %s18, 15
    %p180 = por %p178, %p179
    %p181 = scmp.ne.s32.totalorder %s172, %s173
    %p182 = scmp.eq.s32.totalorder %s18, 0
    %p183 = por %p181, %p182
    %p184 = scmp.ne.s32.totalorder %s172, %s173
    %p185 = scmp.eq.s32.totalorder %s19, 15
    %p186 = por %p184, %p185
    %p188 = scmp.ne.s32.totalorder %s173, %s187
    %p189 = scmp.eq.s32.totalorder %s19, 0
    %p190 = por %p188, %p189
    %s192 = sadd.s32 %s191, 1
    %p195 = scmp.eq.s32.totalorder %s13, 15
    %p196 = scmp.ne.s32.totalorder %s191, %s193
    %p197 = scmp.eq.s32.totalorder %s13, 0
    %p198 = por %p196, %p197
    %p199 = scmp.ne.s32.totalorder %s191, %s193
    %p200 = scmp.eq.s32.totalorder %s18, 15
    %p201 = por %p199, %p200
    %p202 = scmp.ne.s32.totalorder %s193, %s194
    %p203 = scmp.eq.s32.totalorder %s18, 0
    %p204 = por %p202, %p203
    %p205 = scmp.ne.s32.totalorder %s193, %s194
    %p206 = scmp.eq.s32.totalorder %s19, 15
    %p207 = por %p205, %p206
    %p209 = scmp.ne.s32.totalorder %s194, %s208
    %p210 = scmp.eq.s32.totalorder %s19, 0
    %p211 = por %p209, %p210
    %p212 = scmp.le.s32.totalorder 1, %s13
    %p213 = scmp.lt.s32.totalorder %s13, 17
    %p214 = pnand %p212, %p213
    %p215 = pneg %p214
    // Predicated region
    $region9: #{conv_block_forward.6} parent=5 // pred_check
      _
    $region10: #{conv_block_forward.6} parent=5 // pred_check_branch
      %217 = sbr.rel (%p214) target = $region12
    $region11: #{conv_block_forward.6} parent=5 // pred_region
      %s218 = ssub.s32 %s13, 1
      // Predicated region
      $region13: #{conv_block_forward.6} parent=11 // pred_check
        %p219 = pneg %p134
      $region14: #{conv_block_forward.6} parent=11 // pred_check_branch
        %221 = sbr.rel (%p219) target = $region16
      $region15: #{conv_block_forward.6} parent=11 // pred_region
        _
      $region16: #{conv_block_forward.6} parent=11 // pred_fallthru
        _
    $region12: #{conv_block_forward.6} parent=5 // pred_fallthru
      _
    %p222 = scmp.lt.s32.totalorder %s13, 16
    // Predicated region
    $region17: #{conv_block_forward.6} parent=5 // pred_check
      %p223 = pneg %p222
    $region18: #{conv_block_forward.6} parent=5 // pred_check_branch
      %225 = sbr.rel (%p223) target = $region20
    $region19: #{conv_block_forward.6} parent=5 // pred_region
      // Predicated region
      $region21: #{conv_block_forward.6} parent=19 // pred_check
        %p226 = pneg %p47
      $region22: #{conv_block_forward.6} parent=19 // pred_check_branch
        %228 = sbr.rel (%p226) target = $region24
      $region23: #{conv_block_forward.6} parent=19 // pred_region
        %p229 = scmp.lt.s32.totalorder %s20, 1
        %s230 = scalar_select %p229, %s20, 1
        %p231 = scmp.lt.s32.totalorder %s21, 9
        %s232 = scalar_select %p231, %s21, 9
        %s233 = smul.addr %s232, 13
        %s234 = smul.addr %s230, 130
        %s235 = sadd.s32 %s233, %s234
        %s236 = smul.addr %s235, 8
        %s237 = scalar_lea.vmem %s0, %s236
      $region24: #{conv_block_forward.6} parent=19 // pred_fallthru
        _
      // Predicated region
      $region25: #{conv_block_forward.6} parent=19 // pred_check
        %p238 = pneg %p77
      $region26: #{conv_block_forward.6} parent=19 // pred_check_branch
        %240 = sbr.rel (%p238) target = $region28
      $region27: #{conv_block_forward.6} parent=19 // pred_region
        %s241 = sadd.s32 %s21, 1
        %p242 = scmp.lt.s32.totalorder %s20, 1
        %s243 = scalar_select %p242, %s20, 1
        %p244 = scmp.lt.s32.totalorder %s241, 9
        %s245 = scalar_select %p244, %s241, 9
        %s246 = smul.addr %s245, 13
        %s247 = smul.addr %s243, 130
        %s248 = sadd.s32 %s246, %s247
        %s249 = smul.addr %s248, 8
        %s250 = scalar_lea.vmem %s1, %s249
        %s251 = sadd.s32 %s21, 1
      $region28: #{conv_block_forward.6} parent=19 // pred_fallthru
        _
      // Predicated region
      $region29: #{conv_block_forward.6} parent=19 // pred_check
        %p252 = pneg %p107
      $region30: #{conv_block_forward.6} parent=19 // pred_check_branch
        %254 = sbr.rel (%p252) target = $region32
      $region31: #{conv_block_forward.6} parent=19 // pred_region
        %s255 = sadd.s32 %s21, 2
        %p256 = scmp.lt.s32.totalorder %s20, 1
        %s257 = scalar_select %p256, %s20, 1
        %p258 = scmp.lt.s32.totalorder %s255, 9
        %s259 = scalar_select %p258, %s255, 9
        %s260 = smul.addr %s259, 13
        %s261 = smul.addr %s257, 130
        %s262 = sadd.s32 %s260, %s261
        %s263 = smul.addr %s262, 8
        %s264 = scalar_lea.vmem %s2, %s263
        %s265 = sadd.s32 %s21, 2
      $region32: #{conv_block_forward.6} parent=19 // pred_fallthru
        _
    $region20: #{conv_block_forward.6} parent=5 // pred_fallthru
      _
    %p266 = scmp.le.s32.totalorder 1, %s13
    %p267 = scmp.lt.s32.totalorder %s13, 17
    %p268 = pnand %p266, %p267
    %p269 = pneg %p268
    // Predicated region
    $region33: #{conv_block_forward.6} parent=5 // pred_check
      _
    $region34: #{conv_block_forward.6} parent=5 // pred_check_branch
      %271 = sbr.rel (%p268) target = $region36
    $region35: #{conv_block_forward.6} parent=5 // pred_region
      %s272 = ssub.s32 %s13, 1
      %p273 = scmp.lt.s32.totalorder %s22, 1
      %s274 = scalar_select %p273, %s22, 1
      %p275 = scmp.lt.s32.totalorder %s23, 9
      %s276 = scalar_select %p275, %s23, 9
      %s277 = smul.addr %s276, 13
      %s278 = smul.addr %s274, 130
      %s279 = sadd.s32 %s277, %s278
      %s280 = smul.addr %s279, 8
      %s281 = scalar_lea.vmem %s0, %s280
      %p282 = pneg %p53
      %p283 = pneg %p50
      %s284 = sadd.s32 %s23, 1
      %p285 = scmp.lt.s32.totalorder %s22, 1
      %s286 = scalar_select %p285, %s22, 1
      %p287 = scmp.lt.s32.totalorder %s284, 9
      %s288 = scalar_select %p287, %s284, 9
      %s289 = smul.addr %s288, 13
      %s290 = smul.addr %s286, 130
      %s291 = sadd.s32 %s289, %s290
      %s292 = smul.addr %s291, 8
      %s293 = scalar_lea.vmem %s1, %s292
      %p294 = pneg %p83
      %p295 = pneg %p80
      %s296 = sadd.s32 %s23, 2
      %p297 = scmp.lt.s32.totalorder %s22, 1
      %s298 = scalar_select %p297, %s22, 1
      %p299 = scmp.lt.s32.totalorder %s296, 9
      %s300 = scalar_select %p299, %s296, 9
      %s301 = smul.addr %s300, 13
      %s302 = smul.addr %s298, 130
      %s303 = sadd.s32 %s301, %s302
      %s304 = smul.addr %s303, 8
      %s305 = scalar_lea.vmem %s2, %s304
      %p306 = pneg %p113
      %p307 = pneg %p110
      %p308 = pneg %p134
      %p309 = pneg %p131
      %p310 = pneg %p162
      %p311 = pneg %p159
      %p312 = scmp.lt.s32.totalorder %s22, 1
      %s313 = scalar_select %p312, %s22, 1
      %p314 = scmp.lt.s32.totalorder %s23, 7
      %s315 = scalar_select %p314, %s23, 7
      %s316 = smul.addr %s315, 10
      %s317 = smul.addr %s313, 80
      %s318 = sadd.s32 %s316, %s317
      %s319 = smul.addr %s318, 8
      %s320 = scalar_lea.vmem %s4, %s319
      %p321 = pneg %p183
      %p322 = pneg %p180
      %p323 = pneg %p204
      %p324 = pneg %p201
      %p325 = scmp.lt.s32.totalorder %s22, 1
      %s326 = scalar_select %p325, %s22, 1
      %p327 = scmp.lt.s32.totalorder %s23, 9
      %s328 = scalar_select %p327, %s23, 9
      %s329 = smul.addr %s328, 13
      %s330 = smul.addr %s326, 130
      %s331 = sadd.s32 %s329, %s330
      %s332 = smul.addr %s331, 8
      %s333 = scalar_lea.vmem %s0, %s332
      %s334 = sadd.s32 %s23, 1
      %p335 = scmp.lt.s32.totalorder %s22, 1
      %s336 = scalar_select %p335, %s22, 1
      %p337 = scmp.lt.s32.totalorder %s334, 9
      %s338 = scalar_select %p337, %s334, 9
      %s339 = smul.addr %s338, 13
      %s340 = smul.addr %s336, 130
      %s341 = sadd.s32 %s339, %s340
      %s342 = smul.addr %s341, 8
      %s343 = scalar_lea.vmem %s1, %s342
      %s344 = sadd.s32 %s23, 1
      %s345 = sadd.s32 %s23, 2
      %p346 = scmp.lt.s32.totalorder %s22, 1
      %s347 = scalar_select %p346, %s22, 1
      %p348 = scmp.lt.s32.totalorder %s345, 9
      %s349 = scalar_select %p348, %s345, 9
      %s350 = smul.addr %s349, 13
      %s351 = smul.addr %s347, 130
      %s352 = sadd.s32 %s350, %s351
      %s353 = smul.addr %s352, 8
      %s354 = scalar_lea.vmem %s2, %s353
      %s355 = sadd.s32 %s23, 2
      %p356 = scmp.lt.s32.totalorder %s22, 1
      %s357 = scalar_select %p356, %s22, 1
      %p358 = scmp.lt.s32.totalorder %s23, 7
      %s359 = scalar_select %p358, %s23, 7
      %s360 = smul.addr %s359, 10
      %s361 = smul.addr %s357, 80
      %s362 = sadd.s32 %s360, %s361
      %s363 = smul.addr %s362, 8
      %s364 = scalar_lea.vmem %s4, %s363
      %p365 = scmp.eq.s32.totalorder %s22, 0
      %p366 = scmp.eq.s32.totalorder %s23, 0
      %p367 = pnand %p365, %p366
      %p368 = pneg %p367
      // Predicated region
      $region37: #{conv_block_forward.6} parent=35 // pred_check
        _
      $region38: #{conv_block_forward.6} parent=35 // pred_check_branch
        %370 = sbr.rel (%p367) target = $region40
      $region39: #{conv_block_forward.6} parent=35 // pred_region
        %371 = vst [vmem:[%s5] sm:$0x1] 0.0
        %372 = vst [vmem:[%s6] sm:$0x1] 0.0
      $region40: #{conv_block_forward.6} parent=35 // pred_fallthru
        _
      %373 = vst [vmem:[#allocation2] sm:$0xff] 0.0
      %374 = vst [vmem:[#allocation2 + $0x8] sm:$0xff] 0.0
      %375 = vst [vmem:[#allocation2 + $0x10] sm:$0xff] 0.0
      %376 = vst [vmem:[#allocation2 + $0x18] sm:$0xff] 0.0
      %377 = vst [vmem:[#allocation2 + $0x20] sm:$0xff] 0.0
      %378 = vst [vmem:[#allocation2 + $0x28] sm:$0xff] 0.0
      %379 = vst [vmem:[#allocation2 + $0x30] sm:$0xff] 0.0
      %380 = vst [vmem:[#allocation2 + $0x38] sm:$0xff] 0.0
      %381 = vst [vmem:[#allocation2 + $0x40] sm:$0xff] 0.0
      %382 = vst [vmem:[#allocation2 + $0x48] sm:$0xff] 0.0
      %v383 = vld [vmem:[%s333] sm:$0xff]
      %v384 = vld [vmem:[%s333 + $0x8] sm:$0xff]
      %v385 = vld [vmem:[%s333 + $0x10] sm:$0xff]
      %v386 = vld [vmem:[%s333 + $0x18] sm:$0xff]
      %v387 = vld [vmem:[%s333 + $0x20] sm:$0xff]
      %v388 = vld [vmem:[%s333 + $0x28] sm:$0xff]
      %v389 = vld [vmem:[%s333 + $0x30] sm:$0xff]
      %v390 = vld [vmem:[%s333 + $0x38] sm:$0xff]
      %v391 = vld [vmem:[%s333 + $0x40] sm:$0xff]
      %v392 = vld [vmem:[%s333 + $0x48] sm:$0xff]
      %v393 = vld [vmem:[#allocation2] sm:$0xff]
      %v394 = vld [vmem:[#allocation2 + $0x8] sm:$0xff]
      %v395 = vld [vmem:[#allocation2 + $0x10] sm:$0xff]
      %v396 = vld [vmem:[#allocation2 + $0x18] sm:$0xff]
      %v397 = vld [vmem:[#allocation2 + $0x20] sm:$0xff]
      %v398 = vld [vmem:[#allocation2 + $0x28] sm:$0xff]
      %v399 = vld [vmem:[#allocation2 + $0x30] sm:$0xff]
      %v400 = vld [vmem:[#allocation2 + $0x38] sm:$0xff]
      %v401 = vld [vmem:[#allocation2 + $0x40] sm:$0xff]
      %v402 = vld [vmem:[#allocation2 + $0x48] sm:$0xff]
      %v403 = vld [vmem:[%s3] sm:$0xff]
      %v404 = vld [vmem:[%s3 + $0x8] sm:$0xff]
      %v405 = vld [vmem:[%s3 + $0x10] sm:$0xff]
      %v406 = vld [vmem:[%s3 + $0x18] sm:$0xff]
      %v407 = vld [vmem:[%s3 + $0x20] sm:$0xff]
      %v408 = vld [vmem:[%s3 + $0x28] sm:$0xff]
      %v409 = vld [vmem:[%s3 + $0x30] sm:$0xff]
      %v410 = vld [vmem:[%s3 + $0x38] sm:$0xff]
      %v411 = vld [vmem:[%s3 + $0x40] sm:$0xff]
      %v412 = vld [vmem:[%s3 + $0x48] sm:$0xff]
      %v413 = vld [vmem:[%s3 + $0x50] sm:$0xff]
      %v414 = vld [vmem:[%s3 + $0x58] sm:$0xff]
      %v415 = vld [vmem:[%s3 + $0x60] sm:$0xff]
      %v416 = vld [vmem:[%s3 + $0x68] sm:$0xff]
      %v417 = vld [vmem:[%s3 + $0x70] sm:$0xff]
      %v418 = vld [vmem:[%s3 + $0x78] sm:$0xff]
      %419 = vmatpush.msra.mxu0 %v418
      %420 = vmatpush.msra.mxu0 %v417
      %421 = vmatpush.msra.mxu0 %v416
      %422 = vmatpush.msra.mxu0 %v415
      %423 = vmatpush.msra.mxu0 %v414
      %424 = vmatpush.msra.mxu0 %v413
      %425 = vmatpush.msra.mxu0 %v412
      %426 = vmatpush.msra.mxu0 %v411
      %427 = vmatpush.msra.mxu0 %v410
      %428 = vmatpush.msra.mxu0 %v409
      %429 = vmatpush.msra.mxu0 %v408
      %430 = vmatpush.msra.mxu0 %v407
      %431 = vmatpush.msra.mxu0 %v406
      %432 = vmatpush.msra.mxu0 %v405
      %433 = vmatpush.msra.mxu0 %v404
      %434 = vmatpush.msra.mxu0 %v403
      %435 = vmatmul.f32.gmra.mxu0 %v383
      %v436 = vpop.f32.mrf.mxu0
      %v437 = vadd.f32 0.0, %v436
      %438 = vmatmul.f32.gmra.mxu0 %v384
      %v439 = vpop.f32.mrf.mxu0
      %v440 = vadd.f32 0.0, %v439
      %441 = vmatmul.f32.gmra.mxu0 %v385
      %v442 = vpop.f32.mrf.mxu0
      %v443 = vadd.f32 0.0, %v442
      %444 = vmatmul.f32.gmra.mxu0 %v386
      %v445 = vpop.f32.mrf.mxu0
      %v446 = vadd.f32 0.0, %v445
      %447 = vmatmul.f32.gmra.mxu0 %v387
      %v448 = vpop.f32.mrf.mxu0
      %v449 = vadd.f32 0.0, %v448
      %450 = vmatmul.f32.gmra.mxu0 %v388
      %v451 = vpop.f32.mrf.mxu0
      %v452 = vadd.f32 0.0, %v451
      %453 = vmatmul.f32.gmra.mxu0 %v389
      %v454 = vpop.f32.mrf.mxu0
      %v455 = vadd.f32 0.0, %v454
      %456 = vmatmul.f32.gmra.mxu0 %v390
      %v457 = vpop.f32.mrf.mxu0
      %v458 = vadd.f32 0.0, %v457
      %459 = vmatmul.f32.gmra.mxu0 %v391
      %v460 = vpop.f32.mrf.mxu0
      %v461 = vadd.f32 0.0, %v460
      %462 = vmatmul.f32.gmra.mxu0 %v392
      %v463 = vpop.f32.mrf.mxu0
      %v464 = vadd.f32 0.0, %v463
      %465 = vdwg.mxu0
      %v466 = vadd.f32 %v393, %v437
      %v467 = vadd.f32 %v394, %v440
      %v468 = vadd.f32 %v395, %v443
      %v469 = vadd.f32 %v396, %v446
      %v470 = vadd.f32 %v397, %v449
      %v471 = vadd.f32 %v398, %v452
      %v472 = vadd.f32 %v399, %v455
      %v473 = vadd.f32 %v400, %v458
      %v474 = vadd.f32 %v401, %v461
      %v475 = vadd.f32 %v402, %v464
      %476 = vst [vmem:[#allocation2] sm:$0xff] %v466
      %477 = vst [vmem:[#allocation2 + $0x8] sm:$0xff] %v467
      %478 = vst [vmem:[#allocation2 + $0x10] sm:$0xff] %v468
      %479 = vst [vmem:[#allocation2 + $0x18] sm:$0xff] %v469
      %480 = vst [vmem:[#allocation2 + $0x20] sm:$0xff] %v470
      %481 = vst [vmem:[#allocation2 + $0x28] sm:$0xff] %v471
      %482 = vst [vmem:[#allocation2 + $0x30] sm:$0xff] %v472
      %483 = vst [vmem:[#allocation2 + $0x38] sm:$0xff] %v473
      %484 = vst [vmem:[#allocation2 + $0x40] sm:$0xff] %v474
      %485 = vst [vmem:[#allocation2 + $0x48] sm:$0xff] %v475
      %v486 = vld [vmem:[%s333 + $0x1] sm:$0xff]
      %v487 = vld [vmem:[%s333 + $0x9] sm:$0xff]
      %v488 = vld [vmem:[%s333 + $0x11] sm:$0xff]
      %v489 = vld [vmem:[%s333 + $0x19] sm:$0xff]
      %v490 = vld [vmem:[%s333 + $0x21] sm:$0xff]
      %v491 = vld [vmem:[%s333 + $0x29] sm:$0xff]
      %v492 = vld [vmem:[%s333 + $0x31] sm:$0xff]
      %v493 = vld [vmem:[%s333 + $0x39] sm:$0xff]
      %v494 = vld [vmem:[%s333 + $0x41] sm:$0xff]
      %v495 = vld [vmem:[%s333 + $0x49] sm:$0xff]
      %v496 = vld [vmem:[#allocation2] sm:$0xff]
      %v497 = vld [vmem:[#allocation2 + $0x8] sm:$0xff]
      %v498 = vld [vmem:[#allocation2 + $0x10] sm:$0xff]
      %v499 = vld [vmem:[#allocation2 + $0x18] sm:$0xff]
      %v500 = vld [vmem:[#allocation2 + $0x20] sm:$0xff]
      %v501 = vld [vmem:[#allocation2 + $0x28] sm:$0xff]
      %v502 = vld [vmem:[#allocation2 + $0x30] sm:$0xff]
      %v503 = vld [vmem:[#allocation2 + $0x38] sm:$0xff]
      %v504 = vld [vmem:[#allocation2 + $0x40] sm:$0xff]
      %v505 = vld [vmem:[#allocation2 + $0x48] sm:$0xff]
      %s506 = scalar_lea.vmem %s3, 128
      %v507 = vld [vmem:[%s506] sm:$0xff]
      %v508 = vld [vmem:[%s506 + $0x8] sm:$0xff]
      %v509 = vld [vmem:[%s506 + $0x10] sm:$0xff]
      %v510 = vld [vmem:[%s506 + $0x18] sm:$0xff]
      %v511 = vld [vmem:[%s506 + $0x20] sm:$0xff]
      %v512 = vld [vmem:[%s506 + $0x28] sm:$0xff]
      %v513 = vld [vmem:[%s506 + $0x30] sm:$0xff]
      %v514 = vld [vmem:[%s506 + $0x38] sm:$0xff]
      %v515 = vld [vmem:[%s506 + $0x40] sm:$0xff]
      %v516 = vld [vmem:[%s506 + $0x48] sm:$0xff]
      %v517 = vld [vmem:[%s506 + $0x50] sm:$0xff]
      %v518 = vld [vmem:[%s506 + $0x58] sm:$0xff]
      %v519 = vld [vmem:[%s506 + $0x60] sm:$0xff]
      %v520 = vld [vmem:[%s506 + $0x68] sm:$0xff]
      %v521 = vld [vmem:[%s506 + $0x70] sm:$0xff]
      %v522 = vld [vmem:[%s506 + $0x78] sm:$0xff]
      %523 = vmatpush.msra.mxu0 %v522
      %524 = vmatpush.msra.mxu0 %v521
      %525 = vmatpush.msra.mxu0 %v520
      %526 = vmatpush.msra.mxu0 %v519
      %527 = vmatpush.msra.mxu0 %v518
      %528 = vmatpush.msra.mxu0 %v517
      %529 = vmatpush.msra.mxu0 %v516
      %530 = vmatpush.msra.mxu0 %v515
      %531 = vmatpush.msra.mxu0 %v514
      %532 = vmatpush.msra.mxu0 %v513
      %533 = vmatpush.msra.mxu0 %v512
      %534 = vmatpush.msra.mxu0 %v511
      %535 = vmatpush.msra.mxu0 %v510
      %536 = vmatpush.msra.mxu0 %v509
      %537 = vmatpush.msra.mxu0 %v508
      %538 = vmatpush.msra.mxu0 %v507
      %539 = vmatmul.f32.gmra.mxu0 %v486
      %v540 = vpop.f32.mrf.mxu0
      %v541 = vadd.f32 0.0, %v540
      %542 = vmatmul.f32.gmra.mxu0 %v487
      %v543 = vpop.f32.mrf.mxu0
      %v544 = vadd.f32 0.0, %v543
      %545 = vmatmul.f32.gmra.mxu0 %v488
      %v546 = vpop.f32.mrf.mxu0
      %v547 = vadd.f32 0.0, %v546
      %548 = vmatmul.f32.gmra.mxu0 %v489
      %v549 = vpop.f32.mrf.mxu0
      %v550 = vadd.f32 0.0, %v549
      %551 = vmatmul.f32.gmra.mxu0 %v490
      %v552 = vpop.f32.mrf.mxu0
      %v553 = vadd.f32 0.0, %v552
      %554 = vmatmul.f32.gmra.mxu0 %v491
      %v555 = vpop.f32.mrf.mxu0
      %v556 = vadd.f32 0.0, %v555
      %557 = vmatmul.f32.gmra.mxu0 %v492
      %v558 = vpop.f32.mrf.mxu0
      %v559 = vadd.f32 0.0, %v558
      %560 = vmatmul.f32.gmra.mxu0 %v493
      %v561 = vpop.f32.mrf.mxu0
      %v562 = vadd.f32 0.0, %v561
      %563 = vmatmul.f32.gmra.mxu0 %v494
      %v564 = vpop.f32.mrf.mxu0
      %v565 = vadd.f32 0.0, %v564
      %566 = vmatmul.f32.gmra.mxu0 %v495
      %v567 = vpop.f32.mrf.mxu0
      %v568 = vadd.f32 0.0, %v567
      %569 = vdwg.mxu0
      %v570 = vadd.f32 %v496, %v541
      %v571 = vadd.f32 %v497, %v544
      %v572 = vadd.f32 %v498, %v547
      %v573 = vadd.f32 %v499, %v550
      %v574 = vadd.f32 %v500, %v553
      %v575 = vadd.f32 %v501, %v556
      %v576 = vadd.f32 %v502, %v559
      %v577 = vadd.f32 %v503, %v562
      %v578 = vadd.f32 %v504, %v565
      %v579 = vadd.f32 %v505, %v568
      %580 = vst [vmem:[#allocation2] sm:$0xff] %v570
      %581 = vst [vmem:[#allocation2 + $0x8] sm:$0xff] %v571
      %582 = vst [vmem:[#allocation2 + $0x10] sm:$0xff] %v572
      %583 = vst [vmem:[#allocation2 + $0x18] sm:$0xff] %v573
      %584 = vst [vmem:[#allocation2 + $0x20] sm:$0xff] %v574
      %585 = vst [vmem:[#allocation2 + $0x28] sm:$0xff] %v575
      %586 = vst [vmem:[#allocation2 + $0x30] sm:$0xff] %v576
      %587 = vst [vmem:[#allocation2 + $0x38] sm:$0xff] %v577
      %588 = vst [vmem:[#allocation2 + $0x40] sm:$0xff] %v578
      %589 = vst [vmem:[#allocation2 + $0x48] sm:$0xff] %v579
      %v590 = vld [vmem:[%s333 + $0x2] sm:$0xff]
      %v591 = vld [vmem:[%s333 + $0xa] sm:$0xff]
      %v592 = vld [vmem:[%s333 + $0x12] sm:$0xff]
      %v593 = vld [vmem:[%s333 + $0x1a] sm:$0xff]
      %v594 = vld [vmem:[%s333 + $0x22] sm:$0xff]
      %v595 = vld [vmem:[%s333 + $0x2a] sm:$0xff]
      %v596 = vld [vmem:[%s333 + $0x32] sm:$0xff]
      %v597 = vld [vmem:[%s333 + $0x3a] sm:$0xff]
      %v598 = vld [vmem:[%s333 + $0x42] sm:$0xff]
      %v599 = vld [vmem:[%s333 + $0x4a] sm:$0xff]
      %v600 = vld [vmem:[#allocation2] sm:$0xff]
      %v601 = vld [vmem:[#allocation2 + $0x8] sm:$0xff]
      %v602 = vld [vmem:[#allocation2 + $0x10] sm:$0xff]
      %v603 = vld [vmem:[#allocation2 + $0x18] sm:$0xff]
      %v604 = vld [vmem:[#allocation2 + $0x20] sm:$0xff]
      %v605 = vld [vmem:[#allocation2 + $0x28] sm:$0xff]
      %v606 = vld [vmem:[#allocation2 + $0x30] sm:$0xff]
      %v607 = vld [vmem:[#allocation2 + $0x38] sm:$0xff]
      %v608 = vld [vmem:[#allocation2 + $0x40] sm:$0xff]
      %v609 = vld [vmem:[#allocation2 + $0x48] sm:$0xff]
      %s610 = scalar_lea.vmem %s3, 256
      %v611 = vld [vmem:[%s610] sm:$0xff]
      %v612 = vld [vmem:[%s610 + $0x8] sm:$0xff]
      %v613 = vld [vmem:[%s610 + $0x10] sm:$0xff]
      %v614 = vld [vmem:[%s610 + $0x18] sm:$0xff]
      %v615 = vld [vmem:[%s610 + $0x20] sm:$0xff]
      %v616 = vld [vmem:[%s610 + $0x28] sm:$0xff]
      %v617 = vld [vmem:[%s610 + $0x30] sm:$0xff]
      %v618 = vld [vmem:[%s610 + $0x38] sm:$0xff]
      %v619 = vld [vmem:[%s610 + $0x40] sm:$0xff]
      %v620 = vld [vmem:[%s610 + $0x48] sm:$0xff]
      %v621 = vld [vmem:[%s610 + $0x50] sm:$0xff]
      %v622 = vld [vmem:[%s610 + $0x58] sm:$0xff]
      %v623 = vld [vmem:[%s610 + $0x60] sm:$0xff]
      %v624 = vld [vmem:[%s610 + $0x68] sm:$0xff]
      %v625 = vld [vmem:[%s610 + $0x70] sm:$0xff]
      %v626 = vld [vmem:[%s610 + $0x78] sm:$0xff]
      %627 = vmatpush.msra.mxu0 %v626
      %628 = vmatpush.msra.mxu0 %v625
      %629 = vmatpush.msra.mxu0 %v624
      %630 = vmatpush.msra.mxu0 %v623
      %631 = vmatpush.msra.mxu0 %v622
      %632 = vmatpush.msra.mxu0 %v621
      %633 = vmatpush.msra.mxu0 %v620
      %634 = vmatpush.msra.mxu0 %v619
      %635 = vmatpush.msra.mxu0 %v618
      %636 = vmatpush.msra.mxu0 %v617
      %637 = vmatpush.msra.mxu0 %v616
      %638 = vmatpush.msra.mxu0 %v615
      %639 = vmatpush.msra.mxu0 %v614
      %640 = vmatpush.msra.mxu0 %v613
      %641 = vmatpush.msra.mxu0 %v612
      %642 = vmatpush.msra.mxu0 %v611
      %643 = vmatmul.f32.gmra.mxu0 %v590
      %v644 = vpop.f32.mrf.mxu0
      %v645 = vadd.f32 0.0, %v644
      %646 = vmatmul.f32.gmra.mxu0 %v591
      %v647 = vpop.f32.mrf.mxu0
      %v648 = vadd.f32 0.0, %v647
      %649 = vmatmul.f32.gmra.mxu0 %v592
      %v650 = vpop.f32.mrf.mxu0
      %v651 = vadd.f32 0.0, %v650
      %652 = vmatmul.f32.gmra.mxu0 %v593
      %v653 = vpop.f32.mrf.mxu0
      %v654 = vadd.f32 0.0, %v653
      %655 = vmatmul.f32.gmra.mxu0 %v594
      %v656 = vpop.f32.mrf.mxu0
      %v657 = vadd.f32 0.0, %v656
      %658 = vmatmul.f32.gmra.mxu0 %v595
      %v659 = vpop.f32.mrf.mxu0
      %v660 = vadd.f32 0.0, %v659
      %661 = vmatmul.f32.gmra.mxu0 %v596
      %v662 = vpop.f32.mrf.mxu0
      %v663 = vadd.f32 0.0, %v662
      %664 = vmatmul.f32.gmra.mxu0 %v597
      %v665 = vpop.f32.mrf.mxu0
      %v666 = vadd.f32 0.0, %v665
      %667 = vmatmul.f32.gmra.mxu0 %v598
      %v668 = vpop.f32.mrf.mxu0
      %v669 = vadd.f32 0.0, %v668
      %670 = vmatmul.f32.gmra.mxu0 %v599
      %v671 = vpop.f32.mrf.mxu0
      %v672 = vadd.f32 0.0, %v671
      %673 = vdwg.mxu0
      %v674 = vadd.f32 %v600, %v645
      %v675 = vadd.f32 %v601, %v648
      %v676 = vadd.f32 %v602, %v651
      %v677 = vadd.f32 %v603, %v654
      %v678 = vadd.f32 %v604, %v657
      %v679 = vadd.f32 %v605, %v660
      %v680 = vadd.f32 %v606, %v663
      %v681 = vadd.f32 %v607, %v666
      %v682 = vadd.f32 %v608, %v669
      %v683 = vadd.f32 %v609, %v672
      %684 = vst [vmem:[#allocation2] sm:$0xff] %v674
      %685 = vst [vmem:[#allocation2 + $0x8] sm:$0xff] %v675
      %686 = vst [vmem:[#allocation2 + $0x10] sm:$0xff] %v676
      %687 = vst [vmem:[#allocation2 + $0x18] sm:$0xff] %v677
      %688 = vst [vmem:[#allocation2 + $0x20] sm:$0xff] %v678
      %689 = vst [vmem:[#allocation2 + $0x28] sm:$0xff] %v679
      %690 = vst [vmem:[#allocation2 + $0x30] sm:$0xff] %v680
      %691 = vst [vmem:[#allocation2 + $0x38] sm:$0xff] %v681
      %692 = vst [vmem:[#allocation2 + $0x40] sm:$0xff] %v682
      %693 = vst [vmem:[#allocation2 + $0x48] sm:$0xff] %v683
      %v694 = vld [vmem:[%s333 + $0xa] sm:$0xff]
      %v695 = vld [vmem:[%s333 + $0x12] sm:$0xff]
      %v696 = vld [vmem:[%s333 + $0x1a] sm:$0xff]
      %v697 = vld [vmem:[%s333 + $0x22] sm:$0xff]
      %v698 = vld [vmem:[%s333 + $0x2a] sm:$0xff]
      %v699 = vld [vmem:[%s333 + $0x32] sm:$0xff]
      %v700 = vld [vmem:[%s333 + $0x3a] sm:$0xff]
      %v701 = vld [vmem:[%s333 + $0x42] sm:$0xff]
      %v702 = vld [vmem:[%s333 + $0x4a] sm:$0xff]
      %v703 = vld [vmem:[%s333 + $0x52] sm:$0xff]
      %v704 = vld [vmem:[#allocation2] sm:$0xff]
      %v705 = vld [vmem:[#allocation2 + $0x8] sm:$0xff]
      %v706 = vld [vmem:[#allocation2 + $0x10] sm:$0xff]
      %v707 = vld [vmem:[#allocation2 + $0x18] sm:$0xff]
      %v708 = vld [vmem:[#allocation2 + $0x20] sm:$0xff]
      %v709 = vld [vmem:[#allocation2 + $0x28] sm:$0xff]
      %v710 = vld [vmem:[#allocation2 + $0x30] sm:$0xff]
      %v711 = vld [vmem:[#allocation2 + $0x38] sm:$0xff]
      %v712 = vld [vmem:[#allocation2 + $0x40] sm:$0xff]
      %v713 = vld [vmem:[#allocation2 + $0x48] sm:$0xff]
      %s714 = scalar_lea.vmem %s3, 384
      %v715 = vld [vmem:[%s714] sm:$0xff]
      %v716 = vld [vmem:[%s714 + $0x8] sm:$0xff]
      %v717 = vld [vmem:[%s714 + $0x10] sm:$0xff]
      %v718 = vld [vmem:[%s714 + $0x18] sm:$0xff]
      %v719 = vld [vmem:[%s714 + $0x20] sm:$0xff]
      %v720 = vld [vmem:[%s714 + $0x28] sm:$0xff]
      %v721 = vld [vmem:[%s714 + $0x30] sm:$0xff]
      %v722 = vld [vmem:[%s714 + $0x38] sm:$0xff]
      %v723 = vld [vmem:[%s714 + $0x40] sm:$0xff]
      %v724 = vld [vmem:[%s714 + $0x48] sm:$0xff]
      %v725 = vld [vmem:[%s714 + $0x50] sm:$0xff]
      %v726 = vld [vmem:[%s714 + $0x58] sm:$0xff]
      %v727 = vld [vmem:[%s714 + $0x60] sm:$0xff]
      %v728 = vld [vmem:[%s714 + $0x68] sm:$0xff]
      %v729 = vld [vmem:[%s714 + $0x70] sm:$0xff]
      %v730 = vld [vmem:[%s714 + $0x78] sm:$0xff]
      %731 = vmatpush.msra.mxu0 %v730
      %732 = vmatpush.msra.mxu0 %v729
      %733 = vmatpush.msra.mxu0 %v728
      %734 = vmatpush.msra.mxu0 %v727
      %735 = vmatpush.msra.mxu0 %v726
      %736 = vmatpush.msra.mxu0 %v725
      %737 = vmatpush.msra.mxu0 %v724
      %738 = vmatpush.msra.mxu0 %v723
      %739 = vmatpush.msra.mxu0 %v722
      %740 = vmatpush.msra.mxu0 %v721
      %741 = vmatpush.msra.mxu0 %v720
      %742 = vmatpush.msra.mxu0 %v719
      %743 = vmatpush.msra.mxu0 %v718
      %744 = vmatpush.msra.mxu0 %v717
      %745 = vmatpush.msra.mxu0 %v716
      %746 = vmatpush.msra.mxu0 %v715
      %747 = vmatmul.f32.gmra.mxu0 %v694
      %v748 = vpop.f32.mrf.mxu0
      %v749 = vadd.f32 0.0, %v748
      %750 = vmatmul.f32.gmra.mxu0 %v695
      %v751 = vpop.f32.mrf.mxu0
      %v752 = vadd.f32 0.0, %v751
      %753 = vmatmul.f32.gmra.mxu0 %v696
      %v754 = vpop.f32.mrf.mxu0
      %v755 = vadd.f32 0.0, %v754
      %756 = vmatmul.f32.gmra.mxu0 %v697
      %v757 = vpop.f32.mrf.mxu0
      %v758 = vadd.f32 0.0, %v757
      %759 = vmatmul.f32.gmra.mxu0 %v698
      %v760 = vpop.f32.mrf.mxu0
      %v761 = vadd.f32 0.0, %v760
      %762 = vmatmul.f32.gmra.mxu0 %v699
      %v763 = vpop.f32.mrf.mxu0
      %v764 = vadd.f32 0.0, %v763
      %765 = vmatmul.f32.gmra.mxu0 %v700
      %v766 = vpop.f32.mrf.mxu0
      %v767 = vadd.f32 0.0, %v766
      %768 = vmatmul.f32.gmra.mxu0 %v701
      %v769 = vpop.f32.mrf.mxu0
      %v770 = vadd.f32 0.0, %v769
      %771 = vmatmul.f32.gmra.mxu0 %v702
      %v772 = vpop.f32.mrf.mxu0
      %v773 = vadd.f32 0.0, %v772
      %774 = vmatmul.f32.gmra.mxu0 %v703
      %v775 = vpop.f32.mrf.mxu0
      %v776 = vadd.f32 0.0, %v775
      %777 = vdwg.mxu0
      %v778 = vadd.f32 %v704, %v749
      %v779 = vadd.f32 %v705, %v752
      %v780 = vadd.f32 %v706, %v755
      %v781 = vadd.f32 %v707, %v758
      %v782 = vadd.f32 %v708, %v761
      %v783 = vadd.f32 %v709, %v764
      %v784 = vadd.f32 %v710, %v767
      %v785 = vadd.f32 %v711, %v770
      %v786 = vadd.f32 %v712, %v773
      %v787 = vadd.f32 %v713, %v776
      %788 = vst [vmem:[#allocation2] sm:$0xff] %v778
      %789 = vst [vmem:[#allocation2 + $0x8] sm:$0xff] %v779
      %790 = vst [vmem:[#allocation2 + $0x10] sm:$0xff] %v780
      %791 = vst [vmem:[#allocation2 + $0x18] sm:$0xff] %v781
      %792 = vst [vmem:[#allocation2 + $0x20] sm:$0xff] %v782
      %793 = vst [vmem:[#allocation2 + $0x28] sm:$0xff] %v783
      %794 = vst [vmem:[#allocation2 + $0x30] sm:$0xff] %v784
      %795 = vst [vmem:[#allocation2 + $0x38] sm:$0xff] %v785
      %796 = vst [vmem:[#allocation2 + $0x40] sm:$0xff] %v786
      %797 = vst [vmem:[#allocation2 + $0x48] sm:$0xff] %v787
      %v798 = vld [vmem:[%s333 + $0xb] sm:$0xff]
      %v799 = vld [vmem:[%s333 + $0x13] sm:$0xff]
      %v800 = vld [vmem:[%s333 + $0x1b] sm:$0xff]
      %v801 = vld [vmem:[%s333 + $0x23] sm:$0xff]
      %v802 = vld [vmem:[%s333 + $0x2b] sm:$0xff]
      %v803 = vld [vmem:[%s333 + $0x33] sm:$0xff]
      %v804 = vld [vmem:[%s333 + $0x3b] sm:$0xff]
      %v805 = vld [vmem:[%s333 + $0x43] sm:$0xff]
      %v806 = vld [vmem:[%s333 + $0x4b] sm:$0xff]
      %v807 = vld [vmem:[%s333 + $0x53] sm:$0xff]
      %v808 = vld [vmem:[#allocation2] sm:$0xff]
      %v809 = vld [vmem:[#allocation2 + $0x8] sm:$0xff]
      %v810 = vld [vmem:[#allocation2 + $0x10] sm:$0xff]
      %v811 = vld [vmem:[#allocation2 + $0x18] sm:$0xff]
      %v812 = vld [vmem:[#allocation2 + $0x20] sm:$0xff]
      %v813 = vld [vmem:[#allocation2 + $0x28] sm:$0xff]
      %v814 = vld [vmem:[#allocation2 + $0x30] sm:$0xff]
      %v815 = vld [vmem:[#allocation2 + $0x38] sm:$0xff]
      %v816 = vld [vmem:[#allocation2 + $0x40] sm:$0xff]
      %v817 = vld [vmem:[#allocation2 + $0x48] sm:$0xff]
      %s818 = scalar_lea.vmem %s3, 512
      %v819 = vld [vmem:[%s818] sm:$0xff]
      %v820 = vld [vmem:[%s818 + $0x8] sm:$0xff]
      %v821 = vld [vmem:[%s818 + $0x10] sm:$0xff]
      %v822 = vld [vmem:[%s818 + $0x18] sm:$0xff]
      %v823 = vld [vmem:[%s818 + $0x20] sm:$0xff]
      %v824 = vld [vmem:[%s818 + $0x28] sm:$0xff]
      %v825 = vld [vmem:[%s818 + $0x30] sm:$0xff]
      %v826 = vld [vmem:[%s818 + $0x38] sm:$0xff]
      %v827 = vld [vmem:[%s818 + $0x40] sm:$0xff]
      %v828 = vld [vmem:[%s818 + $0x48] sm:$0xff]
      %v829 = vld [vmem:[%s818 + $0x50] sm:$0xff]
      %v830 = vld [vmem:[%s818 + $0x58] sm:$0xff]
      %v831 = vld [vmem:[%s818 + $0x60] sm:$0xff]
      %v832 = vld [vmem:[%s818 + $0x68] sm:$0xff]
      %v833 = vld [vmem:[%s818 + $0x70] sm:$0xff]
      %v834 = vld [vmem:[%s818 + $0x78] sm:$0xff]
      %835 = vmatpush.msra.mxu0 %v834
      %836 = vmatpush.msra.mxu0 %v833
      %837 = vmatpush.msra.mxu0 %v832
      %838 = vmatpush.msra.mxu0 %v831
      %839 = vmatpush.msra.mxu0 %v830
      %840 = vmatpush.msra.mxu0 %v829
      %841 = vmatpush.msra.mxu0 %v828
      %842 = vmatpush.msra.mxu0 %v827
      %843 = vmatpush.msra.mxu0 %v826
      %844 = vmatpush.msra.mxu0 %v825
      %845 = vmatpush.msra.mxu0 %v824
      %846 = vmatpush.msra.mxu0 %v823
      %847 = vmatpush.msra.mxu0 %v822
      %848 = vmatpush.msra.mxu0 %v821
      %849 = vmatpush.msra.mxu0 %v820
      %850 = vmatpush.msra.mxu0 %v819
      %851 = vmatmul.f32.gmra.mxu0 %v798
      %v852 = vpop.f32.mrf.mxu0
      %v853 = vadd.f32 0.0, %v852
      %854 = vmatmul.f32.gmra.mxu0 %v799
      %v855 = vpop.f32.mrf.mxu0
      %v856 = vadd.f32 0.0, %v855
      %857 = vmatmul.f32.gmra.mxu0 %v800
      %v858 = vpop.f32.mrf.mxu0
      %v859 = vadd.f32 0.0, %v858
      %860 = vmatmul.f32.gmra.mxu0 %v801
      %v861 = vpop.f32.mrf.mxu0
      %v862 = vadd.f32 0.0, %v861
      %863 = vmatmul.f32.gmra.mxu0 %v802
      %v864 = vpop.f32.mrf.mxu0
      %v865 = vadd.f32 0.0, %v864
      %866 = vmatmul.f32.gmra.mxu0 %v803
      %v867 = vpop.f32.mrf.mxu0
      %v868 = vadd.f32 0.0, %v867
      %869 = vmatmul.f32.gmra.mxu0 %v804
      %v870 = vpop.f32.mrf.mxu0
      %v871 = vadd.f32 0.0, %v870
      %872 = vmatmul.f32.gmra.mxu0 %v805
      %v873 = vpop.f32.mrf.mxu0
      %v874 = vadd.f32 0.0, %v873
      %875 = vmatmul.f32.gmra.mxu0 %v806
      %v876 = vpop.f32.mrf.mxu0
      %v877 = vadd.f32 0.0, %v876
      %878 = vmatmul.f32.gmra.mxu0 %v807
      %v879 = vpop.f32.mrf.mxu0
      %v880 = vadd.f32 0.0, %v879
      %881 = vdwg.mxu0
      %v882 = vadd.f32 %v808, %v853
      %v883 = vadd.f32 %v809, %v856
      %v884 = vadd.f32 %v810, %v859
      %v885 = vadd.f32 %v811, %v862
      %v886 = vadd.f32 %v812, %v865
      %v887 = vadd.f32 %v813, %v868
      %v888 = vadd.f32 %v814, %v871
      %v889 = vadd.f32 %v815, %v874
      %v890 = vadd.f32 %v816, %v877
      %v891 = vadd.f32 %v817, %v880
      %892 = vst [vmem:[#allocation2] sm:$0xff] %v882
      %893 = vst [vmem:[#allocation2 + $0x8] sm:$0xff] %v883
      %894 = vst [vmem:[#allocation2 + $0x10] sm:$0xff] %v884
      %895 = vst [vmem:[#allocation2 + $0x18] sm:$0xff] %v885
      %896 = vst [vmem:[#allocation2 + $0x20] sm:$0xff] %v886
      %897 = vst [vmem:[#allocation2 + $0x28] sm:$0xff] %v887
      %898 = vst [vmem:[#allocation2 + $0x30] sm:$0xff] %v888
      %899 = vst [vmem:[#allocation2 + $0x38] sm:$0xff] %v889
      %900 = vst [vmem:[#allocation2 + $0x40] sm:$0xff] %v890
      %901 = vst [vmem:[#allocation2 + $0x48] sm:$0xff] %v891
      %v902 = vld [vmem:[%s333 + $0xc] sm:$0xff]
      %v903 = vld [vmem:[%s333 + $0x14] sm:$0xff]
      %v904 = vld [vmem:[%s333 + $0x1c] sm:$0xff]
      %v905 = vld [vmem:[%s333 + $0x24] sm:$0xff]
      %v906 = vld [vmem:[%s333 + $0x2c] sm:$0xff]
      %v907 = vld [vmem:[%s333 + $0x34] sm:$0xff]
      %v908 = vld [vmem:[%s333 + $0x3c] sm:$0xff]
      %v909 = vld [vmem:[%s333 + $0x44] sm:$0xff]
      %v910 = vld [vmem:[%s333 + $0x4c] sm:$0xff]
      %v911 = vld [vmem:[%s333 + $0x54] sm:$0xff]
      %v912 = vld [vmem:[#allocation2] sm:$0xff]
      %v913 = vld [vmem:[#allocation2 + $0x8] sm:$0xff]
      %v914 = vld [vmem:[#allocation2 + $0x10] sm:$0xff]
      %v915 = vld [vmem:[#allocation2 + $0x18] sm:$0xff]
      %v916 = vld [vmem:[#allocation2 + $0x20] sm:$0xff]
      %v917 = vld [vmem:[#allocation2 + $0x28] sm:$0xff]
      %v918 = vld [vmem:[#allocation2 + $0x30] sm:$0xff]
      %v919 = vld [vmem:[#allocation2 + $0x38] sm:$0xff]
      %v920 = vld [vmem:[#allocation2 + $0x40] sm:$0xff]
      %v921 = vld [vmem:[#allocation2 + $0x48] sm:$0xff]
      %s922 = scalar_lea.vmem %s3, 640
      %v923 = vld [vmem:[%s922] sm:$0xff]
      %v924 = vld [vmem:[%s922 + $0x8] sm:$0xff]
      %v925 = vld [vmem:[%s922 + $0x10] sm:$0xff]
      %v926 = vld [vmem:[%s922 + $0x18] sm:$0xff]
      %v927 = vld [vmem:[%s922 + $0x20] sm:$0xff]
      %v928 = vld [vmem:[%s922 + $0x28] sm:$0xff]
      %v929 = vld [vmem:[%s922 + $0x30] sm:$0xff]
      %v930 = vld [vmem:[%s922 + $0x38] sm:$0xff]
      %v931 = vld [vmem:[%s922 + $0x40] sm:$0xff]
      %v932 = vld [vmem:[%s922 + $0x48] sm:$0xff]
      %v933 = vld [vmem:[%s922 + $0x50] sm:$0xff]
      %v934 = vld [vmem:[%s922 + $0x58] sm:$0xff]
      %v935 = vld [vmem:[%s922 + $0x60] sm:$0xff]
      %v936 = vld [vmem:[%s922 + $0x68] sm:$0xff]
      %v937 = vld [vmem:[%s922 + $0x70] sm:$0xff]
      %v938 = vld [vmem:[%s922 + $0x78] sm:$0xff]
      %939 = vmatpush.msra.mxu0 %v938
      %940 = vmatpush.msra.mxu0 %v937
      %941 = vmatpush.msra.mxu0 %v936
      %942 = vmatpush.msra.mxu0 %v935
      %943 = vmatpush.msra.mxu0 %v934
      %944 = vmatpush.msra.mxu0 %v933
      %945 = vmatpush.msra.mxu0 %v932
      %946 = vmatpush.msra.mxu0 %v931
      %947 = vmatpush.msra.mxu0 %v930
      %948 = vmatpush.msra.mxu0 %v929
      %949 = vmatpush.msra.mxu0 %v928
      %950 = vmatpush.msra.mxu0 %v927
      %951 = vmatpush.msra.mxu0 %v926
      %952 = vmatpush.msra.mxu0 %v925
      %953 = vmatpush.msra.mxu0 %v924
      %954 = vmatpush.msra.mxu0 %v923
      %955 = vmatmul.f32.gmra.mxu0 %v902
      %v956 = vpop.f32.mrf.mxu0
      %v957 = vadd.f32 0.0, %v956
      %958 = vmatmul.f32.gmra.mxu0 %v903
      %v959 = vpop.f32.mrf.mxu0
      %v960 = vadd.f32 0.0, %v959
      %961 = vmatmul.f32.gmra.mxu0 %v904
      %v962 = vpop.f32.mrf.mxu0
      %v963 = vadd.f32 0.0, %v962
      %964 = vmatmul.f32.gmra.mxu0 %v905
      %v965 = vpop.f32.mrf.mxu0
      %v966 = vadd.f32 0.0, %v965
      %967 = vmatmul.f32.gmra.mxu0 %v906
      %v968 = vpop.f32.mrf.mxu0
      %v969 = vadd.f32 0.0, %v968
      %970 = vmatmul.f32.gmra.mxu0 %v907
      %v971 = vpop.f32.mrf.mxu0
      %v972 = vadd.f32 0.0, %v971
      %973 = vmatmul.f32.gmra.mxu0 %v908
      %v974 = vpop.f32.mrf.mxu0
      %v975 = vadd.f32 0.0, %v974
      %976 = vmatmul.f32.gmra.mxu0 %v909
      %v977 = vpop.f32.mrf.mxu0
      %v978 = vadd.f32 0.0, %v977
      %979 = vmatmul.f32.gmra.mxu0 %v910
      %v980 = vpop.f32.mrf.mxu0
      %v981 = vadd.f32 0.0, %v980
      %982 = vmatmul.f32.gmra.mxu0 %v911
      %v983 = vpop.f32.mrf.mxu0
      %v984 = vadd.f32 0.0, %v983
      %985 = vdwg.mxu0
      %v986 = vadd.f32 %v912, %v957
      %v987 = vadd.f32 %v913, %v960
      %v988 = vadd.f32 %v914, %v963
      %v989 = vadd.f32 %v915, %v966
      %v990 = vadd.f32 %v916, %v969
      %v991 = vadd.f32 %v917, %v972
      %v992 = vadd.f32 %v918, %v975
      %v993 = vadd.f32 %v919, %v978
      %v994 = vadd.f32 %v920, %v981
      %v995 = vadd.f32 %v921, %v984
      %996 = vst [vmem:[#allocation2] sm:$0xff] %v986
      %997 = vst [vmem:[#allocation2 + $0x8] sm:$0xff] %v987
      %998 = vst [vmem:[#allocation2 + $0x10] sm:$0xff] %v988
      %999 = vst [vmem:[#allocation2 + $0x18] sm:$0xff] %v989
      %1000 = vst [vmem:[#allocation2 + $0x20] sm:$0xff] %v990
      %1001 = vst [vmem:[#allocation2 + $0x28] sm:$0xff] %v991
      %1002 = vst [vmem:[#allocation2 + $0x30] sm:$0xff] %v992
      %1003 = vst [vmem:[#allocation2 + $0x38] sm:$0xff] %v993
      %1004 = vst [vmem:[#allocation2 + $0x40] sm:$0xff] %v994
      %1005 = vst [vmem:[#allocation2 + $0x48] sm:$0xff] %v995
      %v1006 = vld [vmem:[%s333 + $0x14] sm:$0xff]
      %v1007 = vld [vmem:[%s333 + $0x1c] sm:$0xff]
      %v1008 = vld [vmem:[%s333 + $0x24] sm:$0xff]
      %v1009 = vld [vmem:[%s333 + $0x2c] sm:$0xff]
      %v1010 = vld [vmem:[%s333 + $0x34] sm:$0xff]
      %v1011 = vld [vmem:[%s333 + $0x3c] sm:$0xff]
      %v1012 = vld [vmem:[%s333 + $0x44] sm:$0xff]
      %v1013 = vld [vmem:[%s333 + $0x4c] sm:$0xff]
      %v1014 = vld [vmem:[%s333 + $0x54] sm:$0xff]
      %v1015 = vld [vmem:[%s333 + $0x5c] sm:$0xff]
      %v1016 = vld [vmem:[#allocation2] sm:$0xff]
      %v1017 = vld [vmem:[#allocation2 + $0x8] sm:$0xff]
      %v1018 = vld [vmem:[#allocation2 + $0x10] sm:$0xff]
      %v1019 = vld [vmem:[#allocation2 + $0x18] sm:$0xff]
      %v1020 = vld [vmem:[#allocation2 + $0x20] sm:$0xff]
      %v1021 = vld [vmem:[#allocation2 + $0x28] sm:$0xff]
      %v1022 = vld [vmem:[#allocation2 + $0x30] sm:$0xff]
      %v1023 = vld [vmem:[#allocation2 + $0x38] sm:$0xff]
      %v1024 = vld [vmem:[#allocation2 + $0x40] sm:$0xff]
      %v1025 = vld [vmem:[#allocation2 + $0x48] sm:$0xff]
      %s1026 = scalar_lea.vmem %s3, 768
      %v1027 = vld [vmem:[%s1026] sm:$0xff]
      %v1028 = vld [vmem:[%s1026 + $0x8] sm:$0xff]
      %v1029 = vld [vmem:[%s1026 + $0x10] sm:$0xff]
      %v1030 = vld [vmem:[%s1026 + $0x18] sm:$0xff]
      %v1031 = vld [vmem:[%s1026 + $0x20] sm:$0xff]
      %v1032 = vld [vmem:[%s1026 + $0x28] sm:$0xff]
      %v1033 = vld [vmem:[%s1026 + $0x30] sm:$0xff]
      %v1034 = vld [vmem:[%s1026 + $0x38] sm:$0xff]
      %v1035 = vld [vmem:[%s1026 + $0x40] sm:$0xff]
      %v1036 = vld [vmem:[%s1026 + $0x48] sm:$0xff]
      %v1037 = vld [vmem:[%s1026 + $0x50] sm:$0xff]
      %v1038 = vld [vmem:[%s1026 + $0x58] sm:$0xff]
      %v1039 = vld [vmem:[%s1026 + $0x60] sm:$0xff]
      %v1040 = vld [vmem:[%s1026 + $0x68] sm:$0xff]
      %v1041 = vld [vmem:[%s1026 + $0x70] sm:$0xff]
      %v1042 = vld [vmem:[%s1026 + $0x78] sm:$0xff]
      %1043 = vmatpush.msra.mxu0 %v1042
      %1044 = vmatpush.msra.mxu0 %v1041
      %1045 = vmatpush.msra.mxu0 %v1040
      %1046 = vmatpush.msra.mxu0 %v1039
      %1047 = vmatpush.msra.mxu0 %v1038
      %1048 = vmatpush.msra.mxu0 %v1037
      %1049 = vmatpush.msra.mxu0 %v1036
      %1050 = vmatpush.msra.mxu0 %v1035
      %1051 = vmatpush.msra.mxu0 %v1034
      %1052 = vmatpush.msra.mxu0 %v1033
      %1053 = vmatpush.msra.mxu0 %v1032
      %1054 = vmatpush.msra.mxu0 %v1031
      %1055 = vmatpush.msra.mxu0 %v1030
      %1056 = vmatpush.msra.mxu0 %v1029
      %1057 = vmatpush.msra.mxu0 %v1028
      %1058 = vmatpush.msra.mxu0 %v1027
      %1059 = vmatmul.f32.gmra.mxu0 %v1006
      %v1060 = vpop.f32.mrf.mxu0
      %v1061 = vadd.f32 0.0, %v1060
      %1062 = vmatmul.f32.gmra.mxu0 %v1007
      %v1063 = vpop.f32.mrf.mxu0
      %v1064 = vadd.f32 0.0, %v1063
      %1065 = vmatmul.f32.gmra.mxu0 %v1008
      %v1066 = vpop.f32.mrf.mxu0
      %v1067 = vadd.f32 0.0, %v1066
      %1068 = vmatmul.f32.gmra.mxu0 %v1009
      %v1069 = vpop.f32.mrf.mxu0
      %v1070 = vadd.f32 0.0, %v1069
      %1071 = vmatmul.f32.gmra.mxu0 %v1010
      %v1072 = vpop.f32.mrf.mxu0
      %v1073 = vadd.f32 0.0, %v1072
      %1074 = vmatmul.f32.gmra.mxu0 %v1011
      %v1075 = vpop.f32.mrf.mxu0
      %v1076 = vadd.f32 0.0, %v1075
      %1077 = vmatmul.f32.gmra.mxu0 %v1012
      %v1078 = vpop.f32.mrf.mxu0
      %v1079 = vadd.f32 0.0, %v1078
      %1080 = vmatmul.f32.gmra.mxu0 %v1013
      %v1081 = vpop.f32.mrf.mxu0
      %v1082 = vadd.f32 0.0, %v1081
      %1083 = vmatmul.f32.gmra.mxu0 %v1014
      %v1084 = vpop.f32.mrf.mxu0
      %v1085 = vadd.f32 0.0, %v1084
      %1086 = vmatmul.f32.gmra.mxu0 %v1015
      %v1087 = vpop.f32.mrf.mxu0
      %v1088 = vadd.f32 0.0, %v1087
      %1089 = vdwg.mxu0
      %v1090 = vadd.f32 %v1016, %v1061
      %v1091 = vadd.f32 %v1017, %v1064
      %v1092 = vadd.f32 %v1018, %v1067
      %v1093 = vadd.f32 %v1019, %v1070
      %v1094 = vadd.f32 %v1020, %v1073
      %v1095 = vadd.f32 %v1021, %v1076
      %v1096 = vadd.f32 %v1022, %v1079
      %v1097 = vadd.f32 %v1023, %v1082
      %v1098 = vadd.f32 %v1024, %v1085
      %v1099 = vadd.f32 %v1025, %v1088
      %1100 = vst [vmem:[#allocation2] sm:$0xff] %v1090
      %1101 = vst [vmem:[#allocation2 + $0x8] sm:$0xff] %v1091
      %1102 = vst [vmem:[#allocation2 + $0x10] sm:$0xff] %v1092
      %1103 = vst [vmem:[#allocation2 + $0x18] sm:$0xff] %v1093
      %1104 = vst [vmem:[#allocation2 + $0x20] sm:$0xff] %v1094
      %1105 = vst [vmem:[#allocation2 + $0x28] sm:$0xff] %v1095
      %1106 = vst [vmem:[#allocation2 + $0x30] sm:$0xff] %v1096
      %1107 = vst [vmem:[#allocation2 + $0x38] sm:$0xff] %v1097
      %1108 = vst [vmem:[#allocation2 + $0x40] sm:$0xff] %v1098
      %1109 = vst [vmem:[#allocation2 + $0x48] sm:$0xff] %v1099
      %v1110 = vld [vmem:[%s333 + $0x15] sm:$0xff]
      %v1111 = vld [vmem:[%s333 + $0x1d] sm:$0xff]
      %v1112 = vld [vmem:[%s333 + $0x25] sm:$0xff]
      %v1113 = vld [vmem:[%s333 + $0x2d] sm:$0xff]
      %v1114 = vld [vmem:[%s333 + $0x35] sm:$0xff]
      %v1115 = vld [vmem:[%s333 + $0x3d] sm:$0xff]
      %v1116 = vld [vmem:[%s333 + $0x45] sm:$0xff]
      %v1117 = vld [vmem:[%s333 + $0x4d] sm:$0xff]
      %v1118 = vld [vmem:[%s333 + $0x55] sm:$0xff]
      %v1119 = vld [vmem:[%s333 + $0x5d] sm:$0xff]
      %v1120 = vld [vmem:[#allocation2] sm:$0xff]
      %v1121 = vld [vmem:[#allocation2 + $0x8] sm:$0xff]
      %v1122 = vld [vmem:[#allocation2 + $0x10] sm:$0xff]
      %v1123 = vld [vmem:[#allocation2 + $0x18] sm:$0xff]
      %v1124 = vld [vmem:[#allocation2 + $0x20] sm:$0xff]
      %v1125 = vld [vmem:[#allocation2 + $0x28] sm:$0xff]
      %v1126 = vld [vmem:[#allocation2 + $0x30] sm:$0xff]
      %v1127 = vld [vmem:[#allocation2 + $0x38] sm:$0xff]
      %v1128 = vld [vmem:[#allocation2 + $0x40] sm:$0xff]
      %v1129 = vld [vmem:[#allocation2 + $0x48] sm:$0xff]
      %s1130 = scalar_lea.vmem %s3, 896
      %v1131 = vld [vmem:[%s1130] sm:$0xff]
      %v1132 = vld [vmem:[%s1130 + $0x8] sm:$0xff]
      %v1133 = vld [vmem:[%s1130 + $0x10] sm:$0xff]
      %v1134 = vld [vmem:[%s1130 + $0x18] sm:$0xff]
      %v1135 = vld [vmem:[%s1130 + $0x20] sm:$0xff]
      %v1136 = vld [vmem:[%s1130 + $0x28] sm:$0xff]
      %v1137 = vld [vmem:[%s1130 + $0x30] sm:$0xff]
      %v1138 = vld [vmem:[%s1130 + $0x38] sm:$0xff]
      %v1139 = vld [vmem:[%s1130 + $0x40] sm:$0xff]
      %v1140 = vld [vmem:[%s1130 + $0x48] sm:$0xff]
      %v1141 = vld [vmem:[%s1130 + $0x50] sm:$0xff]
      %v1142 = vld [vmem:[%s1130 + $0x58] sm:$0xff]
      %v1143 = vld [vmem:[%s1130 + $0x60] sm:$0xff]
      %v1144 = vld [vmem:[%s1130 + $0x68] sm:$0xff]
      %v1145 = vld [vmem:[%s1130 + $0x70] sm:$0xff]
      %v1146 = vld [vmem:[%s1130 + $0x78] sm:$0xff]
      %1147 = vmatpush.msra.mxu0 %v1146
      %1148 = vmatpush.msra.mxu0 %v1145
      %1149 = vmatpush.msra.mxu0 %v1144
      %1150 = vmatpush.msra.mxu0 %v1143
      %1151 = vmatpush.msra.mxu0 %v1142
      %1152 = vmatpush.msra.mxu0 %v1141
      %1153 = vmatpush.msra.mxu0 %v1140
      %1154 = vmatpush.msra.mxu0 %v1139
      %1155 = vmatpush.msra.mxu0 %v1138
      %1156 = vmatpush.msra.mxu0 %v1137
      %1157 = vmatpush.msra.mxu0 %v1136
      %1158 = vmatpush.msra.mxu0 %v1135
      %1159 = vmatpush.msra.mxu0 %v1134
      %1160 = vmatpush.msra.mxu0 %v1133
      %1161 = vmatpush.msra.mxu0 %v1132
      %1162 = vmatpush.msra.mxu0 %v1131
      %1163 = vmatmul.f32.gmra.mxu0 %v1110
      %v1164 = vpop.f32.mrf.mxu0
      %v1165 = vadd.f32 0.0, %v1164
      %1166 = vmatmul.f32.gmra.mxu0 %v1111
      %v1167 = vpop.f32.mrf.mxu0
      %v1168 = vadd.f32 0.0, %v1167
      %1169 = vmatmul.f32.gmra.mxu0 %v1112
      %v1170 = vpop.f32.mrf.mxu0
      %v1171 = vadd.f32 0.0, %v1170
      %1172 = vmatmul.f32.gmra.mxu0 %v1113
      %v1173 = vpop.f32.mrf.mxu0
      %v1174 = vadd.f32 0.0, %v1173
      %1175 = vmatmul.f32.gmra.mxu0 %v1114
      %v1176 = vpop.f32.mrf.mxu0
      %v1177 = vadd.f32 0.0, %v1176
      %1178 = vmatmul.f32.gmra.mxu0 %v1115
      %v1179 = vpop.f32.mrf.mxu0
      %v1180 = vadd.f32 0.0, %v1179
      %1181 = vmatmul.f32.gmra.mxu0 %v1116
      %v1182 = vpop.f32.mrf.mxu0
      %v1183 = vadd.f32 0.0, %v1182
      %1184 = vmatmul.f32.gmra.mxu0 %v1117
      %v1185 = vpop.f32.mrf.mxu0
      %v1186 = vadd.f32 0.0, %v1185
      %1187 = vmatmul.f32.gmra.mxu0 %v1118
      %v1188 = vpop.f32.mrf.mxu0
      %v1189 = vadd.f32 0.0, %v1188
      %1190 = vmatmul.f32.gmra.mxu0 %v1119
      %v1191 = vpop.f32.mrf.mxu0
      %v1192 = vadd.f32 0.0, %v1191
      %1193 = vdwg.mxu0
      %v1194 = vadd.f32 %v1120, %v1165
      %v1195 = vadd.f32 %v1121, %v1168
      %v1196 = vadd.f32 %v1122, %v1171
      %v1197 = vadd.f32 %v1123, %v1174
      %v1198 = vadd.f32 %v1124, %v1177
      %v1199 = vadd.f32 %v1125, %v1180
      %v1200 = vadd.f32 %v1126, %v1183
      %v1201 = vadd.f32 %v1127, %v1186
      %v1202 = vadd.f32 %v1128, %v1189
      %v1203 = vadd.f32 %v1129, %v1192
      %1204 = vst [vmem:[#allocation2] sm:$0xff] %v1194
      %1205 = vst [vmem:[#allocation2 + $0x8] sm:$0xff] %v1195
      %1206 = vst [vmem:[#allocation2 + $0x10] sm:$0xff] %v1196
      %1207 = vst [vmem:[#allocation2 + $0x18] sm:$0xff] %v1197
      %1208 = vst [vmem:[#allocation2 + $0x20] sm:$0xff] %v1198
      %1209 = vst [vmem:[#allocation2 + $0x28] sm:$0xff] %v1199
      %1210 = vst [vmem:[#allocation2 + $0x30] sm:$0xff] %v1200
      %1211 = vst [vmem:[#allocation2 + $0x38] sm:$0xff] %v1201
      %1212 = vst [vmem:[#allocation2 + $0x40] sm:$0xff] %v1202
      %1213 = vst [vmem:[#allocation2 + $0x48] sm:$0xff] %v1203
      %v1214 = vld [vmem:[%s333 + $0x16] sm:$0xff]
      %v1215 = vld [vmem:[%s333 + $0x1e] sm:$0xff]
      %v1216 = vld [vmem:[%s333 + $0x26] sm:$0xff]
      %v1217 = vld [vmem:[%s333 + $0x2e] sm:$0xff]
      %v1218 = vld [vmem:[%s333 + $0x36] sm:$0xff]
      %v1219 = vld [vmem:[%s333 + $0x3e] sm:$0xff]
      %v1220 = vld [vmem:[%s333 + $0x46] sm:$0xff]
      %v1221 = vld [vmem:[%s333 + $0x4e] sm:$0xff]
      %v1222 = vld [vmem:[%s333 + $0x56] sm:$0xff]
      %v1223 = vld [vmem:[%s333 + $0x5e] sm:$0xff]
      %v1224 = vld [vmem:[#allocation2] sm:$0xff]
      %v1225 = vld [vmem:[#allocation2 + $0x8] sm:$0xff]
      %v1226 = vld [vmem:[#allocation2 + $0x10] sm:$0xff]
      %v1227 = vld [vmem:[#allocation2 + $0x18] sm:$0xff]
      %v1228 = vld [vmem:[#allocation2 + $0x20] sm:$0xff]
      %v1229 = vld [vmem:[#allocation2 + $0x28] sm:$0xff]
      %v1230 = vld [vmem:[#allocation2 + $0x30] sm:$0xff]
      %v1231 = vld [vmem:[#allocation2 + $0x38] sm:$0xff]
      %v1232 = vld [vmem:[#allocation2 + $0x40] sm:$0xff]
      %v1233 = vld [vmem:[#allocation2 + $0x48] sm:$0xff]
      %s1234 = scalar_lea.vmem %s3, 1024
      %v1235 = vld [vmem:[%s1234] sm:$0xff]
      %v1236 = vld [vmem:[%s1234 + $0x8] sm:$0xff]
      %v1237 = vld [vmem:[%s1234 + $0x10] sm:$0xff]
      %v1238 = vld [vmem:[%s1234 + $0x18] sm:$0xff]
      %v1239 = vld [vmem:[%s1234 + $0x20] sm:$0xff]
      %v1240 = vld [vmem:[%s1234 + $0x28] sm:$0xff]
      %v1241 = vld [vmem:[%s1234 + $0x30] sm:$0xff]
      %v1242 = vld [vmem:[%s1234 + $0x38] sm:$0xff]
      %v1243 = vld [vmem:[%s1234 + $0x40] sm:$0xff]
      %v1244 = vld [vmem:[%s1234 + $0x48] sm:$0xff]
      %v1245 = vld [vmem:[%s1234 + $0x50] sm:$0xff]
      %v1246 = vld [vmem:[%s1234 + $0x58] sm:$0xff]
      %v1247 = vld [vmem:[%s1234 + $0x60] sm:$0xff]
      %v1248 = vld [vmem:[%s1234 + $0x68] sm:$0xff]
      %v1249 = vld [vmem:[%s1234 + $0x70] sm:$0xff]
      %v1250 = vld [vmem:[%s1234 + $0x78] sm:$0xff]
      %1251 = vmatpush.msra.mxu0 %v1250
      %1252 = vmatpush.msra.mxu0 %v1249
      %1253 = vmatpush.msra.mxu0 %v1248
      %1254 = vmatpush.msra.mxu0 %v1247
      %1255 = vmatpush.msra.mxu0 %v1246
      %1256 = vmatpush.msra.mxu0 %v1245
      %1257 = vmatpush.msra.mxu0 %v1244
      %1258 = vmatpush.msra.mxu0 %v1243
      %1259 = vmatpush.msra.mxu0 %v1242
      %1260 = vmatpush.msra.mxu0 %v1241
      %1261 = vmatpush.msra.mxu0 %v1240
      %1262 = vmatpush.msra.mxu0 %v1239
      %1263 = vmatpush.msra.mxu0 %v1238
      %1264 = vmatpush.msra.mxu0 %v1237
      %1265 = vmatpush.msra.mxu0 %v1236
      %1266 = vmatpush.msra.mxu0 %v1235
      %1267 = vmatmul.f32.gmra.mxu0 %v1214
      %v1268 = vpop.f32.mrf.mxu0
      %v1269 = vadd.f32 0.0, %v1268
      %1270 = vmatmul.f32.gmra.mxu0 %v1215
      %v1271 = vpop.f32.mrf.mxu0
      %v1272 = vadd.f32 0.0, %v1271
      %1273 = vmatmul.f32.gmra.mxu0 %v1216
      %v1274 = vpop.f32.mrf.mxu0
      %v1275 = vadd.f32 0.0, %v1274
      %1276 = vmatmul.f32.gmra.mxu0 %v1217
      %v1277 = vpop.f32.mrf.mxu0
      %v1278 = vadd.f32 0.0, %v1277
      %1279 = vmatmul.f32.gmra.mxu0 %v1218
      %v1280 = vpop.f32.mrf.mxu0
      %v1281 = vadd.f32 0.0, %v1280
      %1282 = vmatmul.f32.gmra.mxu0 %v1219
      %v1283 = vpop.f32.mrf.mxu0
      %v1284 = vadd.f32 0.0, %v1283
      %1285 = vmatmul.f32.gmra.mxu0 %v1220
      %v1286 = vpop.f32.mrf.mxu0
      %v1287 = vadd.f32 0.0, %v1286
      %1288 = vmatmul.f32.gmra.mxu0 %v1221
      %v1289 = vpop.f32.mrf.mxu0
      %v1290 = vadd.f32 0.0, %v1289
      %1291 = vmatmul.f32.gmra.mxu0 %v1222
      %v1292 = vpop.f32.mrf.mxu0
      %v1293 = vadd.f32 0.0, %v1292
      %1294 = vmatmul.f32.gmra.mxu0 %v1223
      %v1295 = vpop.f32.mrf.mxu0
      %v1296 = vadd.f32 0.0, %v1295
      %1297 = vdwg.mxu0
      %v1298 = vadd.f32 %v1224, %v1269
      %v1299 = vadd.f32 %v1225, %v1272
      %v1300 = vadd.f32 %v1226, %v1275
      %v1301 = vadd.f32 %v1227, %v1278
      %v1302 = vadd.f32 %v1228, %v1281
      %v1303 = vadd.f32 %v1229, %v1284
      %v1304 = vadd.f32 %v1230, %v1287
      %v1305 = vadd.f32 %v1231, %v1290
      %v1306 = vadd.f32 %v1232, %v1293
      %v1307 = vadd.f32 %v1233, %v1296
      %1308 = vst [vmem:[#allocation2] sm:$0xff] %v1298
      %1309 = vst [vmem:[#allocation2 + $0x8] sm:$0xff] %v1299
      %1310 = vst [vmem:[#allocation2 + $0x10] sm:$0xff] %v1300
      %1311 = vst [vmem:[#allocation2 + $0x18] sm:$0xff] %v1301
      %1312 = vst [vmem:[#allocation2 + $0x20] sm:$0xff] %v1302
      %1313 = vst [vmem:[#allocation2 + $0x28] sm:$0xff] %v1303
      %1314 = vst [vmem:[#allocation2 + $0x30] sm:$0xff] %v1304
      %1315 = vst [vmem:[#allocation2 + $0x38] sm:$0xff] %v1305
      %1316 = vst [vmem:[#allocation2 + $0x40] sm:$0xff] %v1306
      %1317 = vst [vmem:[#allocation2 + $0x48] sm:$0xff] %v1307
      %v1318 = vld [vmem:[%s343] sm:$0xff]
      %v1319 = vld [vmem:[%s343 + $0x8] sm:$0xff]
      %v1320 = vld [vmem:[%s343 + $0x10] sm:$0xff]
      %v1321 = vld [vmem:[%s343 + $0x18] sm:$0xff]
      %v1322 = vld [vmem:[%s343 + $0x20] sm:$0xff]
      %v1323 = vld [vmem:[%s343 + $0x28] sm:$0xff]
      %v1324 = vld [vmem:[%s343 + $0x30] sm:$0xff]
      %v1325 = vld [vmem:[%s343 + $0x38] sm:$0xff]
      %v1326 = vld [vmem:[%s343 + $0x40] sm:$0xff]
      %v1327 = vld [vmem:[%s343 + $0x48] sm:$0xff]
      %v1328 = vld [vmem:[#allocation2] sm:$0xff]
      %v1329 = vld [vmem:[#allocation2 + $0x8] sm:$0xff]
      %v1330 = vld [vmem:[#allocation2 + $0x10] sm:$0xff]
      %v1331 = vld [vmem:[#allocation2 + $0x18] sm:$0xff]
      %v1332 = vld [vmem:[#allocation2 + $0x20] sm:$0xff]
      %v1333 = vld [vmem:[#allocation2 + $0x28] sm:$0xff]
      %v1334 = vld [vmem:[#allocation2 + $0x30] sm:$0xff]
      %v1335 = vld [vmem:[#allocation2 + $0x38] sm:$0xff]
      %v1336 = vld [vmem:[#allocation2 + $0x40] sm:$0xff]
      %v1337 = vld [vmem:[#allocation2 + $0x48] sm:$0xff]
      %s1338 = scalar_lea.vmem %s3, 1152
      %v1339 = vld [vmem:[%s1338] sm:$0xff]
      %v1340 = vld [vmem:[%s1338 + $0x8] sm:$0xff]
      %v1341 = vld [vmem:[%s1338 + $0x10] sm:$0xff]
      %v1342 = vld [vmem:[%s1338 + $0x18] sm:$0xff]
      %v1343 = vld [vmem:[%s1338 + $0x20] sm:$0xff]
      %v1344 = vld [vmem:[%s1338 + $0x28] sm:$0xff]
      %v1345 = vld [vmem:[%s1338 + $0x30] sm:$0xff]
      %v1346 = vld [vmem:[%s1338 + $0x38] sm:$0xff]
      %v1347 = vld [vmem:[%s1338 + $0x40] sm:$0xff]
      %v1348 = vld [vmem:[%s1338 + $0x48] sm:$0xff]
      %v1349 = vld [vmem:[%s1338 + $0x50] sm:$0xff]
      %v1350 = vld [vmem:[%s1338 + $0x58] sm:$0xff]
      %v1351 = vld [vmem:[%s1338 + $0x60] sm:$0xff]
      %v1352 = vld [vmem:[%s1338 + $0x68] sm:$0xff]
      %v1353 = vld [vmem:[%s1338 + $0x70] sm:$0xff]
      %v1354 = vld [vmem:[%s1338 + $0x78] sm:$0xff]
      %1355 = vmatpush.msra.mxu0 %v1354
      %1356 = vmatpush.msra.mxu0 %v1353
      %1357 = vmatpush.msra.mxu0 %v1352
      %1358 = vmatpush.msra.mxu0 %v1351
      %1359 = vmatpush.msra.mxu0 %v1350
      %1360 = vmatpush.msra.mxu0 %v1349
      %1361 = vmatpush.msra.mxu0 %v1348
      %1362 = vmatpush.msra.mxu0 %v1347
      %1363 = vmatpush.msra.mxu0 %v1346
      %1364 = vmatpush.msra.mxu0 %v1345
      %1365 = vmatpush.msra.mxu0 %v1344
      %1366 = vmatpush.msra.mxu0 %v1343
      %1367 = vmatpush.msra.mxu0 %v1342
      %1368 = vmatpush.msra.mxu0 %v1341
      %1369 = vmatpush.msra.mxu0 %v1340
      %1370 = vmatpush.msra.mxu0 %v1339
      %1371 = vmatmul.f32.gmra.mxu0 %v1318
      %v1372 = vpop.f32.mrf.mxu0
      %v1373 = vadd.f32 0.0, %v1372
      %1374 = vmatmul.f32.gmra.mxu0 %v1319
      %v1375 = vpop.f32.mrf.mxu0
      %v1376 = vadd.f32 0.0, %v1375
      %1377 = vmatmul.f32.gmra.mxu0 %v1320
      %v1378 = vpop.f32.mrf.mxu0
      %v1379 = vadd.f32 0.0, %v1378
      %1380 = vmatmul.f32.gmra.mxu0 %v1321
      %v1381 = vpop.f32.mrf.mxu0
      %v1382 = vadd.f32 0.0, %v1381
      %1383 = vmatmul.f32.gmra.mxu0 %v1322
      %v1384 = vpop.f32.mrf.mxu0
      %v1385 = vadd.f32 0.0, %v1384
      %1386 = vmatmul.f32.gmra.mxu0 %v1323
      %v1387 = vpop.f32.mrf.mxu0
      %v1388 = vadd.f32 0.0, %v1387
      %1389 = vmatmul.f32.gmra.mxu0 %v1324
      %v1390 = vpop.f32.mrf.mxu0
      %v1391 = vadd.f32 0.0, %v1390
      %1392 = vmatmul.f32.gmra.mxu0 %v1325
      %v1393 = vpop.f32.mrf.mxu0
      %v1394 = vadd.f32 0.0, %v1393
      %1395 = vmatmul.f32.gmra.mxu0 %v1326
      %v1396 = vpop.f32.mrf.mxu0
      %v1397 = vadd.f32 0.0, %v1396
      %1398 = vmatmul.f32.gmra.mxu0 %v1327
      %v1399 = vpop.f32.mrf.mxu0
      %v1400 = vadd.f32 0.0, %v1399
      %1401 = vdwg.mxu0
      %v1402 = vadd.f32 %v1328, %v1373
      %v1403 = vadd.f32 %v1329, %v1376
      %v1404 = vadd.f32 %v1330, %v1379
      %v1405 = vadd.f32 %v1331, %v1382
      %v1406 = vadd.f32 %v1332, %v1385
      %v1407 = vadd.f32 %v1333, %v1388
      %v1408 = vadd.f32 %v1334, %v1391
      %v1409 = vadd.f32 %v1335, %v1394
      %v1410 = vadd.f32 %v1336, %v1397
      %v1411 = vadd.f32 %v1337, %v1400
      %1412 = vst [vmem:[#allocation2] sm:$0xff] %v1402
      %1413 = vst [vmem:[#allocation2 + $0x8] sm:$0xff] %v1403
      %1414 = vst [vmem:[#allocation2 + $0x10] sm:$0xff] %v1404
      %1415 = vst [vmem:[#allocation2 + $0x18] sm:$0xff] %v1405
      %1416 = vst [vmem:[#allocation2 + $0x20] sm:$0xff] %v1406
      %1417 = vst [vmem:[#allocation2 + $0x28] sm:$0xff] %v1407
      %1418 = vst [vmem:[#allocation2 + $0x30] sm:$0xff] %v1408
      %1419 = vst [vmem:[#allocation2 + $0x38] sm:$0xff] %v1409
      %1420 = vst [vmem:[#allocation2 + $0x40] sm:$0xff] %v1410
      %1421 = vst [vmem:[#allocation2 + $0x48] sm:$0xff] %v1411
      %v1422 = vld [vmem:[%s343 + $0x1] sm:$0xff]
      %v1423 = vld [vmem:[%s343 + $0x9] sm:$0xff]
      %v1424 = vld [vmem:[%s343 + $0x11] sm:$0xff]
      %v1425 = vld [vmem:[%s343 + $0x19] sm:$0xff]
      %v1426 = vld [vmem:[%s343 + $0x21] sm:$0xff]
      %v1427 = vld [vmem:[%s343 + $0x29] sm:$0xff]
      %v1428 = vld [vmem:[%s343 + $0x31] sm:$0xff]
      %v1429 = vld [vmem:[%s343 + $0x39] sm:$0xff]
      %v1430 = vld [vmem:[%s343 + $0x41] sm:$0xff]
      %v1431 = vld [vmem:[%s343 + $0x49] sm:$0xff]
      %v1432 = vld [vmem:[#allocation2] sm:$0xff]
      %v1433 = vld [vmem:[#allocation2 + $0x8] sm:$0xff]
      %v1434 = vld [vmem:[#allocation2 + $0x10] sm:$0xff]
      %v1435 = vld [vmem:[#allocation2 + $0x18] sm:$0xff]
      %v1436 = vld [vmem:[#allocation2 + $0x20] sm:$0xff]
      %v1437 = vld [vmem:[#allocation2 + $0x28] sm:$0xff]
      %v1438 = vld [vmem:[#allocation2 + $0x30] sm:$0xff]
      %v1439 = vld [vmem:[#allocation2 + $0x38] sm:$0xff]
      %v1440 = vld [vmem:[#allocation2 + $0x40] sm:$0xff]
      %v1441 = vld [vmem:[#allocation2 + $0x48] sm:$0xff]
      %s1442 = scalar_lea.vmem %s3, 1280
      %v1443 = vld [vmem:[%s1442] sm:$0xff]
      %v1444 = vld [vmem:[%s1442 + $0x8] sm:$0xff]
      %v1445 = vld [vmem:[%s1442 + $0x10] sm:$0xff]
      %v1446 = vld [vmem:[%s1442 + $0x18] sm:$0xff]
      %v1447 = vld [vmem:[%s1442 + $0x20] sm:$0xff]
      %v1448 = vld [vmem:[%s1442 + $0x28] sm:$0xff]
      %v1449 = vld [vmem:[%s1442 + $0x30] sm:$0xff]
      %v1450 = vld [vmem:[%s1442 + $0x38] sm:$0xff]
      %v1451 = vld [vmem:[%s1442 + $0x40] sm:$0xff]
      %v1452 = vld [vmem:[%s1442 + $0x48] sm:$0xff]
      %v1453 = vld [vmem:[%s1442 + $0x50] sm:$0xff]
      %v1454 = vld [vmem:[%s1442 + $0x58] sm:$0xff]
      %v1455 = vld [vmem:[%s1442 + $0x60] sm:$0xff]
      %v1456 = vld [vmem:[%s1442 + $0x68] sm:$0xff]
      %v1457 = vld [vmem:[%s1442 + $0x70] sm:$0xff]
      %v1458 = vld [vmem:[%s1442 + $0x78] sm:$0xff]
      %1459 = vmatpush.msra.mxu0 %v1458
      %1460 = vmatpush.msra.mxu0 %v1457
      %1461 = vmatpush.msra.mxu0 %v1456
      %1462 = vmatpush.msra.mxu0 %v1455
      %1463 = vmatpush.msra.mxu0 %v1454
      %1464 = vmatpush.msra.mxu0 %v1453
      %1465 = vmatpush.msra.mxu0 %v1452
      %1466 = vmatpush.msra.mxu0 %v1451
      %1467 = vmatpush.msra.mxu0 %v1450
      %1468 = vmatpush.msra.mxu0 %v1449
      %1469 = vmatpush.msra.mxu0 %v1448
      %1470 = vmatpush.msra.mxu0 %v1447
      %1471 = vmatpush.msra.mxu0 %v1446
      %1472 = vmatpush.msra.mxu0 %v1445
      %1473 = vmatpush.msra.mxu0 %v1444
      %1474 = vmatpush.msra.mxu0 %v1443
      %1475 = vmatmul.f32.gmra.mxu0 %v1422
      %v1476 = vpop.f32.mrf.mxu0
      %v1477 = vadd.f32 0.0, %v1476
      %1478 = vmatmul.f32.gmra.mxu0 %v1423
      %v1479 = vpop.f32.mrf.mxu0
      %v1480 = vadd.f32 0.0, %v1479
      %1481 = vmatmul.f32.gmra.mxu0 %v1424
      %v1482 = vpop.f32.mrf.mxu0
      %v1483 = vadd.f32 0.0, %v1482
      %1484 = vmatmul.f32.gmra.mxu0 %v1425
      %v1485 = vpop.f32.mrf.mxu0
      %v1486 = vadd.f32 0.0, %v1485
      %1487 = vmatmul.f32.gmra.mxu0 %v1426
      %v1488 = vpop.f32.mrf.mxu0
      %v1489 = vadd.f32 0.0, %v1488
      %1490 = vmatmul.f32.gmra.mxu0 %v1427
      %v1491 = vpop.f32.mrf.mxu0
      %v1492 = vadd.f32 0.0, %v1491
      %1493 = vmatmul.f32.gmra.mxu0 %v1428
      %v1494 = vpop.f32.mrf.mxu0
      %v1495 = vadd.f32 0.0, %v1494
      %1496 = vmatmul.f32.gmra.mxu0 %v1429
      %v1497 = vpop.f32.mrf.mxu0
      %v1498 = vadd.f32 0.0, %v1497
      %1499 = vmatmul.f32.gmra.mxu0 %v1430
      %v1500 = vpop.f32.mrf.mxu0
      %v1501 = vadd.f32 0.0, %v1500
      %1502 = vmatmul.f32.gmra.mxu0 %v1431
      %v1503 = vpop.f32.mrf.mxu0
      %v1504 = vadd.f32 0.0, %v1503
      %1505 = vdwg.mxu0
      %v1506 = vadd.f32 %v1432, %v1477
      %v1507 = vadd.f32 %v1433, %v1480
      %v1508 = vadd.f32 %v1434, %v1483
      %v1509 = vadd.f32 %v1435, %v1486
      %v1510 = vadd.f32 %v1436, %v1489
      %v1511 = vadd.f32 %v1437, %v1492
      %v1512 = vadd.f32 %v1438, %v1495
      %v1513 = vadd.f32 %v1439, %v1498
      %v1514 = vadd.f32 %v1440, %v1501
      %v1515 = vadd.f32 %v1441, %v1504
      %1516 = vst [vmem:[#allocation2] sm:$0xff] %v1506
      %1517 = vst [vmem:[#allocation2 + $0x8] sm:$0xff] %v1507
      %1518 = vst [vmem:[#allocation2 + $0x10] sm:$0xff] %v1508
      %1519 = vst [vmem:[#allocation2 + $0x18] sm:$0xff] %v1509
      %1520 = vst [vmem:[#allocation2 + $0x20] sm:$0xff] %v1510
      %1521 = vst [vmem:[#allocation2 + $0x28] sm:$0xff] %v1511
      %1522 = vst [vmem:[#allocation2 + $0x30] sm:$0xff] %v1512
      %1523 = vst [vmem:[#allocation2 + $0x38] sm:$0xff] %v1513
      %1524 = vst [vmem:[#allocation2 + $0x40] sm:$0xff] %v1514
      %1525 = vst [vmem:[#allocation2 + $0x48] sm:$0xff] %v1515
      %v1526 = vld [vmem:[%s343 + $0x2] sm:$0xff]
      %v1527 = vld [vmem:[%s343 + $0xa] sm:$0xff]
      %v1528 = vld [vmem:[%s343 + $0x12] sm:$0xff]
      %v1529 = vld [vmem:[%s343 + $0x1a] sm:$0xff]
      %v1530 = vld [vmem:[%s343 + $0x22] sm:$0xff]
      %v1531 = vld [vmem:[%s343 + $0x2a] sm:$0xff]
      %v1532 = vld [vmem:[%s343 + $0x32] sm:$0xff]
      %v1533 = vld [vmem:[%s343 + $0x3a] sm:$0xff]
      %v1534 = vld [vmem:[%s343 + $0x42] sm:$0xff]
      %v1535 = vld [vmem:[%s343 + $0x4a] sm:$0xff]
      %v1536 = vld [vmem:[#allocation2] sm:$0xff]
      %v1537 = vld [vmem:[#allocation2 + $0x8] sm:$0xff]
      %v1538 = vld [vmem:[#allocation2 + $0x10] sm:$0xff]
      %v1539 = vld [vmem:[#allocation2 + $0x18] sm:$0xff]
      %v1540 = vld [vmem:[#allocation2 + $0x20] sm:$0xff]
      %v1541 = vld [vmem:[#allocation2 + $0x28] sm:$0xff]
      %v1542 = vld [vmem:[#allocation2 + $0x30] sm:$0xff]
      %v1543 = vld [vmem:[#allocation2 + $0x38] sm:$0xff]
      %v1544 = vld [vmem:[#allocation2 + $0x40] sm:$0xff]
      %v1545 = vld [vmem:[#allocation2 + $0x48] sm:$0xff]
      %s1546 = scalar_lea.vmem %s3, 1408
      %v1547 = vld [vmem:[%s1546] sm:$0xff]
      %v1548 = vld [vmem:[%s1546 + $0x8] sm:$0xff]
      %v1549 = vld [vmem:[%s1546 + $0x10] sm:$0xff]
      %v1550 = vld [vmem:[%s1546 + $0x18] sm:$0xff]
      %v1551 = vld [vmem:[%s1546 + $0x20] sm:$0xff]
      %v1552 = vld [vmem:[%s1546 + $0x28] sm:$0xff]
      %v1553 = vld [vmem:[%s1546 + $0x30] sm:$0xff]
      %v1554 = vld [vmem:[%s1546 + $0x38] sm:$0xff]
      %v1555 = vld [vmem:[%s1546 + $0x40] sm:$0xff]
      %v1556 = vld [vmem:[%s1546 + $0x48] sm:$0xff]
      %v1557 = vld [vmem:[%s1546 + $0x50] sm:$0xff]
      %v1558 = vld [vmem:[%s1546 + $0x58] sm:$0xff]
      %v1559 = vld [vmem:[%s1546 + $0x60] sm:$0xff]
      %v1560 = vld [vmem:[%s1546 + $0x68] sm:$0xff]
      %v1561 = vld [vmem:[%s1546 + $0x70] sm:$0xff]
      %v1562 = vld [vmem:[%s1546 + $0x78] sm:$0xff]
      %1563 = vmatpush.msra.mxu0 %v1562
      %1564 = vmatpush.msra.mxu0 %v1561
      %1565 = vmatpush.msra.mxu0 %v1560
      %1566 = vmatpush.msra.mxu0 %v1559
      %1567 = vmatpush.msra.mxu0 %v1558
      %1568 = vmatpush.msra.mxu0 %v1557
      %1569 = vmatpush.msra.mxu0 %v1556
      %1570 = vmatpush.msra.mxu0 %v1555
      %1571 = vmatpush.msra.mxu0 %v1554
      %1572 = vmatpush.msra.mxu0 %v1553
      %1573 = vmatpush.msra.mxu0 %v1552
      %1574 = vmatpush.msra.mxu0 %v1551
      %1575 = vmatpush.msra.mxu0 %v1550
      %1576 = vmatpush.msra.mxu0 %v1549
      %1577 = vmatpush.msra.mxu0 %v1548
      %1578 = vmatpush.msra.mxu0 %v1547
      %1579 = vmatmul.f32.gmra.mxu0 %v1526
      %v1580 = vpop.f32.mrf.mxu0
      %v1581 = vadd.f32 0.0, %v1580
      %1582 = vmatmul.f32.gmra.mxu0 %v1527
      %v1583 = vpop.f32.mrf.mxu0
      %v1584 = vadd.f32 0.0, %v1583
      %1585 = vmatmul.f32.gmra.mxu0 %v1528
      %v1586 = vpop.f32.mrf.mxu0
      %v1587 = vadd.f32 0.0, %v1586
      %1588 = vmatmul.f32.gmra.mxu0 %v1529
      %v1589 = vpop.f32.mrf.mxu0
      %v1590 = vadd.f32 0.0, %v1589
      %1591 = vmatmul.f32.gmra.mxu0 %v1530
      %v1592 = vpop.f32.mrf.mxu0
      %v1593 = vadd.f32 0.0, %v1592
      %1594 = vmatmul.f32.gmra.mxu0 %v1531
      %v1595 = vpop.f32.mrf.mxu0
      %v1596 = vadd.f32 0.0, %v1595
      %1597 = vmatmul.f32.gmra.mxu0 %v1532
      %v1598 = vpop.f32.mrf.mxu0
      %v1599 = vadd.f32 0.0, %v1598
      %1600 = vmatmul.f32.gmra.mxu0 %v1533
      %v1601 = vpop.f32.mrf.mxu0
      %v1602 = vadd.f32 0.0, %v1601
      %1603 = vmatmul.f32.gmra.mxu0 %v1534
      %v1604 = vpop.f32.mrf.mxu0
      %v1605 = vadd.f32 0.0, %v1604
      %1606 = vmatmul.f32.gmra.mxu0 %v1535
      %v1607 = vpop.f32.mrf.mxu0
      %v1608 = vadd.f32 0.0, %v1607
      %1609 = vdwg.mxu0
      %v1610 = vadd.f32 %v1536, %v1581
      %v1611 = vadd.f32 %v1537, %v1584
      %v1612 = vadd.f32 %v1538, %v1587
      %v1613 = vadd.f32 %v1539, %v1590
      %v1614 = vadd.f32 %v1540, %v1593
      %v1615 = vadd.f32 %v1541, %v1596
      %v1616 = vadd.f32 %v1542, %v1599
      %v1617 = vadd.f32 %v1543, %v1602
      %v1618 = vadd.f32 %v1544, %v1605
      %v1619 = vadd.f32 %v1545, %v1608
      %1620 = vst [vmem:[#allocation2] sm:$0xff] %v1610
      %1621 = vst [vmem:[#allocation2 + $0x8] sm:$0xff] %v1611
      %1622 = vst [vmem:[#allocation2 + $0x10] sm:$0xff] %v1612
      %1623 = vst [vmem:[#allocation2 + $0x18] sm:$0xff] %v1613
      %1624 = vst [vmem:[#allocation2 + $0x20] sm:$0xff] %v1614
      %1625 = vst [vmem:[#allocation2 + $0x28] sm:$0xff] %v1615
      %1626 = vst [vmem:[#allocation2 + $0x30] sm:$0xff] %v1616
      %1627 = vst [vmem:[#allocation2 + $0x38] sm:$0xff] %v1617
      %1628 = vst [vmem:[#allocation2 + $0x40] sm:$0xff] %v1618
      %1629 = vst [vmem:[#allocation2 + $0x48] sm:$0xff] %v1619
      %v1630 = vld [vmem:[%s343 + $0xa] sm:$0xff]
      %v1631 = vld [vmem:[%s343 + $0x12] sm:$0xff]
      %v1632 = vld [vmem:[%s343 + $0x1a] sm:$0xff]
      %v1633 = vld [vmem:[%s343 + $0x22] sm:$0xff]
      %v1634 = vld [vmem:[%s343 + $0x2a] sm:$0xff]
      %v1635 = vld [vmem:[%s343 + $0x32] sm:$0xff]
      %v1636 = vld [vmem:[%s343 + $0x3a] sm:$0xff]
      %v1637 = vld [vmem:[%s343 + $0x42] sm:$0xff]
      %v1638 = vld [vmem:[%s343 + $0x4a] sm:$0xff]
      %v1639 = vld [vmem:[%s343 + $0x52] sm:$0xff]
      %v1640 = vld [vmem:[#allocation2] sm:$0xff]
      %v1641 = vld [vmem:[#allocation2 + $0x8] sm:$0xff]
      %v1642 = vld [vmem:[#allocation2 + $0x10] sm:$0xff]
      %v1643 = vld [vmem:[#allocation2 + $0x18] sm:$0xff]
      %v1644 = vld [vmem:[#allocation2 + $0x20] sm:$0xff]
      %v1645 = vld [vmem:[#allocation2 + $0x28] sm:$0xff]
      %v1646 = vld [vmem:[#allocation2 + $0x30] sm:$0xff]
      %v1647 = vld [vmem:[#allocation2 + $0x38] sm:$0xff]
      %v1648 = vld [vmem:[#allocation2 + $0x40] sm:$0xff]
      %v1649 = vld [vmem:[#allocation2 + $0x48] sm:$0xff]
      %s1650 = scalar_lea.vmem %s3, 1536
      %v1651 = vld [vmem:[%s1650] sm:$0xff]
      %v1652 = vld [vmem:[%s1650 + $0x8] sm:$0xff]
      %v1653 = vld [vmem:[%s1650 + $0x10] sm:$0xff]
      %v1654 = vld [vmem:[%s1650 + $0x18] sm:$0xff]
      %v1655 = vld [vmem:[%s1650 + $0x20] sm:$0xff]
      %v1656 = vld [vmem:[%s1650 + $0x28] sm:$0xff]
      %v1657 = vld [vmem:[%s1650 + $0x30] sm:$0xff]
      %v1658 = vld [vmem:[%s1650 + $0x38] sm:$0xff]
      %v1659 = vld [vmem:[%s1650 + $0x40] sm:$0xff]
      %v1660 = vld [vmem:[%s1650 + $0x48] sm:$0xff]
      %v1661 = vld [vmem:[%s1650 + $0x50] sm:$0xff]
      %v1662 = vld [vmem:[%s1650 + $0x58] sm:$0xff]
      %v1663 = vld [vmem:[%s1650 + $0x60] sm:$0xff]
      %v1664 = vld [vmem:[%s1650 + $0x68] sm:$0xff]
      %v1665 = vld [vmem:[%s1650 + $0x70] sm:$0xff]
      %v1666 = vld [vmem:[%s1650 + $0x78] sm:$0xff]
      %1667 = vmatpush.msra.mxu0 %v1666
      %1668 = vmatpush.msra.mxu0 %v1665
      %1669 = vmatpush.msra.mxu0 %v1664
      %1670 = vmatpush.msra.mxu0 %v1663
      %1671 = vmatpush.msra.mxu0 %v1662
      %1672 = vmatpush.msra.mxu0 %v1661
      %1673 = vmatpush.msra.mxu0 %v1660
      %1674 = vmatpush.msra.mxu0 %v1659
      %1675 = vmatpush.msra.mxu0 %v1658
      %1676 = vmatpush.msra.mxu0 %v1657
      %1677 = vmatpush.msra.mxu0 %v1656
      %1678 = vmatpush.msra.mxu0 %v1655
      %1679 = vmatpush.msra.mxu0 %v1654
      %1680 = vmatpush.msra.mxu0 %v1653
      %1681 = vmatpush.msra.mxu0 %v1652
      %1682 = vmatpush.msra.mxu0 %v1651
      %1683 = vmatmul.f32.gmra.mxu0 %v1630
      %v1684 = vpop.f32.mrf.mxu0
      %v1685 = vadd.f32 0.0, %v1684
      %1686 = vmatmul.f32.gmra.mxu0 %v1631
      %v1687 = vpop.f32.mrf.mxu0
      %v1688 = vadd.f32 0.0, %v1687
      %1689 = vmatmul.f32.gmra.mxu0 %v1632
      %v1690 = vpop.f32.mrf.mxu0
      %v1691 = vadd.f32 0.0, %v1690
      %1692 = vmatmul.f32.gmra.mxu0 %v1633
      %v1693 = vpop.f32.mrf.mxu0
      %v1694 = vadd.f32 0.0, %v1693
      %1695 = vmatmul.f32.gmra.mxu0 %v1634
      %v1696 = vpop.f32.mrf.mxu0
      %v1697 = vadd.f32 0.0, %v1696
      %1698 = vmatmul.f32.gmra.mxu0 %v1635
      %v1699 = vpop.f32.mrf.mxu0
      %v1700 = vadd.f32 0.0, %v1699
      %1701 = vmatmul.f32.gmra.mxu0 %v1636
      %v1702 = vpop.f32.mrf.mxu0
      %v1703 = vadd.f32 0.0, %v1702
      %1704 = vmatmul.f32.gmra.mxu0 %v1637
      %v1705 = vpop.f32.mrf.mxu0
      %v1706 = vadd.f32 0.0, %v1705
      %1707 = vmatmul.f32.gmra.mxu0 %v1638
      %v1708 = vpop.f32.mrf.mxu0
      %v1709 = vadd.f32 0.0, %v1708
      %1710 = vmatmul.f32.gmra.mxu0 %v1639
      %v1711 = vpop.f32.mrf.mxu0
      %v1712 = vadd.f32 0.0, %v1711
      %1713 = vdwg.mxu0
      %v1714 = vadd.f32 %v1640, %v1685
      %v1715 = vadd.f32 %v1641, %v1688
      %v1716 = vadd.f32 %v1642, %v1691
      %v1717 = vadd.f32 %v1643, %v1694
      %v1718 = vadd.f32 %v1644, %v1697
      %v1719 = vadd.f32 %v1645, %v1700
      %v1720 = vadd.f32 %v1646, %v1703
      %v1721 = vadd.f32 %v1647, %v1706
      %v1722 = vadd.f32 %v1648, %v1709
      %v1723 = vadd.f32 %v1649, %v1712
      %1724 = vst [vmem:[#allocation2] sm:$0xff] %v1714
      %1725 = vst [vmem:[#allocation2 + $0x8] sm:$0xff] %v1715
      %1726 = vst [vmem:[#allocation2 + $0x10] sm:$0xff] %v1716
      %1727 = vst [vmem:[#allocation2 + $0x18] sm:$0xff] %v1717
      %1728 = vst [vmem:[#allocation2 + $0x20] sm:$0xff] %v1718
      %1729 = vst [vmem:[#allocation2 + $0x28] sm:$0xff] %v1719
      %1730 = vst [vmem:[#allocation2 + $0x30] sm:$0xff] %v1720
      %1731 = vst [vmem:[#allocation2 + $0x38] sm:$0xff] %v1721
      %1732 = vst [vmem:[#allocation2 + $0x40] sm:$0xff] %v1722
      %1733 = vst [vmem:[#allocation2 + $0x48] sm:$0xff] %v1723
      %v1734 = vld [vmem:[%s343 + $0xb] sm:$0xff]
      %v1735 = vld [vmem:[%s343 + $0x13] sm:$0xff]
      %v1736 = vld [vmem:[%s343 + $0x1b] sm:$0xff]
      %v1737 = vld [vmem:[%s343 + $0x23] sm:$0xff]
      %v1738 = vld [vmem:[%s343 + $0x2b] sm:$0xff]
      %v1739 = vld [vmem:[%s343 + $0x33] sm:$0xff]
      %v1740 = vld [vmem:[%s343 + $0x3b] sm:$0xff]
      %v1741 = vld [vmem:[%s343 + $0x43] sm:$0xff]
      %v1742 = vld [vmem:[%s343 + $0x4b] sm:$0xff]
      %v1743 = vld [vmem:[%s343 + $0x53] sm:$0xff]
      %v1744 = vld [vmem:[#allocation2] sm:$0xff]
      %v1745 = vld [vmem:[#allocation2 + $0x8] sm:$0xff]
      %v1746 = vld [vmem:[#allocation2 + $0x10] sm:$0xff]
      %v1747 = vld [vmem:[#allocation2 + $0x18] sm:$0xff]
      %v1748 = vld [vmem:[#allocation2 + $0x20] sm:$0xff]
      %v1749 = vld [vmem:[#allocation2 + $0x28] sm:$0xff]
      %v1750 = vld [vmem:[#allocation2 + $0x30] sm:$0xff]
      %v1751 = vld [vmem:[#allocation2 + $0x38] sm:$0xff]
      %v1752 = vld [vmem:[#allocation2 + $0x40] sm:$0xff]
      %v1753 = vld [vmem:[#allocation2 + $0x48] sm:$0xff]
      %s1754 = scalar_lea.vmem %s3, 1664
      %v1755 = vld [vmem:[%s1754] sm:$0xff]
      %v1756 = vld [vmem:[%s1754 + $0x8] sm:$0xff]
      %v1757 = vld [vmem:[%s1754 + $0x10] sm:$0xff]
      %v1758 = vld [vmem:[%s1754 + $0x18] sm:$0xff]
      %v1759 = vld [vmem:[%s1754 + $0x20] sm:$0xff]
      %v1760 = vld [vmem:[%s1754 + $0x28] sm:$0xff]
      %v1761 = vld [vmem:[%s1754 + $0x30] sm:$0xff]
      %v1762 = vld [vmem:[%s1754 + $0x38] sm:$0xff]
      %v1763 = vld [vmem:[%s1754 + $0x40] sm:$0xff]
      %v1764 = vld [vmem:[%s1754 + $0x48] sm:$0xff]
      %v1765 = vld [vmem:[%s1754 + $0x50] sm:$0xff]
      %v1766 = vld [vmem:[%s1754 + $0x58] sm:$0xff]
      %v1767 = vld [vmem:[%s1754 + $0x60] sm:$0xff]
      %v1768 = vld [vmem:[%s1754 + $0x68] sm:$0xff]
      %v1769 = vld [vmem:[%s1754 + $0x70] sm:$0xff]
      %v1770 = vld [vmem:[%s1754 + $0x78] sm:$0xff]
      %1771 = vmatpush.msra.mxu0 %v1770
      %1772 = vmatpush.msra.mxu0 %v1769
      %1773 = vmatpush.msra.mxu0 %v1768
      %1774 = vmatpush.msra.mxu0 %v1767
      %1775 = vmatpush.msra.mxu0 %v1766
      %1776 = vmatpush.msra.mxu0 %v1765
      %1777 = vmatpush.msra.mxu0 %v1764
      %1778 = vmatpush.msra.mxu0 %v1763
      %1779 = vmatpush.msra.mxu0 %v1762
      %1780 = vmatpush.msra.mxu0 %v1761
      %1781 = vmatpush.msra.mxu0 %v1760
      %1782 = vmatpush.msra.mxu0 %v1759
      %1783 = vmatpush.msra.mxu0 %v1758
      %1784 = vmatpush.msra.mxu0 %v1757
      %1785 = vmatpush.msra.mxu0 %v1756
      %1786 = vmatpush.msra.mxu0 %v1755
      %1787 = vmatmul.f32.gmra.mxu0 %v1734
      %v1788 = vpop.f32.mrf.mxu0
      %v1789 = vadd.f32 0.0, %v1788
      %1790 = vmatmul.f32.gmra.mxu0 %v1735
      %v1791 = vpop.f32.mrf.mxu0
      %v1792 = vadd.f32 0.0, %v1791
      %1793 = vmatmul.f32.gmra.mxu0 %v1736
      %v1794 = vpop.f32.mrf.mxu0
      %v1795 = vadd.f32 0.0, %v1794
      %1796 = vmatmul.f32.gmra.mxu0 %v1737
      %v1797 = vpop.f32.mrf.mxu0
      %v1798 = vadd.f32 0.0, %v1797
      %1799 = vmatmul.f32.gmra.mxu0 %v1738
      %v1800 = vpop.f32.mrf.mxu0
      %v1801 = vadd.f32 0.0, %v1800
      %1802 = vmatmul.f32.gmra.mxu0 %v1739
      %v1803 = vpop.f32.mrf.mxu0
      %v1804 = vadd.f32 0.0, %v1803
      %1805 = vmatmul.f32.gmra.mxu0 %v1740
      %v1806 = vpop.f32.mrf.mxu0
      %v1807 = vadd.f32 0.0, %v1806
      %1808 = vmatmul.f32.gmra.mxu0 %v1741
      %v1809 = vpop.f32.mrf.mxu0
      %v1810 = vadd.f32 0.0, %v1809
      %1811 = vmatmul.f32.gmra.mxu0 %v1742
      %v1812 = vpop.f32.mrf.mxu0
      %v1813 = vadd.f32 0.0, %v1812
      %1814 = vmatmul.f32.gmra.mxu0 %v1743
      %v1815 = vpop.f32.mrf.mxu0
      %v1816 = vadd.f32 0.0, %v1815
      %1817 = vdwg.mxu0
      %v1818 = vadd.f32 %v1744, %v1789
      %v1819 = vadd.f32 %v1745, %v1792
      %v1820 = vadd.f32 %v1746, %v1795
      %v1821 = vadd.f32 %v1747, %v1798
      %v1822 = vadd.f32 %v1748, %v1801
      %v1823 = vadd.f32 %v1749, %v1804
      %v1824 = vadd.f32 %v1750, %v1807
      %v1825 = vadd.f32 %v1751, %v1810
      %v1826 = vadd.f32 %v1752, %v1813
      %v1827 = vadd.f32 %v1753, %v1816
      %1828 = vst [vmem:[#allocation2] sm:$0xff] %v1818
      %1829 = vst [vmem:[#allocation2 + $0x8] sm:$0xff] %v1819
      %1830 = vst [vmem:[#allocation2 + $0x10] sm:$0xff] %v1820
      %1831 = vst [vmem:[#allocation2 + $0x18] sm:$0xff] %v1821
      %1832 = vst [vmem:[#allocation2 + $0x20] sm:$0xff] %v1822
      %1833 = vst [vmem:[#allocation2 + $0x28] sm:$0xff] %v1823
      %1834 = vst [vmem:[#allocation2 + $0x30] sm:$0xff] %v1824
      %1835 = vst [vmem:[#allocation2 + $0x38] sm:$0xff] %v1825
      %1836 = vst [vmem:[#allocation2 + $0x40] sm:$0xff] %v1826
      %1837 = vst [vmem:[#allocation2 + $0x48] sm:$0xff] %v1827
      %v1838 = vld [vmem:[%s343 + $0xc] sm:$0xff]
      %v1839 = vld [vmem:[%s343 + $0x14] sm:$0xff]
      %v1840 = vld [vmem:[%s343 + $0x1c] sm:$0xff]
      %v1841 = vld [vmem:[%s343 + $0x24] sm:$0xff]
      %v1842 = vld [vmem:[%s343 + $0x2c] sm:$0xff]
      %v1843 = vld [vmem:[%s343 + $0x34] sm:$0xff]
      %v1844 = vld [vmem:[%s343 + $0x3c] sm:$0xff]
      %v1845 = vld [vmem:[%s343 + $0x44] sm:$0xff]
      %v1846 = vld [vmem:[%s343 + $0x4c] sm:$0xff]
      %v1847 = vld [vmem:[%s343 + $0x54] sm:$0xff]
      %v1848 = vld [vmem:[#allocation2] sm:$0xff]
      %v1849 = vld [vmem:[#allocation2 + $0x8] sm:$0xff]
      %v1850 = vld [vmem:[#allocation2 + $0x10] sm:$0xff]
      %v1851 = vld [vmem:[#allocation2 + $0x18] sm:$0xff]
      %v1852 = vld [vmem:[#allocation2 + $0x20] sm:$0xff]
      %v1853 = vld [vmem:[#allocation2 + $0x28] sm:$0xff]
      %v1854 = vld [vmem:[#allocation2 + $0x30] sm:$0xff]
      %v1855 = vld [vmem:[#allocation2 + $0x38] sm:$0xff]
      %v1856 = vld [vmem:[#allocation2 + $0x40] sm:$0xff]
      %v1857 = vld [vmem:[#allocation2 + $0x48] sm:$0xff]
      %s1858 = scalar_lea.vmem %s3, 1792
      %v1859 = vld [vmem:[%s1858] sm:$0xff]
      %v1860 = vld [vmem:[%s1858 + $0x8] sm:$0xff]
      %v1861 = vld [vmem:[%s1858 + $0x10] sm:$0xff]
      %v1862 = vld [vmem:[%s1858 + $0x18] sm:$0xff]
      %v1863 = vld [vmem:[%s1858 + $0x20] sm:$0xff]
      %v1864 = vld [vmem:[%s1858 + $0x28] sm:$0xff]
      %v1865 = vld [vmem:[%s1858 + $0x30] sm:$0xff]
      %v1866 = vld [vmem:[%s1858 + $0x38] sm:$0xff]
      %v1867 = vld [vmem:[%s1858 + $0x40] sm:$0xff]
      %v1868 = vld [vmem:[%s1858 + $0x48] sm:$0xff]
      %v1869 = vld [vmem:[%s1858 + $0x50] sm:$0xff]
      %v1870 = vld [vmem:[%s1858 + $0x58] sm:$0xff]
      %v1871 = vld [vmem:[%s1858 + $0x60] sm:$0xff]
      %v1872 = vld [vmem:[%s1858 + $0x68] sm:$0xff]
      %v1873 = vld [vmem:[%s1858 + $0x70] sm:$0xff]
      %v1874 = vld [vmem:[%s1858 + $0x78] sm:$0xff]
      %1875 = vmatpush.msra.mxu0 %v1874
      %1876 = vmatpush.msra.mxu0 %v1873
      %1877 = vmatpush.msra.mxu0 %v1872
      %1878 = vmatpush.msra.mxu0 %v1871
      %1879 = vmatpush.msra.mxu0 %v1870
      %1880 = vmatpush.msra.mxu0 %v1869
      %1881 = vmatpush.msra.mxu0 %v1868
      %1882 = vmatpush.msra.mxu0 %v1867
      %1883 = vmatpush.msra.mxu0 %v1866
      %1884 = vmatpush.msra.mxu0 %v1865
      %1885 = vmatpush.msra.mxu0 %v1864
      %1886 = vmatpush.msra.mxu0 %v1863
      %1887 = vmatpush.msra.mxu0 %v1862
      %1888 = vmatpush.msra.mxu0 %v1861
      %1889 = vmatpush.msra.mxu0 %v1860
      %1890 = vmatpush.msra.mxu0 %v1859
      %1891 = vmatmul.f32.gmra.mxu0 %v1838
      %v1892 = vpop.f32.mrf.mxu0
      %v1893 = vadd.f32 0.0, %v1892
      %1894 = vmatmul.f32.gmra.mxu0 %v1839
      %v1895 = vpop.f32.mrf.mxu0
      %v1896 = vadd.f32 0.0, %v1895
      %1897 = vmatmul.f32.gmra.mxu0 %v1840
      %v1898 = vpop.f32.mrf.mxu0
      %v1899 = vadd.f32 0.0, %v1898
      %1900 = vmatmul.f32.gmra.mxu0 %v1841
      %v1901 = vpop.f32.mrf.mxu0
      %v1902 = vadd.f32 0.0, %v1901
      %1903 = vmatmul.f32.gmra.mxu0 %v1842
      %v1904 = vpop.f32.mrf.mxu0
      %v1905 = vadd.f32 0.0, %v1904
      %1906 = vmatmul.f32.gmra.mxu0 %v1843
      %v1907 = vpop.f32.mrf.mxu0
      %v1908 = vadd.f32 0.0, %v1907
      %1909 = vmatmul.f32.gmra.mxu0 %v1844
      %v1910 = vpop.f32.mrf.mxu0
      %v1911 = vadd.f32 0.0, %v1910
      %1912 = vmatmul.f32.gmra.mxu0 %v1845
      %v1913 = vpop.f32.mrf.mxu0
      %v1914 = vadd.f32 0.0, %v1913
      %1915 = vmatmul.f32.gmra.mxu0 %v1846
      %v1916 = vpop.f32.mrf.mxu0
      %v1917 = vadd.f32 0.0, %v1916
      %1918 = vmatmul.f32.gmra.mxu0 %v1847
      %v1919 = vpop.f32.mrf.mxu0
      %v1920 = vadd.f32 0.0, %v1919
      %1921 = vdwg.mxu0
      %v1922 = vadd.f32 %v1848, %v1893
      %v1923 = vadd.f32 %v1849, %v1896
      %v1924 = vadd.f32 %v1850, %v1899
      %v1925 = vadd.f32 %v1851, %v1902
      %v1926 = vadd.f32 %v1852, %v1905
      %v1927 = vadd.f32 %v1853, %v1908
      %v1928 = vadd.f32 %v1854, %v1911
      %v1929 = vadd.f32 %v1855, %v1914
      %v1930 = vadd.f32 %v1856, %v1917
      %v1931 = vadd.f32 %v1857, %v1920
      %1932 = vst [vmem:[#allocation2] sm:$0xff] %v1922
      %1933 = vst [vmem:[#allocation2 + $0x8] sm:$0xff] %v1923
      %1934 = vst [vmem:[#allocation2 + $0x10] sm:$0xff] %v1924
      %1935 = vst [vmem:[#allocation2 + $0x18] sm:$0xff] %v1925
      %1936 = vst [vmem:[#allocation2 + $0x20] sm:$0xff] %v1926
      %1937 = vst [vmem:[#allocation2 + $0x28] sm:$0xff] %v1927
      %1938 = vst [vmem:[#allocation2 + $0x30] sm:$0xff] %v1928
      %1939 = vst [vmem:[#allocation2 + $0x38] sm:$0xff] %v1929
      %1940 = vst [vmem:[#allocation2 + $0x40] sm:$0xff] %v1930
      %1941 = vst [vmem:[#allocation2 + $0x48] sm:$0xff] %v1931
      %v1942 = vld [vmem:[%s343 + $0x14] sm:$0xff]
      %v1943 = vld [vmem:[%s343 + $0x1c] sm:$0xff]
      %v1944 = vld [vmem:[%s343 + $0x24] sm:$0xff]
      %v1945 = vld [vmem:[%s343 + $0x2c] sm:$0xff]
      %v1946 = vld [vmem:[%s343 + $0x34] sm:$0xff]
      %v1947 = vld [vmem:[%s343 + $0x3c] sm:$0xff]
      %v1948 = vld [vmem:[%s343 + $0x44] sm:$0xff]
      %v1949 = vld [vmem:[%s343 + $0x4c] sm:$0xff]
      %v1950 = vld [vmem:[%s343 + $0x54] sm:$0xff]
      %v1951 = vld [vmem:[%s343 + $0x5c] sm:$0xff]
      %v1952 = vld [vmem:[#allocation2] sm:$0xff]
      %v1953 = vld [vmem:[#allocation2 + $0x8] sm:$0xff]
      %v1954 = vld [vmem:[#allocation2 + $0x10] sm:$0xff]
      %v1955 = vld [vmem:[#allocation2 + $0x18] sm:$0xff]
      %v1956 = vld [vmem:[#allocation2 + $0x20] sm:$0xff]
      %v1957 = vld [vmem:[#allocation2 + $0x28] sm:$0xff]
      %v1958 = vld [vmem:[#allocation2 + $0x30] sm:$0xff]
      %v1959 = vld [vmem:[#allocation2 + $0x38] sm:$0xff]
      %v1960 = vld [vmem:[#allocation2 + $0x40] sm:$0xff]
      %v1961 = vld [vmem:[#allocation2 + $0x48] sm:$0xff]
      %s1962 = scalar_lea.vmem %s3, 1920
      %v1963 = vld [vmem:[%s1962] sm:$0xff]
      %v1964 = vld [vmem:[%s1962 + $0x8] sm:$0xff]
      %v1965 = vld [vmem:[%s1962 + $0x10] sm:$0xff]
      %v1966 = vld [vmem:[%s1962 + $0x18] sm:$0xff]
      %v1967 = vld [vmem:[%s1962 + $0x20] sm:$0xff]
      %v1968 = vld [vmem:[%s1962 + $0x28] sm:$0xff]
      %v1969 = vld [vmem:[%s1962 + $0x30] sm:$0xff]
      %v1970 = vld [vmem:[%s1962 + $0x38] sm:$0xff]
      %v1971 = vld [vmem:[%s1962 + $0x40] sm:$0xff]
      %v1972 = vld [vmem:[%s1962 + $0x48] sm:$0xff]
      %v1973 = vld [vmem:[%s1962 + $0x50] sm:$0xff]
      %v1974 = vld [vmem:[%s1962 + $0x58] sm:$0xff]
      %v1975 = vld [vmem:[%s1962 + $0x60] sm:$0xff]
      %v1976 = vld [vmem:[%s1962 + $0x68] sm:$0xff]
      %v1977 = vld [vmem:[%s1962 + $0x70] sm:$0xff]
      %v1978 = vld [vmem:[%s1962 + $0x78] sm:$0xff]
      %1979 = vmatpush.msra.mxu0 %v1978
      %1980 = vmatpush.msra.mxu0 %v1977
      %1981 = vmatpush.msra.mxu0 %v1976
      %1982 = vmatpush.msra.mxu0 %v1975
      %1983 = vmatpush.msra.mxu0 %v1974
      %1984 = vmatpush.msra.mxu0 %v1973
      %1985 = vmatpush.msra.mxu0 %v1972
      %1986 = vmatpush.msra.mxu0 %v1971
      %1987 = vmatpush.msra.mxu0 %v1970
      %1988 = vmatpush.msra.mxu0 %v1969
      %1989 = vmatpush.msra.mxu0 %v1968
      %1990 = vmatpush.msra.mxu0 %v1967
      %1991 = vmatpush.msra.mxu0 %v1966
      %1992 = vmatpush.msra.mxu0 %v1965
      %1993 = vmatpush.msra.mxu0 %v1964
      %1994 = vmatpush.msra.mxu0 %v1963
      %1995 = vmatmul.f32.gmra.mxu0 %v1942
      %v1996 = vpop.f32.mrf.mxu0
      %v1997 = vadd.f32 0.0, %v1996
      %1998 = vmatmul.f32.gmra.mxu0 %v1943
      %v1999 = vpop.f32.mrf.mxu0
      %v2000 = vadd.f32 0.0, %v1999
      %2001 = vmatmul.f32.gmra.mxu0 %v1944
      %v2002 = vpop.f32.mrf.mxu0
      %v2003 = vadd.f32 0.0, %v2002
      %2004 = vmatmul.f32.gmra.mxu0 %v1945
      %v2005 = vpop.f32.mrf.mxu0
      %v2006 = vadd.f32 0.0, %v2005
      %2007 = vmatmul.f32.gmra.mxu0 %v1946
      %v2008 = vpop.f32.mrf.mxu0
      %v2009 = vadd.f32 0.0, %v2008
      %2010 = vmatmul.f32.gmra.mxu0 %v1947
      %v2011 = vpop.f32.mrf.mxu0
      %v2012 = vadd.f32 0.0, %v2011
      %2013 = vmatmul.f32.gmra.mxu0 %v1948
      %v2014 = vpop.f32.mrf.mxu0
      %v2015 = vadd.f32 0.0, %v2014
      %2016 = vmatmul.f32.gmra.mxu0 %v1949
      %v2017 = vpop.f32.mrf.mxu0
      %v2018 = vadd.f32 0.0, %v2017
      %2019 = vmatmul.f32.gmra.mxu0 %v1950
      %v2020 = vpop.f32.mrf.mxu0
      %v2021 = vadd.f32 0.0, %v2020
      %2022 = vmatmul.f32.gmra.mxu0 %v1951
      %v2023 = vpop.f32.mrf.mxu0
      %v2024 = vadd.f32 0.0, %v2023
      %2025 = vdwg.mxu0
      %v2026 = vadd.f32 %v1952, %v1997
      %v2027 = vadd.f32 %v1953, %v2000
      %v2028 = vadd.f32 %v1954, %v2003
      %v2029 = vadd.f32 %v1955, %v2006
      %v2030 = vadd.f32 %v1956, %v2009
      %v2031 = vadd.f32 %v1957, %v2012
      %v2032 = vadd.f32 %v1958, %v2015
      %v2033 = vadd.f32 %v1959, %v2018
      %v2034 = vadd.f32 %v1960, %v2021
      %v2035 = vadd.f32 %v1961, %v2024
      %2036 = vst [vmem:[#allocation2] sm:$0xff] %v2026
      %2037 = vst [vmem:[#allocation2 + $0x8] sm:$0xff] %v2027
      %2038 = vst [vmem:[#allocation2 + $0x10] sm:$0xff] %v2028
      %2039 = vst [vmem:[#allocation2 + $0x18] sm:$0xff] %v2029
      %2040 = vst [vmem:[#allocation2 + $0x20] sm:$0xff] %v2030
      %2041 = vst [vmem:[#allocation2 + $0x28] sm:$0xff] %v2031
      %2042 = vst [vmem:[#allocation2 + $0x30] sm:$0xff] %v2032
      %2043 = vst [vmem:[#allocation2 + $0x38] sm:$0xff] %v2033
      %2044 = vst [vmem:[#allocation2 + $0x40] sm:$0xff] %v2034
      %2045 = vst [vmem:[#allocation2 + $0x48] sm:$0xff] %v2035
      %v2046 = vld [vmem:[%s343 + $0x15] sm:$0xff]
      %v2047 = vld [vmem:[%s343 + $0x1d] sm:$0xff]
      %v2048 = vld [vmem:[%s343 + $0x25] sm:$0xff]
      %v2049 = vld [vmem:[%s343 + $0x2d] sm:$0xff]
      %v2050 = vld [vmem:[%s343 + $0x35] sm:$0xff]
      %v2051 = vld [vmem:[%s343 + $0x3d] sm:$0xff]
      %v2052 = vld [vmem:[%s343 + $0x45] sm:$0xff]
      %v2053 = vld [vmem:[%s343 + $0x4d] sm:$0xff]
      %v2054 = vld [vmem:[%s343 + $0x55] sm:$0xff]
      %v2055 = vld [vmem:[%s343 + $0x5d] sm:$0xff]
      %v2056 = vld [vmem:[#allocation2] sm:$0xff]
      %v2057 = vld [vmem:[#allocation2 + $0x8] sm:$0xff]
      %v2058 = vld [vmem:[#allocation2 + $0x10] sm:$0xff]
      %v2059 = vld [vmem:[#allocation2 + $0x18] sm:$0xff]
      %v2060 = vld [vmem:[#allocation2 + $0x20] sm:$0xff]
      %v2061 = vld [vmem:[#allocation2 + $0x28] sm:$0xff]
      %v2062 = vld [vmem:[#allocation2 + $0x30] sm:$0xff]
      %v2063 = vld [vmem:[#allocation2 + $0x38] sm:$0xff]
      %v2064 = vld [vmem:[#allocation2 + $0x40] sm:$0xff]
      %v2065 = vld [vmem:[#allocation2 + $0x48] sm:$0xff]
      %s2066 = scalar_lea.vmem %s3, 2048
      %v2067 = vld [vmem:[%s2066] sm:$0xff]
      %v2068 = vld [vmem:[%s2066 + $0x8] sm:$0xff]
      %v2069 = vld [vmem:[%s2066 + $0x10] sm:$0xff]
      %v2070 = vld [vmem:[%s2066 + $0x18] sm:$0xff]
      %v2071 = vld [vmem:[%s2066 + $0x20] sm:$0xff]
      %v2072 = vld [vmem:[%s2066 + $0x28] sm:$0xff]
      %v2073 = vld [vmem:[%s2066 + $0x30] sm:$0xff]
      %v2074 = vld [vmem:[%s2066 + $0x38] sm:$0xff]
      %v2075 = vld [vmem:[%s2066 + $0x40] sm:$0xff]
      %v2076 = vld [vmem:[%s2066 + $0x48] sm:$0xff]
      %v2077 = vld [vmem:[%s2066 + $0x50] sm:$0xff]
      %v2078 = vld [vmem:[%s2066 + $0x58] sm:$0xff]
      %v2079 = vld [vmem:[%s2066 + $0x60] sm:$0xff]
      %v2080 = vld [vmem:[%s2066 + $0x68] sm:$0xff]
      %v2081 = vld [vmem:[%s2066 + $0x70] sm:$0xff]
      %v2082 = vld [vmem:[%s2066 + $0x78] sm:$0xff]
      %2083 = vmatpush.msra.mxu0 %v2082
      %2084 = vmatpush.msra.mxu0 %v2081
      %2085 = vmatpush.msra.mxu0 %v2080
      %2086 = vmatpush.msra.mxu0 %v2079
      %2087 = vmatpush.msra.mxu0 %v2078
      %2088 = vmatpush.msra.mxu0 %v2077
      %2089 = vmatpush.msra.mxu0 %v2076
      %2090 = vmatpush.msra.mxu0 %v2075
      %2091 = vmatpush.msra.mxu0 %v2074
      %2092 = vmatpush.msra.mxu0 %v2073
      %2093 = vmatpush.msra.mxu0 %v2072
      %2094 = vmatpush.msra.mxu0 %v2071
      %2095 = vmatpush.msra.mxu0 %v2070
      %2096 = vmatpush.msra.mxu0 %v2069
      %2097 = vmatpush.msra.mxu0 %v2068
      %2098 = vmatpush.msra.mxu0 %v2067
      %2099 = vmatmul.f32.gmra.mxu0 %v2046
      %v2100 = vpop.f32.mrf.mxu0
      %v2101 = vadd.f32 0.0, %v2100
      %2102 = vmatmul.f32.gmra.mxu0 %v2047
      %v2103 = vpop.f32.mrf.mxu0
      %v2104 = vadd.f32 0.0, %v2103
      %2105 = vmatmul.f32.gmra.mxu0 %v2048
      %v2106 = vpop.f32.mrf.mxu0
      %v2107 = vadd.f32 0.0, %v2106
      %2108 = vmatmul.f32.gmra.mxu0 %v2049
      %v2109 = vpop.f32.mrf.mxu0
      %v2110 = vadd.f32 0.0, %v2109
      %2111 = vmatmul.f32.gmra.mxu0 %v2050
      %v2112 = vpop.f32.mrf.mxu0
      %v2113 = vadd.f32 0.0, %v2112
      %2114 = vmatmul.f32.gmra.mxu0 %v2051
      %v2115 = vpop.f32.mrf.mxu0
      %v2116 = vadd.f32 0.0, %v2115
      %2117 = vmatmul.f32.gmra.mxu0 %v2052
      %v2118 = vpop.f32.mrf.mxu0
      %v2119 = vadd.f32 0.0, %v2118
      %2120 = vmatmul.f32.gmra.mxu0 %v2053
      %v2121 = vpop.f32.mrf.mxu0
      %v2122 = vadd.f32 0.0, %v2121
      %2123 = vmatmul.f32.gmra.mxu0 %v2054
      %v2124 = vpop.f32.mrf.mxu0
      %v2125 = vadd.f32 0.0, %v2124
      %2126 = vmatmul.f32.gmra.mxu0 %v2055
      %v2127 = vpop.f32.mrf.mxu0
      %v2128 = vadd.f32 0.0, %v2127
      %2129 = vdwg.mxu0
      %v2130 = vadd.f32 %v2056, %v2101
      %v2131 = vadd.f32 %v2057, %v2104
      %v2132 = vadd.f32 %v2058, %v2107
      %v2133 = vadd.f32 %v2059, %v2110
      %v2134 = vadd.f32 %v2060, %v2113
      %v2135 = vadd.f32 %v2061, %v2116
      %v2136 = vadd.f32 %v2062, %v2119
      %v2137 = vadd.f32 %v2063, %v2122
      %v2138 = vadd.f32 %v2064, %v2125
      %v2139 = vadd.f32 %v2065, %v2128
      %2140 = vst [vmem:[#allocation2] sm:$0xff] %v2130
      %2141 = vst [vmem:[#allocation2 + $0x8] sm:$0xff] %v2131
      %2142 = vst [vmem:[#allocation2 + $0x10] sm:$0xff] %v2132
      %2143 = vst [vmem:[#allocation2 + $0x18] sm:$0xff] %v2133
      %2144 = vst [vmem:[#allocation2 + $0x20] sm:$0xff] %v2134
      %2145 = vst [vmem:[#allocation2 + $0x28] sm:$0xff] %v2135
      %2146 = vst [vmem:[#allocation2 + $0x30] sm:$0xff] %v2136
      %2147 = vst [vmem:[#allocation2 + $0x38] sm:$0xff] %v2137
      %2148 = vst [vmem:[#allocation2 + $0x40] sm:$0xff] %v2138
      %2149 = vst [vmem:[#allocation2 + $0x48] sm:$0xff] %v2139
      %v2150 = vld [vmem:[%s343 + $0x16] sm:$0xff]
      %v2151 = vld [vmem:[%s343 + $0x1e] sm:$0xff]
      %v2152 = vld [vmem:[%s343 + $0x26] sm:$0xff]
      %v2153 = vld [vmem:[%s343 + $0x2e] sm:$0xff]
      %v2154 = vld [vmem:[%s343 + $0x36] sm:$0xff]
      %v2155 = vld [vmem:[%s343 + $0x3e] sm:$0xff]
      %v2156 = vld [vmem:[%s343 + $0x46] sm:$0xff]
      %v2157 = vld [vmem:[%s343 + $0x4e] sm:$0xff]
      %v2158 = vld [vmem:[%s343 + $0x56] sm:$0xff]
      %v2159 = vld [vmem:[%s343 + $0x5e] sm:$0xff]
      %v2160 = vld [vmem:[#allocation2] sm:$0xff]
      %v2161 = vld [vmem:[#allocation2 + $0x8] sm:$0xff]
      %v2162 = vld [vmem:[#allocation2 + $0x10] sm:$0xff]
      %v2163 = vld [vmem:[#allocation2 + $0x18] sm:$0xff]
      %v2164 = vld [vmem:[#allocation2 + $0x20] sm:$0xff]
      %v2165 = vld [vmem:[#allocation2 + $0x28] sm:$0xff]
      %v2166 = vld [vmem:[#allocation2 + $0x30] sm:$0xff]
      %v2167 = vld [vmem:[#allocation2 + $0x38] sm:$0xff]
      %v2168 = vld [vmem:[#allocation2 + $0x40] sm:$0xff]
      %v2169 = vld [vmem:[#allocation2 + $0x48] sm:$0xff]
      %s2170 = scalar_lea.vmem %s3, 2176
      %v2171 = vld [vmem:[%s2170] sm:$0xff]
      %v2172 = vld [vmem:[%s2170 + $0x8] sm:$0xff]
      %v2173 = vld [vmem:[%s2170 + $0x10] sm:$0xff]
      %v2174 = vld [vmem:[%s2170 + $0x18] sm:$0xff]
      %v2175 = vld [vmem:[%s2170 + $0x20] sm:$0xff]
      %v2176 = vld [vmem:[%s2170 + $0x28] sm:$0xff]
      %v2177 = vld [vmem:[%s2170 + $0x30] sm:$0xff]
      %v2178 = vld [vmem:[%s2170 + $0x38] sm:$0xff]
      %v2179 = vld [vmem:[%s2170 + $0x40] sm:$0xff]
      %v2180 = vld [vmem:[%s2170 + $0x48] sm:$0xff]
      %v2181 = vld [vmem:[%s2170 + $0x50] sm:$0xff]
      %v2182 = vld [vmem:[%s2170 + $0x58] sm:$0xff]
      %v2183 = vld [vmem:[%s2170 + $0x60] sm:$0xff]
      %v2184 = vld [vmem:[%s2170 + $0x68] sm:$0xff]
      %v2185 = vld [vmem:[%s2170 + $0x70] sm:$0xff]
      %v2186 = vld [vmem:[%s2170 + $0x78] sm:$0xff]
      %2187 = vmatpush.msra.mxu0 %v2186
      %2188 = vmatpush.msra.mxu0 %v2185
      %2189 = vmatpush.msra.mxu0 %v2184
      %2190 = vmatpush.msra.mxu0 %v2183
      %2191 = vmatpush.msra.mxu0 %v2182
      %2192 = vmatpush.msra.mxu0 %v2181
      %2193 = vmatpush.msra.mxu0 %v2180
      %2194 = vmatpush.msra.mxu0 %v2179
      %2195 = vmatpush.msra.mxu0 %v2178
      %2196 = vmatpush.msra.mxu0 %v2177
      %2197 = vmatpush.msra.mxu0 %v2176
      %2198 = vmatpush.msra.mxu0 %v2175
      %2199 = vmatpush.msra.mxu0 %v2174
      %2200 = vmatpush.msra.mxu0 %v2173
      %2201 = vmatpush.msra.mxu0 %v2172
      %2202 = vmatpush.msra.mxu0 %v2171
      %2203 = vmatmul.f32.gmra.mxu0 %v2150
      %v2204 = vpop.f32.mrf.mxu0
      %v2205 = vadd.f32 0.0, %v2204
      %2206 = vmatmul.f32.gmra.mxu0 %v2151
      %v2207 = vpop.f32.mrf.mxu0
      %v2208 = vadd.f32 0.0, %v2207
      %2209 = vmatmul.f32.gmra.mxu0 %v2152
      %v2210 = vpop.f32.mrf.mxu0
      %v2211 = vadd.f32 0.0, %v2210
      %2212 = vmatmul.f32.gmra.mxu0 %v2153
      %v2213 = vpop.f32.mrf.mxu0
      %v2214 = vadd.f32 0.0, %v2213
      %2215 = vmatmul.f32.gmra.mxu0 %v2154
      %v2216 = vpop.f32.mrf.mxu0
      %v2217 = vadd.f32 0.0, %v2216
      %2218 = vmatmul.f32.gmra.mxu0 %v2155
      %v2219 = vpop.f32.mrf.mxu0
      %v2220 = vadd.f32 0.0, %v2219
      %2221 = vmatmul.f32.gmra.mxu0 %v2156
      %v2222 = vpop.f32.mrf.mxu0
      %v2223 = vadd.f32 0.0, %v2222
      %2224 = vmatmul.f32.gmra.mxu0 %v2157
      %v2225 = vpop.f32.mrf.mxu0
      %v2226 = vadd.f32 0.0, %v2225
      %2227 = vmatmul.f32.gmra.mxu0 %v2158
      %v2228 = vpop.f32.mrf.mxu0
      %v2229 = vadd.f32 0.0, %v2228
      %2230 = vmatmul.f32.gmra.mxu0 %v2159
      %v2231 = vpop.f32.mrf.mxu0
      %v2232 = vadd.f32 0.0, %v2231
      %2233 = vdwg.mxu0
      %v2234 = vadd.f32 %v2160, %v2205
      %v2235 = vadd.f32 %v2161, %v2208
      %v2236 = vadd.f32 %v2162, %v2211
      %v2237 = vadd.f32 %v2163, %v2214
      %v2238 = vadd.f32 %v2164, %v2217
      %v2239 = vadd.f32 %v2165, %v2220
      %v2240 = vadd.f32 %v2166, %v2223
      %v2241 = vadd.f32 %v2167, %v2226
      %v2242 = vadd.f32 %v2168, %v2229
      %v2243 = vadd.f32 %v2169, %v2232
      %2244 = vst [vmem:[#allocation2] sm:$0xff] %v2234
      %2245 = vst [vmem:[#allocation2 + $0x8] sm:$0xff] %v2235
      %2246 = vst [vmem:[#allocation2 + $0x10] sm:$0xff] %v2236
      %2247 = vst [vmem:[#allocation2 + $0x18] sm:$0xff] %v2237
      %2248 = vst [vmem:[#allocation2 + $0x20] sm:$0xff] %v2238
      %2249 = vst [vmem:[#allocation2 + $0x28] sm:$0xff] %v2239
      %2250 = vst [vmem:[#allocation2 + $0x30] sm:$0xff] %v2240
      %2251 = vst [vmem:[#allocation2 + $0x38] sm:$0xff] %v2241
      %2252 = vst [vmem:[#allocation2 + $0x40] sm:$0xff] %v2242
      %2253 = vst [vmem:[#allocation2 + $0x48] sm:$0xff] %v2243
      %v2254 = vld [vmem:[%s354] sm:$0xff]
      %v2255 = vld [vmem:[%s354 + $0x8] sm:$0xff]
      %v2256 = vld [vmem:[%s354 + $0x10] sm:$0xff]
      %v2257 = vld [vmem:[%s354 + $0x18] sm:$0xff]
      %v2258 = vld [vmem:[%s354 + $0x20] sm:$0xff]
      %v2259 = vld [vmem:[%s354 + $0x28] sm:$0xff]
      %v2260 = vld [vmem:[%s354 + $0x30] sm:$0xff]
      %v2261 = vld [vmem:[%s354 + $0x38] sm:$0xff]
      %v2262 = vld [vmem:[%s354 + $0x40] sm:$0xff]
      %v2263 = vld [vmem:[%s354 + $0x48] sm:$0xff]
      %v2264 = vld [vmem:[#allocation2] sm:$0xff]
      %v2265 = vld [vmem:[#allocation2 + $0x8] sm:$0xff]
      %v2266 = vld [vmem:[#allocation2 + $0x10] sm:$0xff]
      %v2267 = vld [vmem:[#allocation2 + $0x18] sm:$0xff]
      %v2268 = vld [vmem:[#allocation2 + $0x20] sm:$0xff]
      %v2269 = vld [vmem:[#allocation2 + $0x28] sm:$0xff]
      %v2270 = vld [vmem:[#allocation2 + $0x30] sm:$0xff]
      %v2271 = vld [vmem:[#allocation2 + $0x38] sm:$0xff]
      %v2272 = vld [vmem:[#allocation2 + $0x40] sm:$0xff]
      %v2273 = vld [vmem:[#allocation2 + $0x48] sm:$0xff]
      %s2274 = scalar_lea.vmem %s3, 2304
      %v2275 = vld [vmem:[%s2274] sm:$0xff]
      %v2276 = vld [vmem:[%s2274 + $0x8] sm:$0xff]
      %v2277 = vld [vmem:[%s2274 + $0x10] sm:$0xff]
      %v2278 = vld [vmem:[%s2274 + $0x18] sm:$0xff]
      %v2279 = vld [vmem:[%s2274 + $0x20] sm:$0xff]
      %v2280 = vld [vmem:[%s2274 + $0x28] sm:$0xff]
      %v2281 = vld [vmem:[%s2274 + $0x30] sm:$0xff]
      %v2282 = vld [vmem:[%s2274 + $0x38] sm:$0xff]
      %v2283 = vld [vmem:[%s2274 + $0x40] sm:$0xff]
      %v2284 = vld [vmem:[%s2274 + $0x48] sm:$0xff]
      %v2285 = vld [vmem:[%s2274 + $0x50] sm:$0xff]
      %v2286 = vld [vmem:[%s2274 + $0x58] sm:$0xff]
      %v2287 = vld [vmem:[%s2274 + $0x60] sm:$0xff]
      %v2288 = vld [vmem:[%s2274 + $0x68] sm:$0xff]
      %v2289 = vld [vmem:[%s2274 + $0x70] sm:$0xff]
      %v2290 = vld [vmem:[%s2274 + $0x78] sm:$0xff]
      %2291 = vmatpush.msra.mxu0 %v2290
      %2292 = vmatpush.msra.mxu0 %v2289
      %2293 = vmatpush.msra.mxu0 %v2288
      %2294 = vmatpush.msra.mxu0 %v2287
      %2295 = vmatpush.msra.mxu0 %v2286
      %2296 = vmatpush.msra.mxu0 %v2285
      %2297 = vmatpush.msra.mxu0 %v2284
      %2298 = vmatpush.msra.mxu0 %v2283
      %2299 = vmatpush.msra.mxu0 %v2282
      %2300 = vmatpush.msra.mxu0 %v2281
      %2301 = vmatpush.msra.mxu0 %v2280
      %2302 = vmatpush.msra.mxu0 %v2279
      %2303 = vmatpush.msra.mxu0 %v2278
      %2304 = vmatpush.msra.mxu0 %v2277
      %2305 = vmatpush.msra.mxu0 %v2276
      %2306 = vmatpush.msra.mxu0 %v2275
      %2307 = vmatmul.f32.gmra.mxu0 %v2254
      %v2308 = vpop.f32.mrf.mxu0
      %v2309 = vadd.f32 0.0, %v2308
      %2310 = vmatmul.f32.gmra.mxu0 %v2255
      %v2311 = vpop.f32.mrf.mxu0
      %v2312 = vadd.f32 0.0, %v2311
      %2313 = vmatmul.f32.gmra.mxu0 %v2256
      %v2314 = vpop.f32.mrf.mxu0
      %v2315 = vadd.f32 0.0, %v2314
      %2316 = vmatmul.f32.gmra.mxu0 %v2257
      %v2317 = vpop.f32.mrf.mxu0
      %v2318 = vadd.f32 0.0, %v2317
      %2319 = vmatmul.f32.gmra.mxu0 %v2258
      %v2320 = vpop.f32.mrf.mxu0
      %v2321 = vadd.f32 0.0, %v2320
      %2322 = vmatmul.f32.gmra.mxu0 %v2259
      %v2323 = vpop.f32.mrf.mxu0
      %v2324 = vadd.f32 0.0, %v2323
      %2325 = vmatmul.f32.gmra.mxu0 %v2260
      %v2326 = vpop.f32.mrf.mxu0
      %v2327 = vadd.f32 0.0, %v2326
      %2328 = vmatmul.f32.gmra.mxu0 %v2261
      %v2329 = vpop.f32.mrf.mxu0
      %v2330 = vadd.f32 0.0, %v2329
      %2331 = vmatmul.f32.gmra.mxu0 %v2262
      %v2332 = vpop.f32.mrf.mxu0
      %v2333 = vadd.f32 0.0, %v2332
      %2334 = vmatmul.f32.gmra.mxu0 %v2263
      %v2335 = vpop.f32.mrf.mxu0
      %v2336 = vadd.f32 0.0, %v2335
      %2337 = vdwg.mxu0
      %v2338 = vadd.f32 %v2264, %v2309
      %v2339 = vadd.f32 %v2265, %v2312
      %v2340 = vadd.f32 %v2266, %v2315
      %v2341 = vadd.f32 %v2267, %v2318
      %v2342 = vadd.f32 %v2268, %v2321
      %v2343 = vadd.f32 %v2269, %v2324
      %v2344 = vadd.f32 %v2270, %v2327
      %v2345 = vadd.f32 %v2271, %v2330
      %v2346 = vadd.f32 %v2272, %v2333
      %v2347 = vadd.f32 %v2273, %v2336
      %2348 = vst [vmem:[#allocation2] sm:$0xff] %v2338
      %2349 = vst [vmem:[#allocation2 + $0x8] sm:$0xff] %v2339
      %2350 = vst [vmem:[#allocation2 + $0x10] sm:$0xff] %v2340
      %2351 = vst [vmem:[#allocation2 + $0x18] sm:$0xff] %v2341
      %2352 = vst [vmem:[#allocation2 + $0x20] sm:$0xff] %v2342
      %2353 = vst [vmem:[#allocation2 + $0x28] sm:$0xff] %v2343
      %2354 = vst [vmem:[#allocation2 + $0x30] sm:$0xff] %v2344
      %2355 = vst [vmem:[#allocation2 + $0x38] sm:$0xff] %v2345
      %2356 = vst [vmem:[#allocation2 + $0x40] sm:$0xff] %v2346
      %2357 = vst [vmem:[#allocation2 + $0x48] sm:$0xff] %v2347
      %v2358 = vld [vmem:[%s354 + $0x1] sm:$0xff]
      %v2359 = vld [vmem:[%s354 + $0x9] sm:$0xff]
      %v2360 = vld [vmem:[%s354 + $0x11] sm:$0xff]
      %v2361 = vld [vmem:[%s354 + $0x19] sm:$0xff]
      %v2362 = vld [vmem:[%s354 + $0x21] sm:$0xff]
      %v2363 = vld [vmem:[%s354 + $0x29] sm:$0xff]
      %v2364 = vld [vmem:[%s354 + $0x31] sm:$0xff]
      %v2365 = vld [vmem:[%s354 + $0x39] sm:$0xff]
      %v2366 = vld [vmem:[%s354 + $0x41] sm:$0xff]
      %v2367 = vld [vmem:[%s354 + $0x49] sm:$0xff]
      %v2368 = vld [vmem:[#allocation2] sm:$0xff]
      %v2369 = vld [vmem:[#allocation2 + $0x8] sm:$0xff]
      %v2370 = vld [vmem:[#allocation2 + $0x10] sm:$0xff]
      %v2371 = vld [vmem:[#allocation2 + $0x18] sm:$0xff]
      %v2372 = vld [vmem:[#allocation2 + $0x20] sm:$0xff]
      %v2373 = vld [vmem:[#allocation2 + $0x28] sm:$0xff]
      %v2374 = vld [vmem:[#allocation2 + $0x30] sm:$0xff]
      %v2375 = vld [vmem:[#allocation2 + $0x38] sm:$0xff]
      %v2376 = vld [vmem:[#allocation2 + $0x40] sm:$0xff]
      %v2377 = vld [vmem:[#allocation2 + $0x48] sm:$0xff]
      %s2378 = scalar_lea.vmem %s3, 2432
      %v2379 = vld [vmem:[%s2378] sm:$0xff]
      %v2380 = vld [vmem:[%s2378 + $0x8] sm:$0xff]
      %v2381 = vld [vmem:[%s2378 + $0x10] sm:$0xff]
      %v2382 = vld [vmem:[%s2378 + $0x18] sm:$0xff]
      %v2383 = vld [vmem:[%s2378 + $0x20] sm:$0xff]
      %v2384 = vld [vmem:[%s2378 + $0x28] sm:$0xff]
      %v2385 = vld [vmem:[%s2378 + $0x30] sm:$0xff]
      %v2386 = vld [vmem:[%s2378 + $0x38] sm:$0xff]
      %v2387 = vld [vmem:[%s2378 + $0x40] sm:$0xff]
      %v2388 = vld [vmem:[%s2378 + $0x48] sm:$0xff]
      %v2389 = vld [vmem:[%s2378 + $0x50] sm:$0xff]
      %v2390 = vld [vmem:[%s2378 + $0x58] sm:$0xff]
      %v2391 = vld [vmem:[%s2378 + $0x60] sm:$0xff]
      %v2392 = vld [vmem:[%s2378 + $0x68] sm:$0xff]
      %v2393 = vld [vmem:[%s2378 + $0x70] sm:$0xff]
      %v2394 = vld [vmem:[%s2378 + $0x78] sm:$0xff]
      %2395 = vmatpush.msra.mxu0 %v2394
      %2396 = vmatpush.msra.mxu0 %v2393
      %2397 = vmatpush.msra.mxu0 %v2392
      %2398 = vmatpush.msra.mxu0 %v2391
      %2399 = vmatpush.msra.mxu0 %v2390
      %2400 = vmatpush.msra.mxu0 %v2389
      %2401 = vmatpush.msra.mxu0 %v2388
      %2402 = vmatpush.msra.mxu0 %v2387
      %2403 = vmatpush.msra.mxu0 %v2386
      %2404 = vmatpush.msra.mxu0 %v2385
      %2405 = vmatpush.msra.mxu0 %v2384
      %2406 = vmatpush.msra.mxu0 %v2383
      %2407 = vmatpush.msra.mxu0 %v2382
      %2408 = vmatpush.msra.mxu0 %v2381
      %2409 = vmatpush.msra.mxu0 %v2380
      %2410 = vmatpush.msra.mxu0 %v2379
      %2411 = vmatmul.f32.gmra.mxu0 %v2358
      %v2412 = vpop.f32.mrf.mxu0
      %v2413 = vadd.f32 0.0, %v2412
      %2414 = vmatmul.f32.gmra.mxu0 %v2359
      %v2415 = vpop.f32.mrf.mxu0
      %v2416 = vadd.f32 0.0, %v2415
      %2417 = vmatmul.f32.gmra.mxu0 %v2360
      %v2418 = vpop.f32.mrf.mxu0
      %v2419 = vadd.f32 0.0, %v2418
      %2420 = vmatmul.f32.gmra.mxu0 %v2361
      %v2421 = vpop.f32.mrf.mxu0
      %v2422 = vadd.f32 0.0, %v2421
      %2423 = vmatmul.f32.gmra.mxu0 %v2362
      %v2424 = vpop.f32.mrf.mxu0
      %v2425 = vadd.f32 0.0, %v2424
      %2426 = vmatmul.f32.gmra.mxu0 %v2363
      %v2427 = vpop.f32.mrf.mxu0
      %v2428 = vadd.f32 0.0, %v2427
      %2429 = vmatmul.f32.gmra.mxu0 %v2364
      %v2430 = vpop.f32.mrf.mxu0
      %v2431 = vadd.f32 0.0, %v2430
      %2432 = vmatmul.f32.gmra.mxu0 %v2365
      %v2433 = vpop.f32.mrf.mxu0
      %v2434 = vadd.f32 0.0, %v2433
      %2435 = vmatmul.f32.gmra.mxu0 %v2366
      %v2436 = vpop.f32.mrf.mxu0
      %v2437 = vadd.f32 0.0, %v2436
      %2438 = vmatmul.f32.gmra.mxu0 %v2367
      %v2439 = vpop.f32.mrf.mxu0
      %v2440 = vadd.f32 0.0, %v2439
      %2441 = vdwg.mxu0
      %v2442 = vadd.f32 %v2368, %v2413
      %v2443 = vadd.f32 %v2369, %v2416
      %v2444 = vadd.f32 %v2370, %v2419
      %v2445 = vadd.f32 %v2371, %v2422
      %v2446 = vadd.f32 %v2372, %v2425
      %v2447 = vadd.f32 %v2373, %v2428
      %v2448 = vadd.f32 %v2374, %v2431
      %v2449 = vadd.f32 %v2375, %v2434
      %v2450 = vadd.f32 %v2376, %v2437
      %v2451 = vadd.f32 %v2377, %v2440
      %2452 = vst [vmem:[#allocation2] sm:$0xff] %v2442
      %2453 = vst [vmem:[#allocation2 + $0x8] sm:$0xff] %v2443
      %2454 = vst [vmem:[#allocation2 + $0x10] sm:$0xff] %v2444
      %2455 = vst [vmem:[#allocation2 + $0x18] sm:$0xff] %v2445
      %2456 = vst [vmem:[#allocation2 + $0x20] sm:$0xff] %v2446
      %2457 = vst [vmem:[#allocation2 + $0x28] sm:$0xff] %v2447
      %2458 = vst [vmem:[#allocation2 + $0x30] sm:$0xff] %v2448
      %2459 = vst [vmem:[#allocation2 + $0x38] sm:$0xff] %v2449
      %2460 = vst [vmem:[#allocation2 + $0x40] sm:$0xff] %v2450
      %2461 = vst [vmem:[#allocation2 + $0x48] sm:$0xff] %v2451
      %v2462 = vld [vmem:[%s354 + $0x2] sm:$0xff]
      %v2463 = vld [vmem:[%s354 + $0xa] sm:$0xff]
      %v2464 = vld [vmem:[%s354 + $0x12] sm:$0xff]
      %v2465 = vld [vmem:[%s354 + $0x1a] sm:$0xff]
      %v2466 = vld [vmem:[%s354 + $0x22] sm:$0xff]
      %v2467 = vld [vmem:[%s354 + $0x2a] sm:$0xff]
      %v2468 = vld [vmem:[%s354 + $0x32] sm:$0xff]
      %v2469 = vld [vmem:[%s354 + $0x3a] sm:$0xff]
      %v2470 = vld [vmem:[%s354 + $0x42] sm:$0xff]
      %v2471 = vld [vmem:[%s354 + $0x4a] sm:$0xff]
      %v2472 = vld [vmem:[#allocation2] sm:$0xff]
      %v2473 = vld [vmem:[#allocation2 + $0x8] sm:$0xff]
      %v2474 = vld [vmem:[#allocation2 + $0x10] sm:$0xff]
      %v2475 = vld [vmem:[#allocation2 + $0x18] sm:$0xff]
      %v2476 = vld [vmem:[#allocation2 + $0x20] sm:$0xff]
      %v2477 = vld [vmem:[#allocation2 + $0x28] sm:$0xff]
      %v2478 = vld [vmem:[#allocation2 + $0x30] sm:$0xff]
      %v2479 = vld [vmem:[#allocation2 + $0x38] sm:$0xff]
      %v2480 = vld [vmem:[#allocation2 + $0x40] sm:$0xff]
      %v2481 = vld [vmem:[#allocation2 + $0x48] sm:$0xff]
      %s2482 = scalar_lea.vmem %s3, 2560
      %v2483 = vld [vmem:[%s2482] sm:$0xff]
      %v2484 = vld [vmem:[%s2482 + $0x8] sm:$0xff]
      %v2485 = vld [vmem:[%s2482 + $0x10] sm:$0xff]
      %v2486 = vld [vmem:[%s2482 + $0x18] sm:$0xff]
      %v2487 = vld [vmem:[%s2482 + $0x20] sm:$0xff]
      %v2488 = vld [vmem:[%s2482 + $0x28] sm:$0xff]
      %v2489 = vld [vmem:[%s2482 + $0x30] sm:$0xff]
      %v2490 = vld [vmem:[%s2482 + $0x38] sm:$0xff]
      %v2491 = vld [vmem:[%s2482 + $0x40] sm:$0xff]
      %v2492 = vld [vmem:[%s2482 + $0x48] sm:$0xff]
      %v2493 = vld [vmem:[%s2482 + $0x50] sm:$0xff]
      %v2494 = vld [vmem:[%s2482 + $0x58] sm:$0xff]
      %v2495 = vld [vmem:[%s2482 + $0x60] sm:$0xff]
      %v2496 = vld [vmem:[%s2482 + $0x68] sm:$0xff]
      %v2497 = vld [vmem:[%s2482 + $0x70] sm:$0xff]
      %v2498 = vld [vmem:[%s2482 + $0x78] sm:$0xff]
      %2499 = vmatpush.msra.mxu0 %v2498
      %2500 = vmatpush.msra.mxu0 %v2497
      %2501 = vmatpush.msra.mxu0 %v2496
      %2502 = vmatpush.msra.mxu0 %v2495
      %2503 = vmatpush.msra.mxu0 %v2494
      %2504 = vmatpush.msra.mxu0 %v2493
      %2505 = vmatpush.msra.mxu0 %v2492
      %2506 = vmatpush.msra.mxu0 %v2491
      %2507 = vmatpush.msra.mxu0 %v2490
      %2508 = vmatpush.msra.mxu0 %v2489
      %2509 = vmatpush.msra.mxu0 %v2488
      %2510 = vmatpush.msra.mxu0 %v2487
      %2511 = vmatpush.msra.mxu0 %v2486
      %2512 = vmatpush.msra.mxu0 %v2485
      %2513 = vmatpush.msra.mxu0 %v2484
      %2514 = vmatpush.msra.mxu0 %v2483
      %2515 = vmatmul.f32.gmra.mxu0 %v2462
      %v2516 = vpop.f32.mrf.mxu0
      %v2517 = vadd.f32 0.0, %v2516
      %2518 = vmatmul.f32.gmra.mxu0 %v2463
      %v2519 = vpop.f32.mrf.mxu0
      %v2520 = vadd.f32 0.0, %v2519
      %2521 = vmatmul.f32.gmra.mxu0 %v2464
      %v2522 = vpop.f32.mrf.mxu0
      %v2523 = vadd.f32 0.0, %v2522
      %2524 = vmatmul.f32.gmra.mxu0 %v2465
      %v2525 = vpop.f32.mrf.mxu0
      %v2526 = vadd.f32 0.0, %v2525
      %2527 = vmatmul.f32.gmra.mxu0 %v2466
      %v2528 = vpop.f32.mrf.mxu0
      %v2529 = vadd.f32 0.0, %v2528
      %2530 = vmatmul.f32.gmra.mxu0 %v2467
      %v2531 = vpop.f32.mrf.mxu0
      %v2532 = vadd.f32 0.0, %v2531
      %2533 = vmatmul.f32.gmra.mxu0 %v2468
      %v2534 = vpop.f32.mrf.mxu0
      %v2535 = vadd.f32 0.0, %v2534
      %2536 = vmatmul.f32.gmra.mxu0 %v2469
      %v2537 = vpop.f32.mrf.mxu0
      %v2538 = vadd.f32 0.0, %v2537
      %2539 = vmatmul.f32.gmra.mxu0 %v2470
      %v2540 = vpop.f32.mrf.mxu0
      %v2541 = vadd.f32 0.0, %v2540
      %2542 = vmatmul.f32.gmra.mxu0 %v2471
      %v2543 = vpop.f32.mrf.mxu0
      %v2544 = vadd.f32 0.0, %v2543
      %2545 = vdwg.mxu0
      %v2546 = vadd.f32 %v2472, %v2517
      %v2547 = vadd.f32 %v2473, %v2520
      %v2548 = vadd.f32 %v2474, %v2523
      %v2549 = vadd.f32 %v2475, %v2526
      %v2550 = vadd.f32 %v2476, %v2529
      %v2551 = vadd.f32 %v2477, %v2532
      %v2552 = vadd.f32 %v2478, %v2535
      %v2553 = vadd.f32 %v2479, %v2538
      %v2554 = vadd.f32 %v2480, %v2541
      %v2555 = vadd.f32 %v2481, %v2544
      %2556 = vst [vmem:[#allocation2] sm:$0xff] %v2546
      %2557 = vst [vmem:[#allocation2 + $0x8] sm:$0xff] %v2547
      %2558 = vst [vmem:[#allocation2 + $0x10] sm:$0xff] %v2548
      %2559 = vst [vmem:[#allocation2 + $0x18] sm:$0xff] %v2549
      %2560 = vst [vmem:[#allocation2 + $0x20] sm:$0xff] %v2550
      %2561 = vst [vmem:[#allocation2 + $0x28] sm:$0xff] %v2551
      %2562 = vst [vmem:[#allocation2 + $0x30] sm:$0xff] %v2552
      %2563 = vst [vmem:[#allocation2 + $0x38] sm:$0xff] %v2553
      %2564 = vst [vmem:[#allocation2 + $0x40] sm:$0xff] %v2554
      %2565 = vst [vmem:[#allocation2 + $0x48] sm:$0xff] %v2555
      %v2566 = vld [vmem:[%s354 + $0xa] sm:$0xff]
      %v2567 = vld [vmem:[%s354 + $0x12] sm:$0xff]
      %v2568 = vld [vmem:[%s354 + $0x1a] sm:$0xff]
      %v2569 = vld [vmem:[%s354 + $0x22] sm:$0xff]
      %v2570 = vld [vmem:[%s354 + $0x2a] sm:$0xff]
      %v2571 = vld [vmem:[%s354 + $0x32] sm:$0xff]
      %v2572 = vld [vmem:[%s354 + $0x3a] sm:$0xff]
      %v2573 = vld [vmem:[%s354 + $0x42] sm:$0xff]
      %v2574 = vld [vmem:[%s354 + $0x4a] sm:$0xff]
      %v2575 = vld [vmem:[%s354 + $0x52] sm:$0xff]
      %v2576 = vld [vmem:[#allocation2] sm:$0xff]
      %v2577 = vld [vmem:[#allocation2 + $0x8] sm:$0xff]
      %v2578 = vld [vmem:[#allocation2 + $0x10] sm:$0xff]
      %v2579 = vld [vmem:[#allocation2 + $0x18] sm:$0xff]
      %v2580 = vld [vmem:[#allocation2 + $0x20] sm:$0xff]
      %v2581 = vld [vmem:[#allocation2 + $0x28] sm:$0xff]
      %v2582 = vld [vmem:[#allocation2 + $0x30] sm:$0xff]
      %v2583 = vld [vmem:[#allocation2 + $0x38] sm:$0xff]
      %v2584 = vld [vmem:[#allocation2 + $0x40] sm:$0xff]
      %v2585 = vld [vmem:[#allocation2 + $0x48] sm:$0xff]
      %s2586 = scalar_lea.vmem %s3, 2688
      %v2587 = vld [vmem:[%s2586] sm:$0xff]
      %v2588 = vld [vmem:[%s2586 + $0x8] sm:$0xff]
      %v2589 = vld [vmem:[%s2586 + $0x10] sm:$0xff]
      %v2590 = vld [vmem:[%s2586 + $0x18] sm:$0xff]
      %v2591 = vld [vmem:[%s2586 + $0x20] sm:$0xff]
      %v2592 = vld [vmem:[%s2586 + $0x28] sm:$0xff]
      %v2593 = vld [vmem:[%s2586 + $0x30] sm:$0xff]
      %v2594 = vld [vmem:[%s2586 + $0x38] sm:$0xff]
      %v2595 = vld [vmem:[%s2586 + $0x40] sm:$0xff]
      %v2596 = vld [vmem:[%s2586 + $0x48] sm:$0xff]
      %v2597 = vld [vmem:[%s2586 + $0x50] sm:$0xff]
      %v2598 = vld [vmem:[%s2586 + $0x58] sm:$0xff]
      %v2599 = vld [vmem:[%s2586 + $0x60] sm:$0xff]
      %v2600 = vld [vmem:[%s2586 + $0x68] sm:$0xff]
      %v2601 = vld [vmem:[%s2586 + $0x70] sm:$0xff]
      %v2602 = vld [vmem:[%s2586 + $0x78] sm:$0xff]
      %2603 = vmatpush.msra.mxu0 %v2602
      %2604 = vmatpush.msra.mxu0 %v2601
      %2605 = vmatpush.msra.mxu0 %v2600
      %2606 = vmatpush.msra.mxu0 %v2599
      %2607 = vmatpush.msra.mxu0 %v2598
      %2608 = vmatpush.msra.mxu0 %v2597
      %2609 = vmatpush.msra.mxu0 %v2596
      %2610 = vmatpush.msra.mxu0 %v2595
      %2611 = vmatpush.msra.mxu0 %v2594
      %2612 = vmatpush.msra.mxu0 %v2593
      %2613 = vmatpush.msra.mxu0 %v2592
      %2614 = vmatpush.msra.mxu0 %v2591
      %2615 = vmatpush.msra.mxu0 %v2590
      %2616 = vmatpush.msra.mxu0 %v2589
      %2617 = vmatpush.msra.mxu0 %v2588
      %2618 = vmatpush.msra.mxu0 %v2587
      %2619 = vmatmul.f32.gmra.mxu0 %v2566
      %v2620 = vpop.f32.mrf.mxu0
      %v2621 = vadd.f32 0.0, %v2620
      %2622 = vmatmul.f32.gmra.mxu0 %v2567
      %v2623 = vpop.f32.mrf.mxu0
      %v2624 = vadd.f32 0.0, %v2623
      %2625 = vmatmul.f32.gmra.mxu0 %v2568
      %v2626 = vpop.f32.mrf.mxu0
      %v2627 = vadd.f32 0.0, %v2626
      %2628 = vmatmul.f32.gmra.mxu0 %v2569
      %v2629 = vpop.f32.mrf.mxu0
      %v2630 = vadd.f32 0.0, %v2629
      %2631 = vmatmul.f32.gmra.mxu0 %v2570
      %v2632 = vpop.f32.mrf.mxu0
      %v2633 = vadd.f32 0.0, %v2632
      %2634 = vmatmul.f32.gmra.mxu0 %v2571
      %v2635 = vpop.f32.mrf.mxu0
      %v2636 = vadd.f32 0.0, %v2635
      %2637 = vmatmul.f32.gmra.mxu0 %v2572
      %v2638 = vpop.f32.mrf.mxu0
      %v2639 = vadd.f32 0.0, %v2638
      %2640 = vmatmul.f32.gmra.mxu0 %v2573
      %v2641 = vpop.f32.mrf.mxu0
      %v2642 = vadd.f32 0.0, %v2641
      %2643 = vmatmul.f32.gmra.mxu0 %v2574
      %v2644 = vpop.f32.mrf.mxu0
      %v2645 = vadd.f32 0.0, %v2644
      %2646 = vmatmul.f32.gmra.mxu0 %v2575
      %v2647 = vpop.f32.mrf.mxu0
      %v2648 = vadd.f32 0.0, %v2647
      %2649 = vdwg.mxu0
      %v2650 = vadd.f32 %v2576, %v2621
      %v2651 = vadd.f32 %v2577, %v2624
      %v2652 = vadd.f32 %v2578, %v2627
      %v2653 = vadd.f32 %v2579, %v2630
      %v2654 = vadd.f32 %v2580, %v2633
      %v2655 = vadd.f32 %v2581, %v2636
      %v2656 = vadd.f32 %v2582, %v2639
      %v2657 = vadd.f32 %v2583, %v2642
      %v2658 = vadd.f32 %v2584, %v2645
      %v2659 = vadd.f32 %v2585, %v2648
      %2660 = vst [vmem:[#allocation2] sm:$0xff] %v2650
      %2661 = vst [vmem:[#allocation2 + $0x8] sm:$0xff] %v2651
      %2662 = vst [vmem:[#allocation2 + $0x10] sm:$0xff] %v2652
      %2663 = vst [vmem:[#allocation2 + $0x18] sm:$0xff] %v2653
      %2664 = vst [vmem:[#allocation2 + $0x20] sm:$0xff] %v2654
      %2665 = vst [vmem:[#allocation2 + $0x28] sm:$0xff] %v2655
      %2666 = vst [vmem:[#allocation2 + $0x30] sm:$0xff] %v2656
      %2667 = vst [vmem:[#allocation2 + $0x38] sm:$0xff] %v2657
      %2668 = vst [vmem:[#allocation2 + $0x40] sm:$0xff] %v2658
      %2669 = vst [vmem:[#allocation2 + $0x48] sm:$0xff] %v2659
      %v2670 = vld [vmem:[%s354 + $0xb] sm:$0xff]
      %v2671 = vld [vmem:[%s354 + $0x13] sm:$0xff]
      %v2672 = vld [vmem:[%s354 + $0x1b] sm:$0xff]
      %v2673 = vld [vmem:[%s354 + $0x23] sm:$0xff]
      %v2674 = vld [vmem:[%s354 + $0x2b] sm:$0xff]
      %v2675 = vld [vmem:[%s354 + $0x33] sm:$0xff]
      %v2676 = vld [vmem:[%s354 + $0x3b] sm:$0xff]
      %v2677 = vld [vmem:[%s354 + $0x43] sm:$0xff]
      %v2678 = vld [vmem:[%s354 + $0x4b] sm:$0xff]
      %v2679 = vld [vmem:[%s354 + $0x53] sm:$0xff]
      %v2680 = vld [vmem:[#allocation2] sm:$0xff]
      %v2681 = vld [vmem:[#allocation2 + $0x8] sm:$0xff]
      %v2682 = vld [vmem:[#allocation2 + $0x10] sm:$0xff]
      %v2683 = vld [vmem:[#allocation2 + $0x18] sm:$0xff]
      %v2684 = vld [vmem:[#allocation2 + $0x20] sm:$0xff]
      %v2685 = vld [vmem:[#allocation2 + $0x28] sm:$0xff]
      %v2686 = vld [vmem:[#allocation2 + $0x30] sm:$0xff]
      %v2687 = vld [vmem:[#allocation2 + $0x38] sm:$0xff]
      %v2688 = vld [vmem:[#allocation2 + $0x40] sm:$0xff]
      %v2689 = vld [vmem:[#allocation2 + $0x48] sm:$0xff]
      %s2690 = scalar_lea.vmem %s3, 2816
      %v2691 = vld [vmem:[%s2690] sm:$0xff]
      %v2692 = vld [vmem:[%s2690 + $0x8] sm:$0xff]
      %v2693 = vld [vmem:[%s2690 + $0x10] sm:$0xff]
      %v2694 = vld [vmem:[%s2690 + $0x18] sm:$0xff]
      %v2695 = vld [vmem:[%s2690 + $0x20] sm:$0xff]
      %v2696 = vld [vmem:[%s2690 + $0x28] sm:$0xff]
      %v2697 = vld [vmem:[%s2690 + $0x30] sm:$0xff]
      %v2698 = vld [vmem:[%s2690 + $0x38] sm:$0xff]
      %v2699 = vld [vmem:[%s2690 + $0x40] sm:$0xff]
      %v2700 = vld [vmem:[%s2690 + $0x48] sm:$0xff]
      %v2701 = vld [vmem:[%s2690 + $0x50] sm:$0xff]
      %v2702 = vld [vmem:[%s2690 + $0x58] sm:$0xff]
      %v2703 = vld [vmem:[%s2690 + $0x60] sm:$0xff]
      %v2704 = vld [vmem:[%s2690 + $0x68] sm:$0xff]
      %v2705 = vld [vmem:[%s2690 + $0x70] sm:$0xff]
      %v2706 = vld [vmem:[%s2690 + $0x78] sm:$0xff]
      %2707 = vmatpush.msra.mxu0 %v2706
      %2708 = vmatpush.msra.mxu0 %v2705
      %2709 = vmatpush.msra.mxu0 %v2704
      %2710 = vmatpush.msra.mxu0 %v2703
      %2711 = vmatpush.msra.mxu0 %v2702
      %2712 = vmatpush.msra.mxu0 %v2701
      %2713 = vmatpush.msra.mxu0 %v2700
      %2714 = vmatpush.msra.mxu0 %v2699
      %2715 = vmatpush.msra.mxu0 %v2698
      %2716 = vmatpush.msra.mxu0 %v2697
      %2717 = vmatpush.msra.mxu0 %v2696
      %2718 = vmatpush.msra.mxu0 %v2695
      %2719 = vmatpush.msra.mxu0 %v2694
      %2720 = vmatpush.msra.mxu0 %v2693
      %2721 = vmatpush.msra.mxu0 %v2692
      %2722 = vmatpush.msra.mxu0 %v2691
      %2723 = vmatmul.f32.gmra.mxu0 %v2670
      %v2724 = vpop.f32.mrf.mxu0
      %v2725 = vadd.f32 0.0, %v2724
      %2726 = vmatmul.f32.gmra.mxu0 %v2671
      %v2727 = vpop.f32.mrf.mxu0
      %v2728 = vadd.f32 0.0, %v2727
      %2729 = vmatmul.f32.gmra.mxu0 %v2672
      %v2730 = vpop.f32.mrf.mxu0
      %v2731 = vadd.f32 0.0, %v2730
      %2732 = vmatmul.f32.gmra.mxu0 %v2673
      %v2733 = vpop.f32.mrf.mxu0
      %v2734 = vadd.f32 0.0, %v2733
      %2735 = vmatmul.f32.gmra.mxu0 %v2674
      %v2736 = vpop.f32.mrf.mxu0
      %v2737 = vadd.f32 0.0, %v2736
      %2738 = vmatmul.f32.gmra.mxu0 %v2675
      %v2739 = vpop.f32.mrf.mxu0
      %v2740 = vadd.f32 0.0, %v2739
      %2741 = vmatmul.f32.gmra.mxu0 %v2676
      %v2742 = vpop.f32.mrf.mxu0
      %v2743 = vadd.f32 0.0, %v2742
      %2744 = vmatmul.f32.gmra.mxu0 %v2677
      %v2745 = vpop.f32.mrf.mxu0
      %v2746 = vadd.f32 0.0, %v2745
      %2747 = vmatmul.f32.gmra.mxu0 %v2678
      %v2748 = vpop.f32.mrf.mxu0
      %v2749 = vadd.f32 0.0, %v2748
      %2750 = vmatmul.f32.gmra.mxu0 %v2679
      %v2751 = vpop.f32.mrf.mxu0
      %v2752 = vadd.f32 0.0, %v2751
      %2753 = vdwg.mxu0
      %v2754 = vadd.f32 %v2680, %v2725
      %v2755 = vadd.f32 %v2681, %v2728
      %v2756 = vadd.f32 %v2682, %v2731
      %v2757 = vadd.f32 %v2683, %v2734
      %v2758 = vadd.f32 %v2684, %v2737
      %v2759 = vadd.f32 %v2685, %v2740
      %v2760 = vadd.f32 %v2686, %v2743
      %v2761 = vadd.f32 %v2687, %v2746
      %v2762 = vadd.f32 %v2688, %v2749
      %v2763 = vadd.f32 %v2689, %v2752
      %2764 = vst [vmem:[#allocation2] sm:$0xff] %v2754
      %2765 = vst [vmem:[#allocation2 + $0x8] sm:$0xff] %v2755
      %2766 = vst [vmem:[#allocation2 + $0x10] sm:$0xff] %v2756
      %2767 = vst [vmem:[#allocation2 + $0x18] sm:$0xff] %v2757
      %2768 = vst [vmem:[#allocation2 + $0x20] sm:$0xff] %v2758
      %2769 = vst [vmem:[#allocation2 + $0x28] sm:$0xff] %v2759
      %2770 = vst [vmem:[#allocation2 + $0x30] sm:$0xff] %v2760
      %2771 = vst [vmem:[#allocation2 + $0x38] sm:$0xff] %v2761
      %2772 = vst [vmem:[#allocation2 + $0x40] sm:$0xff] %v2762
      %2773 = vst [vmem:[#allocation2 + $0x48] sm:$0xff] %v2763
      %v2774 = vld [vmem:[%s354 + $0xc] sm:$0xff]
      %v2775 = vld [vmem:[%s354 + $0x14] sm:$0xff]
      %v2776 = vld [vmem:[%s354 + $0x1c] sm:$0xff]
      %v2777 = vld [vmem:[%s354 + $0x24] sm:$0xff]
      %v2778 = vld [vmem:[%s354 + $0x2c] sm:$0xff]
      %v2779 = vld [vmem:[%s354 + $0x34] sm:$0xff]
      %v2780 = vld [vmem:[%s354 + $0x3c] sm:$0xff]
      %v2781 = vld [vmem:[%s354 + $0x44] sm:$0xff]
      %v2782 = vld [vmem:[%s354 + $0x4c] sm:$0xff]
      %v2783 = vld [vmem:[%s354 + $0x54] sm:$0xff]
      %v2784 = vld [vmem:[#allocation2] sm:$0xff]
      %v2785 = vld [vmem:[#allocation2 + $0x8] sm:$0xff]
      %v2786 = vld [vmem:[#allocation2 + $0x10] sm:$0xff]
      %v2787 = vld [vmem:[#allocation2 + $0x18] sm:$0xff]
      %v2788 = vld [vmem:[#allocation2 + $0x20] sm:$0xff]
      %v2789 = vld [vmem:[#allocation2 + $0x28] sm:$0xff]
      %v2790 = vld [vmem:[#allocation2 + $0x30] sm:$0xff]
      %v2791 = vld [vmem:[#allocation2 + $0x38] sm:$0xff]
      %v2792 = vld [vmem:[#allocation2 + $0x40] sm:$0xff]
      %v2793 = vld [vmem:[#allocation2 + $0x48] sm:$0xff]
      %s2794 = scalar_lea.vmem %s3, 2944
      %v2795 = vld [vmem:[%s2794] sm:$0xff]
      %v2796 = vld [vmem:[%s2794 + $0x8] sm:$0xff]
      %v2797 = vld [vmem:[%s2794 + $0x10] sm:$0xff]
      %v2798 = vld [vmem:[%s2794 + $0x18] sm:$0xff]
      %v2799 = vld [vmem:[%s2794 + $0x20] sm:$0xff]
      %v2800 = vld [vmem:[%s2794 + $0x28] sm:$0xff]
      %v2801 = vld [vmem:[%s2794 + $0x30] sm:$0xff]
      %v2802 = vld [vmem:[%s2794 + $0x38] sm:$0xff]
      %v2803 = vld [vmem:[%s2794 + $0x40] sm:$0xff]
      %v2804 = vld [vmem:[%s2794 + $0x48] sm:$0xff]
      %v2805 = vld [vmem:[%s2794 + $0x50] sm:$0xff]
      %v2806 = vld [vmem:[%s2794 + $0x58] sm:$0xff]
      %v2807 = vld [vmem:[%s2794 + $0x60] sm:$0xff]
      %v2808 = vld [vmem:[%s2794 + $0x68] sm:$0xff]
      %v2809 = vld [vmem:[%s2794 + $0x70] sm:$0xff]
      %v2810 = vld [vmem:[%s2794 + $0x78] sm:$0xff]
      %2811 = vmatpush.msra.mxu0 %v2810
      %2812 = vmatpush.msra.mxu0 %v2809
      %2813 = vmatpush.msra.mxu0 %v2808
      %2814 = vmatpush.msra.mxu0 %v2807
      %2815 = vmatpush.msra.mxu0 %v2806
      %2816 = vmatpush.msra.mxu0 %v2805
      %2817 = vmatpush.msra.mxu0 %v2804
      %2818 = vmatpush.msra.mxu0 %v2803
      %2819 = vmatpush.msra.mxu0 %v2802
      %2820 = vmatpush.msra.mxu0 %v2801
      %2821 = vmatpush.msra.mxu0 %v2800
      %2822 = vmatpush.msra.mxu0 %v2799
      %2823 = vmatpush.msra.mxu0 %v2798
      %2824 = vmatpush.msra.mxu0 %v2797
      %2825 = vmatpush.msra.mxu0 %v2796
      %2826 = vmatpush.msra.mxu0 %v2795
      %2827 = vmatmul.f32.gmra.mxu0 %v2774
      %v2828 = vpop.f32.mrf.mxu0
      %v2829 = vadd.f32 0.0, %v2828
      %2830 = vmatmul.f32.gmra.mxu0 %v2775
      %v2831 = vpop.f32.mrf.mxu0
      %v2832 = vadd.f32 0.0, %v2831
      %2833 = vmatmul.f32.gmra.mxu0 %v2776
      %v2834 = vpop.f32.mrf.mxu0
      %v2835 = vadd.f32 0.0, %v2834
      %2836 = vmatmul.f32.gmra.mxu0 %v2777
      %v2837 = vpop.f32.mrf.mxu0
      %v2838 = vadd.f32 0.0, %v2837
      %2839 = vmatmul.f32.gmra.mxu0 %v2778
      %v2840 = vpop.f32.mrf.mxu0
      %v2841 = vadd.f32 0.0, %v2840
      %2842 = vmatmul.f32.gmra.mxu0 %v2779
      %v2843 = vpop.f32.mrf.mxu0
      %v2844 = vadd.f32 0.0, %v2843
      %2845 = vmatmul.f32.gmra.mxu0 %v2780
      %v2846 = vpop.f32.mrf.mxu0
      %v2847 = vadd.f32 0.0, %v2846
      %2848 = vmatmul.f32.gmra.mxu0 %v2781
      %v2849 = vpop.f32.mrf.mxu0
      %v2850 = vadd.f32 0.0, %v2849
      %2851 = vmatmul.f32.gmra.mxu0 %v2782
      %v2852 = vpop.f32.mrf.mxu0
      %v2853 = vadd.f32 0.0, %v2852
      %2854 = vmatmul.f32.gmra.mxu0 %v2783
      %v2855 = vpop.f32.mrf.mxu0
      %v2856 = vadd.f32 0.0, %v2855
      %2857 = vdwg.mxu0
      %v2858 = vadd.f32 %v2784, %v2829
      %v2859 = vadd.f32 %v2785, %v2832
      %v2860 = vadd.f32 %v2786, %v2835
      %v2861 = vadd.f32 %v2787, %v2838
      %v2862 = vadd.f32 %v2788, %v2841
      %v2863 = vadd.f32 %v2789, %v2844
      %v2864 = vadd.f32 %v2790, %v2847
      %v2865 = vadd.f32 %v2791, %v2850
      %v2866 = vadd.f32 %v2792, %v2853
      %v2867 = vadd.f32 %v2793, %v2856
      %2868 = vst [vmem:[#allocation2] sm:$0xff] %v2858
      %2869 = vst [vmem:[#allocation2 + $0x8] sm:$0xff] %v2859
      %2870 = vst [vmem:[#allocation2 + $0x10] sm:$0xff] %v2860
      %2871 = vst [vmem:[#allocation2 + $0x18] sm:$0xff] %v2861
      %2872 = vst [vmem:[#allocation2 + $0x20] sm:$0xff] %v2862
      %2873 = vst [vmem:[#allocation2 + $0x28] sm:$0xff] %v2863
      %2874 = vst [vmem:[#allocation2 + $0x30] sm:$0xff] %v2864
      %2875 = vst [vmem:[#allocation2 + $0x38] sm:$0xff] %v2865
      %2876 = vst [vmem:[#allocation2 + $0x40] sm:$0xff] %v2866
      %2877 = vst [vmem:[#allocation2 + $0x48] sm:$0xff] %v2867
      %v2878 = vld [vmem:[%s354 + $0x14] sm:$0xff]
      %v2879 = vld [vmem:[%s354 + $0x1c] sm:$0xff]
      %v2880 = vld [vmem:[%s354 + $0x24] sm:$0xff]
      %v2881 = vld [vmem:[%s354 + $0x2c] sm:$0xff]
      %v2882 = vld [vmem:[%s354 + $0x34] sm:$0xff]
      %v2883 = vld [vmem:[%s354 + $0x3c] sm:$0xff]
      %v2884 = vld [vmem:[%s354 + $0x44] sm:$0xff]
      %v2885 = vld [vmem:[%s354 + $0x4c] sm:$0xff]
      %v2886 = vld [vmem:[%s354 + $0x54] sm:$0xff]
      %v2887 = vld [vmem:[%s354 + $0x5c] sm:$0xff]
      %v2888 = vld [vmem:[#allocation2] sm:$0xff]
      %v2889 = vld [vmem:[#allocation2 + $0x8] sm:$0xff]
      %v2890 = vld [vmem:[#allocation2 + $0x10] sm:$0xff]
      %v2891 = vld [vmem:[#allocation2 + $0x18] sm:$0xff]
      %v2892 = vld [vmem:[#allocation2 + $0x20] sm:$0xff]
      %v2893 = vld [vmem:[#allocation2 + $0x28] sm:$0xff]
      %v2894 = vld [vmem:[#allocation2 + $0x30] sm:$0xff]
      %v2895 = vld [vmem:[#allocation2 + $0x38] sm:$0xff]
      %v2896 = vld [vmem:[#allocation2 + $0x40] sm:$0xff]
      %v2897 = vld [vmem:[#allocation2 + $0x48] sm:$0xff]
      %s2898 = scalar_lea.vmem %s3, 3072
      %v2899 = vld [vmem:[%s2898] sm:$0xff]
      %v2900 = vld [vmem:[%s2898 + $0x8] sm:$0xff]
      %v2901 = vld [vmem:[%s2898 + $0x10] sm:$0xff]
      %v2902 = vld [vmem:[%s2898 + $0x18] sm:$0xff]
      %v2903 = vld [vmem:[%s2898 + $0x20] sm:$0xff]
      %v2904 = vld [vmem:[%s2898 + $0x28] sm:$0xff]
      %v2905 = vld [vmem:[%s2898 + $0x30] sm:$0xff]
      %v2906 = vld [vmem:[%s2898 + $0x38] sm:$0xff]
      %v2907 = vld [vmem:[%s2898 + $0x40] sm:$0xff]
      %v2908 = vld [vmem:[%s2898 + $0x48] sm:$0xff]
      %v2909 = vld [vmem:[%s2898 + $0x50] sm:$0xff]
      %v2910 = vld [vmem:[%s2898 + $0x58] sm:$0xff]
      %v2911 = vld [vmem:[%s2898 + $0x60] sm:$0xff]
      %v2912 = vld [vmem:[%s2898 + $0x68] sm:$0xff]
      %v2913 = vld [vmem:[%s2898 + $0x70] sm:$0xff]
      %v2914 = vld [vmem:[%s2898 + $0x78] sm:$0xff]
      %2915 = vmatpush.msra.mxu0 %v2914
      %2916 = vmatpush.msra.mxu0 %v2913
      %2917 = vmatpush.msra.mxu0 %v2912
      %2918 = vmatpush.msra.mxu0 %v2911
      %2919 = vmatpush.msra.mxu0 %v2910
      %2920 = vmatpush.msra.mxu0 %v2909
      %2921 = vmatpush.msra.mxu0 %v2908
      %2922 = vmatpush.msra.mxu0 %v2907
      %2923 = vmatpush.msra.mxu0 %v2906
      %2924 = vmatpush.msra.mxu0 %v2905
      %2925 = vmatpush.msra.mxu0 %v2904
      %2926 = vmatpush.msra.mxu0 %v2903
      %2927 = vmatpush.msra.mxu0 %v2902
      %2928 = vmatpush.msra.mxu0 %v2901
      %2929 = vmatpush.msra.mxu0 %v2900
      %2930 = vmatpush.msra.mxu0 %v2899
      %2931 = vmatmul.f32.gmra.mxu0 %v2878
      %v2932 = vpop.f32.mrf.mxu0
      %v2933 = vadd.f32 0.0, %v2932
      %2934 = vmatmul.f32.gmra.mxu0 %v2879
      %v2935 = vpop.f32.mrf.mxu0
      %v2936 = vadd.f32 0.0, %v2935
      %2937 = vmatmul.f32.gmra.mxu0 %v2880
      %v2938 = vpop.f32.mrf.mxu0
      %v2939 = vadd.f32 0.0, %v2938
      %2940 = vmatmul.f32.gmra.mxu0 %v2881
      %v2941 = vpop.f32.mrf.mxu0
      %v2942 = vadd.f32 0.0, %v2941
      %2943 = vmatmul.f32.gmra.mxu0 %v2882
      %v2944 = vpop.f32.mrf.mxu0
      %v2945 = vadd.f32 0.0, %v2944
      %2946 = vmatmul.f32.gmra.mxu0 %v2883
      %v2947 = vpop.f32.mrf.mxu0
      %v2948 = vadd.f32 0.0, %v2947
      %2949 = vmatmul.f32.gmra.mxu0 %v2884
      %v2950 = vpop.f32.mrf.mxu0
      %v2951 = vadd.f32 0.0, %v2950
      %2952 = vmatmul.f32.gmra.mxu0 %v2885
      %v2953 = vpop.f32.mrf.mxu0
      %v2954 = vadd.f32 0.0, %v2953
      %2955 = vmatmul.f32.gmra.mxu0 %v2886
      %v2956 = vpop.f32.mrf.mxu0
      %v2957 = vadd.f32 0.0, %v2956
      %2958 = vmatmul.f32.gmra.mxu0 %v2887
      %v2959 = vpop.f32.mrf.mxu0
      %v2960 = vadd.f32 0.0, %v2959
      %2961 = vdwg.mxu0
      %v2962 = vadd.f32 %v2888, %v2933
      %v2963 = vadd.f32 %v2889, %v2936
      %v2964 = vadd.f32 %v2890, %v2939
      %v2965 = vadd.f32 %v2891, %v2942
      %v2966 = vadd.f32 %v2892, %v2945
      %v2967 = vadd.f32 %v2893, %v2948
      %v2968 = vadd.f32 %v2894, %v2951
      %v2969 = vadd.f32 %v2895, %v2954
      %v2970 = vadd.f32 %v2896, %v2957
      %v2971 = vadd.f32 %v2897, %v2960
      %2972 = vst [vmem:[#allocation2] sm:$0xff] %v2962
      %2973 = vst [vmem:[#allocation2 + $0x8] sm:$0xff] %v2963
      %2974 = vst [vmem:[#allocation2 + $0x10] sm:$0xff] %v2964
      %2975 = vst [vmem:[#allocation2 + $0x18] sm:$0xff] %v2965
      %2976 = vst [vmem:[#allocation2 + $0x20] sm:$0xff] %v2966
      %2977 = vst [vmem:[#allocation2 + $0x28] sm:$0xff] %v2967
      %2978 = vst [vmem:[#allocation2 + $0x30] sm:$0xff] %v2968
      %2979 = vst [vmem:[#allocation2 + $0x38] sm:$0xff] %v2969
      %2980 = vst [vmem:[#allocation2 + $0x40] sm:$0xff] %v2970
      %2981 = vst [vmem:[#allocation2 + $0x48] sm:$0xff] %v2971
      %v2982 = vld [vmem:[%s354 + $0x15] sm:$0xff]
      %v2983 = vld [vmem:[%s354 + $0x1d] sm:$0xff]
      %v2984 = vld [vmem:[%s354 + $0x25] sm:$0xff]
      %v2985 = vld [vmem:[%s354 + $0x2d] sm:$0xff]
      %v2986 = vld [vmem:[%s354 + $0x35] sm:$0xff]
      %v2987 = vld [vmem:[%s354 + $0x3d] sm:$0xff]
      %v2988 = vld [vmem:[%s354 + $0x45] sm:$0xff]
      %v2989 = vld [vmem:[%s354 + $0x4d] sm:$0xff]
      %v2990 = vld [vmem:[%s354 + $0x55] sm:$0xff]
      %v2991 = vld [vmem:[%s354 + $0x5d] sm:$0xff]
      %v2992 = vld [vmem:[#allocation2] sm:$0xff]
      %v2993 = vld [vmem:[#allocation2 + $0x8] sm:$0xff]
      %v2994 = vld [vmem:[#allocation2 + $0x10] sm:$0xff]
      %v2995 = vld [vmem:[#allocation2 + $0x18] sm:$0xff]
      %v2996 = vld [vmem:[#allocation2 + $0x20] sm:$0xff]
      %v2997 = vld [vmem:[#allocation2 + $0x28] sm:$0xff]
      %v2998 = vld [vmem:[#allocation2 + $0x30] sm:$0xff]
      %v2999 = vld [vmem:[#allocation2 + $0x38] sm:$0xff]
      %v3000 = vld [vmem:[#allocation2 + $0x40] sm:$0xff]
      %v3001 = vld [vmem:[#allocation2 + $0x48] sm:$0xff]
      %s3002 = scalar_lea.vmem %s3, 3200
      %v3003 = vld [vmem:[%s3002] sm:$0xff]
      %v3004 = vld [vmem:[%s3002 + $0x8] sm:$0xff]
      %v3005 = vld [vmem:[%s3002 + $0x10] sm:$0xff]
      %v3006 = vld [vmem:[%s3002 + $0x18] sm:$0xff]
      %v3007 = vld [vmem:[%s3002 + $0x20] sm:$0xff]
      %v3008 = vld [vmem:[%s3002 + $0x28] sm:$0xff]
      %v3009 = vld [vmem:[%s3002 + $0x30] sm:$0xff]
      %v3010 = vld [vmem:[%s3002 + $0x38] sm:$0xff]
      %v3011 = vld [vmem:[%s3002 + $0x40] sm:$0xff]
      %v3012 = vld [vmem:[%s3002 + $0x48] sm:$0xff]
      %v3013 = vld [vmem:[%s3002 + $0x50] sm:$0xff]
      %v3014 = vld [vmem:[%s3002 + $0x58] sm:$0xff]
      %v3015 = vld [vmem:[%s3002 + $0x60] sm:$0xff]
      %v3016 = vld [vmem:[%s3002 + $0x68] sm:$0xff]
      %v3017 = vld [vmem:[%s3002 + $0x70] sm:$0xff]
      %v3018 = vld [vmem:[%s3002 + $0x78] sm:$0xff]
      %3019 = vmatpush.msra.mxu0 %v3018
      %3020 = vmatpush.msra.mxu0 %v3017
      %3021 = vmatpush.msra.mxu0 %v3016
      %3022 = vmatpush.msra.mxu0 %v3015
      %3023 = vmatpush.msra.mxu0 %v3014
      %3024 = vmatpush.msra.mxu0 %v3013
      %3025 = vmatpush.msra.mxu0 %v3012
      %3026 = vmatpush.msra.mxu0 %v3011
      %3027 = vmatpush.msra.mxu0 %v3010
      %3028 = vmatpush.msra.mxu0 %v3009
      %3029 = vmatpush.msra.mxu0 %v3008
      %3030 = vmatpush.msra.mxu0 %v3007
      %3031 = vmatpush.msra.mxu0 %v3006
      %3032 = vmatpush.msra.mxu0 %v3005
      %3033 = vmatpush.msra.mxu0 %v3004
      %3034 = vmatpush.msra.mxu0 %v3003
      %3035 = vmatmul.f32.gmra.mxu0 %v2982
      %v3036 = vpop.f32.mrf.mxu0
      %v3037 = vadd.f32 0.0, %v3036
      %3038 = vmatmul.f32.gmra.mxu0 %v2983
      %v3039 = vpop.f32.mrf.mxu0
      %v3040 = vadd.f32 0.0, %v3039
      %3041 = vmatmul.f32.gmra.mxu0 %v2984
      %v3042 = vpop.f32.mrf.mxu0
      %v3043 = vadd.f32 0.0, %v3042
      %3044 = vmatmul.f32.gmra.mxu0 %v2985
      %v3045 = vpop.f32.mrf.mxu0
      %v3046 = vadd.f32 0.0, %v3045
      %3047 = vmatmul.f32.gmra.mxu0 %v2986
      %v3048 = vpop.f32.mrf.mxu0
      %v3049 = vadd.f32 0.0, %v3048
      %3050 = vmatmul.f32.gmra.mxu0 %v2987
      %v3051 = vpop.f32.mrf.mxu0
      %v3052 = vadd.f32 0.0, %v3051
      %3053 = vmatmul.f32.gmra.mxu0 %v2988
      %v3054 = vpop.f32.mrf.mxu0
      %v3055 = vadd.f32 0.0, %v3054
      %3056 = vmatmul.f32.gmra.mxu0 %v2989
      %v3057 = vpop.f32.mrf.mxu0
      %v3058 = vadd.f32 0.0, %v3057
      %3059 = vmatmul.f32.gmra.mxu0 %v2990
      %v3060 = vpop.f32.mrf.mxu0
      %v3061 = vadd.f32 0.0, %v3060
      %3062 = vmatmul.f32.gmra.mxu0 %v2991
      %v3063 = vpop.f32.mrf.mxu0
      %v3064 = vadd.f32 0.0, %v3063
      %3065 = vdwg.mxu0
      %v3066 = vadd.f32 %v2992, %v3037
      %v3067 = vadd.f32 %v2993, %v3040
      %v3068 = vadd.f32 %v2994, %v3043
      %v3069 = vadd.f32 %v2995, %v3046
      %v3070 = vadd.f32 %v2996, %v3049
      %v3071 = vadd.f32 %v2997, %v3052
      %v3072 = vadd.f32 %v2998, %v3055
      %v3073 = vadd.f32 %v2999, %v3058
      %v3074 = vadd.f32 %v3000, %v3061
      %v3075 = vadd.f32 %v3001, %v3064
      %3076 = vst [vmem:[#allocation2] sm:$0xff] %v3066
      %3077 = vst [vmem:[#allocation2 + $0x8] sm:$0xff] %v3067
      %3078 = vst [vmem:[#allocation2 + $0x10] sm:$0xff] %v3068
      %3079 = vst [vmem:[#allocation2 + $0x18] sm:$0xff] %v3069
      %3080 = vst [vmem:[#allocation2 + $0x20] sm:$0xff] %v3070
      %3081 = vst [vmem:[#allocation2 + $0x28] sm:$0xff] %v3071
      %3082 = vst [vmem:[#allocation2 + $0x30] sm:$0xff] %v3072
      %3083 = vst [vmem:[#allocation2 + $0x38] sm:$0xff] %v3073
      %3084 = vst [vmem:[#allocation2 + $0x40] sm:$0xff] %v3074
      %3085 = vst [vmem:[#allocation2 + $0x48] sm:$0xff] %v3075
      %v3086 = vld [vmem:[%s354 + $0x16] sm:$0xff]
      %v3087 = vld [vmem:[%s354 + $0x1e] sm:$0xff]
      %v3088 = vld [vmem:[%s354 + $0x26] sm:$0xff]
      %v3089 = vld [vmem:[%s354 + $0x2e] sm:$0xff]
      %v3090 = vld [vmem:[%s354 + $0x36] sm:$0xff]
      %v3091 = vld [vmem:[%s354 + $0x3e] sm:$0xff]
      %v3092 = vld [vmem:[%s354 + $0x46] sm:$0xff]
      %v3093 = vld [vmem:[%s354 + $0x4e] sm:$0xff]
      %v3094 = vld [vmem:[%s354 + $0x56] sm:$0xff]
      %v3095 = vld [vmem:[%s354 + $0x5e] sm:$0xff]
      %v3096 = vld [vmem:[#allocation2] sm:$0xff]
      %v3097 = vld [vmem:[#allocation2 + $0x8] sm:$0xff]
      %v3098 = vld [vmem:[#allocation2 + $0x10] sm:$0xff]
      %v3099 = vld [vmem:[#allocation2 + $0x18] sm:$0xff]
      %v3100 = vld [vmem:[#allocation2 + $0x20] sm:$0xff]
      %v3101 = vld [vmem:[#allocation2 + $0x28] sm:$0xff]
      %v3102 = vld [vmem:[#allocation2 + $0x30] sm:$0xff]
      %v3103 = vld [vmem:[#allocation2 + $0x38] sm:$0xff]
      %v3104 = vld [vmem:[#allocation2 + $0x40] sm:$0xff]
      %v3105 = vld [vmem:[#allocation2 + $0x48] sm:$0xff]
      %s3106 = scalar_lea.vmem %s3, 3328
      %v3107 = vld [vmem:[%s3106] sm:$0xff]
      %v3108 = vld [vmem:[%s3106 + $0x8] sm:$0xff]
      %v3109 = vld [vmem:[%s3106 + $0x10] sm:$0xff]
      %v3110 = vld [vmem:[%s3106 + $0x18] sm:$0xff]
      %v3111 = vld [vmem:[%s3106 + $0x20] sm:$0xff]
      %v3112 = vld [vmem:[%s3106 + $0x28] sm:$0xff]
      %v3113 = vld [vmem:[%s3106 + $0x30] sm:$0xff]
      %v3114 = vld [vmem:[%s3106 + $0x38] sm:$0xff]
      %v3115 = vld [vmem:[%s3106 + $0x40] sm:$0xff]
      %v3116 = vld [vmem:[%s3106 + $0x48] sm:$0xff]
      %v3117 = vld [vmem:[%s3106 + $0x50] sm:$0xff]
      %v3118 = vld [vmem:[%s3106 + $0x58] sm:$0xff]
      %v3119 = vld [vmem:[%s3106 + $0x60] sm:$0xff]
      %v3120 = vld [vmem:[%s3106 + $0x68] sm:$0xff]
      %v3121 = vld [vmem:[%s3106 + $0x70] sm:$0xff]
      %v3122 = vld [vmem:[%s3106 + $0x78] sm:$0xff]
      %3123 = vmatpush.msra.mxu0 %v3122
      %3124 = vmatpush.msra.mxu0 %v3121
      %3125 = vmatpush.msra.mxu0 %v3120
      %3126 = vmatpush.msra.mxu0 %v3119
      %3127 = vmatpush.msra.mxu0 %v3118
      %3128 = vmatpush.msra.mxu0 %v3117
      %3129 = vmatpush.msra.mxu0 %v3116
      %3130 = vmatpush.msra.mxu0 %v3115
      %3131 = vmatpush.msra.mxu0 %v3114
      %3132 = vmatpush.msra.mxu0 %v3113
      %3133 = vmatpush.msra.mxu0 %v3112
      %3134 = vmatpush.msra.mxu0 %v3111
      %3135 = vmatpush.msra.mxu0 %v3110
      %3136 = vmatpush.msra.mxu0 %v3109
      %3137 = vmatpush.msra.mxu0 %v3108
      %3138 = vmatpush.msra.mxu0 %v3107
      %3139 = vmatmul.f32.gmra.mxu0 %v3086
      %v3140 = vpop.f32.mrf.mxu0
      %v3141 = vadd.f32 0.0, %v3140
      %3142 = vmatmul.f32.gmra.mxu0 %v3087
      %v3143 = vpop.f32.mrf.mxu0
      %v3144 = vadd.f32 0.0, %v3143
      %3145 = vmatmul.f32.gmra.mxu0 %v3088
      %v3146 = vpop.f32.mrf.mxu0
      %v3147 = vadd.f32 0.0, %v3146
      %3148 = vmatmul.f32.gmra.mxu0 %v3089
      %v3149 = vpop.f32.mrf.mxu0
      %v3150 = vadd.f32 0.0, %v3149
      %3151 = vmatmul.f32.gmra.mxu0 %v3090
      %v3152 = vpop.f32.mrf.mxu0
      %v3153 = vadd.f32 0.0, %v3152
      %3154 = vmatmul.f32.gmra.mxu0 %v3091
      %v3155 = vpop.f32.mrf.mxu0
      %v3156 = vadd.f32 0.0, %v3155
      %3157 = vmatmul.f32.gmra.mxu0 %v3092
      %v3158 = vpop.f32.mrf.mxu0
      %v3159 = vadd.f32 0.0, %v3158
      %3160 = vmatmul.f32.gmra.mxu0 %v3093
      %v3161 = vpop.f32.mrf.mxu0
      %v3162 = vadd.f32 0.0, %v3161
      %3163 = vmatmul.f32.gmra.mxu0 %v3094
      %v3164 = vpop.f32.mrf.mxu0
      %v3165 = vadd.f32 0.0, %v3164
      %3166 = vmatmul.f32.gmra.mxu0 %v3095
      %v3167 = vpop.f32.mrf.mxu0
      %v3168 = vadd.f32 0.0, %v3167
      %3169 = vdwg.mxu0
      %v3170 = vadd.f32 %v3096, %v3141
      %v3171 = vadd.f32 %v3097, %v3144
      %v3172 = vadd.f32 %v3098, %v3147
      %v3173 = vadd.f32 %v3099, %v3150
      %v3174 = vadd.f32 %v3100, %v3153
      %v3175 = vadd.f32 %v3101, %v3156
      %v3176 = vadd.f32 %v3102, %v3159
      %v3177 = vadd.f32 %v3103, %v3162
      %v3178 = vadd.f32 %v3104, %v3165
      %v3179 = vadd.f32 %v3105, %v3168
      %3180 = vst [vmem:[#allocation2] sm:$0xff] %v3170
      %3181 = vst [vmem:[#allocation2 + $0x8] sm:$0xff] %v3171
      %3182 = vst [vmem:[#allocation2 + $0x10] sm:$0xff] %v3172
      %3183 = vst [vmem:[#allocation2 + $0x18] sm:$0xff] %v3173
      %3184 = vst [vmem:[#allocation2 + $0x20] sm:$0xff] %v3174
      %3185 = vst [vmem:[#allocation2 + $0x28] sm:$0xff] %v3175
      %3186 = vst [vmem:[#allocation2 + $0x30] sm:$0xff] %v3176
      %3187 = vst [vmem:[#allocation2 + $0x38] sm:$0xff] %v3177
      %3188 = vst [vmem:[#allocation2 + $0x40] sm:$0xff] %v3178
      %3189 = vst [vmem:[#allocation2 + $0x48] sm:$0xff] %v3179
      %v3190 = vlaneseq
      %v3191 = vshrl.u32 %v3190, 7
      %v3192 = vadd.s32 %v3191, 8
      %v3193 = vadd.s32 %v3191, 16
      %v3194 = vadd.s32 %v3191, 24
      %v3195 = vadd.s32 %v3191, 32
      %v3196 = vadd.s32 %v3191, 40
      %v3197 = vadd.s32 %v3191, 48
      %v3198 = vadd.s32 %v3191, 56
      %v3199 = vadd.s32 %v3191, 64
      %v3200 = vadd.s32 %v3191, 72
      %vm3201 = vcmp.lt.s32.totalorder %v3191, 0
      %v3202 = vsub.s32 0, %v3191
      %v3203 = vsel %vm3201, %v3202, %v3191
      %v3204 = vand.u32 %v3203, 65535
      %v3205 = vshrl.u32 %v3203, 16
      %v3207 = vmul.u32 %v3204, 52429
      %v3208 = vmul.u32 %v3204, 52428
      %v3209 = vmul.u32 %v3205, 52429
      %v3210 = vmul.u32 %v3205, 52428
      %v3211 = vshll.u32 %v3208, 16
      %v3212 = vshrl.u32 %v3208, 16
      %v3213 = vshll.u32 %v3209, 16
      %v3214 = vshrl.u32 %v3209, 16
      %vm3215 = vc.u32 %v3207, %v3211
      %v3216 = vsel %vm3215, 1, 0
      %v3217 = vadd.s32 %v3207, %v3211
      %v3218 = vadd.s32 %v3210, %v3216
      %vm3219 = vc.u32 %v3217, %v3213
      %v3220 = vsel %vm3219, 1, 0
      %v3221 = vadd.s32 %v3217, %v3213
      %v3222 = vadd.s32 %v3218, %v3220
      %v3223 = vadd.s32 %v3222, %v3212
      %v3224 = vadd.s32 %v3223, %v3214
      %v3225 = vshrl.u32 %v3224, 3
      %v3226 = vmul.u32 %v3225, 10
      %v3227 = vsub.s32 %v3203, %v3226
      %v3228 = vsub.s32 0, %v3227
      %v3229 = vsel %vm3201, %v3228, %v3227
      %vm3230 = vcmp.lt.s32.totalorder %v3192, 0
      %v3231 = vsub.s32 0, %v3192
      %v3232 = vsel %vm3230, %v3231, %v3192
      %v3233 = vand.u32 %v3232, 65535
      %v3234 = vshrl.u32 %v3232, 16
      %v3236 = vmul.u32 %v3233, 52429
      %v3237 = vmul.u32 %v3233, 52428
      %v3238 = vmul.u32 %v3234, 52429
      %v3239 = vmul.u32 %v3234, 52428
      %v3240 = vshll.u32 %v3237, 16
      %v3241 = vshrl.u32 %v3237, 16
      %v3242 = vshll.u32 %v3238, 16
      %v3243 = vshrl.u32 %v3238, 16
      %vm3244 = vc.u32 %v3236, %v3240
      %v3245 = vsel %vm3244, 1, 0
      %v3246 = vadd.s32 %v3236, %v3240
      %v3247 = vadd.s32 %v3239, %v3245
      %vm3248 = vc.u32 %v3246, %v3242
      %v3249 = vsel %vm3248, 1, 0
      %v3250 = vadd.s32 %v3246, %v3242
      %v3251 = vadd.s32 %v3247, %v3249
      %v3252 = vadd.s32 %v3251, %v3241
      %v3253 = vadd.s32 %v3252, %v3243
      %v3254 = vshrl.u32 %v3253, 3
      %v3255 = vmul.u32 %v3254, 10
      %v3256 = vsub.s32 %v3232, %v3255
      %v3257 = vsub.s32 0, %v3256
      %v3258 = vsel %vm3230, %v3257, %v3256
      %vm3259 = vcmp.lt.s32.totalorder %v3193, 0
      %v3260 = vsub.s32 0, %v3193
      %v3261 = vsel %vm3259, %v3260, %v3193
      %v3262 = vand.u32 %v3261, 65535
      %v3263 = vshrl.u32 %v3261, 16
      %v3265 = vmul.u32 %v3262, 52429
      %v3266 = vmul.u32 %v3262, 52428
      %v3267 = vmul.u32 %v3263, 52429
      %v3268 = vmul.u32 %v3263, 52428
      %v3269 = vshll.u32 %v3266, 16
      %v3270 = vshrl.u32 %v3266, 16
      %v3271 = vshll.u32 %v3267, 16
      %v3272 = vshrl.u32 %v3267, 16
      %vm3273 = vc.u32 %v3265, %v3269
      %v3274 = vsel %vm3273, 1, 0
      %v3275 = vadd.s32 %v3265, %v3269
      %v3276 = vadd.s32 %v3268, %v3274
      %vm3277 = vc.u32 %v3275, %v3271
      %v3278 = vsel %vm3277, 1, 0
      %v3279 = vadd.s32 %v3275, %v3271
      %v3280 = vadd.s32 %v3276, %v3278
      %v3281 = vadd.s32 %v3280, %v3270
      %v3282 = vadd.s32 %v3281, %v3272
      %v3283 = vshrl.u32 %v3282, 3
      %v3284 = vmul.u32 %v3283, 10
      %v3285 = vsub.s32 %v3261, %v3284
      %v3286 = vsub.s32 0, %v3285
      %v3287 = vsel %vm3259, %v3286, %v3285
      %vm3288 = vcmp.lt.s32.totalorder %v3194, 0
      %v3289 = vsub.s32 0, %v3194
      %v3290 = vsel %vm3288, %v3289, %v3194
      %v3291 = vand.u32 %v3290, 65535
      %v3292 = vshrl.u32 %v3290, 16
      %v3294 = vmul.u32 %v3291, 52429
      %v3295 = vmul.u32 %v3291, 52428
      %v3296 = vmul.u32 %v3292, 52429
      %v3297 = vmul.u32 %v3292, 52428
      %v3298 = vshll.u32 %v3295, 16
      %v3299 = vshrl.u32 %v3295, 16
      %v3300 = vshll.u32 %v3296, 16
      %v3301 = vshrl.u32 %v3296, 16
      %vm3302 = vc.u32 %v3294, %v3298
      %v3303 = vsel %vm3302, 1, 0
      %v3304 = vadd.s32 %v3294, %v3298
      %v3305 = vadd.s32 %v3297, %v3303
      %vm3306 = vc.u32 %v3304, %v3300
      %v3307 = vsel %vm3306, 1, 0
      %v3308 = vadd.s32 %v3304, %v3300
      %v3309 = vadd.s32 %v3305, %v3307
      %v3310 = vadd.s32 %v3309, %v3299
      %v3311 = vadd.s32 %v3310, %v3301
      %v3312 = vshrl.u32 %v3311, 3
      %v3313 = vmul.u32 %v3312, 10
      %v3314 = vsub.s32 %v3290, %v3313
      %v3315 = vsub.s32 0, %v3314
      %v3316 = vsel %vm3288, %v3315, %v3314
      %vm3317 = vcmp.lt.s32.totalorder %v3195, 0
      %v3318 = vsub.s32 0, %v3195
      %v3319 = vsel %vm3317, %v3318, %v3195
      %v3320 = vand.u32 %v3319, 65535
      %v3321 = vshrl.u32 %v3319, 16
      %v3323 = vmul.u32 %v3320, 52429
      %v3324 = vmul.u32 %v3320, 52428
      %v3325 = vmul.u32 %v3321, 52429
      %v3326 = vmul.u32 %v3321, 52428
      %v3327 = vshll.u32 %v3324, 16
      %v3328 = vshrl.u32 %v3324, 16
      %v3329 = vshll.u32 %v3325, 16
      %v3330 = vshrl.u32 %v3325, 16
      %vm3331 = vc.u32 %v3323, %v3327
      %v3332 = vsel %vm3331, 1, 0
      %v3333 = vadd.s32 %v3323, %v3327
      %v3334 = vadd.s32 %v3326, %v3332
      %vm3335 = vc.u32 %v3333, %v3329
      %v3336 = vsel %vm3335, 1, 0
      %v3337 = vadd.s32 %v3333, %v3329
      %v3338 = vadd.s32 %v3334, %v3336
      %v3339 = vadd.s32 %v3338, %v3328
      %v3340 = vadd.s32 %v3339, %v3330
      %v3341 = vshrl.u32 %v3340, 3
      %v3342 = vmul.u32 %v3341, 10
      %v3343 = vsub.s32 %v3319, %v3342
      %v3344 = vsub.s32 0, %v3343
      %v3345 = vsel %vm3317, %v3344, %v3343
      %vm3346 = vcmp.lt.s32.totalorder %v3196, 0
      %v3347 = vsub.s32 0, %v3196
      %v3348 = vsel %vm3346, %v3347, %v3196
      %v3349 = vand.u32 %v3348, 65535
      %v3350 = vshrl.u32 %v3348, 16
      %v3352 = vmul.u32 %v3349, 52429
      %v3353 = vmul.u32 %v3349, 52428
      %v3354 = vmul.u32 %v3350, 52429
      %v3355 = vmul.u32 %v3350, 52428
      %v3356 = vshll.u32 %v3353, 16
      %v3357 = vshrl.u32 %v3353, 16
      %v3358 = vshll.u32 %v3354, 16
      %v3359 = vshrl.u32 %v3354, 16
      %vm3360 = vc.u32 %v3352, %v3356
      %v3361 = vsel %vm3360, 1, 0
      %v3362 = vadd.s32 %v3352, %v3356
      %v3363 = vadd.s32 %v3355, %v3361
      %vm3364 = vc.u32 %v3362, %v3358
      %v3365 = vsel %vm3364, 1, 0
      %v3366 = vadd.s32 %v3362, %v3358
      %v3367 = vadd.s32 %v3363, %v3365
      %v3368 = vadd.s32 %v3367, %v3357
      %v3369 = vadd.s32 %v3368, %v3359
      %v3370 = vshrl.u32 %v3369, 3
      %v3371 = vmul.u32 %v3370, 10
      %v3372 = vsub.s32 %v3348, %v3371
      %v3373 = vsub.s32 0, %v3372
      %v3374 = vsel %vm3346, %v3373, %v3372
      %vm3375 = vcmp.lt.s32.totalorder %v3197, 0
      %v3376 = vsub.s32 0, %v3197
      %v3377 = vsel %vm3375, %v3376, %v3197
      %v3378 = vand.u32 %v3377, 65535
      %v3379 = vshrl.u32 %v3377, 16
      %v3381 = vmul.u32 %v3378, 52429
      %v3382 = vmul.u32 %v3378, 52428
      %v3383 = vmul.u32 %v3379, 52429
      %v3384 = vmul.u32 %v3379, 52428
      %v3385 = vshll.u32 %v3382, 16
      %v3386 = vshrl.u32 %v3382, 16
      %v3387 = vshll.u32 %v3383, 16
      %v3388 = vshrl.u32 %v3383, 16
      %vm3389 = vc.u32 %v3381, %v3385
      %v3390 = vsel %vm3389, 1, 0
      %v3391 = vadd.s32 %v3381, %v3385
      %v3392 = vadd.s32 %v3384, %v3390
      %vm3393 = vc.u32 %v3391, %v3387
      %v3394 = vsel %vm3393, 1, 0
      %v3395 = vadd.s32 %v3391, %v3387
      %v3396 = vadd.s32 %v3392, %v3394
      %v3397 = vadd.s32 %v3396, %v3386
      %v3398 = vadd.s32 %v3397, %v3388
      %v3399 = vshrl.u32 %v3398, 3
      %v3400 = vmul.u32 %v3399, 10
      %v3401 = vsub.s32 %v3377, %v3400
      %v3402 = vsub.s32 0, %v3401
      %v3403 = vsel %vm3375, %v3402, %v3401
      %vm3404 = vcmp.lt.s32.totalorder %v3198, 0
      %v3405 = vsub.s32 0, %v3198
      %v3406 = vsel %vm3404, %v3405, %v3198
      %v3407 = vand.u32 %v3406, 65535
      %v3408 = vshrl.u32 %v3406, 16
      %v3410 = vmul.u32 %v3407, 52429
      %v3411 = vmul.u32 %v3407, 52428
      %v3412 = vmul.u32 %v3408, 52429
      %v3413 = vmul.u32 %v3408, 52428
      %v3414 = vshll.u32 %v3411, 16
      %v3415 = vshrl.u32 %v3411, 16
      %v3416 = vshll.u32 %v3412, 16
      %v3417 = vshrl.u32 %v3412, 16
      %vm3418 = vc.u32 %v3410, %v3414
      %v3419 = vsel %vm3418, 1, 0
      %v3420 = vadd.s32 %v3410, %v3414
      %v3421 = vadd.s32 %v3413, %v3419
      %vm3422 = vc.u32 %v3420, %v3416
      %v3423 = vsel %vm3422, 1, 0
      %v3424 = vadd.s32 %v3420, %v3416
      %v3425 = vadd.s32 %v3421, %v3423
      %v3426 = vadd.s32 %v3425, %v3415
      %v3427 = vadd.s32 %v3426, %v3417
      %v3428 = vshrl.u32 %v3427, 3
      %v3429 = vmul.u32 %v3428, 10
      %v3430 = vsub.s32 %v3406, %v3429
      %v3431 = vsub.s32 0, %v3430
      %v3432 = vsel %vm3404, %v3431, %v3430
      %vm3433 = vcmp.lt.s32.totalorder %v3199, 0
      %v3434 = vsub.s32 0, %v3199
      %v3435 = vsel %vm3433, %v3434, %v3199
      %v3436 = vand.u32 %v3435, 65535
      %v3437 = vshrl.u32 %v3435, 16
      %v3439 = vmul.u32 %v3436, 52429
      %v3440 = vmul.u32 %v3436, 52428
      %v3441 = vmul.u32 %v3437, 52429
      %v3442 = vmul.u32 %v3437, 52428
      %v3443 = vshll.u32 %v3440, 16
      %v3444 = vshrl.u32 %v3440, 16
      %v3445 = vshll.u32 %v3441, 16
      %v3446 = vshrl.u32 %v3441, 16
      %vm3447 = vc.u32 %v3439, %v3443
      %v3448 = vsel %vm3447, 1, 0
      %v3449 = vadd.s32 %v3439, %v3443
      %v3450 = vadd.s32 %v3442, %v3448
      %vm3451 = vc.u32 %v3449, %v3445
      %v3452 = vsel %vm3451, 1, 0
      %v3453 = vadd.s32 %v3449, %v3445
      %v3454 = vadd.s32 %v3450, %v3452
      %v3455 = vadd.s32 %v3454, %v3444
      %v3456 = vadd.s32 %v3455, %v3446
      %v3457 = vshrl.u32 %v3456, 3
      %v3458 = vmul.u32 %v3457, 10
      %v3459 = vsub.s32 %v3435, %v3458
      %v3460 = vsub.s32 0, %v3459
      %v3461 = vsel %vm3433, %v3460, %v3459
      %vm3462 = vcmp.lt.s32.totalorder %v3200, 0
      %v3463 = vsub.s32 0, %v3200
      %v3464 = vsel %vm3462, %v3463, %v3200
      %v3465 = vand.u32 %v3464, 65535
      %v3466 = vshrl.u32 %v3464, 16
      %v3468 = vmul.u32 %v3465, 52429
      %v3469 = vmul.u32 %v3465, 52428
      %v3470 = vmul.u32 %v3466, 52429
      %v3471 = vmul.u32 %v3466, 52428
      %v3472 = vshll.u32 %v3469, 16
      %v3473 = vshrl.u32 %v3469, 16
      %v3474 = vshll.u32 %v3470, 16
      %v3475 = vshrl.u32 %v3470, 16
      %vm3476 = vc.u32 %v3468, %v3472
      %v3477 = vsel %vm3476, 1, 0
      %v3478 = vadd.s32 %v3468, %v3472
      %v3479 = vadd.s32 %v3471, %v3477
      %vm3480 = vc.u32 %v3478, %v3474
      %v3481 = vsel %vm3480, 1, 0
      %v3482 = vadd.s32 %v3478, %v3474
      %v3483 = vadd.s32 %v3479, %v3481
      %v3484 = vadd.s32 %v3483, %v3473
      %v3485 = vadd.s32 %v3484, %v3475
      %v3486 = vshrl.u32 %v3485, 3
      %v3487 = vmul.u32 %v3486, 10
      %v3488 = vsub.s32 %v3464, %v3487
      %v3489 = vsub.s32 0, %v3488
      %v3490 = vsel %vm3462, %v3489, %v3488
      %vm3491 = vcmp.ne.s32.totalorder %v3229, 0
      %vm3492 = vcmp.ne.s32.totalorder %v3258, 0
      %vm3493 = vcmp.ne.s32.totalorder %v3287, 0
      %vm3494 = vcmp.ne.s32.totalorder %v3316, 0
      %vm3495 = vcmp.ne.s32.totalorder %v3345, 0
      %vm3496 = vcmp.ne.s32.totalorder %v3374, 0
      %vm3497 = vcmp.ne.s32.totalorder %v3403, 0
      %vm3498 = vcmp.ne.s32.totalorder %v3432, 0
      %vm3499 = vcmp.ne.s32.totalorder %v3461, 0
      %vm3500 = vcmp.ne.s32.totalorder %v3490, 0
      %vm3501 = vcmp.lt.s32.totalorder %v3229, 0
      %vm3502 = vcmp.lt.s32.totalorder %v3258, 0
      %vm3503 = vcmp.lt.s32.totalorder %v3287, 0
      %vm3504 = vcmp.lt.s32.totalorder %v3316, 0
      %vm3505 = vcmp.lt.s32.totalorder %v3345, 0
      %vm3506 = vcmp.lt.s32.totalorder %v3374, 0
      %vm3507 = vcmp.lt.s32.totalorder %v3403, 0
      %vm3508 = vcmp.lt.s32.totalorder %v3432, 0
      %vm3509 = vcmp.lt.s32.totalorder %v3461, 0
      %vm3510 = vcmp.lt.s32.totalorder %v3490, 0
      %vm3511 = vmand %vm3501, %vm3491
      %vm3512 = vmand %vm3502, %vm3492
      %vm3513 = vmand %vm3503, %vm3493
      %vm3514 = vmand %vm3504, %vm3494
      %vm3515 = vmand %vm3505, %vm3495
      %vm3516 = vmand %vm3506, %vm3496
      %vm3517 = vmand %vm3507, %vm3497
      %vm3518 = vmand %vm3508, %vm3498
      %vm3519 = vmand %vm3509, %vm3499
      %vm3520 = vmand %vm3510, %vm3500
      %v3521 = vadd.s32 %v3229, 10
      %v3522 = vadd.s32 %v3258, 10
      %v3523 = vadd.s32 %v3287, 10
      %v3524 = vadd.s32 %v3316, 10
      %v3525 = vadd.s32 %v3345, 10
      %v3526 = vadd.s32 %v3374, 10
      %v3527 = vadd.s32 %v3403, 10
      %v3528 = vadd.s32 %v3432, 10
      %v3529 = vadd.s32 %v3461, 10
      %v3530 = vadd.s32 %v3490, 10
      %v3531 = vsel %vm3511, %v3521, %v3229
      %v3532 = vsel %vm3512, %v3522, %v3258
      %v3533 = vsel %vm3513, %v3523, %v3287
      %v3534 = vsel %vm3514, %v3524, %v3316
      %v3535 = vsel %vm3515, %v3525, %v3345
      %v3536 = vsel %vm3516, %v3526, %v3374
      %v3537 = vsel %vm3517, %v3527, %v3403
      %v3538 = vsel %vm3518, %v3528, %v3432
      %v3539 = vsel %vm3519, %v3529, %v3461
      %v3540 = vsel %vm3520, %v3530, %v3490
      %vm3541 = vcmp.lt.s32.totalorder %v3531, 8
      %vm3542 = vcmp.lt.s32.totalorder %v3532, 8
      %vm3543 = vcmp.lt.s32.totalorder %v3533, 8
      %vm3544 = vcmp.lt.s32.totalorder %v3534, 8
      %vm3545 = vcmp.lt.s32.totalorder %v3535, 8
      %vm3546 = vcmp.lt.s32.totalorder %v3536, 8
      %vm3547 = vcmp.lt.s32.totalorder %v3537, 8
      %vm3548 = vcmp.lt.s32.totalorder %v3538, 8
      %vm3549 = vcmp.lt.s32.totalorder %v3539, 8
      %vm3550 = vcmp.lt.s32.totalorder %v3540, 8
      %v3551 = vsel %vm3541, 1, 0
      %v3552 = vsel %vm3542, 1, 0
      %v3553 = vsel %vm3543, 1, 0
      %v3554 = vsel %vm3544, 1, 0
      %v3555 = vsel %vm3545, 1, 0
      %v3556 = vsel %vm3546, 1, 0
      %v3557 = vsel %vm3547, 1, 0
      %v3558 = vsel %vm3548, 1, 0
      %v3559 = vsel %vm3549, 1, 0
      %v3560 = vsel %vm3550, 1, 0
      %v3561 = vcvt.s32.f32 %v3551
      %v3562 = vcvt.s32.f32 %v3552
      %v3563 = vcvt.s32.f32 %v3553
      %v3564 = vcvt.s32.f32 %v3554
      %v3565 = vcvt.s32.f32 %v3555
      %v3566 = vcvt.s32.f32 %v3556
      %v3567 = vcvt.s32.f32 %v3557
      %v3568 = vcvt.s32.f32 %v3558
      %v3569 = vcvt.s32.f32 %v3559
      %v3570 = vcvt.s32.f32 %v3560
      %v3571 = vld [vmem:[#allocation2] sm:$0xff]
      %v3572 = vld [vmem:[#allocation2 + $0x8] sm:$0xff]
      %v3573 = vld [vmem:[#allocation2 + $0x10] sm:$0xff]
      %v3574 = vld [vmem:[#allocation2 + $0x18] sm:$0xff]
      %v3575 = vld [vmem:[#allocation2 + $0x20] sm:$0xff]
      %v3576 = vld [vmem:[#allocation2 + $0x28] sm:$0xff]
      %v3577 = vld [vmem:[#allocation2 + $0x30] sm:$0xff]
      %v3578 = vld [vmem:[#allocation2 + $0x38] sm:$0xff]
      %v3579 = vld [vmem:[#allocation2 + $0x40] sm:$0xff]
      %v3580 = vld [vmem:[#allocation2 + $0x48] sm:$0xff]
      %v3581 = vmul.f32 %v3571, %v3561
      %v3582 = vmul.f32 %v3572, %v3562
      %v3583 = vmul.f32 %v3573, %v3563
      %v3584 = vmul.f32 %v3574, %v3564
      %v3585 = vmul.f32 %v3575, %v3565
      %v3586 = vmul.f32 %v3576, %v3566
      %v3587 = vmul.f32 %v3577, %v3567
      %v3588 = vmul.f32 %v3578, %v3568
      %v3589 = vmul.f32 %v3579, %v3569
      %v3590 = vmul.f32 %v3580, %v3570
      %3591 = vst [vmem:[%s364] sm:$0xff] %v3581
      %3592 = vst [vmem:[%s364 + $0x8] sm:$0xff] %v3582
      %3593 = vst [vmem:[%s364 + $0x10] sm:$0xff] %v3583
      %3594 = vst [vmem:[%s364 + $0x18] sm:$0xff] %v3584
      %3595 = vst [vmem:[%s364 + $0x20] sm:$0xff] %v3585
      %3596 = vst [vmem:[%s364 + $0x28] sm:$0xff] %v3586
      %3597 = vst [vmem:[%s364 + $0x30] sm:$0xff] %v3587
      %3598 = vst [vmem:[%s364 + $0x38] sm:$0xff] %v3588
      %3599 = vst [vmem:[%s364 + $0x40] sm:$0xff] %v3589
      %3600 = vst [vmem:[%s364 + $0x48] sm:$0xff] %v3590
      %v3601 = vld [vmem:[%s5] sm:$0x1]
      %v3602 = vadd.f32 %v3581, %v3582
      %v3603 = vadd.f32 %v3602, %v3583
      %v3604 = vadd.f32 %v3603, %v3584
      %v3605 = vadd.f32 %v3604, %v3585
      %v3606 = vadd.f32 %v3605, %v3586
      %v3607 = vadd.f32 %v3606, %v3587
      %v3608 = vadd.f32 %v3607, %v3588
      %v3609 = vadd.f32 %v3608, %v3589
      %v3610 = vadd.f32 %v3609, %v3590
      %v3611 = vrot.slane %v3610, 4
      %v3612 = vadd.f32 %v3610, %v3611
      %v3613 = vrot.slane %v3612, 2
      %v3614 = vadd.f32 %v3612, %v3613
      %v3615 = vrot.slane %v3614, 1
      %v3616 = vadd.f32 %v3614, %v3615
      %v3617 = vadd.f32 %v3601, %v3616
      %3618 = vst [vmem:[%s5] sm:$0x1] %v3617
      %v3619 = vld [vmem:[%s6] sm:$0x1]
      %v3620 = vmul.f32 %v3581, %v3581
      %v3621 = vmul.f32 %v3582, %v3582
      %v3622 = vmul.f32 %v3583, %v3583
      %v3623 = vmul.f32 %v3584, %v3584
      %v3624 = vmul.f32 %v3585, %v3585
      %v3625 = vmul.f32 %v3586, %v3586
      %v3626 = vmul.f32 %v3587, %v3587
      %v3627 = vmul.f32 %v3588, %v3588
      %v3628 = vmul.f32 %v3589, %v3589
      %v3629 = vmul.f32 %v3590, %v3590
      %v3630 = vadd.f32 %v3620, %v3621
      %v3631 = vadd.f32 %v3630, %v3622
      %v3632 = vadd.f32 %v3631, %v3623
      %v3633 = vadd.f32 %v3632, %v3624
      %v3634 = vadd.f32 %v3633, %v3625
      %v3635 = vadd.f32 %v3634, %v3626
      %v3636 = vadd.f32 %v3635, %v3627
      %v3637 = vadd.f32 %v3636, %v3628
      %v3638 = vadd.f32 %v3637, %v3629
      %v3639 = vrot.slane %v3638, 4
      %v3640 = vadd.f32 %v3638, %v3639
      %v3641 = vrot.slane %v3640, 2
      %v3642 = vadd.f32 %v3640, %v3641
      %v3643 = vrot.slane %v3642, 1
      %v3644 = vadd.f32 %v3642, %v3643
      %v3645 = vadd.f32 %v3619, %v3644
      %3646 = vst [vmem:[%s6] sm:$0x1] %v3645
      %p3647 = scmp.lt.s32.totalorder %s22, 1
      %s3648 = scalar_select %p3647, %s22, 1
      %p3649 = scmp.lt.s32.totalorder %s23, 7
      %s3650 = scalar_select %p3649, %s23, 7
      %s3651 = smul.addr %s3650, 10
      %s3652 = smul.addr %s3648, 80
      %s3653 = sadd.s32 %s3651, %s3652
      %s3654 = smul.addr %s3653, 8
      %s3655 = scalar_lea.vmem %s4, %s3654
      // Predicated region
      $region41: #{conv_block_forward.6} parent=35 // pred_check
        %p3656 = pneg %p159
      $region42: #{conv_block_forward.6} parent=35 // pred_check_branch
        %3658 = sbr.rel (%p3656) target = $region44
      $region43: #{conv_block_forward.6} parent=35 // pred_region
        _
      $region44: #{conv_block_forward.6} parent=35 // pred_fallthru
        _
      // Predicated region
      $region45: #{conv_block_forward.6} parent=35 // pred_check
        %p3659 = pneg %p180
      $region46: #{conv_block_forward.6} parent=35 // pred_check_branch
        %3661 = sbr.rel (%p3659) target = $region48
      $region47: #{conv_block_forward.6} parent=35 // pred_region
        _
      $region48: #{conv_block_forward.6} parent=35 // pred_fallthru
        _
      // Predicated region
      $region49: #{conv_block_forward.6} parent=35 // pred_check
        %p3662 = pneg %p201
      $region50: #{conv_block_forward.6} parent=35 // pred_check_branch
        %3664 = sbr.rel (%p3662) target = $region52
      $region51: #{conv_block_forward.6} parent=35 // pred_region
        _
      $region52: #{conv_block_forward.6} parent=35 // pred_fallthru
        _
      // Predicated region
      $region53: #{conv_block_forward.6} parent=35 // pred_check
        %p3665 = pneg %p180
      $region54: #{conv_block_forward.6} parent=35 // pred_check_branch
        %3667 = sbr.rel (%p3665) target = $region56
      $region55: #{conv_block_forward.6} parent=35 // pred_region
        _
      $region56: #{conv_block_forward.6} parent=35 // pred_fallthru
        _
      // Predicated region
      $region57: #{conv_block_forward.6} parent=35 // pred_check
        %p3668 = pneg %p201
      $region58: #{conv_block_forward.6} parent=35 // pred_check_branch
        %3670 = sbr.rel (%p3668) target = $region60
      $region59: #{conv_block_forward.6} parent=35 // pred_region
        _
      $region60: #{conv_block_forward.6} parent=35 // pred_fallthru
        _
    $region36: #{conv_block_forward.6} parent=5 // pred_fallthru
      _
    %p3671 = scmp.le.s32.totalorder 2, %s13
    // Predicated region
    $region61: #{conv_block_forward.6} parent=5 // pred_check
      %p3672 = pneg %p3671
    $region62: #{conv_block_forward.6} parent=5 // pred_check_branch
      %3674 = sbr.rel (%p3672) target = $region64
    $region63: #{conv_block_forward.6} parent=5 // pred_region
      %s3675 = ssub.s32 %s13, 2
      // Predicated region
      $region65: #{conv_block_forward.6} parent=63 // pred_check
        %p3676 = pneg %p165
      $region66: #{conv_block_forward.6} parent=63 // pred_check_branch
        %3678 = sbr.rel (%p3676) target = $region68
      $region67: #{conv_block_forward.6} parent=63 // pred_region
        %p3679 = scmp.lt.s32.totalorder %s24, 1
        %s3680 = scalar_select %p3679, %s24, 1
        %p3681 = scmp.lt.s32.totalorder %s25, 7
        %s3682 = scalar_select %p3681, %s25, 7
        %s3683 = smul.addr %s3682, 10
        %s3684 = smul.addr %s3680, 80
        %s3685 = sadd.s32 %s3683, %s3684
        %s3686 = smul.addr %s3685, 8
        %s3687 = scalar_lea.vmem %s4, %s3686
      $region68: #{conv_block_forward.6} parent=63 // pred_fallthru
        _
    $region64: #{conv_block_forward.6} parent=5 // pred_fallthru
      _
  $region6: #{conv_block_forward.6} parent=0 // loop_footer
    %s17 = sadd.s32 1, %s13
  $region7: #{conv_block_forward.6} parent=0 // loop_footer_branch
    %12 = sbr.rel target = $region3
  $region8: #{conv_block_forward.6} parent=0 // loop_exit
    _

</llo_original>
